<compile_context>
chip_gen: v7x
topology: tpu7x:2x2x1
jax: 0.10.0
libtpu: 0.0.40
codegen_flags: <defaults>
</compile_context>

<pallas_src>
import jax
import jax.numpy as jnp
from jax import lax
from jax.experimental import pallas as pl
from jax.experimental.pallas import tpu as pltpu

EPS = 1e-5  # PyTorch BatchNorm2d default


def _make_encoder_kernel(layer_dims):
    """layer_dims: static tuple of (cin, cout, m_in) per conv layer."""

    def kernel(x_ref, w_ref, p_ref, o_ref):
        h = x_ref[...]                                    # (C0, M1) bf16, lane-dense
        for l, (cin, cout, m_in) in enumerate(layer_dims):
            m_out = m_in // 4
            h16 = h.astype(jnp.bfloat16)                  # MXU operands in bf16
            w_l = w_ref[l]                                # (4, Cmax, Kpad) bf16
            # 2x2 / stride-2 conv == 4 accumulated matmuls, one per (kh, kw) tap.
            # Tap t = 2*kh + kw occupies lane columns [t*m_out, (t+1)*m_out) of h
            # and its weights start at lane/sublane 0 of w_l[t] (aligned slices).
            y = None
            for t in range(4):
                w_t = w_l[t, :cout, :cin]                       # (cout, cin) bf16
                x_t = h16[:, t * m_out:(t + 1) * m_out]         # (cin, m_out) bf16
                d = jnp.dot(w_t, x_t, preferred_element_type=jnp.float32)
                y = d if y is None else y + d                   # f32 accumulate
            # BatchNorm2d, training-mode batch stats (biased variance), one-pass:
            # sum and sum-of-squares in f32, var = E[y^2] - mean^2. The conv bias
            # is exactly cancelled by the batch-mean subtraction (train-mode BN
            # only) and therefore is never added.
            inv_m = jnp.float32(1.0 / m_out)
            s1 = jnp.sum(y, axis=1, keepdims=True)              # (cout, 1)
            s2 = jnp.sum(y * y, axis=1, keepdims=True)          # (cout, 1)
            mean = s1 * inv_m
            var = jnp.maximum(s2 * inv_m - mean * mean, 0.0)
            p = p_ref[l]                                        # (Cmax, 2) f32
            gamma = p[:cout, 0:1]
            beta = p[:cout, 1:2]
            scale = gamma * lax.rsqrt(var + EPS)
            shift = beta - mean * scale
            h = jnp.maximum(y * scale + shift, 0.0)             # ReLU, f32 carry
        o_ref[...] = h.astype(o_ref.dtype)

    return kernel


def _reorder_pixels(x_nchw, levels):
    """(N, C, H, W) -> (C, M) bf16 in tap-major pixel order, single transpose.

    m = t1*M/4 + t2*M/16 + ... + tL*M/4**L + ((n*Hf + hf)*Wf + wf), with
    t_l = 2*kh_l + kw_l (kh_l / kw_l = l-th stride-2 bit of h / w). With this
    order every conv layer's four taps are four contiguous equal lane chunks,
    so the kernel never reshuffles activations between layers.
    """
    n, c, hh, ww = x_nchw.shape
    hf, wf = hh >> levels, ww >> levels
    x = x_nchw.reshape((n, c, hf) + (2,) * levels + (wf,) + (2,) * levels)
    # axes: 0 n | 1 c | 2 hf | 3..2+L kh_L..kh_1 | 3+L wf | 4+L..3+2L kw_L..kw_1
    perm = [1]
    for l in range(1, levels + 1):
        perm += [3 + levels - l, 4 + 2 * levels - l]   # (kh_l, kw_l), l = 1..L
    perm += [0, 2, 3 + levels]                         # (n, hf, wf)
    return jnp.transpose(x, perm).reshape(c, -1).astype(jnp.bfloat16)


def init_encoder_params(num_channels, key):
    # conv layers: (in, out) = (3, nc), (nc, 2nc), (2nc, 4nc), (4nc, 8nc), kernel 2x2
    chans = [(3, num_channels), (num_channels, num_channels * 2),
             (num_channels * 2, num_channels * 4), (num_channels * 4, num_channels * 8)]
    params = []
    for cin, cout in chans:
        key, kw, kb = jax.random.split(key, 3)
        w = jax.random.normal(kw, (cout, cin, 2, 2), jnp.float32) * 0.1
        b = jax.random.normal(kb, (cout,), jnp.float32) * 0.1
        gamma = jnp.ones((cout,), jnp.float32)   # BatchNorm2d weight init
        beta = jnp.zeros((cout,), jnp.float32)   # BatchNorm2d bias init
        params.append((w, b, gamma, beta))
    return params


def encoder_forward(x_nchw, params, *, return_nchw=True):
    n, _, hh, ww = x_nchw.shape
    n_layers = len(params)
    hf, wf = hh >> n_layers, ww >> n_layers

    cins = [p[0].shape[1] for p in params]
    couts = [p[0].shape[0] for p in params]
    c_max = (max(couts) + 7) // 8 * 8                       # sublane-aligned rows
    k_pad = max(128, (max(cins) + 127) // 128 * 128)        # lane-aligned tap cols

    # Weights: one (L, 4, Cmax, Kpad) bf16 slab; tap t = 2*kh + kw lives at
    # [l, t, :cout, :cin] so every in-kernel slice starts at lane/sublane 0.
    # BN params: one (L, Cmax, 2) f32 slab (gamma, beta). Conv bias dropped —
    # exactly cancelled by train-mode BN's batch-mean subtraction.
    w_packed = jnp.zeros((n_layers, 4, c_max, k_pad), jnp.bfloat16)
    p_packed = jnp.zeros((n_layers, c_max, 2), jnp.float32)
    for l, (w, _bias, gamma, beta) in enumerate(params):
        cout, cin = w.shape[0], w.shape[1]
        w_taps = jnp.transpose(w, (2, 3, 0, 1)).reshape(4, cout, cin)   # (t,cout,cin)
        w_packed = w_packed.at[l, :, :cout, :cin].set(w_taps.astype(jnp.bfloat16))
        p_packed = p_packed.at[l, :cout, 0].set(gamma.astype(jnp.float32))
        p_packed = p_packed.at[l, :cout, 1].set(beta.astype(jnp.float32))

    x_r = _reorder_pixels(x_nchw, n_layers)                 # (C0, M1) bf16

    layer_dims = []
    m = x_r.shape[1]
    for l in range(n_layers):
        layer_dims.append((cins[l], couts[l], m))
        m //= 4
    c_fin, m_fin = couts[-1], m

    flops = sum(8 * ci * co * (mi // 4) + 8 * co * (mi // 4)
                for ci, co, mi in layer_dims)
    bytes_accessed = (x_r.size * 2 + w_packed.size * 2 + p_packed.size * 4
                      + c_fin * m_fin * 4)

    # Explicit scoped-VMEM budget (v5e default is only 16 MiB). Inputs are
    # counted double-buffered; activations in f32 with headroom.
    act_bytes = sum(co * (mi // 4) * 4 * 3 for _ci, co, mi in layer_dims)
    vmem_need = 2 * bytes_accessed + act_bytes
    vmem_limit = int(min(32 * 2**20, max(8 * 2**20, 2 * vmem_need)))

    out = pl.pallas_call(
        _make_encoder_kernel(tuple(layer_dims)),
        out_shape=jax.ShapeDtypeStruct((c_fin, m_fin), jnp.float32),
        in_specs=[
            pl.BlockSpec(x_r.shape, lambda: (0, 0)),
            pl.BlockSpec(w_packed.shape, lambda: (0, 0, 0, 0)),
            pl.BlockSpec(p_packed.shape, lambda: (0, 0, 0)),
        ],
        out_specs=pl.BlockSpec((c_fin, m_fin), lambda: (0, 0)),
        compiler_params=pltpu.CompilerParams(vmem_limit_bytes=vmem_limit),
        cost_estimate=pl.CostEstimate(
            flops=int(flops), transcendentals=int(sum(couts)),
            bytes_accessed=int(bytes_accessed)),
    )(x_r, w_packed, p_packed)

    if not return_nchw:
        # Lane-dense (C_fin, M_fin), m = (n*Hf + hf)*Wf + wf; a decoder written
        # in the same tap-major convention can skip both HBM transposes.
        return out
    # (C_fin, M_fin) -> NCHW (module semantics)
    return out.reshape(c_fin, n, hf, wf).transpose(1, 0, 2, 3)


def reference_forward(x, params):
    # Pure-JAX reference: Conv2d(k=2,s=2,bias) -> BatchNorm2d(train mode) -> ReLU.
    h = x
    for (w, b, gamma, beta) in params:
        h = lax.conv_general_dilated(
            h, w, window_strides=(2, 2), padding="VALID",
            dimension_numbers=("NCHW", "OIHW", "NCHW"))
        h = h + b.reshape(1, -1, 1, 1)
        mean = jnp.mean(h, axis=(0, 2, 3), keepdims=True)
        var = jnp.mean(jnp.square(h - mean), axis=(0, 2, 3), keepdims=True)
        h = (h - mean) * lax.rsqrt(var + EPS)
        h = h * gamma.reshape(1, -1, 1, 1) + beta.reshape(1, -1, 1, 1)
        h = jnp.maximum(h, 0.0)
    return h


if __name__ == "__main__":
    key = jax.random.PRNGKey(0)
    key, kx = jax.random.split(key)
    num_channels = 4
    # Spatial must be divisible by 16 (four stride-2 halvings). Sized so that
    # N*Hf*Wf = 128 -> every layer's flattened pixel dim is a multiple of 128
    # lanes (unmasked, lane-dense slices and stores); input is still only ~0.4 MB.
    x = jax.random.normal(kx, (2, 3, 128, 128), jnp.float32)
    params = init_encoder_params(num_channels, key)

    out = jax.jit(encoder_forward)(x, params)
    out = jax.block_until_ready(out)
    assert out.shape == (2, num_channels * 8, 8, 8), out.shape
    assert bool(jnp.all(out >= 0.0))  # ReLU output

    ref = jax.block_until_ready(reference_forward(x, params))
    max_err = float(jnp.max(jnp.abs(out - ref)))
    # bf16 MXU operands (f32 accumulation / BN stats): tolerance loosened vs the
    # all-f32 variant per review guidance; BN renormalizes each layer so the
    # error stays at the bf16-rounding level.
    assert max_err < 1e-1, max_err

    print("KERNEL_OK")
</pallas_src>

<mosaic_0001>
module attributes {stable_mosaic.version = 11 : i64} {
  func.func @kernel(%arg0: memref<3x32768xbf16, #tpu.memory_space<vmem>>, %arg1: memref<4x4x32x128xbf16, #tpu.memory_space<vmem>>, %arg2: memref<4x32x2xf32, #tpu.memory_space<vmem>>, %arg3: memref<32x128xf32, #tpu.memory_space<vmem>>) attributes {dimension_semantics = [], scalar_prefetch = 0 : i64, scratch_operands = 0 : i64, tpu.core_type = #tpu.core_type<tc>} {
    %c0 = arith.constant 0 : index
    %c0_0 = arith.constant 0 : index
    %0 = vector.load %arg0[%c0, %c0_0] : memref<3x32768xbf16, #tpu.memory_space<vmem>>, vector<3x32768xbf16>
    %c0_1 = arith.constant 0 : index
    %c0_2 = arith.constant 0 : index
    %c0_3 = arith.constant 0 : index
    %c0_4 = arith.constant 0 : index
    %1 = vector.load %arg1[%c0_1, %c0_2, %c0_3, %c0_4] : memref<4x4x32x128xbf16, #tpu.memory_space<vmem>>, vector<1x4x32x128xbf16>
    %2 = vector.shape_cast %1 : vector<1x4x32x128xbf16> to vector<4x32x128xbf16>
    %3 = vector.extract_strided_slice %2 {offsets = [0, 0, 0], sizes = [1, 4, 3], strides = [1, 1, 1]} : vector<4x32x128xbf16> to vector<1x4x3xbf16>
    %4 = vector.shape_cast %3 : vector<1x4x3xbf16> to vector<4x3xbf16>
    %5 = vector.extract_strided_slice %0 {offsets = [0, 0], sizes = [3, 8192], strides = [1, 1]} : vector<3x32768xbf16> to vector<3x8192xbf16>
    %cst = arith.constant dense<0.000000e+00> : vector<4x8192xf32>
    %6 = tpu.matmul %4, %5, %cst {dimension_numbers = #tpu.dot_dimension_numbers<[1], [0], [0], [1], [0, 0, 1, 1], [], []>} : vector<4x3xbf16>, vector<3x8192xbf16>, vector<4x8192xf32> -> vector<4x8192xf32>
    %7 = vector.extract_strided_slice %2 {offsets = [1, 0, 0], sizes = [1, 4, 3], strides = [1, 1, 1]} : vector<4x32x128xbf16> to vector<1x4x3xbf16>
    %8 = vector.shape_cast %7 : vector<1x4x3xbf16> to vector<4x3xbf16>
    %9 = vector.extract_strided_slice %0 {offsets = [0, 8192], sizes = [3, 8192], strides = [1, 1]} : vector<3x32768xbf16> to vector<3x8192xbf16>
    %cst_5 = arith.constant dense<0.000000e+00> : vector<4x8192xf32>
    %10 = tpu.matmul %8, %9, %cst_5 {dimension_numbers = #tpu.dot_dimension_numbers<[1], [0], [0], [1], [0, 0, 1, 1], [], []>} : vector<4x3xbf16>, vector<3x8192xbf16>, vector<4x8192xf32> -> vector<4x8192xf32>
    %11 = arith.addf %6, %10 : vector<4x8192xf32>
    %12 = vector.extract_strided_slice %2 {offsets = [2, 0, 0], sizes = [1, 4, 3], strides = [1, 1, 1]} : vector<4x32x128xbf16> to vector<1x4x3xbf16>
    %13 = vector.shape_cast %12 : vector<1x4x3xbf16> to vector<4x3xbf16>
    %14 = vector.extract_strided_slice %0 {offsets = [0, 16384], sizes = [3, 8192], strides = [1, 1]} : vector<3x32768xbf16> to vector<3x8192xbf16>
    %cst_6 = arith.constant dense<0.000000e+00> : vector<4x8192xf32>
    %15 = tpu.matmul %13, %14, %cst_6 {dimension_numbers = #tpu.dot_dimension_numbers<[1], [0], [0], [1], [0, 0, 1, 1], [], []>} : vector<4x3xbf16>, vector<3x8192xbf16>, vector<4x8192xf32> -> vector<4x8192xf32>
    %16 = arith.addf %11, %15 : vector<4x8192xf32>
    %17 = vector.extract_strided_slice %2 {offsets = [3, 0, 0], sizes = [1, 4, 3], strides = [1, 1, 1]} : vector<4x32x128xbf16> to vector<1x4x3xbf16>
    %18 = vector.shape_cast %17 : vector<1x4x3xbf16> to vector<4x3xbf16>
    %19 = vector.extract_strided_slice %0 {offsets = [0, 24576], sizes = [3, 8192], strides = [1, 1]} : vector<3x32768xbf16> to vector<3x8192xbf16>
    %cst_7 = arith.constant dense<0.000000e+00> : vector<4x8192xf32>
    %20 = tpu.matmul %18, %19, %cst_7 {dimension_numbers = #tpu.dot_dimension_numbers<[1], [0], [0], [1], [0, 0, 1, 1], [], []>} : vector<4x3xbf16>, vector<3x8192xbf16>, vector<4x8192xf32> -> vector<4x8192xf32>
    %21 = arith.addf %16, %20 : vector<4x8192xf32>
    %cst_8 = arith.constant dense<0.000000e+00> : vector<4xf32>
    %22 = vector.multi_reduction <add>, %21, %cst_8 [1] : vector<4x8192xf32> to vector<4xf32>
    %23 = vector.shape_cast %22 : vector<4xf32> to vector<4x1xf32>
    %24 = arith.mulf %21, %21 : vector<4x8192xf32>
    %cst_9 = arith.constant dense<0.000000e+00> : vector<4xf32>
    %25 = vector.multi_reduction <add>, %24, %cst_9 [1] : vector<4x8192xf32> to vector<4xf32>
    %26 = vector.shape_cast %25 : vector<4xf32> to vector<4x1xf32>
    %cst_10 = arith.constant 1.22070313E-4 : f32
    %27 = vector.broadcast %cst_10 : f32 to vector<4x1xf32>
    %28 = arith.mulf %23, %27 : vector<4x1xf32>
    %cst_11 = arith.constant 1.22070313E-4 : f32
    %29 = vector.broadcast %cst_11 : f32 to vector<4x1xf32>
    %30 = arith.mulf %26, %29 : vector<4x1xf32>
    %31 = arith.mulf %28, %28 : vector<4x1xf32>
    %32 = arith.subf %30, %31 : vector<4x1xf32>
    %cst_12 = arith.constant 0.000000e+00 : f32
    %33 = vector.broadcast %cst_12 : f32 to vector<4x1xf32>
    %34 = arith.maximumf %32, %33 : vector<4x1xf32>
    %c0_13 = arith.constant 0 : index
    %c0_14 = arith.constant 0 : index
    %c0_15 = arith.constant 0 : index
    %35 = vector.load %arg2[%c0_13, %c0_14, %c0_15] : memref<4x32x2xf32, #tpu.memory_space<vmem>>, vector<1x32x2xf32>
    %36 = vector.shape_cast %35 : vector<1x32x2xf32> to vector<32x2xf32>
    %37 = vector.extract_strided_slice %36 {offsets = [0, 0], sizes = [4, 1], strides = [1, 1]} : vector<32x2xf32> to vector<4x1xf32>
    %38 = vector.extract_strided_slice %36 {offsets = [0, 1], sizes = [4, 1], strides = [1, 1]} : vector<32x2xf32> to vector<4x1xf32>
    %cst_16 = arith.constant 9.99999974E-6 : f32
    %39 = vector.broadcast %cst_16 : f32 to vector<4x1xf32>
    %40 = arith.addf %34, %39 : vector<4x1xf32>
    %41 = math.rsqrt %40 : vector<4x1xf32>
    %42 = arith.mulf %37, %41 : vector<4x1xf32>
    %43 = arith.mulf %28, %42 : vector<4x1xf32>
    %44 = arith.subf %38, %43 : vector<4x1xf32>
    %45 = vector.broadcast %42 : vector<4x1xf32> to vector<4x8192xf32>
    %46 = arith.mulf %21, %45 : vector<4x8192xf32>
    %47 = vector.broadcast %44 : vector<4x1xf32> to vector<4x8192xf32>
    %48 = arith.addf %46, %47 : vector<4x8192xf32>
    %cst_17 = arith.constant 0.000000e+00 : f32
    %49 = vector.broadcast %cst_17 : f32 to vector<4x8192xf32>
    %50 = arith.maximumf %48, %49 : vector<4x8192xf32>
    %51 = arith.truncf %50 : vector<4x8192xf32> to vector<4x8192xbf16>
    %c1 = arith.constant 1 : index
    %c0_18 = arith.constant 0 : index
    %c0_19 = arith.constant 0 : index
    %c0_20 = arith.constant 0 : index
    %52 = vector.load %arg1[%c1, %c0_18, %c0_19, %c0_20] : memref<4x4x32x128xbf16, #tpu.memory_space<vmem>>, vector<1x4x32x128xbf16>
    %53 = vector.shape_cast %52 : vector<1x4x32x128xbf16> to vector<4x32x128xbf16>
    %54 = vector.extract_strided_slice %53 {offsets = [0, 0, 0], sizes = [1, 8, 4], strides = [1, 1, 1]} : vector<4x32x128xbf16> to vector<1x8x4xbf16>
    %55 = vector.shape_cast %54 : vector<1x8x4xbf16> to vector<8x4xbf16>
    %56 = vector.extract_strided_slice %51 {offsets = [0, 0], sizes = [4, 2048], strides = [1, 1]} : vector<4x8192xbf16> to vector<4x2048xbf16>
    %cst_21 = arith.constant dense<0.000000e+00> : vector<8x2048xf32>
    %57 = tpu.matmul %55, %56, %cst_21 {dimension_numbers = #tpu.dot_dimension_numbers<[1], [0], [0], [1], [0, 0, 1, 1], [], []>} : vector<8x4xbf16>, vector<4x2048xbf16>, vector<8x2048xf32> -> vector<8x2048xf32>
    %58 = vector.extract_strided_slice %53 {offsets = [1, 0, 0], sizes = [1, 8, 4], strides = [1, 1, 1]} : vector<4x32x128xbf16> to vector<1x8x4xbf16>
    %59 = vector.shape_cast %58 : vector<1x8x4xbf16> to vector<8x4xbf16>
    %60 = vector.extract_strided_slice %51 {offsets = [0, 2048], sizes = [4, 2048], strides = [1, 1]} : vector<4x8192xbf16> to vector<4x2048xbf16>
    %cst_22 = arith.constant dense<0.000000e+00> : vector<8x2048xf32>
    %61 = tpu.matmul %59, %60, %cst_22 {dimension_numbers = #tpu.dot_dimension_numbers<[1], [0], [0], [1], [0, 0, 1, 1], [], []>} : vector<8x4xbf16>, vector<4x2048xbf16>, vector<8x2048xf32> -> vector<8x2048xf32>
    %62 = arith.addf %57, %61 : vector<8x2048xf32>
    %63 = vector.extract_strided_slice %53 {offsets = [2, 0, 0], sizes = [1, 8, 4], strides = [1, 1, 1]} : vector<4x32x128xbf16> to vector<1x8x4xbf16>
    %64 = vector.shape_cast %63 : vector<1x8x4xbf16> to vector<8x4xbf16>
    %65 = vector.extract_strided_slice %51 {offsets = [0, 4096], sizes = [4, 2048], strides = [1, 1]} : vector<4x8192xbf16> to vector<4x2048xbf16>
    %cst_23 = arith.constant dense<0.000000e+00> : vector<8x2048xf32>
    %66 = tpu.matmul %64, %65, %cst_23 {dimension_numbers = #tpu.dot_dimension_numbers<[1], [0], [0], [1], [0, 0, 1, 1], [], []>} : vector<8x4xbf16>, vector<4x2048xbf16>, vector<8x2048xf32> -> vector<8x2048xf32>
    %67 = arith.addf %62, %66 : vector<8x2048xf32>
    %68 = vector.extract_strided_slice %53 {offsets = [3, 0, 0], sizes = [1, 8, 4], strides = [1, 1, 1]} : vector<4x32x128xbf16> to vector<1x8x4xbf16>
    %69 = vector.shape_cast %68 : vector<1x8x4xbf16> to vector<8x4xbf16>
    %70 = vector.extract_strided_slice %51 {offsets = [0, 6144], sizes = [4, 2048], strides = [1, 1]} : vector<4x8192xbf16> to vector<4x2048xbf16>
    %cst_24 = arith.constant dense<0.000000e+00> : vector<8x2048xf32>
    %71 = tpu.matmul %69, %70, %cst_24 {dimension_numbers = #tpu.dot_dimension_numbers<[1], [0], [0], [1], [0, 0, 1, 1], [], []>} : vector<8x4xbf16>, vector<4x2048xbf16>, vector<8x2048xf32> -> vector<8x2048xf32>
    %72 = arith.addf %67, %71 : vector<8x2048xf32>
    %cst_25 = arith.constant dense<0.000000e+00> : vector<8xf32>
    %73 = vector.multi_reduction <add>, %72, %cst_25 [1] : vector<8x2048xf32> to vector<8xf32>
    %74 = vector.shape_cast %73 : vector<8xf32> to vector<8x1xf32>
    %75 = arith.mulf %72, %72 : vector<8x2048xf32>
    %cst_26 = arith.constant dense<0.000000e+00> : vector<8xf32>
    %76 = vector.multi_reduction <add>, %75, %cst_26 [1] : vector<8x2048xf32> to vector<8xf32>
    %77 = vector.shape_cast %76 : vector<8xf32> to vector<8x1xf32>
    %cst_27 = arith.constant 4.8828125E-4 : f32
    %78 = vector.broadcast %cst_27 : f32 to vector<8x1xf32>
    %79 = arith.mulf %74, %78 : vector<8x1xf32>
    %cst_28 = arith.constant 4.8828125E-4 : f32
    %80 = vector.broadcast %cst_28 : f32 to vector<8x1xf32>
    %81 = arith.mulf %77, %80 : vector<8x1xf32>
    %82 = arith.mulf %79, %79 : vector<8x1xf32>
    %83 = arith.subf %81, %82 : vector<8x1xf32>
    %cst_29 = arith.constant 0.000000e+00 : f32
    %84 = vector.broadcast %cst_29 : f32 to vector<8x1xf32>
    %85 = arith.maximumf %83, %84 : vector<8x1xf32>
    %c1_30 = arith.constant 1 : index
    %c0_31 = arith.constant 0 : index
    %c0_32 = arith.constant 0 : index
    %86 = vector.load %arg2[%c1_30, %c0_31, %c0_32] : memref<4x32x2xf32, #tpu.memory_space<vmem>>, vector<1x32x2xf32>
    %87 = vector.shape_cast %86 : vector<1x32x2xf32> to vector<32x2xf32>
    %88 = vector.extract_strided_slice %87 {offsets = [0, 0], sizes = [8, 1], strides = [1, 1]} : vector<32x2xf32> to vector<8x1xf32>
    %89 = vector.extract_strided_slice %87 {offsets = [0, 1], sizes = [8, 1], strides = [1, 1]} : vector<32x2xf32> to vector<8x1xf32>
    %cst_33 = arith.constant 9.99999974E-6 : f32
    %90 = vector.broadcast %cst_33 : f32 to vector<8x1xf32>
    %91 = arith.addf %85, %90 : vector<8x1xf32>
    %92 = math.rsqrt %91 : vector<8x1xf32>
    %93 = arith.mulf %88, %92 : vector<8x1xf32>
    %94 = arith.mulf %79, %93 : vector<8x1xf32>
    %95 = arith.subf %89, %94 : vector<8x1xf32>
    %96 = vector.broadcast %93 : vector<8x1xf32> to vector<8x2048xf32>
    %97 = arith.mulf %72, %96 : vector<8x2048xf32>
    %98 = vector.broadcast %95 : vector<8x1xf32> to vector<8x2048xf32>
    %99 = arith.addf %97, %98 : vector<8x2048xf32>
    %cst_34 = arith.constant 0.000000e+00 : f32
    %100 = vector.broadcast %cst_34 : f32 to vector<8x2048xf32>
    %101 = arith.maximumf %99, %100 : vector<8x2048xf32>
    %102 = arith.truncf %101 : vector<8x2048xf32> to vector<8x2048xbf16>
    %c2 = arith.constant 2 : index
    %c0_35 = arith.constant 0 : index
    %c0_36 = arith.constant 0 : index
    %c0_37 = arith.constant 0 : index
    %103 = vector.load %arg1[%c2, %c0_35, %c0_36, %c0_37] : memref<4x4x32x128xbf16, #tpu.memory_space<vmem>>, vector<1x4x32x128xbf16>
    %104 = vector.shape_cast %103 : vector<1x4x32x128xbf16> to vector<4x32x128xbf16>
    %105 = vector.extract_strided_slice %104 {offsets = [0, 0, 0], sizes = [1, 16, 8], strides = [1, 1, 1]} : vector<4x32x128xbf16> to vector<1x16x8xbf16>
    %106 = vector.shape_cast %105 : vector<1x16x8xbf16> to vector<16x8xbf16>
    %107 = vector.extract_strided_slice %102 {offsets = [0, 0], sizes = [8, 512], strides = [1, 1]} : vector<8x2048xbf16> to vector<8x512xbf16>
    %cst_38 = arith.constant dense<0.000000e+00> : vector<16x512xf32>
    %108 = tpu.matmul %106, %107, %cst_38 {dimension_numbers = #tpu.dot_dimension_numbers<[1], [0], [0], [1], [0, 0, 1, 1], [], []>} : vector<16x8xbf16>, vector<8x512xbf16>, vector<16x512xf32> -> vector<16x512xf32>
    %109 = vector.extract_strided_slice %104 {offsets = [1, 0, 0], sizes = [1, 16, 8], strides = [1, 1, 1]} : vector<4x32x128xbf16> to vector<1x16x8xbf16>
    %110 = vector.shape_cast %109 : vector<1x16x8xbf16> to vector<16x8xbf16>
    %111 = vector.extract_strided_slice %102 {offsets = [0, 512], sizes = [8, 512], strides = [1, 1]} : vector<8x2048xbf16> to vector<8x512xbf16>
    %cst_39 = arith.constant dense<0.000000e+00> : vector<16x512xf32>
    %112 = tpu.matmul %110, %111, %cst_39 {dimension_numbers = #tpu.dot_dimension_numbers<[1], [0], [0], [1], [0, 0, 1, 1], [], []>} : vector<16x8xbf16>, vector<8x512xbf16>, vector<16x512xf32> -> vector<16x512xf32>
    %113 = arith.addf %108, %112 : vector<16x512xf32>
    %114 = vector.extract_strided_slice %104 {offsets = [2, 0, 0], sizes = [1, 16, 8], strides = [1, 1, 1]} : vector<4x32x128xbf16> to vector<1x16x8xbf16>
    %115 = vector.shape_cast %114 : vector<1x16x8xbf16> to vector<16x8xbf16>
    %116 = vector.extract_strided_slice %102 {offsets = [0, 1024], sizes = [8, 512], strides = [1, 1]} : vector<8x2048xbf16> to vector<8x512xbf16>
    %cst_40 = arith.constant dense<0.000000e+00> : vector<16x512xf32>
    %117 = tpu.matmul %115, %116, %cst_40 {dimension_numbers = #tpu.dot_dimension_numbers<[1], [0], [0], [1], [0, 0, 1, 1], [], []>} : vector<16x8xbf16>, vector<8x512xbf16>, vector<16x512xf32> -> vector<16x512xf32>
    %118 = arith.addf %113, %117 : vector<16x512xf32>
    %119 = vector.extract_strided_slice %104 {offsets = [3, 0, 0], sizes = [1, 16, 8], strides = [1, 1, 1]} : vector<4x32x128xbf16> to vector<1x16x8xbf16>
    %120 = vector.shape_cast %119 : vector<1x16x8xbf16> to vector<16x8xbf16>
    %121 = vector.extract_strided_slice %102 {offsets = [0, 1536], sizes = [8, 512], strides = [1, 1]} : vector<8x2048xbf16> to vector<8x512xbf16>
    %cst_41 = arith.constant dense<0.000000e+00> : vector<16x512xf32>
    %122 = tpu.matmul %120, %121, %cst_41 {dimension_numbers = #tpu.dot_dimension_numbers<[1], [0], [0], [1], [0, 0, 1, 1], [], []>} : vector<16x8xbf16>, vector<8x512xbf16>, vector<16x512xf32> -> vector<16x512xf32>
    %123 = arith.addf %118, %122 : vector<16x512xf32>
    %cst_42 = arith.constant dense<0.000000e+00> : vector<16xf32>
    %124 = vector.multi_reduction <add>, %123, %cst_42 [1] : vector<16x512xf32> to vector<16xf32>
    %125 = vector.shape_cast %124 : vector<16xf32> to vector<16x1xf32>
    %126 = arith.mulf %123, %123 : vector<16x512xf32>
    %cst_43 = arith.constant dense<0.000000e+00> : vector<16xf32>
    %127 = vector.multi_reduction <add>, %126, %cst_43 [1] : vector<16x512xf32> to vector<16xf32>
    %128 = vector.shape_cast %127 : vector<16xf32> to vector<16x1xf32>
    %cst_44 = arith.constant 0.001953125 : f32
    %129 = vector.broadcast %cst_44 : f32 to vector<16x1xf32>
    %130 = arith.mulf %125, %129 : vector<16x1xf32>
    %cst_45 = arith.constant 0.001953125 : f32
    %131 = vector.broadcast %cst_45 : f32 to vector<16x1xf32>
    %132 = arith.mulf %128, %131 : vector<16x1xf32>
    %133 = arith.mulf %130, %130 : vector<16x1xf32>
    %134 = arith.subf %132, %133 : vector<16x1xf32>
    %cst_46 = arith.constant 0.000000e+00 : f32
    %135 = vector.broadcast %cst_46 : f32 to vector<16x1xf32>
    %136 = arith.maximumf %134, %135 : vector<16x1xf32>
    %c2_47 = arith.constant 2 : index
    %c0_48 = arith.constant 0 : index
    %c0_49 = arith.constant 0 : index
    %137 = vector.load %arg2[%c2_47, %c0_48, %c0_49] : memref<4x32x2xf32, #tpu.memory_space<vmem>>, vector<1x32x2xf32>
    %138 = vector.shape_cast %137 : vector<1x32x2xf32> to vector<32x2xf32>
    %139 = vector.extract_strided_slice %138 {offsets = [0, 0], sizes = [16, 1], strides = [1, 1]} : vector<32x2xf32> to vector<16x1xf32>
    %140 = vector.extract_strided_slice %138 {offsets = [0, 1], sizes = [16, 1], strides = [1, 1]} : vector<32x2xf32> to vector<16x1xf32>
    %cst_50 = arith.constant 9.99999974E-6 : f32
    %141 = vector.broadcast %cst_50 : f32 to vector<16x1xf32>
    %142 = arith.addf %136, %141 : vector<16x1xf32>
    %143 = math.rsqrt %142 : vector<16x1xf32>
    %144 = arith.mulf %139, %143 : vector<16x1xf32>
    %145 = arith.mulf %130, %144 : vector<16x1xf32>
    %146 = arith.subf %140, %145 : vector<16x1xf32>
    %147 = vector.broadcast %144 : vector<16x1xf32> to vector<16x512xf32>
    %148 = arith.mulf %123, %147 : vector<16x512xf32>
    %149 = vector.broadcast %146 : vector<16x1xf32> to vector<16x512xf32>
    %150 = arith.addf %148, %149 : vector<16x512xf32>
    %cst_51 = arith.constant 0.000000e+00 : f32
    %151 = vector.broadcast %cst_51 : f32 to vector<16x512xf32>
    %152 = arith.maximumf %150, %151 : vector<16x512xf32>
    %153 = arith.truncf %152 : vector<16x512xf32> to vector<16x512xbf16>
    %c3 = arith.constant 3 : index
    %c0_52 = arith.constant 0 : index
    %c0_53 = arith.constant 0 : index
    %c0_54 = arith.constant 0 : index
    %154 = vector.load %arg1[%c3, %c0_52, %c0_53, %c0_54] : memref<4x4x32x128xbf16, #tpu.memory_space<vmem>>, vector<1x4x32x128xbf16>
    %155 = vector.shape_cast %154 : vector<1x4x32x128xbf16> to vector<4x32x128xbf16>
    %156 = vector.extract_strided_slice %155 {offsets = [0, 0, 0], sizes = [1, 32, 16], strides = [1, 1, 1]} : vector<4x32x128xbf16> to vector<1x32x16xbf16>
    %157 = vector.shape_cast %156 : vector<1x32x16xbf16> to vector<32x16xbf16>
    %158 = vector.extract_strided_slice %153 {offsets = [0, 0], sizes = [16, 128], strides = [1, 1]} : vector<16x512xbf16> to vector<16x128xbf16>
    %cst_55 = arith.constant dense<0.000000e+00> : vector<32x128xf32>
    %159 = tpu.matmul %157, %158, %cst_55 {dimension_numbers = #tpu.dot_dimension_numbers<[1], [0], [0], [1], [0, 0, 1, 1], [], []>} : vector<32x16xbf16>, vector<16x128xbf16>, vector<32x128xf32> -> vector<32x128xf32>
    %160 = vector.extract_strided_slice %155 {offsets = [1, 0, 0], sizes = [1, 32, 16], strides = [1, 1, 1]} : vector<4x32x128xbf16> to vector<1x32x16xbf16>
    %161 = vector.shape_cast %160 : vector<1x32x16xbf16> to vector<32x16xbf16>
    %162 = vector.extract_strided_slice %153 {offsets = [0, 128], sizes = [16, 128], strides = [1, 1]} : vector<16x512xbf16> to vector<16x128xbf16>
    %cst_56 = arith.constant dense<0.000000e+00> : vector<32x128xf32>
    %163 = tpu.matmul %161, %162, %cst_56 {dimension_numbers = #tpu.dot_dimension_numbers<[1], [0], [0], [1], [0, 0, 1, 1], [], []>} : vector<32x16xbf16>, vector<16x128xbf16>, vector<32x128xf32> -> vector<32x128xf32>
    %164 = arith.addf %159, %163 : vector<32x128xf32>
    %165 = vector.extract_strided_slice %155 {offsets = [2, 0, 0], sizes = [1, 32, 16], strides = [1, 1, 1]} : vector<4x32x128xbf16> to vector<1x32x16xbf16>
    %166 = vector.shape_cast %165 : vector<1x32x16xbf16> to vector<32x16xbf16>
    %167 = vector.extract_strided_slice %153 {offsets = [0, 256], sizes = [16, 128], strides = [1, 1]} : vector<16x512xbf16> to vector<16x128xbf16>
    %cst_57 = arith.constant dense<0.000000e+00> : vector<32x128xf32>
    %168 = tpu.matmul %166, %167, %cst_57 {dimension_numbers = #tpu.dot_dimension_numbers<[1], [0], [0], [1], [0, 0, 1, 1], [], []>} : vector<32x16xbf16>, vector<16x128xbf16>, vector<32x128xf32> -> vector<32x128xf32>
    %169 = arith.addf %164, %168 : vector<32x128xf32>
    %170 = vector.extract_strided_slice %155 {offsets = [3, 0, 0], sizes = [1, 32, 16], strides = [1, 1, 1]} : vector<4x32x128xbf16> to vector<1x32x16xbf16>
    %171 = vector.shape_cast %170 : vector<1x32x16xbf16> to vector<32x16xbf16>
    %172 = vector.extract_strided_slice %153 {offsets = [0, 384], sizes = [16, 128], strides = [1, 1]} : vector<16x512xbf16> to vector<16x128xbf16>
    %cst_58 = arith.constant dense<0.000000e+00> : vector<32x128xf32>
    %173 = tpu.matmul %171, %172, %cst_58 {dimension_numbers = #tpu.dot_dimension_numbers<[1], [0], [0], [1], [0, 0, 1, 1], [], []>} : vector<32x16xbf16>, vector<16x128xbf16>, vector<32x128xf32> -> vector<32x128xf32>
    %174 = arith.addf %169, %173 : vector<32x128xf32>
    %cst_59 = arith.constant dense<0.000000e+00> : vector<32xf32>
    %175 = vector.multi_reduction <add>, %174, %cst_59 [1] : vector<32x128xf32> to vector<32xf32>
    %176 = vector.shape_cast %175 : vector<32xf32> to vector<32x1xf32>
    %177 = arith.mulf %174, %174 : vector<32x128xf32>
    %cst_60 = arith.constant dense<0.000000e+00> : vector<32xf32>
    %178 = vector.multi_reduction <add>, %177, %cst_60 [1] : vector<32x128xf32> to vector<32xf32>
    %179 = vector.shape_cast %178 : vector<32xf32> to vector<32x1xf32>
    %cst_61 = arith.constant 7.812500e-03 : f32
    %180 = vector.broadcast %cst_61 : f32 to vector<32x1xf32>
    %181 = arith.mulf %176, %180 : vector<32x1xf32>
    %cst_62 = arith.constant 7.812500e-03 : f32
    %182 = vector.broadcast %cst_62 : f32 to vector<32x1xf32>
    %183 = arith.mulf %179, %182 : vector<32x1xf32>
    %184 = arith.mulf %181, %181 : vector<32x1xf32>
    %185 = arith.subf %183, %184 : vector<32x1xf32>
    %cst_63 = arith.constant 0.000000e+00 : f32
    %186 = vector.broadcast %cst_63 : f32 to vector<32x1xf32>
    %187 = arith.maximumf %185, %186 : vector<32x1xf32>
    %c3_64 = arith.constant 3 : index
    %c0_65 = arith.constant 0 : index
    %c0_66 = arith.constant 0 : index
    %188 = vector.load %arg2[%c3_64, %c0_65, %c0_66] : memref<4x32x2xf32, #tpu.memory_space<vmem>>, vector<1x32x2xf32>
    %189 = vector.shape_cast %188 : vector<1x32x2xf32> to vector<32x2xf32>
    %190 = vector.extract_strided_slice %189 {offsets = [0, 0], sizes = [32, 1], strides = [1, 1]} : vector<32x2xf32> to vector<32x1xf32>
    %191 = vector.extract_strided_slice %189 {offsets = [0, 1], sizes = [32, 1], strides = [1, 1]} : vector<32x2xf32> to vector<32x1xf32>
    %cst_67 = arith.constant 9.99999974E-6 : f32
    %192 = vector.broadcast %cst_67 : f32 to vector<32x1xf32>
    %193 = arith.addf %187, %192 : vector<32x1xf32>
    %194 = math.rsqrt %193 : vector<32x1xf32>
    %195 = arith.mulf %190, %194 : vector<32x1xf32>
    %196 = arith.mulf %181, %195 : vector<32x1xf32>
    %197 = arith.subf %191, %196 : vector<32x1xf32>
    %198 = vector.broadcast %195 : vector<32x1xf32> to vector<32x128xf32>
    %199 = arith.mulf %174, %198 : vector<32x128xf32>
    %200 = vector.broadcast %197 : vector<32x1xf32> to vector<32x128xf32>
    %201 = arith.addf %199, %200 : vector<32x128xf32>
    %cst_68 = arith.constant 0.000000e+00 : f32
    %202 = vector.broadcast %cst_68 : f32 to vector<32x128xf32>
    %203 = arith.maximumf %201, %202 : vector<32x128xf32>
    %c0_69 = arith.constant 0 : index
    %c0_70 = arith.constant 0 : index
    %204 = vector.load %arg3[%c0_69, %c0_70] : memref<32x128xf32, #tpu.memory_space<vmem>>, vector<32x128xf32>
    tpu.vector_store %arg3[%c0_69, %c0_70], %203 {strides = array<i32>} : memref<32x128xf32, #tpu.memory_space<vmem>>, vector<32x128xf32>,
    return
  }
}

</mosaic_0001>

<llo_original>
// kernel: encoder_forward.1
$region0: #{encoder_forward.1}
  #allocation0 [shape = 'u32[]', space=smem, size = 0x4, offset = 0x4, fixed_abs, tag = 'smem constant byte address 0x4 - core index']
  #allocation1 [shape = 'u32[144,128]{1,0:T(1,128)}', space=vmem, size = 0x12000, scoped, tag = 'internal scratch']
  %s0 = inlined_call_operand.vmem [shape: bf16[3,32768], index: 0, kind: input, shape index: {}]
  %s1 = inlined_call_operand.vmem [shape: bf16[4,4,32,128], index: 1, kind: input, shape index: {}]
  %s2 = inlined_call_operand.vmem [shape: f32[4,32,2], index: 2, kind: input, shape index: {}]
  %s3 = inlined_call_operand.vmem [shape: f32[32,128], index: 3, kind: output, shape index: {}]
  %s4 = sld [smem:[#allocation0]]
  $region22: #{encoder_forward.1} parent=0
    _
  %s6 = ssub.s32 1, %s4
  %s7 = scalar_select 0, %s6, %s4
  // Predicated region
  $region2: #{encoder_forward.1} parent=0 // pred_check
    _
  $region3: #{encoder_forward.1} parent=0 // pred_check_branch
    %9 = sbr.rel (0) target = $region5
  $region4: #{encoder_forward.1} parent=0 // pred_region
    _
  $region5: #{encoder_forward.1} parent=0 // pred_fallthru
    _
  // Predicated region
  $region6: #{encoder_forward.1} parent=0 // pred_check
    _
  $region7: #{encoder_forward.1} parent=0 // pred_check_branch
    %11 = sbr.rel (0) target = $region9
  $region8: #{encoder_forward.1} parent=0 // pred_region
    _
  $region9: #{encoder_forward.1} parent=0 // pred_fallthru
    _
  // Predicated region
  $region10: #{encoder_forward.1} parent=0 // pred_check
    _
  $region11: #{encoder_forward.1} parent=0 // pred_check_branch
    %13 = sbr.rel (0) target = $region13
  $region12: #{encoder_forward.1} parent=0 // pred_region
    _
  $region13: #{encoder_forward.1} parent=0 // pred_fallthru
    _
  %v15 = vld [vmem:[%s0] sm:$0xff]
  %v16 = vld [vmem:[%s0 + $0x8] sm:$0xff]
  %v17 = vld [vmem:[%s0 + $0x10] sm:$0xff]
  %v18 = vld [vmem:[%s0 + $0x18] sm:$0xff]
  %v19 = vld [vmem:[%s0 + $0x20] sm:$0xff]
  %v20 = vld [vmem:[%s0 + $0x28] sm:$0xff]
  %v21 = vld [vmem:[%s0 + $0x30] sm:$0xff]
  %v22 = vld [vmem:[%s0 + $0x38] sm:$0xff]
  %v23 = vld [vmem:[%s0 + $0x40] sm:$0xff]
  %v24 = vld [vmem:[%s0 + $0x48] sm:$0xff]
  %v25 = vld [vmem:[%s0 + $0x50] sm:$0xff]
  %v26 = vld [vmem:[%s0 + $0x58] sm:$0xff]
  %v27 = vld [vmem:[%s0 + $0x60] sm:$0xff]
  %v28 = vld [vmem:[%s0 + $0x68] sm:$0xff]
  %v29 = vld [vmem:[%s0 + $0x70] sm:$0xff]
  %v30 = vld [vmem:[%s0 + $0x78] sm:$0xff]
  %v31 = vld [vmem:[%s0 + $0x80] sm:$0xff]
  %v32 = vld [vmem:[%s0 + $0x88] sm:$0xff]
  %v33 = vld [vmem:[%s0 + $0x90] sm:$0xff]
  %v34 = vld [vmem:[%s0 + $0x98] sm:$0xff]
  %v35 = vld [vmem:[%s0 + $0xa0] sm:$0xff]
  %v36 = vld [vmem:[%s0 + $0xa8] sm:$0xff]
  %v37 = vld [vmem:[%s0 + $0xb0] sm:$0xff]
  %v38 = vld [vmem:[%s0 + $0xb8] sm:$0xff]
  %v39 = vld [vmem:[%s0 + $0xc0] sm:$0xff]
  %v40 = vld [vmem:[%s0 + $0xc8] sm:$0xff]
  %v41 = vld [vmem:[%s0 + $0xd0] sm:$0xff]
  %v42 = vld [vmem:[%s0 + $0xd8] sm:$0xff]
  %v43 = vld [vmem:[%s0 + $0xe0] sm:$0xff]
  %v44 = vld [vmem:[%s0 + $0xe8] sm:$0xff]
  %v45 = vld [vmem:[%s0 + $0xf0] sm:$0xff]
  %v46 = vld [vmem:[%s0 + $0xf8] sm:$0xff]
  %v47 = vld [vmem:[%s0 + $0x100] sm:$0xff]
  %v48 = vld [vmem:[%s0 + $0x108] sm:$0xff]
  %v49 = vld [vmem:[%s0 + $0x110] sm:$0xff]
  %v50 = vld [vmem:[%s0 + $0x118] sm:$0xff]
  %v51 = vld [vmem:[%s0 + $0x120] sm:$0xff]
  %v52 = vld [vmem:[%s0 + $0x128] sm:$0xff]
  %v53 = vld [vmem:[%s0 + $0x130] sm:$0xff]
  %v54 = vld [vmem:[%s0 + $0x138] sm:$0xff]
  %v55 = vld [vmem:[%s0 + $0x140] sm:$0xff]
  %v56 = vld [vmem:[%s0 + $0x148] sm:$0xff]
  %v57 = vld [vmem:[%s0 + $0x150] sm:$0xff]
  %v58 = vld [vmem:[%s0 + $0x158] sm:$0xff]
  %v59 = vld [vmem:[%s0 + $0x160] sm:$0xff]
  %v60 = vld [vmem:[%s0 + $0x168] sm:$0xff]
  %v61 = vld [vmem:[%s0 + $0x170] sm:$0xff]
  %v62 = vld [vmem:[%s0 + $0x178] sm:$0xff]
  %v63 = vld [vmem:[%s0 + $0x180] sm:$0xff]
  %v64 = vld [vmem:[%s0 + $0x188] sm:$0xff]
  %v65 = vld [vmem:[%s0 + $0x190] sm:$0xff]
  %v66 = vld [vmem:[%s0 + $0x198] sm:$0xff]
  %v67 = vld [vmem:[%s0 + $0x1a0] sm:$0xff]
  %v68 = vld [vmem:[%s0 + $0x1a8] sm:$0xff]
  %v69 = vld [vmem:[%s0 + $0x1b0] sm:$0xff]
  %v70 = vld [vmem:[%s0 + $0x1b8] sm:$0xff]
  %v71 = vld [vmem:[%s0 + $0x1c0] sm:$0xff]
  %v72 = vld [vmem:[%s0 + $0x1c8] sm:$0xff]
  %v73 = vld [vmem:[%s0 + $0x1d0] sm:$0xff]
  %v74 = vld [vmem:[%s0 + $0x1d8] sm:$0xff]
  %v75 = vld [vmem:[%s0 + $0x1e0] sm:$0xff]
  %v76 = vld [vmem:[%s0 + $0x1e8] sm:$0xff]
  %v77 = vld [vmem:[%s0 + $0x1f0] sm:$0xff]
  %v78 = vld [vmem:[%s0 + $0x1f8] sm:$0xff]
  %v79 = vld [vmem:[%s1] sm:$0xf]
  %v80 = vld [vmem:[%s1 + $0x10] sm:$0xf]
  %v81 = vld [vmem:[%s1 + $0x20] sm:$0xf]
  %v82 = vld [vmem:[%s1 + $0x30] sm:$0xf]
  %v99 = vcombine.high %v31, %v31
  %v101 = vunpack.c.l.s4 1983009808
  %v102 = vunpack.c.0.s8 %v101
  %v103 = vlaneseq
  %v104 = vshrl.u32 %v103, 7
  %v105 = vsub.s32 %v102, %v104
  %v106 = vrot.slane %v31, %v105
  %v108 = vunpack.c.l.s4 1983009808
  %v109 = vunpack.c.0.s8 %v108
  %v110 = vlaneseq
  %v111 = vshrl.u32 %v110, 7
  %v112 = vsub.s32 %v109, %v111
  %v113 = vrot.slane %v99, %v112
  %v114 = vcombine.high %v106, %v106
  %v115 = vcombine.high %v113, %v113
  %v116 = vcombine.high %v32, %v32
  %v118 = vunpack.c.l.s4 1983009808
  %v119 = vunpack.c.0.s8 %v118
  %v120 = vlaneseq
  %v121 = vshrl.u32 %v120, 7
  %v122 = vsub.s32 %v119, %v121
  %v123 = vrot.slane %v32, %v122
  %v125 = vunpack.c.l.s4 1983009808
  %v126 = vunpack.c.0.s8 %v125
  %v127 = vlaneseq
  %v128 = vshrl.u32 %v127, 7
  %v129 = vsub.s32 %v126, %v128
  %v130 = vrot.slane %v116, %v129
  %v131 = vcombine.high %v123, %v123
  %v132 = vcombine.high %v130, %v130
  %v133 = vcombine.high %v33, %v33
  %v135 = vunpack.c.l.s4 1983009808
  %v136 = vunpack.c.0.s8 %v135
  %v137 = vlaneseq
  %v138 = vshrl.u32 %v137, 7
  %v139 = vsub.s32 %v136, %v138
  %v140 = vrot.slane %v33, %v139
  %v142 = vunpack.c.l.s4 1983009808
  %v143 = vunpack.c.0.s8 %v142
  %v144 = vlaneseq
  %v145 = vshrl.u32 %v144, 7
  %v146 = vsub.s32 %v143, %v145
  %v147 = vrot.slane %v133, %v146
  %v148 = vcombine.high %v140, %v140
  %v149 = vcombine.high %v147, %v147
  %v150 = vcombine.high %v34, %v34
  %v152 = vunpack.c.l.s4 1983009808
  %v153 = vunpack.c.0.s8 %v152
  %v154 = vlaneseq
  %v155 = vshrl.u32 %v154, 7
  %v156 = vsub.s32 %v153, %v155
  %v157 = vrot.slane %v34, %v156
  %v159 = vunpack.c.l.s4 1983009808
  %v160 = vunpack.c.0.s8 %v159
  %v161 = vlaneseq
  %v162 = vshrl.u32 %v161, 7
  %v163 = vsub.s32 %v160, %v162
  %v164 = vrot.slane %v150, %v163
  %v165 = vcombine.high %v157, %v157
  %v166 = vcombine.high %v164, %v164
  %v167 = vcombine.high %v35, %v35
  %v169 = vunpack.c.l.s4 1983009808
  %v170 = vunpack.c.0.s8 %v169
  %v171 = vlaneseq
  %v172 = vshrl.u32 %v171, 7
  %v173 = vsub.s32 %v170, %v172
  %v174 = vrot.slane %v35, %v173
  %v176 = vunpack.c.l.s4 1983009808
  %v177 = vunpack.c.0.s8 %v176
  %v178 = vlaneseq
  %v179 = vshrl.u32 %v178, 7
  %v180 = vsub.s32 %v177, %v179
  %v181 = vrot.slane %v167, %v180
  %v182 = vcombine.high %v174, %v174
  %v183 = vcombine.high %v181, %v181
  %v184 = vcombine.high %v36, %v36
  %v186 = vunpack.c.l.s4 1983009808
  %v187 = vunpack.c.0.s8 %v186
  %v188 = vlaneseq
  %v189 = vshrl.u32 %v188, 7
  %v190 = vsub.s32 %v187, %v189
  %v191 = vrot.slane %v36, %v190
  %v193 = vunpack.c.l.s4 1983009808
  %v194 = vunpack.c.0.s8 %v193
  %v195 = vlaneseq
  %v196 = vshrl.u32 %v195, 7
  %v197 = vsub.s32 %v194, %v196
  %v198 = vrot.slane %v184, %v197
  %v199 = vcombine.high %v191, %v191
  %v200 = vcombine.high %v198, %v198
  %v201 = vcombine.high %v37, %v37
  %v203 = vunpack.c.l.s4 1983009808
  %v204 = vunpack.c.0.s8 %v203
  %v205 = vlaneseq
  %v206 = vshrl.u32 %v205, 7
  %v207 = vsub.s32 %v204, %v206
  %v208 = vrot.slane %v37, %v207
  %v210 = vunpack.c.l.s4 1983009808
  %v211 = vunpack.c.0.s8 %v210
  %v212 = vlaneseq
  %v213 = vshrl.u32 %v212, 7
  %v214 = vsub.s32 %v211, %v213
  %v215 = vrot.slane %v201, %v214
  %v216 = vcombine.high %v208, %v208
  %v217 = vcombine.high %v215, %v215
  %v218 = vcombine.high %v38, %v38
  %v220 = vunpack.c.l.s4 1983009808
  %v221 = vunpack.c.0.s8 %v220
  %v222 = vlaneseq
  %v223 = vshrl.u32 %v222, 7
  %v224 = vsub.s32 %v221, %v223
  %v225 = vrot.slane %v38, %v224
  %v227 = vunpack.c.l.s4 1983009808
  %v228 = vunpack.c.0.s8 %v227
  %v229 = vlaneseq
  %v230 = vshrl.u32 %v229, 7
  %v231 = vsub.s32 %v228, %v230
  %v232 = vrot.slane %v218, %v231
  %v233 = vcombine.high %v225, %v225
  %v234 = vcombine.high %v232, %v232
  %v235 = vcombine.high %v39, %v39
  %v237 = vunpack.c.l.s4 1983009808
  %v238 = vunpack.c.0.s8 %v237
  %v239 = vlaneseq
  %v240 = vshrl.u32 %v239, 7
  %v241 = vsub.s32 %v238, %v240
  %v242 = vrot.slane %v39, %v241
  %v244 = vunpack.c.l.s4 1983009808
  %v245 = vunpack.c.0.s8 %v244
  %v246 = vlaneseq
  %v247 = vshrl.u32 %v246, 7
  %v248 = vsub.s32 %v245, %v247
  %v249 = vrot.slane %v235, %v248
  %v250 = vcombine.high %v242, %v242
  %v251 = vcombine.high %v249, %v249
  %v252 = vcombine.high %v40, %v40
  %v254 = vunpack.c.l.s4 1983009808
  %v255 = vunpack.c.0.s8 %v254
  %v256 = vlaneseq
  %v257 = vshrl.u32 %v256, 7
  %v258 = vsub.s32 %v255, %v257
  %v259 = vrot.slane %v40, %v258
  %v261 = vunpack.c.l.s4 1983009808
  %v262 = vunpack.c.0.s8 %v261
  %v263 = vlaneseq
  %v264 = vshrl.u32 %v263, 7
  %v265 = vsub.s32 %v262, %v264
  %v266 = vrot.slane %v252, %v265
  %v267 = vcombine.high %v259, %v259
  %v268 = vcombine.high %v266, %v266
  %v269 = vcombine.high %v41, %v41
  %v271 = vunpack.c.l.s4 1983009808
  %v272 = vunpack.c.0.s8 %v271
  %v273 = vlaneseq
  %v274 = vshrl.u32 %v273, 7
  %v275 = vsub.s32 %v272, %v274
  %v276 = vrot.slane %v41, %v275
  %v278 = vunpack.c.l.s4 1983009808
  %v279 = vunpack.c.0.s8 %v278
  %v280 = vlaneseq
  %v281 = vshrl.u32 %v280, 7
  %v282 = vsub.s32 %v279, %v281
  %v283 = vrot.slane %v269, %v282
  %v284 = vcombine.high %v276, %v276
  %v285 = vcombine.high %v283, %v283
  %v286 = vcombine.high %v42, %v42
  %v288 = vunpack.c.l.s4 1983009808
  %v289 = vunpack.c.0.s8 %v288
  %v290 = vlaneseq
  %v291 = vshrl.u32 %v290, 7
  %v292 = vsub.s32 %v289, %v291
  %v293 = vrot.slane %v42, %v292
  %v295 = vunpack.c.l.s4 1983009808
  %v296 = vunpack.c.0.s8 %v295
  %v297 = vlaneseq
  %v298 = vshrl.u32 %v297, 7
  %v299 = vsub.s32 %v296, %v298
  %v300 = vrot.slane %v286, %v299
  %v301 = vcombine.high %v293, %v293
  %v302 = vcombine.high %v300, %v300
  %v303 = vcombine.high %v43, %v43
  %v305 = vunpack.c.l.s4 1983009808
  %v306 = vunpack.c.0.s8 %v305
  %v307 = vlaneseq
  %v308 = vshrl.u32 %v307, 7
  %v309 = vsub.s32 %v306, %v308
  %v310 = vrot.slane %v43, %v309
  %v312 = vunpack.c.l.s4 1983009808
  %v313 = vunpack.c.0.s8 %v312
  %v314 = vlaneseq
  %v315 = vshrl.u32 %v314, 7
  %v316 = vsub.s32 %v313, %v315
  %v317 = vrot.slane %v303, %v316
  %v318 = vcombine.high %v310, %v310
  %v319 = vcombine.high %v317, %v317
  %v320 = vcombine.high %v44, %v44
  %v322 = vunpack.c.l.s4 1983009808
  %v323 = vunpack.c.0.s8 %v322
  %v324 = vlaneseq
  %v325 = vshrl.u32 %v324, 7
  %v326 = vsub.s32 %v323, %v325
  %v327 = vrot.slane %v44, %v326
  %v329 = vunpack.c.l.s4 1983009808
  %v330 = vunpack.c.0.s8 %v329
  %v331 = vlaneseq
  %v332 = vshrl.u32 %v331, 7
  %v333 = vsub.s32 %v330, %v332
  %v334 = vrot.slane %v320, %v333
  %v335 = vcombine.high %v327, %v327
  %v336 = vcombine.high %v334, %v334
  %v337 = vcombine.high %v45, %v45
  %v339 = vunpack.c.l.s4 1983009808
  %v340 = vunpack.c.0.s8 %v339
  %v341 = vlaneseq
  %v342 = vshrl.u32 %v341, 7
  %v343 = vsub.s32 %v340, %v342
  %v344 = vrot.slane %v45, %v343
  %v346 = vunpack.c.l.s4 1983009808
  %v347 = vunpack.c.0.s8 %v346
  %v348 = vlaneseq
  %v349 = vshrl.u32 %v348, 7
  %v350 = vsub.s32 %v347, %v349
  %v351 = vrot.slane %v337, %v350
  %v352 = vcombine.high %v344, %v344
  %v353 = vcombine.high %v351, %v351
  %v354 = vcombine.high %v46, %v46
  %v356 = vunpack.c.l.s4 1983009808
  %v357 = vunpack.c.0.s8 %v356
  %v358 = vlaneseq
  %v359 = vshrl.u32 %v358, 7
  %v360 = vsub.s32 %v357, %v359
  %v361 = vrot.slane %v46, %v360
  %v363 = vunpack.c.l.s4 1983009808
  %v364 = vunpack.c.0.s8 %v363
  %v365 = vlaneseq
  %v366 = vshrl.u32 %v365, 7
  %v367 = vsub.s32 %v364, %v366
  %v368 = vrot.slane %v354, %v367
  %v369 = vcombine.high %v361, %v361
  %v370 = vcombine.high %v368, %v368
  %vm371 = vcmask 23552
  %v373 = vsel %vm371, %v80, 0
  %vm375 = vcmask 1040384
  %vm376 = vcmask 1041408
  %v377 = vsel %vm375, 4294967295, 65535
  %v378 = vsel %vm376, %v377, 0
  %v380 = vand.u32 %v106, %v378
  %v383 = vand.u32 %v114, %v378
  %v386 = vand.u32 %v113, %v378
  %v389 = vand.u32 %v115, %v378
  %v392 = vand.u32 %v123, %v378
  %v395 = vand.u32 %v131, %v378
  %v398 = vand.u32 %v130, %v378
  %v401 = vand.u32 %v132, %v378
  %v404 = vand.u32 %v140, %v378
  %v407 = vand.u32 %v148, %v378
  %v410 = vand.u32 %v147, %v378
  %v413 = vand.u32 %v149, %v378
  %v416 = vand.u32 %v157, %v378
  %v419 = vand.u32 %v165, %v378
  %v422 = vand.u32 %v164, %v378
  %v425 = vand.u32 %v166, %v378
  %v428 = vand.u32 %v174, %v378
  %v431 = vand.u32 %v182, %v378
  %v434 = vand.u32 %v181, %v378
  %v437 = vand.u32 %v183, %v378
  %v440 = vand.u32 %v191, %v378
  %v443 = vand.u32 %v199, %v378
  %v446 = vand.u32 %v198, %v378
  %v449 = vand.u32 %v200, %v378
  %v452 = vand.u32 %v208, %v378
  %v455 = vand.u32 %v216, %v378
  %v458 = vand.u32 %v215, %v378
  %v461 = vand.u32 %v217, %v378
  %v464 = vand.u32 %v225, %v378
  %v467 = vand.u32 %v233, %v378
  %v470 = vand.u32 %v232, %v378
  %v473 = vand.u32 %v234, %v378
  %v476 = vand.u32 %v242, %v378
  %v479 = vand.u32 %v250, %v378
  %v482 = vand.u32 %v249, %v378
  %v485 = vand.u32 %v251, %v378
  %v488 = vand.u32 %v259, %v378
  %v491 = vand.u32 %v267, %v378
  %v494 = vand.u32 %v266, %v378
  %v497 = vand.u32 %v268, %v378
  %v500 = vand.u32 %v276, %v378
  %v503 = vand.u32 %v284, %v378
  %v506 = vand.u32 %v283, %v378
  %v509 = vand.u32 %v285, %v378
  %v512 = vand.u32 %v293, %v378
  %v515 = vand.u32 %v301, %v378
  %v518 = vand.u32 %v300, %v378
  %v521 = vand.u32 %v302, %v378
  %v524 = vand.u32 %v310, %v378
  %v527 = vand.u32 %v318, %v378
  %v530 = vand.u32 %v317, %v378
  %v533 = vand.u32 %v319, %v378
  %v536 = vand.u32 %v327, %v378
  %v539 = vand.u32 %v335, %v378
  %v542 = vand.u32 %v334, %v378
  %v545 = vand.u32 %v336, %v378
  %v548 = vand.u32 %v344, %v378
  %v551 = vand.u32 %v352, %v378
  %v554 = vand.u32 %v351, %v378
  %v557 = vand.u32 %v353, %v378
  %v560 = vand.u32 %v361, %v378
  %v563 = vand.u32 %v369, %v378
  %v566 = vand.u32 %v368, %v378
  %v569 = vand.u32 %v370, %v378
  %571 = vmatprep.subr.bf16.mxu0 %v383
  %572 = vmatpush1.bf16.msra.mxu0 %v380
  %573 = vmatprep.subr.bf16.mxu0 0
  %574 = vmatpush1.bf16.msra.mxu0 0
  %575 = vmatprep.subr.bf16.mxu0 0
  %576 = vmatpush1.bf16.msra.mxu0 0
  %577 = vmatprep.subr.bf16.mxu0 0
  %578 = vmatpush1.bf16.msra.mxu0 0
  %579 = vmatprep.subr.bf16.mxu0 0
  %580 = vmatpush1.bf16.msra.mxu0 0
  %581 = vmatprep.subr.bf16.mxu0 0
  %582 = vmatpush1.bf16.msra.mxu0 0
  %583 = vmatprep.subr.bf16.mxu0 0
  %584 = vmatpush1.bf16.msra.mxu0 0
  %585 = vmatprep.subr.bf16.mxu0 0
  %586 = vmatpush1.bf16.msra.mxu0 0
  %587 = vmatprep.subr.bf16.mxu0 0
  %588 = vmatpush1.bf16.msra.mxu0 0
  %589 = vmatprep.subr.bf16.mxu0 0
  %590 = vmatpush1.bf16.msra.mxu0 0
  %591 = vmatprep.subr.bf16.mxu0 0
  %592 = vmatpush1.bf16.msra.mxu0 0
  %593 = vmatprep.subr.bf16.mxu0 0
  %594 = vmatpush1.bf16.msra.mxu0 0
  %595 = vmatprep.subr.bf16.mxu0 0
  %596 = vmatpush1.bf16.msra.mxu0 0
  %597 = vmatprep.subr.bf16.mxu0 0
  %598 = vmatpush1.bf16.msra.mxu0 0
  %599 = vmatprep.subr.bf16.mxu0 0
  %600 = vmatpush1.bf16.msra.mxu0 0
  %601 = vmatprep.subr.bf16.mxu0 0
  %602 = vmatpush1.bf16.msra.mxu0 0
  %603 = vmatprep.mubr.bf16.mxu0 0
  %604 = vmatmul.mubr.bf16.gmra.mrb[0].mxu0 %v373
  %v605 = vpop.f32.mrb[0].mxu0
  %v606 = vadd.f32 0.0, %v605
  %v607 = vpop.f32.mrb[0].mxu0
  %v608 = vadd.f32 0.0, %v607
  %v609 = vpop.f32.mrb[0].mxu0
  %v610 = vpop.f32.mrb[0].mxu0
  %611 = vdwg.mxu0
  %612 = vmatprep.subr.bf16.mxu0 %v389
  %613 = vmatpush1.bf16.msra.mxu0 %v386
  %614 = vmatprep.subr.bf16.mxu0 0
  %615 = vmatpush1.bf16.msra.mxu0 0
  %616 = vmatprep.subr.bf16.mxu0 0
  %617 = vmatpush1.bf16.msra.mxu0 0
  %618 = vmatprep.subr.bf16.mxu0 0
  %619 = vmatpush1.bf16.msra.mxu0 0
  %620 = vmatprep.subr.bf16.mxu0 0
  %621 = vmatpush1.bf16.msra.mxu0 0
  %622 = vmatprep.subr.bf16.mxu0 0
  %623 = vmatpush1.bf16.msra.mxu0 0
  %624 = vmatprep.subr.bf16.mxu0 0
  %625 = vmatpush1.bf16.msra.mxu0 0
  %626 = vmatprep.subr.bf16.mxu0 0
  %627 = vmatpush1.bf16.msra.mxu0 0
  %628 = vmatprep.subr.bf16.mxu0 0
  %629 = vmatpush1.bf16.msra.mxu0 0
  %630 = vmatprep.subr.bf16.mxu0 0
  %631 = vmatpush1.bf16.msra.mxu0 0
  %632 = vmatprep.subr.bf16.mxu0 0
  %633 = vmatpush1.bf16.msra.mxu0 0
  %634 = vmatprep.subr.bf16.mxu0 0
  %635 = vmatpush1.bf16.msra.mxu0 0
  %636 = vmatprep.subr.bf16.mxu0 0
  %637 = vmatpush1.bf16.msra.mxu0 0
  %638 = vmatprep.subr.bf16.mxu0 0
  %639 = vmatpush1.bf16.msra.mxu0 0
  %640 = vmatprep.subr.bf16.mxu0 0
  %641 = vmatpush1.bf16.msra.mxu0 0
  %642 = vmatprep.subr.bf16.mxu0 0
  %643 = vmatpush1.bf16.msra.mxu0 0
  %644 = vmatprep.mubr.bf16.mxu0 0
  %645 = vmatmul.mubr.bf16.gmra.mrb[0].mxu0 %v373
  %v646 = vpop.f32.mrb[0].mxu0
  %v647 = vadd.f32 0.0, %v646
  %v648 = vpop.f32.mrb[0].mxu0
  %v649 = vadd.f32 0.0, %v648
  %v650 = vpop.f32.mrb[0].mxu0
  %v651 = vpop.f32.mrb[0].mxu0
  %652 = vdwg.mxu0
  %653 = vmatprep.subr.bf16.mxu0 %v395
  %654 = vmatpush1.bf16.msra.mxu0 %v392
  %655 = vmatprep.subr.bf16.mxu0 0
  %656 = vmatpush1.bf16.msra.mxu0 0
  %657 = vmatprep.subr.bf16.mxu0 0
  %658 = vmatpush1.bf16.msra.mxu0 0
  %659 = vmatprep.subr.bf16.mxu0 0
  %660 = vmatpush1.bf16.msra.mxu0 0
  %661 = vmatprep.subr.bf16.mxu0 0
  %662 = vmatpush1.bf16.msra.mxu0 0
  %663 = vmatprep.subr.bf16.mxu0 0
  %664 = vmatpush1.bf16.msra.mxu0 0
  %665 = vmatprep.subr.bf16.mxu0 0
  %666 = vmatpush1.bf16.msra.mxu0 0
  %667 = vmatprep.subr.bf16.mxu0 0
  %668 = vmatpush1.bf16.msra.mxu0 0
  %669 = vmatprep.subr.bf16.mxu0 0
  %670 = vmatpush1.bf16.msra.mxu0 0
  %671 = vmatprep.subr.bf16.mxu0 0
  %672 = vmatpush1.bf16.msra.mxu0 0
  %673 = vmatprep.subr.bf16.mxu0 0
  %674 = vmatpush1.bf16.msra.mxu0 0
  %675 = vmatprep.subr.bf16.mxu0 0
  %676 = vmatpush1.bf16.msra.mxu0 0
  %677 = vmatprep.subr.bf16.mxu0 0
  %678 = vmatpush1.bf16.msra.mxu0 0
  %679 = vmatprep.subr.bf16.mxu0 0
  %680 = vmatpush1.bf16.msra.mxu0 0
  %681 = vmatprep.subr.bf16.mxu0 0
  %682 = vmatpush1.bf16.msra.mxu0 0
  %683 = vmatprep.subr.bf16.mxu0 0
  %684 = vmatpush1.bf16.msra.mxu0 0
  %685 = vmatprep.mubr.bf16.mxu0 0
  %686 = vmatmul.mubr.bf16.gmra.mrb[0].mxu0 %v373
  %v687 = vpop.f32.mrb[0].mxu0
  %v688 = vadd.f32 0.0, %v687
  %v689 = vpop.f32.mrb[0].mxu0
  %v690 = vadd.f32 0.0, %v689
  %v691 = vpop.f32.mrb[0].mxu0
  %v692 = vpop.f32.mrb[0].mxu0
  %693 = vdwg.mxu0
  %694 = vmatprep.subr.bf16.mxu0 %v401
  %695 = vmatpush1.bf16.msra.mxu0 %v398
  %696 = vmatprep.subr.bf16.mxu0 0
  %697 = vmatpush1.bf16.msra.mxu0 0
  %698 = vmatprep.subr.bf16.mxu0 0
  %699 = vmatpush1.bf16.msra.mxu0 0
  %700 = vmatprep.subr.bf16.mxu0 0
  %701 = vmatpush1.bf16.msra.mxu0 0
  %702 = vmatprep.subr.bf16.mxu0 0
  %703 = vmatpush1.bf16.msra.mxu0 0
  %704 = vmatprep.subr.bf16.mxu0 0
  %705 = vmatpush1.bf16.msra.mxu0 0
  %706 = vmatprep.subr.bf16.mxu0 0
  %707 = vmatpush1.bf16.msra.mxu0 0
  %708 = vmatprep.subr.bf16.mxu0 0
  %709 = vmatpush1.bf16.msra.mxu0 0
  %710 = vmatprep.subr.bf16.mxu0 0
  %711 = vmatpush1.bf16.msra.mxu0 0
  %712 = vmatprep.subr.bf16.mxu0 0
  %713 = vmatpush1.bf16.msra.mxu0 0
  %714 = vmatprep.subr.bf16.mxu0 0
  %715 = vmatpush1.bf16.msra.mxu0 0
  %716 = vmatprep.subr.bf16.mxu0 0
  %717 = vmatpush1.bf16.msra.mxu0 0
  %718 = vmatprep.subr.bf16.mxu0 0
  %719 = vmatpush1.bf16.msra.mxu0 0
  %720 = vmatprep.subr.bf16.mxu0 0
  %721 = vmatpush1.bf16.msra.mxu0 0
  %722 = vmatprep.subr.bf16.mxu0 0
  %723 = vmatpush1.bf16.msra.mxu0 0
  %724 = vmatprep.subr.bf16.mxu0 0
  %725 = vmatpush1.bf16.msra.mxu0 0
  %726 = vmatprep.mubr.bf16.mxu0 0
  %727 = vmatmul.mubr.bf16.gmra.mrb[0].mxu0 %v373
  %v728 = vpop.f32.mrb[0].mxu0
  %v729 = vadd.f32 0.0, %v728
  %v730 = vpop.f32.mrb[0].mxu0
  %v731 = vadd.f32 0.0, %v730
  %v732 = vpop.f32.mrb[0].mxu0
  %v733 = vpop.f32.mrb[0].mxu0
  %734 = vdwg.mxu0
  %735 = vmatprep.subr.bf16.mxu0 %v407
  %736 = vmatpush1.bf16.msra.mxu0 %v404
  %737 = vmatprep.subr.bf16.mxu0 0
  %738 = vmatpush1.bf16.msra.mxu0 0
  %739 = vmatprep.subr.bf16.mxu0 0
  %740 = vmatpush1.bf16.msra.mxu0 0
  %741 = vmatprep.subr.bf16.mxu0 0
  %742 = vmatpush1.bf16.msra.mxu0 0
  %743 = vmatprep.subr.bf16.mxu0 0
  %744 = vmatpush1.bf16.msra.mxu0 0
  %745 = vmatprep.subr.bf16.mxu0 0
  %746 = vmatpush1.bf16.msra.mxu0 0
  %747 = vmatprep.subr.bf16.mxu0 0
  %748 = vmatpush1.bf16.msra.mxu0 0
  %749 = vmatprep.subr.bf16.mxu0 0
  %750 = vmatpush1.bf16.msra.mxu0 0
  %751 = vmatprep.subr.bf16.mxu0 0
  %752 = vmatpush1.bf16.msra.mxu0 0
  %753 = vmatprep.subr.bf16.mxu0 0
  %754 = vmatpush1.bf16.msra.mxu0 0
  %755 = vmatprep.subr.bf16.mxu0 0
  %756 = vmatpush1.bf16.msra.mxu0 0
  %757 = vmatprep.subr.bf16.mxu0 0
  %758 = vmatpush1.bf16.msra.mxu0 0
  %759 = vmatprep.subr.bf16.mxu0 0
  %760 = vmatpush1.bf16.msra.mxu0 0
  %761 = vmatprep.subr.bf16.mxu0 0
  %762 = vmatpush1.bf16.msra.mxu0 0
  %763 = vmatprep.subr.bf16.mxu0 0
  %764 = vmatpush1.bf16.msra.mxu0 0
  %765 = vmatprep.subr.bf16.mxu0 0
  %766 = vmatpush1.bf16.msra.mxu0 0
  %767 = vmatprep.mubr.bf16.mxu0 0
  %768 = vmatmul.mubr.bf16.gmra.mrb[0].mxu0 %v373
  %v769 = vpop.f32.mrb[0].mxu0
  %v770 = vadd.f32 0.0, %v769
  %v771 = vpop.f32.mrb[0].mxu0
  %v772 = vadd.f32 0.0, %v771
  %v773 = vpop.f32.mrb[0].mxu0
  %v774 = vpop.f32.mrb[0].mxu0
  %775 = vdwg.mxu0
  %776 = vmatprep.subr.bf16.mxu0 %v413
  %777 = vmatpush1.bf16.msra.mxu0 %v410
  %778 = vmatprep.subr.bf16.mxu0 0
  %779 = vmatpush1.bf16.msra.mxu0 0
  %780 = vmatprep.subr.bf16.mxu0 0
  %781 = vmatpush1.bf16.msra.mxu0 0
  %782 = vmatprep.subr.bf16.mxu0 0
  %783 = vmatpush1.bf16.msra.mxu0 0
  %784 = vmatprep.subr.bf16.mxu0 0
  %785 = vmatpush1.bf16.msra.mxu0 0
  %786 = vmatprep.subr.bf16.mxu0 0
  %787 = vmatpush1.bf16.msra.mxu0 0
  %788 = vmatprep.subr.bf16.mxu0 0
  %789 = vmatpush1.bf16.msra.mxu0 0
  %790 = vmatprep.subr.bf16.mxu0 0
  %791 = vmatpush1.bf16.msra.mxu0 0
  %792 = vmatprep.subr.bf16.mxu0 0
  %793 = vmatpush1.bf16.msra.mxu0 0
  %794 = vmatprep.subr.bf16.mxu0 0
  %795 = vmatpush1.bf16.msra.mxu0 0
  %796 = vmatprep.subr.bf16.mxu0 0
  %797 = vmatpush1.bf16.msra.mxu0 0
  %798 = vmatprep.subr.bf16.mxu0 0
  %799 = vmatpush1.bf16.msra.mxu0 0
  %800 = vmatprep.subr.bf16.mxu0 0
  %801 = vmatpush1.bf16.msra.mxu0 0
  %802 = vmatprep.subr.bf16.mxu0 0
  %803 = vmatpush1.bf16.msra.mxu0 0
  %804 = vmatprep.subr.bf16.mxu0 0
  %805 = vmatpush1.bf16.msra.mxu0 0
  %806 = vmatprep.subr.bf16.mxu0 0
  %807 = vmatpush1.bf16.msra.mxu0 0
  %808 = vmatprep.mubr.bf16.mxu0 0
  %809 = vmatmul.mubr.bf16.gmra.mrb[0].mxu0 %v373
  %v810 = vpop.f32.mrb[0].mxu0
  %v811 = vadd.f32 0.0, %v810
  %v812 = vpop.f32.mrb[0].mxu0
  %v813 = vadd.f32 0.0, %v812
  %v814 = vpop.f32.mrb[0].mxu0
  %v815 = vpop.f32.mrb[0].mxu0
  %816 = vdwg.mxu0
  %817 = vmatprep.subr.bf16.mxu0 %v419
  %818 = vmatpush1.bf16.msra.mxu0 %v416
  %819 = vmatprep.subr.bf16.mxu0 0
  %820 = vmatpush1.bf16.msra.mxu0 0
  %821 = vmatprep.subr.bf16.mxu0 0
  %822 = vmatpush1.bf16.msra.mxu0 0
  %823 = vmatprep.subr.bf16.mxu0 0
  %824 = vmatpush1.bf16.msra.mxu0 0
  %825 = vmatprep.subr.bf16.mxu0 0
  %826 = vmatpush1.bf16.msra.mxu0 0
  %827 = vmatprep.subr.bf16.mxu0 0
  %828 = vmatpush1.bf16.msra.mxu0 0
  %829 = vmatprep.subr.bf16.mxu0 0
  %830 = vmatpush1.bf16.msra.mxu0 0
  %831 = vmatprep.subr.bf16.mxu0 0
  %832 = vmatpush1.bf16.msra.mxu0 0
  %833 = vmatprep.subr.bf16.mxu0 0
  %834 = vmatpush1.bf16.msra.mxu0 0
  %835 = vmatprep.subr.bf16.mxu0 0
  %836 = vmatpush1.bf16.msra.mxu0 0
  %837 = vmatprep.subr.bf16.mxu0 0
  %838 = vmatpush1.bf16.msra.mxu0 0
  %839 = vmatprep.subr.bf16.mxu0 0
  %840 = vmatpush1.bf16.msra.mxu0 0
  %841 = vmatprep.subr.bf16.mxu0 0
  %842 = vmatpush1.bf16.msra.mxu0 0
  %843 = vmatprep.subr.bf16.mxu0 0
  %844 = vmatpush1.bf16.msra.mxu0 0
  %845 = vmatprep.subr.bf16.mxu0 0
  %846 = vmatpush1.bf16.msra.mxu0 0
  %847 = vmatprep.subr.bf16.mxu0 0
  %848 = vmatpush1.bf16.msra.mxu0 0
  %849 = vmatprep.mubr.bf16.mxu0 0
  %850 = vmatmul.mubr.bf16.gmra.mrb[0].mxu0 %v373
  %v851 = vpop.f32.mrb[0].mxu0
  %v852 = vadd.f32 0.0, %v851
  %v853 = vpop.f32.mrb[0].mxu0
  %v854 = vadd.f32 0.0, %v853
  %v855 = vpop.f32.mrb[0].mxu0
  %v856 = vpop.f32.mrb[0].mxu0
  %857 = vdwg.mxu0
  %858 = vmatprep.subr.bf16.mxu0 %v425
  %859 = vmatpush1.bf16.msra.mxu0 %v422
  %860 = vmatprep.subr.bf16.mxu0 0
  %861 = vmatpush1.bf16.msra.mxu0 0
  %862 = vmatprep.subr.bf16.mxu0 0
  %863 = vmatpush1.bf16.msra.mxu0 0
  %864 = vmatprep.subr.bf16.mxu0 0
  %865 = vmatpush1.bf16.msra.mxu0 0
  %866 = vmatprep.subr.bf16.mxu0 0
  %867 = vmatpush1.bf16.msra.mxu0 0
  %868 = vmatprep.subr.bf16.mxu0 0
  %869 = vmatpush1.bf16.msra.mxu0 0
  %870 = vmatprep.subr.bf16.mxu0 0
  %871 = vmatpush1.bf16.msra.mxu0 0
  %872 = vmatprep.subr.bf16.mxu0 0
  %873 = vmatpush1.bf16.msra.mxu0 0
  %874 = vmatprep.subr.bf16.mxu0 0
  %875 = vmatpush1.bf16.msra.mxu0 0
  %876 = vmatprep.subr.bf16.mxu0 0
  %877 = vmatpush1.bf16.msra.mxu0 0
  %878 = vmatprep.subr.bf16.mxu0 0
  %879 = vmatpush1.bf16.msra.mxu0 0
  %880 = vmatprep.subr.bf16.mxu0 0
  %881 = vmatpush1.bf16.msra.mxu0 0
  %882 = vmatprep.subr.bf16.mxu0 0
  %883 = vmatpush1.bf16.msra.mxu0 0
  %884 = vmatprep.subr.bf16.mxu0 0
  %885 = vmatpush1.bf16.msra.mxu0 0
  %886 = vmatprep.subr.bf16.mxu0 0
  %887 = vmatpush1.bf16.msra.mxu0 0
  %888 = vmatprep.subr.bf16.mxu0 0
  %889 = vmatpush1.bf16.msra.mxu0 0
  %890 = vmatprep.mubr.bf16.mxu0 0
  %891 = vmatmul.mubr.bf16.gmra.mrb[0].mxu0 %v373
  %v892 = vpop.f32.mrb[0].mxu0
  %v893 = vadd.f32 0.0, %v892
  %v894 = vpop.f32.mrb[0].mxu0
  %v895 = vadd.f32 0.0, %v894
  %v896 = vpop.f32.mrb[0].mxu0
  %v897 = vpop.f32.mrb[0].mxu0
  %898 = vdwg.mxu0
  %899 = vmatprep.subr.bf16.mxu0 %v431
  %900 = vmatpush1.bf16.msra.mxu0 %v428
  %901 = vmatprep.subr.bf16.mxu0 0
  %902 = vmatpush1.bf16.msra.mxu0 0
  %903 = vmatprep.subr.bf16.mxu0 0
  %904 = vmatpush1.bf16.msra.mxu0 0
  %905 = vmatprep.subr.bf16.mxu0 0
  %906 = vmatpush1.bf16.msra.mxu0 0
  %907 = vmatprep.subr.bf16.mxu0 0
  %908 = vmatpush1.bf16.msra.mxu0 0
  %909 = vmatprep.subr.bf16.mxu0 0
  %910 = vmatpush1.bf16.msra.mxu0 0
  %911 = vmatprep.subr.bf16.mxu0 0
  %912 = vmatpush1.bf16.msra.mxu0 0
  %913 = vmatprep.subr.bf16.mxu0 0
  %914 = vmatpush1.bf16.msra.mxu0 0
  %915 = vmatprep.subr.bf16.mxu0 0
  %916 = vmatpush1.bf16.msra.mxu0 0
  %917 = vmatprep.subr.bf16.mxu0 0
  %918 = vmatpush1.bf16.msra.mxu0 0
  %919 = vmatprep.subr.bf16.mxu0 0
  %920 = vmatpush1.bf16.msra.mxu0 0
  %921 = vmatprep.subr.bf16.mxu0 0
  %922 = vmatpush1.bf16.msra.mxu0 0
  %923 = vmatprep.subr.bf16.mxu0 0
  %924 = vmatpush1.bf16.msra.mxu0 0
  %925 = vmatprep.subr.bf16.mxu0 0
  %926 = vmatpush1.bf16.msra.mxu0 0
  %927 = vmatprep.subr.bf16.mxu0 0
  %928 = vmatpush1.bf16.msra.mxu0 0
  %929 = vmatprep.subr.bf16.mxu0 0
  %930 = vmatpush1.bf16.msra.mxu0 0
  %931 = vmatprep.mubr.bf16.mxu0 0
  %932 = vmatmul.mubr.bf16.gmra.mrb[0].mxu0 %v373
  %v933 = vpop.f32.mrb[0].mxu0
  %v934 = vadd.f32 0.0, %v933
  %v935 = vpop.f32.mrb[0].mxu0
  %v936 = vadd.f32 0.0, %v935
  %v937 = vpop.f32.mrb[0].mxu0
  %v938 = vpop.f32.mrb[0].mxu0
  %939 = vdwg.mxu0
  %940 = vmatprep.subr.bf16.mxu0 %v437
  %941 = vmatpush1.bf16.msra.mxu0 %v434
  %942 = vmatprep.subr.bf16.mxu0 0
  %943 = vmatpush1.bf16.msra.mxu0 0
  %944 = vmatprep.subr.bf16.mxu0 0
  %945 = vmatpush1.bf16.msra.mxu0 0
  %946 = vmatprep.subr.bf16.mxu0 0
  %947 = vmatpush1.bf16.msra.mxu0 0
  %948 = vmatprep.subr.bf16.mxu0 0
  %949 = vmatpush1.bf16.msra.mxu0 0
  %950 = vmatprep.subr.bf16.mxu0 0
  %951 = vmatpush1.bf16.msra.mxu0 0
  %952 = vmatprep.subr.bf16.mxu0 0
  %953 = vmatpush1.bf16.msra.mxu0 0
  %954 = vmatprep.subr.bf16.mxu0 0
  %955 = vmatpush1.bf16.msra.mxu0 0
  %956 = vmatprep.subr.bf16.mxu0 0
  %957 = vmatpush1.bf16.msra.mxu0 0
  %958 = vmatprep.subr.bf16.mxu0 0
  %959 = vmatpush1.bf16.msra.mxu0 0
  %960 = vmatprep.subr.bf16.mxu0 0
  %961 = vmatpush1.bf16.msra.mxu0 0
  %962 = vmatprep.subr.bf16.mxu0 0
  %963 = vmatpush1.bf16.msra.mxu0 0
  %964 = vmatprep.subr.bf16.mxu0 0
  %965 = vmatpush1.bf16.msra.mxu0 0
  %966 = vmatprep.subr.bf16.mxu0 0
  %967 = vmatpush1.bf16.msra.mxu0 0
  %968 = vmatprep.subr.bf16.mxu0 0
  %969 = vmatpush1.bf16.msra.mxu0 0
  %970 = vmatprep.subr.bf16.mxu0 0
  %971 = vmatpush1.bf16.msra.mxu0 0
  %972 = vmatprep.mubr.bf16.mxu0 0
  %973 = vmatmul.mubr.bf16.gmra.mrb[0].mxu0 %v373
  %v974 = vpop.f32.mrb[0].mxu0
  %v975 = vadd.f32 0.0, %v974
  %v976 = vpop.f32.mrb[0].mxu0
  %v977 = vadd.f32 0.0, %v976
  %v978 = vpop.f32.mrb[0].mxu0
  %v979 = vpop.f32.mrb[0].mxu0
  %980 = vdwg.mxu0
  %981 = vmatprep.subr.bf16.mxu0 %v443
  %982 = vmatpush1.bf16.msra.mxu0 %v440
  %983 = vmatprep.subr.bf16.mxu0 0
  %984 = vmatpush1.bf16.msra.mxu0 0
  %985 = vmatprep.subr.bf16.mxu0 0
  %986 = vmatpush1.bf16.msra.mxu0 0
  %987 = vmatprep.subr.bf16.mxu0 0
  %988 = vmatpush1.bf16.msra.mxu0 0
  %989 = vmatprep.subr.bf16.mxu0 0
  %990 = vmatpush1.bf16.msra.mxu0 0
  %991 = vmatprep.subr.bf16.mxu0 0
  %992 = vmatpush1.bf16.msra.mxu0 0
  %993 = vmatprep.subr.bf16.mxu0 0
  %994 = vmatpush1.bf16.msra.mxu0 0
  %995 = vmatprep.subr.bf16.mxu0 0
  %996 = vmatpush1.bf16.msra.mxu0 0
  %997 = vmatprep.subr.bf16.mxu0 0
  %998 = vmatpush1.bf16.msra.mxu0 0
  %999 = vmatprep.subr.bf16.mxu0 0
  %1000 = vmatpush1.bf16.msra.mxu0 0
  %1001 = vmatprep.subr.bf16.mxu0 0
  %1002 = vmatpush1.bf16.msra.mxu0 0
  %1003 = vmatprep.subr.bf16.mxu0 0
  %1004 = vmatpush1.bf16.msra.mxu0 0
  %1005 = vmatprep.subr.bf16.mxu0 0
  %1006 = vmatpush1.bf16.msra.mxu0 0
  %1007 = vmatprep.subr.bf16.mxu0 0
  %1008 = vmatpush1.bf16.msra.mxu0 0
  %1009 = vmatprep.subr.bf16.mxu0 0
  %1010 = vmatpush1.bf16.msra.mxu0 0
  %1011 = vmatprep.subr.bf16.mxu0 0
  %1012 = vmatpush1.bf16.msra.mxu0 0
  %1013 = vmatprep.mubr.bf16.mxu0 0
  %1014 = vmatmul.mubr.bf16.gmra.mrb[0].mxu0 %v373
  %v1015 = vpop.f32.mrb[0].mxu0
  %v1016 = vadd.f32 0.0, %v1015
  %v1017 = vpop.f32.mrb[0].mxu0
  %v1018 = vadd.f32 0.0, %v1017
  %v1019 = vpop.f32.mrb[0].mxu0
  %v1020 = vpop.f32.mrb[0].mxu0
  %1021 = vdwg.mxu0
  %1022 = vmatprep.subr.bf16.mxu0 %v449
  %1023 = vmatpush1.bf16.msra.mxu0 %v446
  %1024 = vmatprep.subr.bf16.mxu0 0
  %1025 = vmatpush1.bf16.msra.mxu0 0
  %1026 = vmatprep.subr.bf16.mxu0 0
  %1027 = vmatpush1.bf16.msra.mxu0 0
  %1028 = vmatprep.subr.bf16.mxu0 0
  %1029 = vmatpush1.bf16.msra.mxu0 0
  %1030 = vmatprep.subr.bf16.mxu0 0
  %1031 = vmatpush1.bf16.msra.mxu0 0
  %1032 = vmatprep.subr.bf16.mxu0 0
  %1033 = vmatpush1.bf16.msra.mxu0 0
  %1034 = vmatprep.subr.bf16.mxu0 0
  %1035 = vmatpush1.bf16.msra.mxu0 0
  %1036 = vmatprep.subr.bf16.mxu0 0
  %1037 = vmatpush1.bf16.msra.mxu0 0
  %1038 = vmatprep.subr.bf16.mxu0 0
  %1039 = vmatpush1.bf16.msra.mxu0 0
  %1040 = vmatprep.subr.bf16.mxu0 0
  %1041 = vmatpush1.bf16.msra.mxu0 0
  %1042 = vmatprep.subr.bf16.mxu0 0
  %1043 = vmatpush1.bf16.msra.mxu0 0
  %1044 = vmatprep.subr.bf16.mxu0 0
  %1045 = vmatpush1.bf16.msra.mxu0 0
  %1046 = vmatprep.subr.bf16.mxu0 0
  %1047 = vmatpush1.bf16.msra.mxu0 0
  %1048 = vmatprep.subr.bf16.mxu0 0
  %1049 = vmatpush1.bf16.msra.mxu0 0
  %1050 = vmatprep.subr.bf16.mxu0 0
  %1051 = vmatpush1.bf16.msra.mxu0 0
  %1052 = vmatprep.subr.bf16.mxu0 0
  %1053 = vmatpush1.bf16.msra.mxu0 0
  %1054 = vmatprep.mubr.bf16.mxu0 0
  %1055 = vmatmul.mubr.bf16.gmra.mrb[0].mxu0 %v373
  %v1056 = vpop.f32.mrb[0].mxu0
  %v1057 = vadd.f32 0.0, %v1056
  %v1058 = vpop.f32.mrb[0].mxu0
  %v1059 = vadd.f32 0.0, %v1058
  %v1060 = vpop.f32.mrb[0].mxu0
  %v1061 = vpop.f32.mrb[0].mxu0
  %1062 = vdwg.mxu0
  %1063 = vmatprep.subr.bf16.mxu0 %v455
  %1064 = vmatpush1.bf16.msra.mxu0 %v452
  %1065 = vmatprep.subr.bf16.mxu0 0
  %1066 = vmatpush1.bf16.msra.mxu0 0
  %1067 = vmatprep.subr.bf16.mxu0 0
  %1068 = vmatpush1.bf16.msra.mxu0 0
  %1069 = vmatprep.subr.bf16.mxu0 0
  %1070 = vmatpush1.bf16.msra.mxu0 0
  %1071 = vmatprep.subr.bf16.mxu0 0
  %1072 = vmatpush1.bf16.msra.mxu0 0
  %1073 = vmatprep.subr.bf16.mxu0 0
  %1074 = vmatpush1.bf16.msra.mxu0 0
  %1075 = vmatprep.subr.bf16.mxu0 0
  %1076 = vmatpush1.bf16.msra.mxu0 0
  %1077 = vmatprep.subr.bf16.mxu0 0
  %1078 = vmatpush1.bf16.msra.mxu0 0
  %1079 = vmatprep.subr.bf16.mxu0 0
  %1080 = vmatpush1.bf16.msra.mxu0 0
  %1081 = vmatprep.subr.bf16.mxu0 0
  %1082 = vmatpush1.bf16.msra.mxu0 0
  %1083 = vmatprep.subr.bf16.mxu0 0
  %1084 = vmatpush1.bf16.msra.mxu0 0
  %1085 = vmatprep.subr.bf16.mxu0 0
  %1086 = vmatpush1.bf16.msra.mxu0 0
  %1087 = vmatprep.subr.bf16.mxu0 0
  %1088 = vmatpush1.bf16.msra.mxu0 0
  %1089 = vmatprep.subr.bf16.mxu0 0
  %1090 = vmatpush1.bf16.msra.mxu0 0
  %1091 = vmatprep.subr.bf16.mxu0 0
  %1092 = vmatpush1.bf16.msra.mxu0 0
  %1093 = vmatprep.subr.bf16.mxu0 0
  %1094 = vmatpush1.bf16.msra.mxu0 0
  %1095 = vmatprep.mubr.bf16.mxu0 0
  %1096 = vmatmul.mubr.bf16.gmra.mrb[0].mxu0 %v373
  %v1097 = vpop.f32.mrb[0].mxu0
  %v1098 = vadd.f32 0.0, %v1097
  %v1099 = vpop.f32.mrb[0].mxu0
  %v1100 = vadd.f32 0.0, %v1099
  %v1101 = vpop.f32.mrb[0].mxu0
  %v1102 = vpop.f32.mrb[0].mxu0
  %1103 = vdwg.mxu0
  %1104 = vmatprep.subr.bf16.mxu0 %v461
  %1105 = vmatpush1.bf16.msra.mxu0 %v458
  %1106 = vmatprep.subr.bf16.mxu0 0
  %1107 = vmatpush1.bf16.msra.mxu0 0
  %1108 = vmatprep.subr.bf16.mxu0 0
  %1109 = vmatpush1.bf16.msra.mxu0 0
  %1110 = vmatprep.subr.bf16.mxu0 0
  %1111 = vmatpush1.bf16.msra.mxu0 0
  %1112 = vmatprep.subr.bf16.mxu0 0
  %1113 = vmatpush1.bf16.msra.mxu0 0
  %1114 = vmatprep.subr.bf16.mxu0 0
  %1115 = vmatpush1.bf16.msra.mxu0 0
  %1116 = vmatprep.subr.bf16.mxu0 0
  %1117 = vmatpush1.bf16.msra.mxu0 0
  %1118 = vmatprep.subr.bf16.mxu0 0
  %1119 = vmatpush1.bf16.msra.mxu0 0
  %1120 = vmatprep.subr.bf16.mxu0 0
  %1121 = vmatpush1.bf16.msra.mxu0 0
  %1122 = vmatprep.subr.bf16.mxu0 0
  %1123 = vmatpush1.bf16.msra.mxu0 0
  %1124 = vmatprep.subr.bf16.mxu0 0
  %1125 = vmatpush1.bf16.msra.mxu0 0
  %1126 = vmatprep.subr.bf16.mxu0 0
  %1127 = vmatpush1.bf16.msra.mxu0 0
  %1128 = vmatprep.subr.bf16.mxu0 0
  %1129 = vmatpush1.bf16.msra.mxu0 0
  %1130 = vmatprep.subr.bf16.mxu0 0
  %1131 = vmatpush1.bf16.msra.mxu0 0
  %1132 = vmatprep.subr.bf16.mxu0 0
  %1133 = vmatpush1.bf16.msra.mxu0 0
  %1134 = vmatprep.subr.bf16.mxu0 0
  %1135 = vmatpush1.bf16.msra.mxu0 0
  %1136 = vmatprep.mubr.bf16.mxu0 0
  %1137 = vmatmul.mubr.bf16.gmra.mrb[0].mxu0 %v373
  %v1138 = vpop.f32.mrb[0].mxu0
  %v1139 = vadd.f32 0.0, %v1138
  %v1140 = vpop.f32.mrb[0].mxu0
  %v1141 = vadd.f32 0.0, %v1140
  %v1142 = vpop.f32.mrb[0].mxu0
  %v1143 = vpop.f32.mrb[0].mxu0
  %1144 = vdwg.mxu0
  %1145 = vmatprep.subr.bf16.mxu0 %v467
  %1146 = vmatpush1.bf16.msra.mxu0 %v464
  %1147 = vmatprep.subr.bf16.mxu0 0
  %1148 = vmatpush1.bf16.msra.mxu0 0
  %1149 = vmatprep.subr.bf16.mxu0 0
  %1150 = vmatpush1.bf16.msra.mxu0 0
  %1151 = vmatprep.subr.bf16.mxu0 0
  %1152 = vmatpush1.bf16.msra.mxu0 0
  %1153 = vmatprep.subr.bf16.mxu0 0
  %1154 = vmatpush1.bf16.msra.mxu0 0
  %1155 = vmatprep.subr.bf16.mxu0 0
  %1156 = vmatpush1.bf16.msra.mxu0 0
  %1157 = vmatprep.subr.bf16.mxu0 0
  %1158 = vmatpush1.bf16.msra.mxu0 0
  %1159 = vmatprep.subr.bf16.mxu0 0
  %1160 = vmatpush1.bf16.msra.mxu0 0
  %1161 = vmatprep.subr.bf16.mxu0 0
  %1162 = vmatpush1.bf16.msra.mxu0 0
  %1163 = vmatprep.subr.bf16.mxu0 0
  %1164 = vmatpush1.bf16.msra.mxu0 0
  %1165 = vmatprep.subr.bf16.mxu0 0
  %1166 = vmatpush1.bf16.msra.mxu0 0
  %1167 = vmatprep.subr.bf16.mxu0 0
  %1168 = vmatpush1.bf16.msra.mxu0 0
  %1169 = vmatprep.subr.bf16.mxu0 0
  %1170 = vmatpush1.bf16.msra.mxu0 0
  %1171 = vmatprep.subr.bf16.mxu0 0
  %1172 = vmatpush1.bf16.msra.mxu0 0
  %1173 = vmatprep.subr.bf16.mxu0 0
  %1174 = vmatpush1.bf16.msra.mxu0 0
  %1175 = vmatprep.subr.bf16.mxu0 0
  %1176 = vmatpush1.bf16.msra.mxu0 0
  %1177 = vmatprep.mubr.bf16.mxu0 0
  %1178 = vmatmul.mubr.bf16.gmra.mrb[0].mxu0 %v373
  %v1179 = vpop.f32.mrb[0].mxu0
  %v1180 = vadd.f32 0.0, %v1179
  %v1181 = vpop.f32.mrb[0].mxu0
  %v1182 = vadd.f32 0.0, %v1181
  %v1183 = vpop.f32.mrb[0].mxu0
  %v1184 = vpop.f32.mrb[0].mxu0
  %1185 = vdwg.mxu0
  %1186 = vmatprep.subr.bf16.mxu0 %v473
  %1187 = vmatpush1.bf16.msra.mxu0 %v470
  %1188 = vmatprep.subr.bf16.mxu0 0
  %1189 = vmatpush1.bf16.msra.mxu0 0
  %1190 = vmatprep.subr.bf16.mxu0 0
  %1191 = vmatpush1.bf16.msra.mxu0 0
  %1192 = vmatprep.subr.bf16.mxu0 0
  %1193 = vmatpush1.bf16.msra.mxu0 0
  %1194 = vmatprep.subr.bf16.mxu0 0
  %1195 = vmatpush1.bf16.msra.mxu0 0
  %1196 = vmatprep.subr.bf16.mxu0 0
  %1197 = vmatpush1.bf16.msra.mxu0 0
  %1198 = vmatprep.subr.bf16.mxu0 0
  %1199 = vmatpush1.bf16.msra.mxu0 0
  %1200 = vmatprep.subr.bf16.mxu0 0
  %1201 = vmatpush1.bf16.msra.mxu0 0
  %1202 = vmatprep.subr.bf16.mxu0 0
  %1203 = vmatpush1.bf16.msra.mxu0 0
  %1204 = vmatprep.subr.bf16.mxu0 0
  %1205 = vmatpush1.bf16.msra.mxu0 0
  %1206 = vmatprep.subr.bf16.mxu0 0
  %1207 = vmatpush1.bf16.msra.mxu0 0
  %1208 = vmatprep.subr.bf16.mxu0 0
  %1209 = vmatpush1.bf16.msra.mxu0 0
  %1210 = vmatprep.subr.bf16.mxu0 0
  %1211 = vmatpush1.bf16.msra.mxu0 0
  %1212 = vmatprep.subr.bf16.mxu0 0
  %1213 = vmatpush1.bf16.msra.mxu0 0
  %1214 = vmatprep.subr.bf16.mxu0 0
  %1215 = vmatpush1.bf16.msra.mxu0 0
  %1216 = vmatprep.subr.bf16.mxu0 0
  %1217 = vmatpush1.bf16.msra.mxu0 0
  %1218 = vmatprep.mubr.bf16.mxu0 0
  %1219 = vmatmul.mubr.bf16.gmra.mrb[0].mxu0 %v373
  %v1220 = vpop.f32.mrb[0].mxu0
  %v1221 = vadd.f32 0.0, %v1220
  %v1222 = vpop.f32.mrb[0].mxu0
  %v1223 = vadd.f32 0.0, %v1222
  %v1224 = vpop.f32.mrb[0].mxu0
  %v1225 = vpop.f32.mrb[0].mxu0
  %1226 = vdwg.mxu0
  %1227 = vmatprep.subr.bf16.mxu0 %v479
  %1228 = vmatpush1.bf16.msra.mxu0 %v476
  %1229 = vmatprep.subr.bf16.mxu0 0
  %1230 = vmatpush1.bf16.msra.mxu0 0
  %1231 = vmatprep.subr.bf16.mxu0 0
  %1232 = vmatpush1.bf16.msra.mxu0 0
  %1233 = vmatprep.subr.bf16.mxu0 0
  %1234 = vmatpush1.bf16.msra.mxu0 0
  %1235 = vmatprep.subr.bf16.mxu0 0
  %1236 = vmatpush1.bf16.msra.mxu0 0
  %1237 = vmatprep.subr.bf16.mxu0 0
  %1238 = vmatpush1.bf16.msra.mxu0 0
  %1239 = vmatprep.subr.bf16.mxu0 0
  %1240 = vmatpush1.bf16.msra.mxu0 0
  %1241 = vmatprep.subr.bf16.mxu0 0
  %1242 = vmatpush1.bf16.msra.mxu0 0
  %1243 = vmatprep.subr.bf16.mxu0 0
  %1244 = vmatpush1.bf16.msra.mxu0 0
  %1245 = vmatprep.subr.bf16.mxu0 0
  %1246 = vmatpush1.bf16.msra.mxu0 0
  %1247 = vmatprep.subr.bf16.mxu0 0
  %1248 = vmatpush1.bf16.msra.mxu0 0
  %1249 = vmatprep.subr.bf16.mxu0 0
  %1250 = vmatpush1.bf16.msra.mxu0 0
  %1251 = vmatprep.subr.bf16.mxu0 0
  %1252 = vmatpush1.bf16.msra.mxu0 0
  %1253 = vmatprep.subr.bf16.mxu0 0
  %1254 = vmatpush1.bf16.msra.mxu0 0
  %1255 = vmatprep.subr.bf16.mxu0 0
  %1256 = vmatpush1.bf16.msra.mxu0 0
  %1257 = vmatprep.subr.bf16.mxu0 0
  %1258 = vmatpush1.bf16.msra.mxu0 0
  %1259 = vmatprep.mubr.bf16.mxu0 0
  %1260 = vmatmul.mubr.bf16.gmra.mrb[0].mxu0 %v373
  %v1261 = vpop.f32.mrb[0].mxu0
  %v1262 = vadd.f32 0.0, %v1261
  %v1263 = vpop.f32.mrb[0].mxu0
  %v1264 = vadd.f32 0.0, %v1263
  %v1265 = vpop.f32.mrb[0].mxu0
  %v1266 = vpop.f32.mrb[0].mxu0
  %1267 = vdwg.mxu0
  %1268 = vmatprep.subr.bf16.mxu0 %v485
  %1269 = vmatpush1.bf16.msra.mxu0 %v482
  %1270 = vmatprep.subr.bf16.mxu0 0
  %1271 = vmatpush1.bf16.msra.mxu0 0
  %1272 = vmatprep.subr.bf16.mxu0 0
  %1273 = vmatpush1.bf16.msra.mxu0 0
  %1274 = vmatprep.subr.bf16.mxu0 0
  %1275 = vmatpush1.bf16.msra.mxu0 0
  %1276 = vmatprep.subr.bf16.mxu0 0
  %1277 = vmatpush1.bf16.msra.mxu0 0
  %1278 = vmatprep.subr.bf16.mxu0 0
  %1279 = vmatpush1.bf16.msra.mxu0 0
  %1280 = vmatprep.subr.bf16.mxu0 0
  %1281 = vmatpush1.bf16.msra.mxu0 0
  %1282 = vmatprep.subr.bf16.mxu0 0
  %1283 = vmatpush1.bf16.msra.mxu0 0
  %1284 = vmatprep.subr.bf16.mxu0 0
  %1285 = vmatpush1.bf16.msra.mxu0 0
  %1286 = vmatprep.subr.bf16.mxu0 0
  %1287 = vmatpush1.bf16.msra.mxu0 0
  %1288 = vmatprep.subr.bf16.mxu0 0
  %1289 = vmatpush1.bf16.msra.mxu0 0
  %1290 = vmatprep.subr.bf16.mxu0 0
  %1291 = vmatpush1.bf16.msra.mxu0 0
  %1292 = vmatprep.subr.bf16.mxu0 0
  %1293 = vmatpush1.bf16.msra.mxu0 0
  %1294 = vmatprep.subr.bf16.mxu0 0
  %1295 = vmatpush1.bf16.msra.mxu0 0
  %1296 = vmatprep.subr.bf16.mxu0 0
  %1297 = vmatpush1.bf16.msra.mxu0 0
  %1298 = vmatprep.subr.bf16.mxu0 0
  %1299 = vmatpush1.bf16.msra.mxu0 0
  %1300 = vmatprep.mubr.bf16.mxu0 0
  %1301 = vmatmul.mubr.bf16.gmra.mrb[0].mxu0 %v373
  %v1302 = vpop.f32.mrb[0].mxu0
  %v1303 = vadd.f32 0.0, %v1302
  %v1304 = vpop.f32.mrb[0].mxu0
  %v1305 = vadd.f32 0.0, %v1304
  %v1306 = vpop.f32.mrb[0].mxu0
  %v1307 = vpop.f32.mrb[0].mxu0
  %1308 = vdwg.mxu0
  %1309 = vmatprep.subr.bf16.mxu0 %v491
  %1310 = vmatpush1.bf16.msra.mxu0 %v488
  %1311 = vmatprep.subr.bf16.mxu0 0
  %1312 = vmatpush1.bf16.msra.mxu0 0
  %1313 = vmatprep.subr.bf16.mxu0 0
  %1314 = vmatpush1.bf16.msra.mxu0 0
  %1315 = vmatprep.subr.bf16.mxu0 0
  %1316 = vmatpush1.bf16.msra.mxu0 0
  %1317 = vmatprep.subr.bf16.mxu0 0
  %1318 = vmatpush1.bf16.msra.mxu0 0
  %1319 = vmatprep.subr.bf16.mxu0 0
  %1320 = vmatpush1.bf16.msra.mxu0 0
  %1321 = vmatprep.subr.bf16.mxu0 0
  %1322 = vmatpush1.bf16.msra.mxu0 0
  %1323 = vmatprep.subr.bf16.mxu0 0
  %1324 = vmatpush1.bf16.msra.mxu0 0
  %1325 = vmatprep.subr.bf16.mxu0 0
  %1326 = vmatpush1.bf16.msra.mxu0 0
  %1327 = vmatprep.subr.bf16.mxu0 0
  %1328 = vmatpush1.bf16.msra.mxu0 0
  %1329 = vmatprep.subr.bf16.mxu0 0
  %1330 = vmatpush1.bf16.msra.mxu0 0
  %1331 = vmatprep.subr.bf16.mxu0 0
  %1332 = vmatpush1.bf16.msra.mxu0 0
  %1333 = vmatprep.subr.bf16.mxu0 0
  %1334 = vmatpush1.bf16.msra.mxu0 0
  %1335 = vmatprep.subr.bf16.mxu0 0
  %1336 = vmatpush1.bf16.msra.mxu0 0
  %1337 = vmatprep.subr.bf16.mxu0 0
  %1338 = vmatpush1.bf16.msra.mxu0 0
  %1339 = vmatprep.subr.bf16.mxu0 0
  %1340 = vmatpush1.bf16.msra.mxu0 0
  %1341 = vmatprep.mubr.bf16.mxu0 0
  %1342 = vmatmul.mubr.bf16.gmra.mrb[0].mxu0 %v373
  %v1343 = vpop.f32.mrb[0].mxu0
  %v1344 = vadd.f32 0.0, %v1343
  %v1345 = vpop.f32.mrb[0].mxu0
  %v1346 = vadd.f32 0.0, %v1345
  %v1347 = vpop.f32.mrb[0].mxu0
  %v1348 = vpop.f32.mrb[0].mxu0
  %1349 = vdwg.mxu0
  %1350 = vmatprep.subr.bf16.mxu0 %v497
  %1351 = vmatpush1.bf16.msra.mxu0 %v494
  %1352 = vmatprep.subr.bf16.mxu0 0
  %1353 = vmatpush1.bf16.msra.mxu0 0
  %1354 = vmatprep.subr.bf16.mxu0 0
  %1355 = vmatpush1.bf16.msra.mxu0 0
  %1356 = vmatprep.subr.bf16.mxu0 0
  %1357 = vmatpush1.bf16.msra.mxu0 0
  %1358 = vmatprep.subr.bf16.mxu0 0
  %1359 = vmatpush1.bf16.msra.mxu0 0
  %1360 = vmatprep.subr.bf16.mxu0 0
  %1361 = vmatpush1.bf16.msra.mxu0 0
  %1362 = vmatprep.subr.bf16.mxu0 0
  %1363 = vmatpush1.bf16.msra.mxu0 0
  %1364 = vmatprep.subr.bf16.mxu0 0
  %1365 = vmatpush1.bf16.msra.mxu0 0
  %1366 = vmatprep.subr.bf16.mxu0 0
  %1367 = vmatpush1.bf16.msra.mxu0 0
  %1368 = vmatprep.subr.bf16.mxu0 0
  %1369 = vmatpush1.bf16.msra.mxu0 0
  %1370 = vmatprep.subr.bf16.mxu0 0
  %1371 = vmatpush1.bf16.msra.mxu0 0
  %1372 = vmatprep.subr.bf16.mxu0 0
  %1373 = vmatpush1.bf16.msra.mxu0 0
  %1374 = vmatprep.subr.bf16.mxu0 0
  %1375 = vmatpush1.bf16.msra.mxu0 0
  %1376 = vmatprep.subr.bf16.mxu0 0
  %1377 = vmatpush1.bf16.msra.mxu0 0
  %1378 = vmatprep.subr.bf16.mxu0 0
  %1379 = vmatpush1.bf16.msra.mxu0 0
  %1380 = vmatprep.subr.bf16.mxu0 0
  %1381 = vmatpush1.bf16.msra.mxu0 0
  %1382 = vmatprep.mubr.bf16.mxu0 0
  %1383 = vmatmul.mubr.bf16.gmra.mrb[0].mxu0 %v373
  %v1384 = vpop.f32.mrb[0].mxu0
  %v1385 = vadd.f32 0.0, %v1384
  %v1386 = vpop.f32.mrb[0].mxu0
  %v1387 = vadd.f32 0.0, %v1386
  %v1388 = vpop.f32.mrb[0].mxu0
  %v1389 = vpop.f32.mrb[0].mxu0
  %1390 = vdwg.mxu0
  %1391 = vmatprep.subr.bf16.mxu0 %v503
  %1392 = vmatpush1.bf16.msra.mxu0 %v500
  %1393 = vmatprep.subr.bf16.mxu0 0
  %1394 = vmatpush1.bf16.msra.mxu0 0
  %1395 = vmatprep.subr.bf16.mxu0 0
  %1396 = vmatpush1.bf16.msra.mxu0 0
  %1397 = vmatprep.subr.bf16.mxu0 0
  %1398 = vmatpush1.bf16.msra.mxu0 0
  %1399 = vmatprep.subr.bf16.mxu0 0
  %1400 = vmatpush1.bf16.msra.mxu0 0
  %1401 = vmatprep.subr.bf16.mxu0 0
  %1402 = vmatpush1.bf16.msra.mxu0 0
  %1403 = vmatprep.subr.bf16.mxu0 0
  %1404 = vmatpush1.bf16.msra.mxu0 0
  %1405 = vmatprep.subr.bf16.mxu0 0
  %1406 = vmatpush1.bf16.msra.mxu0 0
  %1407 = vmatprep.subr.bf16.mxu0 0
  %1408 = vmatpush1.bf16.msra.mxu0 0
  %1409 = vmatprep.subr.bf16.mxu0 0
  %1410 = vmatpush1.bf16.msra.mxu0 0
  %1411 = vmatprep.subr.bf16.mxu0 0
  %1412 = vmatpush1.bf16.msra.mxu0 0
  %1413 = vmatprep.subr.bf16.mxu0 0
  %1414 = vmatpush1.bf16.msra.mxu0 0
  %1415 = vmatprep.subr.bf16.mxu0 0
  %1416 = vmatpush1.bf16.msra.mxu0 0
  %1417 = vmatprep.subr.bf16.mxu0 0
  %1418 = vmatpush1.bf16.msra.mxu0 0
  %1419 = vmatprep.subr.bf16.mxu0 0
  %1420 = vmatpush1.bf16.msra.mxu0 0
  %1421 = vmatprep.subr.bf16.mxu0 0
  %1422 = vmatpush1.bf16.msra.mxu0 0
  %1423 = vmatprep.mubr.bf16.mxu0 0
  %1424 = vmatmul.mubr.bf16.gmra.mrb[0].mxu0 %v373
  %v1425 = vpop.f32.mrb[0].mxu0
  %v1426 = vadd.f32 0.0, %v1425
  %v1427 = vpop.f32.mrb[0].mxu0
  %v1428 = vadd.f32 0.0, %v1427
  %v1429 = vpop.f32.mrb[0].mxu0
  %v1430 = vpop.f32.mrb[0].mxu0
  %1431 = vdwg.mxu0
  %1432 = vmatprep.subr.bf16.mxu0 %v509
  %1433 = vmatpush1.bf16.msra.mxu0 %v506
  %1434 = vmatprep.subr.bf16.mxu0 0
  %1435 = vmatpush1.bf16.msra.mxu0 0
  %1436 = vmatprep.subr.bf16.mxu0 0
  %1437 = vmatpush1.bf16.msra.mxu0 0
  %1438 = vmatprep.subr.bf16.mxu0 0
  %1439 = vmatpush1.bf16.msra.mxu0 0
  %1440 = vmatprep.subr.bf16.mxu0 0
  %1441 = vmatpush1.bf16.msra.mxu0 0
  %1442 = vmatprep.subr.bf16.mxu0 0
  %1443 = vmatpush1.bf16.msra.mxu0 0
  %1444 = vmatprep.subr.bf16.mxu0 0
  %1445 = vmatpush1.bf16.msra.mxu0 0
  %1446 = vmatprep.subr.bf16.mxu0 0
  %1447 = vmatpush1.bf16.msra.mxu0 0
  %1448 = vmatprep.subr.bf16.mxu0 0
  %1449 = vmatpush1.bf16.msra.mxu0 0
  %1450 = vmatprep.subr.bf16.mxu0 0
  %1451 = vmatpush1.bf16.msra.mxu0 0
  %1452 = vmatprep.subr.bf16.mxu0 0
  %1453 = vmatpush1.bf16.msra.mxu0 0
  %1454 = vmatprep.subr.bf16.mxu0 0
  %1455 = vmatpush1.bf16.msra.mxu0 0
  %1456 = vmatprep.subr.bf16.mxu0 0
  %1457 = vmatpush1.bf16.msra.mxu0 0
  %1458 = vmatprep.subr.bf16.mxu0 0
  %1459 = vmatpush1.bf16.msra.mxu0 0
  %1460 = vmatprep.subr.bf16.mxu0 0
  %1461 = vmatpush1.bf16.msra.mxu0 0
  %1462 = vmatprep.subr.bf16.mxu0 0
  %1463 = vmatpush1.bf16.msra.mxu0 0
  %1464 = vmatprep.mubr.bf16.mxu0 0
  %1465 = vmatmul.mubr.bf16.gmra.mrb[0].mxu0 %v373
  %v1466 = vpop.f32.mrb[0].mxu0
  %v1467 = vadd.f32 0.0, %v1466
  %v1468 = vpop.f32.mrb[0].mxu0
  %v1469 = vadd.f32 0.0, %v1468
  %v1470 = vpop.f32.mrb[0].mxu0
  %v1471 = vpop.f32.mrb[0].mxu0
  %1472 = vdwg.mxu0
  %1473 = vmatprep.subr.bf16.mxu0 %v515
  %1474 = vmatpush1.bf16.msra.mxu0 %v512
  %1475 = vmatprep.subr.bf16.mxu0 0
  %1476 = vmatpush1.bf16.msra.mxu0 0
  %1477 = vmatprep.subr.bf16.mxu0 0
  %1478 = vmatpush1.bf16.msra.mxu0 0
  %1479 = vmatprep.subr.bf16.mxu0 0
  %1480 = vmatpush1.bf16.msra.mxu0 0
  %1481 = vmatprep.subr.bf16.mxu0 0
  %1482 = vmatpush1.bf16.msra.mxu0 0
  %1483 = vmatprep.subr.bf16.mxu0 0
  %1484 = vmatpush1.bf16.msra.mxu0 0
  %1485 = vmatprep.subr.bf16.mxu0 0
  %1486 = vmatpush1.bf16.msra.mxu0 0
  %1487 = vmatprep.subr.bf16.mxu0 0
  %1488 = vmatpush1.bf16.msra.mxu0 0
  %1489 = vmatprep.subr.bf16.mxu0 0
  %1490 = vmatpush1.bf16.msra.mxu0 0
  %1491 = vmatprep.subr.bf16.mxu0 0
  %1492 = vmatpush1.bf16.msra.mxu0 0
  %1493 = vmatprep.subr.bf16.mxu0 0
  %1494 = vmatpush1.bf16.msra.mxu0 0
  %1495 = vmatprep.subr.bf16.mxu0 0
  %1496 = vmatpush1.bf16.msra.mxu0 0
  %1497 = vmatprep.subr.bf16.mxu0 0
  %1498 = vmatpush1.bf16.msra.mxu0 0
  %1499 = vmatprep.subr.bf16.mxu0 0
  %1500 = vmatpush1.bf16.msra.mxu0 0
  %1501 = vmatprep.subr.bf16.mxu0 0
  %1502 = vmatpush1.bf16.msra.mxu0 0
  %1503 = vmatprep.subr.bf16.mxu0 0
  %1504 = vmatpush1.bf16.msra.mxu0 0
  %1505 = vmatprep.mubr.bf16.mxu0 0
  %1506 = vmatmul.mubr.bf16.gmra.mrb[0].mxu0 %v373
  %v1507 = vpop.f32.mrb[0].mxu0
  %v1508 = vadd.f32 0.0, %v1507
  %v1509 = vpop.f32.mrb[0].mxu0
  %v1510 = vadd.f32 0.0, %v1509
  %v1511 = vpop.f32.mrb[0].mxu0
  %v1512 = vpop.f32.mrb[0].mxu0
  %1513 = vdwg.mxu0
  %1514 = vmatprep.subr.bf16.mxu0 %v521
  %1515 = vmatpush1.bf16.msra.mxu0 %v518
  %1516 = vmatprep.subr.bf16.mxu0 0
  %1517 = vmatpush1.bf16.msra.mxu0 0
  %1518 = vmatprep.subr.bf16.mxu0 0
  %1519 = vmatpush1.bf16.msra.mxu0 0
  %1520 = vmatprep.subr.bf16.mxu0 0
  %1521 = vmatpush1.bf16.msra.mxu0 0
  %1522 = vmatprep.subr.bf16.mxu0 0
  %1523 = vmatpush1.bf16.msra.mxu0 0
  %1524 = vmatprep.subr.bf16.mxu0 0
  %1525 = vmatpush1.bf16.msra.mxu0 0
  %1526 = vmatprep.subr.bf16.mxu0 0
  %1527 = vmatpush1.bf16.msra.mxu0 0
  %1528 = vmatprep.subr.bf16.mxu0 0
  %1529 = vmatpush1.bf16.msra.mxu0 0
  %1530 = vmatprep.subr.bf16.mxu0 0
  %1531 = vmatpush1.bf16.msra.mxu0 0
  %1532 = vmatprep.subr.bf16.mxu0 0
  %1533 = vmatpush1.bf16.msra.mxu0 0
  %1534 = vmatprep.subr.bf16.mxu0 0
  %1535 = vmatpush1.bf16.msra.mxu0 0
  %1536 = vmatprep.subr.bf16.mxu0 0
  %1537 = vmatpush1.bf16.msra.mxu0 0
  %1538 = vmatprep.subr.bf16.mxu0 0
  %1539 = vmatpush1.bf16.msra.mxu0 0
  %1540 = vmatprep.subr.bf16.mxu0 0
  %1541 = vmatpush1.bf16.msra.mxu0 0
  %1542 = vmatprep.subr.bf16.mxu0 0
  %1543 = vmatpush1.bf16.msra.mxu0 0
  %1544 = vmatprep.subr.bf16.mxu0 0
  %1545 = vmatpush1.bf16.msra.mxu0 0
  %1546 = vmatprep.mubr.bf16.mxu0 0
  %1547 = vmatmul.mubr.bf16.gmra.mrb[0].mxu0 %v373
  %v1548 = vpop.f32.mrb[0].mxu0
  %v1549 = vadd.f32 0.0, %v1548
  %v1550 = vpop.f32.mrb[0].mxu0
  %v1551 = vadd.f32 0.0, %v1550
  %v1552 = vpop.f32.mrb[0].mxu0
  %v1553 = vpop.f32.mrb[0].mxu0
  %1554 = vdwg.mxu0
  %1555 = vmatprep.subr.bf16.mxu0 %v527
  %1556 = vmatpush1.bf16.msra.mxu0 %v524
  %1557 = vmatprep.subr.bf16.mxu0 0
  %1558 = vmatpush1.bf16.msra.mxu0 0
  %1559 = vmatprep.subr.bf16.mxu0 0
  %1560 = vmatpush1.bf16.msra.mxu0 0
  %1561 = vmatprep.subr.bf16.mxu0 0
  %1562 = vmatpush1.bf16.msra.mxu0 0
  %1563 = vmatprep.subr.bf16.mxu0 0
  %1564 = vmatpush1.bf16.msra.mxu0 0
  %1565 = vmatprep.subr.bf16.mxu0 0
  %1566 = vmatpush1.bf16.msra.mxu0 0
  %1567 = vmatprep.subr.bf16.mxu0 0
  %1568 = vmatpush1.bf16.msra.mxu0 0
  %1569 = vmatprep.subr.bf16.mxu0 0
  %1570 = vmatpush1.bf16.msra.mxu0 0
  %1571 = vmatprep.subr.bf16.mxu0 0
  %1572 = vmatpush1.bf16.msra.mxu0 0
  %1573 = vmatprep.subr.bf16.mxu0 0
  %1574 = vmatpush1.bf16.msra.mxu0 0
  %1575 = vmatprep.subr.bf16.mxu0 0
  %1576 = vmatpush1.bf16.msra.mxu0 0
  %1577 = vmatprep.subr.bf16.mxu0 0
  %1578 = vmatpush1.bf16.msra.mxu0 0
  %1579 = vmatprep.subr.bf16.mxu0 0
  %1580 = vmatpush1.bf16.msra.mxu0 0
  %1581 = vmatprep.subr.bf16.mxu0 0
  %1582 = vmatpush1.bf16.msra.mxu0 0
  %1583 = vmatprep.subr.bf16.mxu0 0
  %1584 = vmatpush1.bf16.msra.mxu0 0
  %1585 = vmatprep.subr.bf16.mxu0 0
  %1586 = vmatpush1.bf16.msra.mxu0 0
  %1587 = vmatprep.mubr.bf16.mxu0 0
  %1588 = vmatmul.mubr.bf16.gmra.mrb[0].mxu0 %v373
  %v1589 = vpop.f32.mrb[0].mxu0
  %v1590 = vadd.f32 0.0, %v1589
  %v1591 = vpop.f32.mrb[0].mxu0
  %v1592 = vadd.f32 0.0, %v1591
  %v1593 = vpop.f32.mrb[0].mxu0
  %v1594 = vpop.f32.mrb[0].mxu0
  %1595 = vdwg.mxu0
  %1596 = vmatprep.subr.bf16.mxu0 %v533
  %1597 = vmatpush1.bf16.msra.mxu0 %v530
  %1598 = vmatprep.subr.bf16.mxu0 0
  %1599 = vmatpush1.bf16.msra.mxu0 0
  %1600 = vmatprep.subr.bf16.mxu0 0
  %1601 = vmatpush1.bf16.msra.mxu0 0
  %1602 = vmatprep.subr.bf16.mxu0 0
  %1603 = vmatpush1.bf16.msra.mxu0 0
  %1604 = vmatprep.subr.bf16.mxu0 0
  %1605 = vmatpush1.bf16.msra.mxu0 0
  %1606 = vmatprep.subr.bf16.mxu0 0
  %1607 = vmatpush1.bf16.msra.mxu0 0
  %1608 = vmatprep.subr.bf16.mxu0 0
  %1609 = vmatpush1.bf16.msra.mxu0 0
  %1610 = vmatprep.subr.bf16.mxu0 0
  %1611 = vmatpush1.bf16.msra.mxu0 0
  %1612 = vmatprep.subr.bf16.mxu0 0
  %1613 = vmatpush1.bf16.msra.mxu0 0
  %1614 = vmatprep.subr.bf16.mxu0 0
  %1615 = vmatpush1.bf16.msra.mxu0 0
  %1616 = vmatprep.subr.bf16.mxu0 0
  %1617 = vmatpush1.bf16.msra.mxu0 0
  %1618 = vmatprep.subr.bf16.mxu0 0
  %1619 = vmatpush1.bf16.msra.mxu0 0
  %1620 = vmatprep.subr.bf16.mxu0 0
  %1621 = vmatpush1.bf16.msra.mxu0 0
  %1622 = vmatprep.subr.bf16.mxu0 0
  %1623 = vmatpush1.bf16.msra.mxu0 0
  %1624 = vmatprep.subr.bf16.mxu0 0
  %1625 = vmatpush1.bf16.msra.mxu0 0
  %1626 = vmatprep.subr.bf16.mxu0 0
  %1627 = vmatpush1.bf16.msra.mxu0 0
  %1628 = vmatprep.mubr.bf16.mxu0 0
  %1629 = vmatmul.mubr.bf16.gmra.mrb[0].mxu0 %v373
  %v1630 = vpop.f32.mrb[0].mxu0
  %v1631 = vadd.f32 0.0, %v1630
  %v1632 = vpop.f32.mrb[0].mxu0
  %v1633 = vadd.f32 0.0, %v1632
  %v1634 = vpop.f32.mrb[0].mxu0
  %v1635 = vpop.f32.mrb[0].mxu0
  %1636 = vdwg.mxu0
  %1637 = vmatprep.subr.bf16.mxu0 %v539
  %1638 = vmatpush1.bf16.msra.mxu0 %v536
  %1639 = vmatprep.subr.bf16.mxu0 0
  %1640 = vmatpush1.bf16.msra.mxu0 0
  %1641 = vmatprep.subr.bf16.mxu0 0
  %1642 = vmatpush1.bf16.msra.mxu0 0
  %1643 = vmatprep.subr.bf16.mxu0 0
  %1644 = vmatpush1.bf16.msra.mxu0 0
  %1645 = vmatprep.subr.bf16.mxu0 0
  %1646 = vmatpush1.bf16.msra.mxu0 0
  %1647 = vmatprep.subr.bf16.mxu0 0
  %1648 = vmatpush1.bf16.msra.mxu0 0
  %1649 = vmatprep.subr.bf16.mxu0 0
  %1650 = vmatpush1.bf16.msra.mxu0 0
  %1651 = vmatprep.subr.bf16.mxu0 0
  %1652 = vmatpush1.bf16.msra.mxu0 0
  %1653 = vmatprep.subr.bf16.mxu0 0
  %1654 = vmatpush1.bf16.msra.mxu0 0
  %1655 = vmatprep.subr.bf16.mxu0 0
  %1656 = vmatpush1.bf16.msra.mxu0 0
  %1657 = vmatprep.subr.bf16.mxu0 0
  %1658 = vmatpush1.bf16.msra.mxu0 0
  %1659 = vmatprep.subr.bf16.mxu0 0
  %1660 = vmatpush1.bf16.msra.mxu0 0
  %1661 = vmatprep.subr.bf16.mxu0 0
  %1662 = vmatpush1.bf16.msra.mxu0 0
  %1663 = vmatprep.subr.bf16.mxu0 0
  %1664 = vmatpush1.bf16.msra.mxu0 0
  %1665 = vmatprep.subr.bf16.mxu0 0
  %1666 = vmatpush1.bf16.msra.mxu0 0
  %1667 = vmatprep.subr.bf16.mxu0 0
  %1668 = vmatpush1.bf16.msra.mxu0 0
  %1669 = vmatprep.mubr.bf16.mxu0 0
  %1670 = vmatmul.mubr.bf16.gmra.mrb[0].mxu0 %v373
  %v1671 = vpop.f32.mrb[0].mxu0
  %v1672 = vadd.f32 0.0, %v1671
  %v1673 = vpop.f32.mrb[0].mxu0
  %v1674 = vadd.f32 0.0, %v1673
  %v1675 = vpop.f32.mrb[0].mxu0
  %v1676 = vpop.f32.mrb[0].mxu0
  %1677 = vdwg.mxu0
  %1678 = vmatprep.subr.bf16.mxu0 %v545
  %1679 = vmatpush1.bf16.msra.mxu0 %v542
  %1680 = vmatprep.subr.bf16.mxu0 0
  %1681 = vmatpush1.bf16.msra.mxu0 0
  %1682 = vmatprep.subr.bf16.mxu0 0
  %1683 = vmatpush1.bf16.msra.mxu0 0
  %1684 = vmatprep.subr.bf16.mxu0 0
  %1685 = vmatpush1.bf16.msra.mxu0 0
  %1686 = vmatprep.subr.bf16.mxu0 0
  %1687 = vmatpush1.bf16.msra.mxu0 0
  %1688 = vmatprep.subr.bf16.mxu0 0
  %1689 = vmatpush1.bf16.msra.mxu0 0
  %1690 = vmatprep.subr.bf16.mxu0 0
  %1691 = vmatpush1.bf16.msra.mxu0 0
  %1692 = vmatprep.subr.bf16.mxu0 0
  %1693 = vmatpush1.bf16.msra.mxu0 0
  %1694 = vmatprep.subr.bf16.mxu0 0
  %1695 = vmatpush1.bf16.msra.mxu0 0
  %1696 = vmatprep.subr.bf16.mxu0 0
  %1697 = vmatpush1.bf16.msra.mxu0 0
  %1698 = vmatprep.subr.bf16.mxu0 0
  %1699 = vmatpush1.bf16.msra.mxu0 0
  %1700 = vmatprep.subr.bf16.mxu0 0
  %1701 = vmatpush1.bf16.msra.mxu0 0
  %1702 = vmatprep.subr.bf16.mxu0 0
  %1703 = vmatpush1.bf16.msra.mxu0 0
  %1704 = vmatprep.subr.bf16.mxu0 0
  %1705 = vmatpush1.bf16.msra.mxu0 0
  %1706 = vmatprep.subr.bf16.mxu0 0
  %1707 = vmatpush1.bf16.msra.mxu0 0
  %1708 = vmatprep.subr.bf16.mxu0 0
  %1709 = vmatpush1.bf16.msra.mxu0 0
  %1710 = vmatprep.mubr.bf16.mxu0 0
  %1711 = vmatmul.mubr.bf16.gmra.mrb[0].mxu0 %v373
  %v1712 = vpop.f32.mrb[0].mxu0
  %v1713 = vadd.f32 0.0, %v1712
  %v1714 = vpop.f32.mrb[0].mxu0
  %v1715 = vadd.f32 0.0, %v1714
  %v1716 = vpop.f32.mrb[0].mxu0
  %v1717 = vpop.f32.mrb[0].mxu0
  %1718 = vdwg.mxu0
  %1719 = vmatprep.subr.bf16.mxu0 %v551
  %1720 = vmatpush1.bf16.msra.mxu0 %v548
  %1721 = vmatprep.subr.bf16.mxu0 0
  %1722 = vmatpush1.bf16.msra.mxu0 0
  %1723 = vmatprep.subr.bf16.mxu0 0
  %1724 = vmatpush1.bf16.msra.mxu0 0
  %1725 = vmatprep.subr.bf16.mxu0 0
  %1726 = vmatpush1.bf16.msra.mxu0 0
  %1727 = vmatprep.subr.bf16.mxu0 0
  %1728 = vmatpush1.bf16.msra.mxu0 0
  %1729 = vmatprep.subr.bf16.mxu0 0
  %1730 = vmatpush1.bf16.msra.mxu0 0
  %1731 = vmatprep.subr.bf16.mxu0 0
  %1732 = vmatpush1.bf16.msra.mxu0 0
  %1733 = vmatprep.subr.bf16.mxu0 0
  %1734 = vmatpush1.bf16.msra.mxu0 0
  %1735 = vmatprep.subr.bf16.mxu0 0
  %1736 = vmatpush1.bf16.msra.mxu0 0
  %1737 = vmatprep.subr.bf16.mxu0 0
  %1738 = vmatpush1.bf16.msra.mxu0 0
  %1739 = vmatprep.subr.bf16.mxu0 0
  %1740 = vmatpush1.bf16.msra.mxu0 0
  %1741 = vmatprep.subr.bf16.mxu0 0
  %1742 = vmatpush1.bf16.msra.mxu0 0
  %1743 = vmatprep.subr.bf16.mxu0 0
  %1744 = vmatpush1.bf16.msra.mxu0 0
  %1745 = vmatprep.subr.bf16.mxu0 0
  %1746 = vmatpush1.bf16.msra.mxu0 0
  %1747 = vmatprep.subr.bf16.mxu0 0
  %1748 = vmatpush1.bf16.msra.mxu0 0
  %1749 = vmatprep.subr.bf16.mxu0 0
  %1750 = vmatpush1.bf16.msra.mxu0 0
  %1751 = vmatprep.mubr.bf16.mxu0 0
  %1752 = vmatmul.mubr.bf16.gmra.mrb[0].mxu0 %v373
  %v1753 = vpop.f32.mrb[0].mxu0
  %v1754 = vadd.f32 0.0, %v1753
  %v1755 = vpop.f32.mrb[0].mxu0
  %v1756 = vadd.f32 0.0, %v1755
  %v1757 = vpop.f32.mrb[0].mxu0
  %v1758 = vpop.f32.mrb[0].mxu0
  %1759 = vdwg.mxu0
  %1760 = vmatprep.subr.bf16.mxu0 %v557
  %1761 = vmatpush1.bf16.msra.mxu0 %v554
  %1762 = vmatprep.subr.bf16.mxu0 0
  %1763 = vmatpush1.bf16.msra.mxu0 0
  %1764 = vmatprep.subr.bf16.mxu0 0
  %1765 = vmatpush1.bf16.msra.mxu0 0
  %1766 = vmatprep.subr.bf16.mxu0 0
  %1767 = vmatpush1.bf16.msra.mxu0 0
  %1768 = vmatprep.subr.bf16.mxu0 0
  %1769 = vmatpush1.bf16.msra.mxu0 0
  %1770 = vmatprep.subr.bf16.mxu0 0
  %1771 = vmatpush1.bf16.msra.mxu0 0
  %1772 = vmatprep.subr.bf16.mxu0 0
  %1773 = vmatpush1.bf16.msra.mxu0 0
  %1774 = vmatprep.subr.bf16.mxu0 0
  %1775 = vmatpush1.bf16.msra.mxu0 0
  %1776 = vmatprep.subr.bf16.mxu0 0
  %1777 = vmatpush1.bf16.msra.mxu0 0
  %1778 = vmatprep.subr.bf16.mxu0 0
  %1779 = vmatpush1.bf16.msra.mxu0 0
  %1780 = vmatprep.subr.bf16.mxu0 0
  %1781 = vmatpush1.bf16.msra.mxu0 0
  %1782 = vmatprep.subr.bf16.mxu0 0
  %1783 = vmatpush1.bf16.msra.mxu0 0
  %1784 = vmatprep.subr.bf16.mxu0 0
  %1785 = vmatpush1.bf16.msra.mxu0 0
  %1786 = vmatprep.subr.bf16.mxu0 0
  %1787 = vmatpush1.bf16.msra.mxu0 0
  %1788 = vmatprep.subr.bf16.mxu0 0
  %1789 = vmatpush1.bf16.msra.mxu0 0
  %1790 = vmatprep.subr.bf16.mxu0 0
  %1791 = vmatpush1.bf16.msra.mxu0 0
  %1792 = vmatprep.mubr.bf16.mxu0 0
  %1793 = vmatmul.mubr.bf16.gmra.mrb[0].mxu0 %v373
  %v1794 = vpop.f32.mrb[0].mxu0
  %v1795 = vadd.f32 0.0, %v1794
  %v1796 = vpop.f32.mrb[0].mxu0
  %v1797 = vadd.f32 0.0, %v1796
  %v1798 = vpop.f32.mrb[0].mxu0
  %v1799 = vpop.f32.mrb[0].mxu0
  %1800 = vdwg.mxu0
  %1801 = vmatprep.subr.bf16.mxu0 %v563
  %1802 = vmatpush1.bf16.msra.mxu0 %v560
  %1803 = vmatprep.subr.bf16.mxu0 0
  %1804 = vmatpush1.bf16.msra.mxu0 0
  %1805 = vmatprep.subr.bf16.mxu0 0
  %1806 = vmatpush1.bf16.msra.mxu0 0
  %1807 = vmatprep.subr.bf16.mxu0 0
  %1808 = vmatpush1.bf16.msra.mxu0 0
  %1809 = vmatprep.subr.bf16.mxu0 0
  %1810 = vmatpush1.bf16.msra.mxu0 0
  %1811 = vmatprep.subr.bf16.mxu0 0
  %1812 = vmatpush1.bf16.msra.mxu0 0
  %1813 = vmatprep.subr.bf16.mxu0 0
  %1814 = vmatpush1.bf16.msra.mxu0 0
  %1815 = vmatprep.subr.bf16.mxu0 0
  %1816 = vmatpush1.bf16.msra.mxu0 0
  %1817 = vmatprep.subr.bf16.mxu0 0
  %1818 = vmatpush1.bf16.msra.mxu0 0
  %1819 = vmatprep.subr.bf16.mxu0 0
  %1820 = vmatpush1.bf16.msra.mxu0 0
  %1821 = vmatprep.subr.bf16.mxu0 0
  %1822 = vmatpush1.bf16.msra.mxu0 0
  %1823 = vmatprep.subr.bf16.mxu0 0
  %1824 = vmatpush1.bf16.msra.mxu0 0
  %1825 = vmatprep.subr.bf16.mxu0 0
  %1826 = vmatpush1.bf16.msra.mxu0 0
  %1827 = vmatprep.subr.bf16.mxu0 0
  %1828 = vmatpush1.bf16.msra.mxu0 0
  %1829 = vmatprep.subr.bf16.mxu0 0
  %1830 = vmatpush1.bf16.msra.mxu0 0
  %1831 = vmatprep.subr.bf16.mxu0 0
  %1832 = vmatpush1.bf16.msra.mxu0 0
  %1833 = vmatprep.mubr.bf16.mxu0 0
  %1834 = vmatmul.mubr.bf16.gmra.mrb[0].mxu0 %v373
  %v1835 = vpop.f32.mrb[0].mxu0
  %v1836 = vadd.f32 0.0, %v1835
  %v1837 = vpop.f32.mrb[0].mxu0
  %v1838 = vadd.f32 0.0, %v1837
  %v1839 = vpop.f32.mrb[0].mxu0
  %v1840 = vpop.f32.mrb[0].mxu0
  %1841 = vdwg.mxu0
  %1842 = vmatprep.subr.bf16.mxu0 %v569
  %1843 = vmatpush1.bf16.msra.mxu0 %v566
  %1844 = vmatprep.subr.bf16.mxu0 0
  %1845 = vmatpush1.bf16.msra.mxu0 0
  %1846 = vmatprep.subr.bf16.mxu0 0
  %1847 = vmatpush1.bf16.msra.mxu0 0
  %1848 = vmatprep.subr.bf16.mxu0 0
  %1849 = vmatpush1.bf16.msra.mxu0 0
  %1850 = vmatprep.subr.bf16.mxu0 0
  %1851 = vmatpush1.bf16.msra.mxu0 0
  %1852 = vmatprep.subr.bf16.mxu0 0
  %1853 = vmatpush1.bf16.msra.mxu0 0
  %1854 = vmatprep.subr.bf16.mxu0 0
  %1855 = vmatpush1.bf16.msra.mxu0 0
  %1856 = vmatprep.subr.bf16.mxu0 0
  %1857 = vmatpush1.bf16.msra.mxu0 0
  %1858 = vmatprep.subr.bf16.mxu0 0
  %1859 = vmatpush1.bf16.msra.mxu0 0
  %1860 = vmatprep.subr.bf16.mxu0 0
  %1861 = vmatpush1.bf16.msra.mxu0 0
  %1862 = vmatprep.subr.bf16.mxu0 0
  %1863 = vmatpush1.bf16.msra.mxu0 0
  %1864 = vmatprep.subr.bf16.mxu0 0
  %1865 = vmatpush1.bf16.msra.mxu0 0
  %1866 = vmatprep.subr.bf16.mxu0 0
  %1867 = vmatpush1.bf16.msra.mxu0 0
  %1868 = vmatprep.subr.bf16.mxu0 0
  %1869 = vmatpush1.bf16.msra.mxu0 0
  %1870 = vmatprep.subr.bf16.mxu0 0
  %1871 = vmatpush1.bf16.msra.mxu0 0
  %1872 = vmatprep.subr.bf16.mxu0 0
  %1873 = vmatpush1.bf16.msra.mxu0 0
  %1874 = vmatprep.mubr.bf16.mxu0 0
  %1875 = vmatmul.mubr.bf16.gmra.mrb[0].mxu0 %v373
  %v1876 = vpop.f32.mrb[0].mxu0
  %v1877 = vadd.f32 0.0, %v1876
  %v1878 = vpop.f32.mrb[0].mxu0
  %v1879 = vadd.f32 0.0, %v1878
  %v1880 = vpop.f32.mrb[0].mxu0
  %v1881 = vpop.f32.mrb[0].mxu0
  %1882 = vdwg.mxu0
  %v1899 = vcombine.high %v15, %v15
  %v1901 = vunpack.c.l.s4 1983009808
  %v1902 = vunpack.c.0.s8 %v1901
  %v1903 = vlaneseq
  %v1904 = vshrl.u32 %v1903, 7
  %v1905 = vsub.s32 %v1902, %v1904
  %v1906 = vrot.slane %v15, %v1905
  %v1908 = vunpack.c.l.s4 1983009808
  %v1909 = vunpack.c.0.s8 %v1908
  %v1910 = vlaneseq
  %v1911 = vshrl.u32 %v1910, 7
  %v1912 = vsub.s32 %v1909, %v1911
  %v1913 = vrot.slane %v1899, %v1912
  %v1914 = vcombine.high %v1906, %v1906
  %v1915 = vcombine.high %v1913, %v1913
  %v1916 = vcombine.high %v16, %v16
  %v1918 = vunpack.c.l.s4 1983009808
  %v1919 = vunpack.c.0.s8 %v1918
  %v1920 = vlaneseq
  %v1921 = vshrl.u32 %v1920, 7
  %v1922 = vsub.s32 %v1919, %v1921
  %v1923 = vrot.slane %v16, %v1922
  %v1925 = vunpack.c.l.s4 1983009808
  %v1926 = vunpack.c.0.s8 %v1925
  %v1927 = vlaneseq
  %v1928 = vshrl.u32 %v1927, 7
  %v1929 = vsub.s32 %v1926, %v1928
  %v1930 = vrot.slane %v1916, %v1929
  %v1931 = vcombine.high %v1923, %v1923
  %v1932 = vcombine.high %v1930, %v1930
  %v1933 = vcombine.high %v17, %v17
  %v1935 = vunpack.c.l.s4 1983009808
  %v1936 = vunpack.c.0.s8 %v1935
  %v1937 = vlaneseq
  %v1938 = vshrl.u32 %v1937, 7
  %v1939 = vsub.s32 %v1936, %v1938
  %v1940 = vrot.slane %v17, %v1939
  %v1942 = vunpack.c.l.s4 1983009808
  %v1943 = vunpack.c.0.s8 %v1942
  %v1944 = vlaneseq
  %v1945 = vshrl.u32 %v1944, 7
  %v1946 = vsub.s32 %v1943, %v1945
  %v1947 = vrot.slane %v1933, %v1946
  %v1948 = vcombine.high %v1940, %v1940
  %v1949 = vcombine.high %v1947, %v1947
  %v1950 = vcombine.high %v18, %v18
  %v1952 = vunpack.c.l.s4 1983009808
  %v1953 = vunpack.c.0.s8 %v1952
  %v1954 = vlaneseq
  %v1955 = vshrl.u32 %v1954, 7
  %v1956 = vsub.s32 %v1953, %v1955
  %v1957 = vrot.slane %v18, %v1956
  %v1959 = vunpack.c.l.s4 1983009808
  %v1960 = vunpack.c.0.s8 %v1959
  %v1961 = vlaneseq
  %v1962 = vshrl.u32 %v1961, 7
  %v1963 = vsub.s32 %v1960, %v1962
  %v1964 = vrot.slane %v1950, %v1963
  %v1965 = vcombine.high %v1957, %v1957
  %v1966 = vcombine.high %v1964, %v1964
  %v1967 = vcombine.high %v19, %v19
  %v1969 = vunpack.c.l.s4 1983009808
  %v1970 = vunpack.c.0.s8 %v1969
  %v1971 = vlaneseq
  %v1972 = vshrl.u32 %v1971, 7
  %v1973 = vsub.s32 %v1970, %v1972
  %v1974 = vrot.slane %v19, %v1973
  %v1976 = vunpack.c.l.s4 1983009808
  %v1977 = vunpack.c.0.s8 %v1976
  %v1978 = vlaneseq
  %v1979 = vshrl.u32 %v1978, 7
  %v1980 = vsub.s32 %v1977, %v1979
  %v1981 = vrot.slane %v1967, %v1980
  %v1982 = vcombine.high %v1974, %v1974
  %v1983 = vcombine.high %v1981, %v1981
  %v1984 = vcombine.high %v20, %v20
  %v1986 = vunpack.c.l.s4 1983009808
  %v1987 = vunpack.c.0.s8 %v1986
  %v1988 = vlaneseq
  %v1989 = vshrl.u32 %v1988, 7
  %v1990 = vsub.s32 %v1987, %v1989
  %v1991 = vrot.slane %v20, %v1990
  %v1993 = vunpack.c.l.s4 1983009808
  %v1994 = vunpack.c.0.s8 %v1993
  %v1995 = vlaneseq
  %v1996 = vshrl.u32 %v1995, 7
  %v1997 = vsub.s32 %v1994, %v1996
  %v1998 = vrot.slane %v1984, %v1997
  %v1999 = vcombine.high %v1991, %v1991
  %v2000 = vcombine.high %v1998, %v1998
  %v2001 = vcombine.high %v21, %v21
  %v2003 = vunpack.c.l.s4 1983009808
  %v2004 = vunpack.c.0.s8 %v2003
  %v2005 = vlaneseq
  %v2006 = vshrl.u32 %v2005, 7
  %v2007 = vsub.s32 %v2004, %v2006
  %v2008 = vrot.slane %v21, %v2007
  %v2010 = vunpack.c.l.s4 1983009808
  %v2011 = vunpack.c.0.s8 %v2010
  %v2012 = vlaneseq
  %v2013 = vshrl.u32 %v2012, 7
  %v2014 = vsub.s32 %v2011, %v2013
  %v2015 = vrot.slane %v2001, %v2014
  %v2016 = vcombine.high %v2008, %v2008
  %v2017 = vcombine.high %v2015, %v2015
  %v2018 = vcombine.high %v22, %v22
  %v2020 = vunpack.c.l.s4 1983009808
  %v2021 = vunpack.c.0.s8 %v2020
  %v2022 = vlaneseq
  %v2023 = vshrl.u32 %v2022, 7
  %v2024 = vsub.s32 %v2021, %v2023
  %v2025 = vrot.slane %v22, %v2024
  %v2027 = vunpack.c.l.s4 1983009808
  %v2028 = vunpack.c.0.s8 %v2027
  %v2029 = vlaneseq
  %v2030 = vshrl.u32 %v2029, 7
  %v2031 = vsub.s32 %v2028, %v2030
  %v2032 = vrot.slane %v2018, %v2031
  %v2033 = vcombine.high %v2025, %v2025
  %v2034 = vcombine.high %v2032, %v2032
  %v2035 = vcombine.high %v23, %v23
  %v2037 = vunpack.c.l.s4 1983009808
  %v2038 = vunpack.c.0.s8 %v2037
  %v2039 = vlaneseq
  %v2040 = vshrl.u32 %v2039, 7
  %v2041 = vsub.s32 %v2038, %v2040
  %v2042 = vrot.slane %v23, %v2041
  %v2044 = vunpack.c.l.s4 1983009808
  %v2045 = vunpack.c.0.s8 %v2044
  %v2046 = vlaneseq
  %v2047 = vshrl.u32 %v2046, 7
  %v2048 = vsub.s32 %v2045, %v2047
  %v2049 = vrot.slane %v2035, %v2048
  %v2050 = vcombine.high %v2042, %v2042
  %v2051 = vcombine.high %v2049, %v2049
  %v2052 = vcombine.high %v24, %v24
  %v2054 = vunpack.c.l.s4 1983009808
  %v2055 = vunpack.c.0.s8 %v2054
  %v2056 = vlaneseq
  %v2057 = vshrl.u32 %v2056, 7
  %v2058 = vsub.s32 %v2055, %v2057
  %v2059 = vrot.slane %v24, %v2058
  %v2061 = vunpack.c.l.s4 1983009808
  %v2062 = vunpack.c.0.s8 %v2061
  %v2063 = vlaneseq
  %v2064 = vshrl.u32 %v2063, 7
  %v2065 = vsub.s32 %v2062, %v2064
  %v2066 = vrot.slane %v2052, %v2065
  %v2067 = vcombine.high %v2059, %v2059
  %v2068 = vcombine.high %v2066, %v2066
  %v2069 = vcombine.high %v25, %v25
  %v2071 = vunpack.c.l.s4 1983009808
  %v2072 = vunpack.c.0.s8 %v2071
  %v2073 = vlaneseq
  %v2074 = vshrl.u32 %v2073, 7
  %v2075 = vsub.s32 %v2072, %v2074
  %v2076 = vrot.slane %v25, %v2075
  %v2078 = vunpack.c.l.s4 1983009808
  %v2079 = vunpack.c.0.s8 %v2078
  %v2080 = vlaneseq
  %v2081 = vshrl.u32 %v2080, 7
  %v2082 = vsub.s32 %v2079, %v2081
  %v2083 = vrot.slane %v2069, %v2082
  %v2084 = vcombine.high %v2076, %v2076
  %v2085 = vcombine.high %v2083, %v2083
  %v2086 = vcombine.high %v26, %v26
  %v2088 = vunpack.c.l.s4 1983009808
  %v2089 = vunpack.c.0.s8 %v2088
  %v2090 = vlaneseq
  %v2091 = vshrl.u32 %v2090, 7
  %v2092 = vsub.s32 %v2089, %v2091
  %v2093 = vrot.slane %v26, %v2092
  %v2095 = vunpack.c.l.s4 1983009808
  %v2096 = vunpack.c.0.s8 %v2095
  %v2097 = vlaneseq
  %v2098 = vshrl.u32 %v2097, 7
  %v2099 = vsub.s32 %v2096, %v2098
  %v2100 = vrot.slane %v2086, %v2099
  %v2101 = vcombine.high %v2093, %v2093
  %v2102 = vcombine.high %v2100, %v2100
  %v2103 = vcombine.high %v27, %v27
  %v2105 = vunpack.c.l.s4 1983009808
  %v2106 = vunpack.c.0.s8 %v2105
  %v2107 = vlaneseq
  %v2108 = vshrl.u32 %v2107, 7
  %v2109 = vsub.s32 %v2106, %v2108
  %v2110 = vrot.slane %v27, %v2109
  %v2112 = vunpack.c.l.s4 1983009808
  %v2113 = vunpack.c.0.s8 %v2112
  %v2114 = vlaneseq
  %v2115 = vshrl.u32 %v2114, 7
  %v2116 = vsub.s32 %v2113, %v2115
  %v2117 = vrot.slane %v2103, %v2116
  %v2118 = vcombine.high %v2110, %v2110
  %v2119 = vcombine.high %v2117, %v2117
  %v2120 = vcombine.high %v28, %v28
  %v2122 = vunpack.c.l.s4 1983009808
  %v2123 = vunpack.c.0.s8 %v2122
  %v2124 = vlaneseq
  %v2125 = vshrl.u32 %v2124, 7
  %v2126 = vsub.s32 %v2123, %v2125
  %v2127 = vrot.slane %v28, %v2126
  %v2129 = vunpack.c.l.s4 1983009808
  %v2130 = vunpack.c.0.s8 %v2129
  %v2131 = vlaneseq
  %v2132 = vshrl.u32 %v2131, 7
  %v2133 = vsub.s32 %v2130, %v2132
  %v2134 = vrot.slane %v2120, %v2133
  %v2135 = vcombine.high %v2127, %v2127
  %v2136 = vcombine.high %v2134, %v2134
  %v2137 = vcombine.high %v29, %v29
  %v2139 = vunpack.c.l.s4 1983009808
  %v2140 = vunpack.c.0.s8 %v2139
  %v2141 = vlaneseq
  %v2142 = vshrl.u32 %v2141, 7
  %v2143 = vsub.s32 %v2140, %v2142
  %v2144 = vrot.slane %v29, %v2143
  %v2146 = vunpack.c.l.s4 1983009808
  %v2147 = vunpack.c.0.s8 %v2146
  %v2148 = vlaneseq
  %v2149 = vshrl.u32 %v2148, 7
  %v2150 = vsub.s32 %v2147, %v2149
  %v2151 = vrot.slane %v2137, %v2150
  %v2152 = vcombine.high %v2144, %v2144
  %v2153 = vcombine.high %v2151, %v2151
  %v2154 = vcombine.high %v30, %v30
  %v2156 = vunpack.c.l.s4 1983009808
  %v2157 = vunpack.c.0.s8 %v2156
  %v2158 = vlaneseq
  %v2159 = vshrl.u32 %v2158, 7
  %v2160 = vsub.s32 %v2157, %v2159
  %v2161 = vrot.slane %v30, %v2160
  %v2163 = vunpack.c.l.s4 1983009808
  %v2164 = vunpack.c.0.s8 %v2163
  %v2165 = vlaneseq
  %v2166 = vshrl.u32 %v2165, 7
  %v2167 = vsub.s32 %v2164, %v2166
  %v2168 = vrot.slane %v2154, %v2167
  %v2169 = vcombine.high %v2161, %v2161
  %v2170 = vcombine.high %v2168, %v2168
  %v2172 = vsel %vm371, %v79, 0
  %v2175 = vand.u32 %v1906, %v378
  %v2178 = vand.u32 %v1914, %v378
  %v2181 = vand.u32 %v1913, %v378
  %v2184 = vand.u32 %v1915, %v378
  %v2187 = vand.u32 %v1923, %v378
  %v2190 = vand.u32 %v1931, %v378
  %v2193 = vand.u32 %v1930, %v378
  %v2196 = vand.u32 %v1932, %v378
  %v2199 = vand.u32 %v1940, %v378
  %v2202 = vand.u32 %v1948, %v378
  %v2205 = vand.u32 %v1947, %v378
  %v2208 = vand.u32 %v1949, %v378
  %v2211 = vand.u32 %v1957, %v378
  %v2214 = vand.u32 %v1965, %v378
  %v2217 = vand.u32 %v1964, %v378
  %v2220 = vand.u32 %v1966, %v378
  %v2223 = vand.u32 %v1974, %v378
  %v2226 = vand.u32 %v1982, %v378
  %v2229 = vand.u32 %v1981, %v378
  %v2232 = vand.u32 %v1983, %v378
  %v2235 = vand.u32 %v1991, %v378
  %v2238 = vand.u32 %v1999, %v378
  %v2241 = vand.u32 %v1998, %v378
  %v2244 = vand.u32 %v2000, %v378
  %v2247 = vand.u32 %v2008, %v378
  %v2250 = vand.u32 %v2016, %v378
  %v2253 = vand.u32 %v2015, %v378
  %v2256 = vand.u32 %v2017, %v378
  %v2259 = vand.u32 %v2025, %v378
  %v2262 = vand.u32 %v2033, %v378
  %v2265 = vand.u32 %v2032, %v378
  %v2268 = vand.u32 %v2034, %v378
  %v2271 = vand.u32 %v2042, %v378
  %v2274 = vand.u32 %v2050, %v378
  %v2277 = vand.u32 %v2049, %v378
  %v2280 = vand.u32 %v2051, %v378
  %v2283 = vand.u32 %v2059, %v378
  %v2286 = vand.u32 %v2067, %v378
  %v2289 = vand.u32 %v2066, %v378
  %v2292 = vand.u32 %v2068, %v378
  %v2295 = vand.u32 %v2076, %v378
  %v2298 = vand.u32 %v2084, %v378
  %v2301 = vand.u32 %v2083, %v378
  %v2304 = vand.u32 %v2085, %v378
  %v2307 = vand.u32 %v2093, %v378
  %v2310 = vand.u32 %v2101, %v378
  %v2313 = vand.u32 %v2100, %v378
  %v2316 = vand.u32 %v2102, %v378
  %v2319 = vand.u32 %v2110, %v378
  %v2322 = vand.u32 %v2118, %v378
  %v2325 = vand.u32 %v2117, %v378
  %v2328 = vand.u32 %v2119, %v378
  %v2331 = vand.u32 %v2127, %v378
  %v2334 = vand.u32 %v2135, %v378
  %v2337 = vand.u32 %v2134, %v378
  %v2340 = vand.u32 %v2136, %v378
  %v2343 = vand.u32 %v2144, %v378
  %v2346 = vand.u32 %v2152, %v378
  %v2349 = vand.u32 %v2151, %v378
  %v2352 = vand.u32 %v2153, %v378
  %v2355 = vand.u32 %v2161, %v378
  %v2358 = vand.u32 %v2169, %v378
  %v2361 = vand.u32 %v2168, %v378
  %v2364 = vand.u32 %v2170, %v378
  %2366 = vmatprep.subr.bf16.mxu0 %v2178
  %2367 = vmatpush1.bf16.msra.mxu0 %v2175
  %2368 = vmatprep.subr.bf16.mxu0 0
  %2369 = vmatpush1.bf16.msra.mxu0 0
  %2370 = vmatprep.subr.bf16.mxu0 0
  %2371 = vmatpush1.bf16.msra.mxu0 0
  %2372 = vmatprep.subr.bf16.mxu0 0
  %2373 = vmatpush1.bf16.msra.mxu0 0
  %2374 = vmatprep.subr.bf16.mxu0 0
  %2375 = vmatpush1.bf16.msra.mxu0 0
  %2376 = vmatprep.subr.bf16.mxu0 0
  %2377 = vmatpush1.bf16.msra.mxu0 0
  %2378 = vmatprep.subr.bf16.mxu0 0
  %2379 = vmatpush1.bf16.msra.mxu0 0
  %2380 = vmatprep.subr.bf16.mxu0 0
  %2381 = vmatpush1.bf16.msra.mxu0 0
  %2382 = vmatprep.subr.bf16.mxu0 0
  %2383 = vmatpush1.bf16.msra.mxu0 0
  %2384 = vmatprep.subr.bf16.mxu0 0
  %2385 = vmatpush1.bf16.msra.mxu0 0
  %2386 = vmatprep.subr.bf16.mxu0 0
  %2387 = vmatpush1.bf16.msra.mxu0 0
  %2388 = vmatprep.subr.bf16.mxu0 0
  %2389 = vmatpush1.bf16.msra.mxu0 0
  %2390 = vmatprep.subr.bf16.mxu0 0
  %2391 = vmatpush1.bf16.msra.mxu0 0
  %2392 = vmatprep.subr.bf16.mxu0 0
  %2393 = vmatpush1.bf16.msra.mxu0 0
  %2394 = vmatprep.subr.bf16.mxu0 0
  %2395 = vmatpush1.bf16.msra.mxu0 0
  %2396 = vmatprep.subr.bf16.mxu0 0
  %2397 = vmatpush1.bf16.msra.mxu0 0
  %2398 = vmatprep.mubr.bf16.mxu0 0
  %2399 = vmatmul.mubr.bf16.gmra.mrb[0].mxu0 %v2172
  %v2400 = vpop.f32.mrb[0].mxu0
  %v2401 = vadd.f32 %v606, %v2400
  %v2402 = vpop.f32.mrb[0].mxu0
  %v2403 = vadd.f32 %v608, %v2402
  %v2404 = vpop.f32.mrb[0].mxu0
  %v2405 = vpop.f32.mrb[0].mxu0
  %2406 = vdwg.mxu0
  %2407 = vmatprep.subr.bf16.mxu0 %v2184
  %2408 = vmatpush1.bf16.msra.mxu0 %v2181
  %2409 = vmatprep.subr.bf16.mxu0 0
  %2410 = vmatpush1.bf16.msra.mxu0 0
  %2411 = vmatprep.subr.bf16.mxu0 0
  %2412 = vmatpush1.bf16.msra.mxu0 0
  %2413 = vmatprep.subr.bf16.mxu0 0
  %2414 = vmatpush1.bf16.msra.mxu0 0
  %2415 = vmatprep.subr.bf16.mxu0 0
  %2416 = vmatpush1.bf16.msra.mxu0 0
  %2417 = vmatprep.subr.bf16.mxu0 0
  %2418 = vmatpush1.bf16.msra.mxu0 0
  %2419 = vmatprep.subr.bf16.mxu0 0
  %2420 = vmatpush1.bf16.msra.mxu0 0
  %2421 = vmatprep.subr.bf16.mxu0 0
  %2422 = vmatpush1.bf16.msra.mxu0 0
  %2423 = vmatprep.subr.bf16.mxu0 0
  %2424 = vmatpush1.bf16.msra.mxu0 0
  %2425 = vmatprep.subr.bf16.mxu0 0
  %2426 = vmatpush1.bf16.msra.mxu0 0
  %2427 = vmatprep.subr.bf16.mxu0 0
  %2428 = vmatpush1.bf16.msra.mxu0 0
  %2429 = vmatprep.subr.bf16.mxu0 0
  %2430 = vmatpush1.bf16.msra.mxu0 0
  %2431 = vmatprep.subr.bf16.mxu0 0
  %2432 = vmatpush1.bf16.msra.mxu0 0
  %2433 = vmatprep.subr.bf16.mxu0 0
  %2434 = vmatpush1.bf16.msra.mxu0 0
  %2435 = vmatprep.subr.bf16.mxu0 0
  %2436 = vmatpush1.bf16.msra.mxu0 0
  %2437 = vmatprep.subr.bf16.mxu0 0
  %2438 = vmatpush1.bf16.msra.mxu0 0
  %2439 = vmatprep.mubr.bf16.mxu0 0
  %2440 = vmatmul.mubr.bf16.gmra.mrb[0].mxu0 %v2172
  %v2441 = vpop.f32.mrb[0].mxu0
  %v2442 = vadd.f32 %v647, %v2441
  %v2443 = vpop.f32.mrb[0].mxu0
  %v2444 = vadd.f32 %v649, %v2443
  %v2445 = vpop.f32.mrb[0].mxu0
  %v2446 = vpop.f32.mrb[0].mxu0
  %2447 = vdwg.mxu0
  %2448 = vmatprep.subr.bf16.mxu0 %v2190
  %2449 = vmatpush1.bf16.msra.mxu0 %v2187
  %2450 = vmatprep.subr.bf16.mxu0 0
  %2451 = vmatpush1.bf16.msra.mxu0 0
  %2452 = vmatprep.subr.bf16.mxu0 0
  %2453 = vmatpush1.bf16.msra.mxu0 0
  %2454 = vmatprep.subr.bf16.mxu0 0
  %2455 = vmatpush1.bf16.msra.mxu0 0
  %2456 = vmatprep.subr.bf16.mxu0 0
  %2457 = vmatpush1.bf16.msra.mxu0 0
  %2458 = vmatprep.subr.bf16.mxu0 0
  %2459 = vmatpush1.bf16.msra.mxu0 0
  %2460 = vmatprep.subr.bf16.mxu0 0
  %2461 = vmatpush1.bf16.msra.mxu0 0
  %2462 = vmatprep.subr.bf16.mxu0 0
  %2463 = vmatpush1.bf16.msra.mxu0 0
  %2464 = vmatprep.subr.bf16.mxu0 0
  %2465 = vmatpush1.bf16.msra.mxu0 0
  %2466 = vmatprep.subr.bf16.mxu0 0
  %2467 = vmatpush1.bf16.msra.mxu0 0
  %2468 = vmatprep.subr.bf16.mxu0 0
  %2469 = vmatpush1.bf16.msra.mxu0 0
  %2470 = vmatprep.subr.bf16.mxu0 0
  %2471 = vmatpush1.bf16.msra.mxu0 0
  %2472 = vmatprep.subr.bf16.mxu0 0
  %2473 = vmatpush1.bf16.msra.mxu0 0
  %2474 = vmatprep.subr.bf16.mxu0 0
  %2475 = vmatpush1.bf16.msra.mxu0 0
  %2476 = vmatprep.subr.bf16.mxu0 0
  %2477 = vmatpush1.bf16.msra.mxu0 0
  %2478 = vmatprep.subr.bf16.mxu0 0
  %2479 = vmatpush1.bf16.msra.mxu0 0
  %2480 = vmatprep.mubr.bf16.mxu0 0
  %2481 = vmatmul.mubr.bf16.gmra.mrb[0].mxu0 %v2172
  %v2482 = vpop.f32.mrb[0].mxu0
  %v2483 = vadd.f32 %v688, %v2482
  %v2484 = vpop.f32.mrb[0].mxu0
  %v2485 = vadd.f32 %v690, %v2484
  %v2486 = vpop.f32.mrb[0].mxu0
  %v2487 = vpop.f32.mrb[0].mxu0
  %2488 = vdwg.mxu0
  %2489 = vmatprep.subr.bf16.mxu0 %v2196
  %2490 = vmatpush1.bf16.msra.mxu0 %v2193
  %2491 = vmatprep.subr.bf16.mxu0 0
  %2492 = vmatpush1.bf16.msra.mxu0 0
  %2493 = vmatprep.subr.bf16.mxu0 0
  %2494 = vmatpush1.bf16.msra.mxu0 0
  %2495 = vmatprep.subr.bf16.mxu0 0
  %2496 = vmatpush1.bf16.msra.mxu0 0
  %2497 = vmatprep.subr.bf16.mxu0 0
  %2498 = vmatpush1.bf16.msra.mxu0 0
  %2499 = vmatprep.subr.bf16.mxu0 0
  %2500 = vmatpush1.bf16.msra.mxu0 0
  %2501 = vmatprep.subr.bf16.mxu0 0
  %2502 = vmatpush1.bf16.msra.mxu0 0
  %2503 = vmatprep.subr.bf16.mxu0 0
  %2504 = vmatpush1.bf16.msra.mxu0 0
  %2505 = vmatprep.subr.bf16.mxu0 0
  %2506 = vmatpush1.bf16.msra.mxu0 0
  %2507 = vmatprep.subr.bf16.mxu0 0
  %2508 = vmatpush1.bf16.msra.mxu0 0
  %2509 = vmatprep.subr.bf16.mxu0 0
  %2510 = vmatpush1.bf16.msra.mxu0 0
  %2511 = vmatprep.subr.bf16.mxu0 0
  %2512 = vmatpush1.bf16.msra.mxu0 0
  %2513 = vmatprep.subr.bf16.mxu0 0
  %2514 = vmatpush1.bf16.msra.mxu0 0
  %2515 = vmatprep.subr.bf16.mxu0 0
  %2516 = vmatpush1.bf16.msra.mxu0 0
  %2517 = vmatprep.subr.bf16.mxu0 0
  %2518 = vmatpush1.bf16.msra.mxu0 0
  %2519 = vmatprep.subr.bf16.mxu0 0
  %2520 = vmatpush1.bf16.msra.mxu0 0
  %2521 = vmatprep.mubr.bf16.mxu0 0
  %2522 = vmatmul.mubr.bf16.gmra.mrb[0].mxu0 %v2172
  %v2523 = vpop.f32.mrb[0].mxu0
  %v2524 = vadd.f32 %v729, %v2523
  %v2525 = vpop.f32.mrb[0].mxu0
  %v2526 = vadd.f32 %v731, %v2525
  %v2527 = vpop.f32.mrb[0].mxu0
  %v2528 = vpop.f32.mrb[0].mxu0
  %2529 = vdwg.mxu0
  %2530 = vmatprep.subr.bf16.mxu0 %v2202
  %2531 = vmatpush1.bf16.msra.mxu0 %v2199
  %2532 = vmatprep.subr.bf16.mxu0 0
  %2533 = vmatpush1.bf16.msra.mxu0 0
  %2534 = vmatprep.subr.bf16.mxu0 0
  %2535 = vmatpush1.bf16.msra.mxu0 0
  %2536 = vmatprep.subr.bf16.mxu0 0
  %2537 = vmatpush1.bf16.msra.mxu0 0
  %2538 = vmatprep.subr.bf16.mxu0 0
  %2539 = vmatpush1.bf16.msra.mxu0 0
  %2540 = vmatprep.subr.bf16.mxu0 0
  %2541 = vmatpush1.bf16.msra.mxu0 0
  %2542 = vmatprep.subr.bf16.mxu0 0
  %2543 = vmatpush1.bf16.msra.mxu0 0
  %2544 = vmatprep.subr.bf16.mxu0 0
  %2545 = vmatpush1.bf16.msra.mxu0 0
  %2546 = vmatprep.subr.bf16.mxu0 0
  %2547 = vmatpush1.bf16.msra.mxu0 0
  %2548 = vmatprep.subr.bf16.mxu0 0
  %2549 = vmatpush1.bf16.msra.mxu0 0
  %2550 = vmatprep.subr.bf16.mxu0 0
  %2551 = vmatpush1.bf16.msra.mxu0 0
  %2552 = vmatprep.subr.bf16.mxu0 0
  %2553 = vmatpush1.bf16.msra.mxu0 0
  %2554 = vmatprep.subr.bf16.mxu0 0
  %2555 = vmatpush1.bf16.msra.mxu0 0
  %2556 = vmatprep.subr.bf16.mxu0 0
  %2557 = vmatpush1.bf16.msra.mxu0 0
  %2558 = vmatprep.subr.bf16.mxu0 0
  %2559 = vmatpush1.bf16.msra.mxu0 0
  %2560 = vmatprep.subr.bf16.mxu0 0
  %2561 = vmatpush1.bf16.msra.mxu0 0
  %2562 = vmatprep.mubr.bf16.mxu0 0
  %2563 = vmatmul.mubr.bf16.gmra.mrb[0].mxu0 %v2172
  %v2564 = vpop.f32.mrb[0].mxu0
  %v2565 = vadd.f32 %v770, %v2564
  %v2566 = vpop.f32.mrb[0].mxu0
  %v2567 = vadd.f32 %v772, %v2566
  %v2568 = vpop.f32.mrb[0].mxu0
  %v2569 = vpop.f32.mrb[0].mxu0
  %2570 = vdwg.mxu0
  %2571 = vmatprep.subr.bf16.mxu0 %v2208
  %2572 = vmatpush1.bf16.msra.mxu0 %v2205
  %2573 = vmatprep.subr.bf16.mxu0 0
  %2574 = vmatpush1.bf16.msra.mxu0 0
  %2575 = vmatprep.subr.bf16.mxu0 0
  %2576 = vmatpush1.bf16.msra.mxu0 0
  %2577 = vmatprep.subr.bf16.mxu0 0
  %2578 = vmatpush1.bf16.msra.mxu0 0
  %2579 = vmatprep.subr.bf16.mxu0 0
  %2580 = vmatpush1.bf16.msra.mxu0 0
  %2581 = vmatprep.subr.bf16.mxu0 0
  %2582 = vmatpush1.bf16.msra.mxu0 0
  %2583 = vmatprep.subr.bf16.mxu0 0
  %2584 = vmatpush1.bf16.msra.mxu0 0
  %2585 = vmatprep.subr.bf16.mxu0 0
  %2586 = vmatpush1.bf16.msra.mxu0 0
  %2587 = vmatprep.subr.bf16.mxu0 0
  %2588 = vmatpush1.bf16.msra.mxu0 0
  %2589 = vmatprep.subr.bf16.mxu0 0
  %2590 = vmatpush1.bf16.msra.mxu0 0
  %2591 = vmatprep.subr.bf16.mxu0 0
  %2592 = vmatpush1.bf16.msra.mxu0 0
  %2593 = vmatprep.subr.bf16.mxu0 0
  %2594 = vmatpush1.bf16.msra.mxu0 0
  %2595 = vmatprep.subr.bf16.mxu0 0
  %2596 = vmatpush1.bf16.msra.mxu0 0
  %2597 = vmatprep.subr.bf16.mxu0 0
  %2598 = vmatpush1.bf16.msra.mxu0 0
  %2599 = vmatprep.subr.bf16.mxu0 0
  %2600 = vmatpush1.bf16.msra.mxu0 0
  %2601 = vmatprep.subr.bf16.mxu0 0
  %2602 = vmatpush1.bf16.msra.mxu0 0
  %2603 = vmatprep.mubr.bf16.mxu0 0
  %2604 = vmatmul.mubr.bf16.gmra.mrb[0].mxu0 %v2172
  %v2605 = vpop.f32.mrb[0].mxu0
  %v2606 = vadd.f32 %v811, %v2605
  %v2607 = vpop.f32.mrb[0].mxu0
  %v2608 = vadd.f32 %v813, %v2607
  %v2609 = vpop.f32.mrb[0].mxu0
  %v2610 = vpop.f32.mrb[0].mxu0
  %2611 = vdwg.mxu0
  %2612 = vmatprep.subr.bf16.mxu0 %v2214
  %2613 = vmatpush1.bf16.msra.mxu0 %v2211
  %2614 = vmatprep.subr.bf16.mxu0 0
  %2615 = vmatpush1.bf16.msra.mxu0 0
  %2616 = vmatprep.subr.bf16.mxu0 0
  %2617 = vmatpush1.bf16.msra.mxu0 0
  %2618 = vmatprep.subr.bf16.mxu0 0
  %2619 = vmatpush1.bf16.msra.mxu0 0
  %2620 = vmatprep.subr.bf16.mxu0 0
  %2621 = vmatpush1.bf16.msra.mxu0 0
  %2622 = vmatprep.subr.bf16.mxu0 0
  %2623 = vmatpush1.bf16.msra.mxu0 0
  %2624 = vmatprep.subr.bf16.mxu0 0
  %2625 = vmatpush1.bf16.msra.mxu0 0
  %2626 = vmatprep.subr.bf16.mxu0 0
  %2627 = vmatpush1.bf16.msra.mxu0 0
  %2628 = vmatprep.subr.bf16.mxu0 0
  %2629 = vmatpush1.bf16.msra.mxu0 0
  %2630 = vmatprep.subr.bf16.mxu0 0
  %2631 = vmatpush1.bf16.msra.mxu0 0
  %2632 = vmatprep.subr.bf16.mxu0 0
  %2633 = vmatpush1.bf16.msra.mxu0 0
  %2634 = vmatprep.subr.bf16.mxu0 0
  %2635 = vmatpush1.bf16.msra.mxu0 0
  %2636 = vmatprep.subr.bf16.mxu0 0
  %2637 = vmatpush1.bf16.msra.mxu0 0
  %2638 = vmatprep.subr.bf16.mxu0 0
  %2639 = vmatpush1.bf16.msra.mxu0 0
  %2640 = vmatprep.subr.bf16.mxu0 0
  %2641 = vmatpush1.bf16.msra.mxu0 0
  %2642 = vmatprep.subr.bf16.mxu0 0
  %2643 = vmatpush1.bf16.msra.mxu0 0
  %2644 = vmatprep.mubr.bf16.mxu0 0
  %2645 = vmatmul.mubr.bf16.gmra.mrb[0].mxu0 %v2172
  %v2646 = vpop.f32.mrb[0].mxu0
  %v2647 = vadd.f32 %v852, %v2646
  %v2648 = vpop.f32.mrb[0].mxu0
  %v2649 = vadd.f32 %v854, %v2648
  %v2650 = vpop.f32.mrb[0].mxu0
  %v2651 = vpop.f32.mrb[0].mxu0
  %2652 = vdwg.mxu0
  %2653 = vmatprep.subr.bf16.mxu0 %v2220
  %2654 = vmatpush1.bf16.msra.mxu0 %v2217
  %2655 = vmatprep.subr.bf16.mxu0 0
  %2656 = vmatpush1.bf16.msra.mxu0 0
  %2657 = vmatprep.subr.bf16.mxu0 0
  %2658 = vmatpush1.bf16.msra.mxu0 0
  %2659 = vmatprep.subr.bf16.mxu0 0
  %2660 = vmatpush1.bf16.msra.mxu0 0
  %2661 = vmatprep.subr.bf16.mxu0 0
  %2662 = vmatpush1.bf16.msra.mxu0 0
  %2663 = vmatprep.subr.bf16.mxu0 0
  %2664 = vmatpush1.bf16.msra.mxu0 0
  %2665 = vmatprep.subr.bf16.mxu0 0
  %2666 = vmatpush1.bf16.msra.mxu0 0
  %2667 = vmatprep.subr.bf16.mxu0 0
  %2668 = vmatpush1.bf16.msra.mxu0 0
  %2669 = vmatprep.subr.bf16.mxu0 0
  %2670 = vmatpush1.bf16.msra.mxu0 0
  %2671 = vmatprep.subr.bf16.mxu0 0
  %2672 = vmatpush1.bf16.msra.mxu0 0
  %2673 = vmatprep.subr.bf16.mxu0 0
  %2674 = vmatpush1.bf16.msra.mxu0 0
  %2675 = vmatprep.subr.bf16.mxu0 0
  %2676 = vmatpush1.bf16.msra.mxu0 0
  %2677 = vmatprep.subr.bf16.mxu0 0
  %2678 = vmatpush1.bf16.msra.mxu0 0
  %2679 = vmatprep.subr.bf16.mxu0 0
  %2680 = vmatpush1.bf16.msra.mxu0 0
  %2681 = vmatprep.subr.bf16.mxu0 0
  %2682 = vmatpush1.bf16.msra.mxu0 0
  %2683 = vmatprep.subr.bf16.mxu0 0
  %2684 = vmatpush1.bf16.msra.mxu0 0
  %2685 = vmatprep.mubr.bf16.mxu0 0
  %2686 = vmatmul.mubr.bf16.gmra.mrb[0].mxu0 %v2172
  %v2687 = vpop.f32.mrb[0].mxu0
  %v2688 = vadd.f32 %v893, %v2687
  %v2689 = vpop.f32.mrb[0].mxu0
  %v2690 = vadd.f32 %v895, %v2689
  %v2691 = vpop.f32.mrb[0].mxu0
  %v2692 = vpop.f32.mrb[0].mxu0
  %2693 = vdwg.mxu0
  %2694 = vmatprep.subr.bf16.mxu0 %v2226
  %2695 = vmatpush1.bf16.msra.mxu0 %v2223
  %2696 = vmatprep.subr.bf16.mxu0 0
  %2697 = vmatpush1.bf16.msra.mxu0 0
  %2698 = vmatprep.subr.bf16.mxu0 0
  %2699 = vmatpush1.bf16.msra.mxu0 0
  %2700 = vmatprep.subr.bf16.mxu0 0
  %2701 = vmatpush1.bf16.msra.mxu0 0
  %2702 = vmatprep.subr.bf16.mxu0 0
  %2703 = vmatpush1.bf16.msra.mxu0 0
  %2704 = vmatprep.subr.bf16.mxu0 0
  %2705 = vmatpush1.bf16.msra.mxu0 0
  %2706 = vmatprep.subr.bf16.mxu0 0
  %2707 = vmatpush1.bf16.msra.mxu0 0
  %2708 = vmatprep.subr.bf16.mxu0 0
  %2709 = vmatpush1.bf16.msra.mxu0 0
  %2710 = vmatprep.subr.bf16.mxu0 0
  %2711 = vmatpush1.bf16.msra.mxu0 0
  %2712 = vmatprep.subr.bf16.mxu0 0
  %2713 = vmatpush1.bf16.msra.mxu0 0
  %2714 = vmatprep.subr.bf16.mxu0 0
  %2715 = vmatpush1.bf16.msra.mxu0 0
  %2716 = vmatprep.subr.bf16.mxu0 0
  %2717 = vmatpush1.bf16.msra.mxu0 0
  %2718 = vmatprep.subr.bf16.mxu0 0
  %2719 = vmatpush1.bf16.msra.mxu0 0
  %2720 = vmatprep.subr.bf16.mxu0 0
  %2721 = vmatpush1.bf16.msra.mxu0 0
  %2722 = vmatprep.subr.bf16.mxu0 0
  %2723 = vmatpush1.bf16.msra.mxu0 0
  %2724 = vmatprep.subr.bf16.mxu0 0
  %2725 = vmatpush1.bf16.msra.mxu0 0
  %2726 = vmatprep.mubr.bf16.mxu0 0
  %2727 = vmatmul.mubr.bf16.gmra.mrb[0].mxu0 %v2172
  %v2728 = vpop.f32.mrb[0].mxu0
  %v2729 = vadd.f32 %v934, %v2728
  %v2730 = vpop.f32.mrb[0].mxu0
  %v2731 = vadd.f32 %v936, %v2730
  %v2732 = vpop.f32.mrb[0].mxu0
  %v2733 = vpop.f32.mrb[0].mxu0
  %2734 = vdwg.mxu0
  %2735 = vmatprep.subr.bf16.mxu0 %v2232
  %2736 = vmatpush1.bf16.msra.mxu0 %v2229
  %2737 = vmatprep.subr.bf16.mxu0 0
  %2738 = vmatpush1.bf16.msra.mxu0 0
  %2739 = vmatprep.subr.bf16.mxu0 0
  %2740 = vmatpush1.bf16.msra.mxu0 0
  %2741 = vmatprep.subr.bf16.mxu0 0
  %2742 = vmatpush1.bf16.msra.mxu0 0
  %2743 = vmatprep.subr.bf16.mxu0 0
  %2744 = vmatpush1.bf16.msra.mxu0 0
  %2745 = vmatprep.subr.bf16.mxu0 0
  %2746 = vmatpush1.bf16.msra.mxu0 0
  %2747 = vmatprep.subr.bf16.mxu0 0
  %2748 = vmatpush1.bf16.msra.mxu0 0
  %2749 = vmatprep.subr.bf16.mxu0 0
  %2750 = vmatpush1.bf16.msra.mxu0 0
  %2751 = vmatprep.subr.bf16.mxu0 0
  %2752 = vmatpush1.bf16.msra.mxu0 0
  %2753 = vmatprep.subr.bf16.mxu0 0
  %2754 = vmatpush1.bf16.msra.mxu0 0
  %2755 = vmatprep.subr.bf16.mxu0 0
  %2756 = vmatpush1.bf16.msra.mxu0 0
  %2757 = vmatprep.subr.bf16.mxu0 0
  %2758 = vmatpush1.bf16.msra.mxu0 0
  %2759 = vmatprep.subr.bf16.mxu0 0
  %2760 = vmatpush1.bf16.msra.mxu0 0
  %2761 = vmatprep.subr.bf16.mxu0 0
  %2762 = vmatpush1.bf16.msra.mxu0 0
  %2763 = vmatprep.subr.bf16.mxu0 0
  %2764 = vmatpush1.bf16.msra.mxu0 0
  %2765 = vmatprep.subr.bf16.mxu0 0
  %2766 = vmatpush1.bf16.msra.mxu0 0
  %2767 = vmatprep.mubr.bf16.mxu0 0
  %2768 = vmatmul.mubr.bf16.gmra.mrb[0].mxu0 %v2172
  %v2769 = vpop.f32.mrb[0].mxu0
  %v2770 = vadd.f32 %v975, %v2769
  %v2771 = vpop.f32.mrb[0].mxu0
  %v2772 = vadd.f32 %v977, %v2771
  %v2773 = vpop.f32.mrb[0].mxu0
  %v2774 = vpop.f32.mrb[0].mxu0
  %2775 = vdwg.mxu0
  %2776 = vmatprep.subr.bf16.mxu0 %v2238
  %2777 = vmatpush1.bf16.msra.mxu0 %v2235
  %2778 = vmatprep.subr.bf16.mxu0 0
  %2779 = vmatpush1.bf16.msra.mxu0 0
  %2780 = vmatprep.subr.bf16.mxu0 0
  %2781 = vmatpush1.bf16.msra.mxu0 0
  %2782 = vmatprep.subr.bf16.mxu0 0
  %2783 = vmatpush1.bf16.msra.mxu0 0
  %2784 = vmatprep.subr.bf16.mxu0 0
  %2785 = vmatpush1.bf16.msra.mxu0 0
  %2786 = vmatprep.subr.bf16.mxu0 0
  %2787 = vmatpush1.bf16.msra.mxu0 0
  %2788 = vmatprep.subr.bf16.mxu0 0
  %2789 = vmatpush1.bf16.msra.mxu0 0
  %2790 = vmatprep.subr.bf16.mxu0 0
  %2791 = vmatpush1.bf16.msra.mxu0 0
  %2792 = vmatprep.subr.bf16.mxu0 0
  %2793 = vmatpush1.bf16.msra.mxu0 0
  %2794 = vmatprep.subr.bf16.mxu0 0
  %2795 = vmatpush1.bf16.msra.mxu0 0
  %2796 = vmatprep.subr.bf16.mxu0 0
  %2797 = vmatpush1.bf16.msra.mxu0 0
  %2798 = vmatprep.subr.bf16.mxu0 0
  %2799 = vmatpush1.bf16.msra.mxu0 0
  %2800 = vmatprep.subr.bf16.mxu0 0
  %2801 = vmatpush1.bf16.msra.mxu0 0
  %2802 = vmatprep.subr.bf16.mxu0 0
  %2803 = vmatpush1.bf16.msra.mxu0 0
  %2804 = vmatprep.subr.bf16.mxu0 0
  %2805 = vmatpush1.bf16.msra.mxu0 0
  %2806 = vmatprep.subr.bf16.mxu0 0
  %2807 = vmatpush1.bf16.msra.mxu0 0
  %2808 = vmatprep.mubr.bf16.mxu0 0
  %2809 = vmatmul.mubr.bf16.gmra.mrb[0].mxu0 %v2172
  %v2810 = vpop.f32.mrb[0].mxu0
  %v2811 = vadd.f32 %v1016, %v2810
  %v2812 = vpop.f32.mrb[0].mxu0
  %v2813 = vadd.f32 %v1018, %v2812
  %v2814 = vpop.f32.mrb[0].mxu0
  %v2815 = vpop.f32.mrb[0].mxu0
  %2816 = vdwg.mxu0
  %2817 = vmatprep.subr.bf16.mxu0 %v2244
  %2818 = vmatpush1.bf16.msra.mxu0 %v2241
  %2819 = vmatprep.subr.bf16.mxu0 0
  %2820 = vmatpush1.bf16.msra.mxu0 0
  %2821 = vmatprep.subr.bf16.mxu0 0
  %2822 = vmatpush1.bf16.msra.mxu0 0
  %2823 = vmatprep.subr.bf16.mxu0 0
  %2824 = vmatpush1.bf16.msra.mxu0 0
  %2825 = vmatprep.subr.bf16.mxu0 0
  %2826 = vmatpush1.bf16.msra.mxu0 0
  %2827 = vmatprep.subr.bf16.mxu0 0
  %2828 = vmatpush1.bf16.msra.mxu0 0
  %2829 = vmatprep.subr.bf16.mxu0 0
  %2830 = vmatpush1.bf16.msra.mxu0 0
  %2831 = vmatprep.subr.bf16.mxu0 0
  %2832 = vmatpush1.bf16.msra.mxu0 0
  %2833 = vmatprep.subr.bf16.mxu0 0
  %2834 = vmatpush1.bf16.msra.mxu0 0
  %2835 = vmatprep.subr.bf16.mxu0 0
  %2836 = vmatpush1.bf16.msra.mxu0 0
  %2837 = vmatprep.subr.bf16.mxu0 0
  %2838 = vmatpush1.bf16.msra.mxu0 0
  %2839 = vmatprep.subr.bf16.mxu0 0
  %2840 = vmatpush1.bf16.msra.mxu0 0
  %2841 = vmatprep.subr.bf16.mxu0 0
  %2842 = vmatpush1.bf16.msra.mxu0 0
  %2843 = vmatprep.subr.bf16.mxu0 0
  %2844 = vmatpush1.bf16.msra.mxu0 0
  %2845 = vmatprep.subr.bf16.mxu0 0
  %2846 = vmatpush1.bf16.msra.mxu0 0
  %2847 = vmatprep.subr.bf16.mxu0 0
  %2848 = vmatpush1.bf16.msra.mxu0 0
  %2849 = vmatprep.mubr.bf16.mxu0 0
  %2850 = vmatmul.mubr.bf16.gmra.mrb[0].mxu0 %v2172
  %v2851 = vpop.f32.mrb[0].mxu0
  %v2852 = vadd.f32 %v1057, %v2851
  %v2853 = vpop.f32.mrb[0].mxu0
  %v2854 = vadd.f32 %v1059, %v2853
  %v2855 = vpop.f32.mrb[0].mxu0
  %v2856 = vpop.f32.mrb[0].mxu0
  %2857 = vdwg.mxu0
  %2858 = vmatprep.subr.bf16.mxu0 %v2250
  %2859 = vmatpush1.bf16.msra.mxu0 %v2247
  %2860 = vmatprep.subr.bf16.mxu0 0
  %2861 = vmatpush1.bf16.msra.mxu0 0
  %2862 = vmatprep.subr.bf16.mxu0 0
  %2863 = vmatpush1.bf16.msra.mxu0 0
  %2864 = vmatprep.subr.bf16.mxu0 0
  %2865 = vmatpush1.bf16.msra.mxu0 0
  %2866 = vmatprep.subr.bf16.mxu0 0
  %2867 = vmatpush1.bf16.msra.mxu0 0
  %2868 = vmatprep.subr.bf16.mxu0 0
  %2869 = vmatpush1.bf16.msra.mxu0 0
  %2870 = vmatprep.subr.bf16.mxu0 0
  %2871 = vmatpush1.bf16.msra.mxu0 0
  %2872 = vmatprep.subr.bf16.mxu0 0
  %2873 = vmatpush1.bf16.msra.mxu0 0
  %2874 = vmatprep.subr.bf16.mxu0 0
  %2875 = vmatpush1.bf16.msra.mxu0 0
  %2876 = vmatprep.subr.bf16.mxu0 0
  %2877 = vmatpush1.bf16.msra.mxu0 0
  %2878 = vmatprep.subr.bf16.mxu0 0
  %2879 = vmatpush1.bf16.msra.mxu0 0
  %2880 = vmatprep.subr.bf16.mxu0 0
  %2881 = vmatpush1.bf16.msra.mxu0 0
  %2882 = vmatprep.subr.bf16.mxu0 0
  %2883 = vmatpush1.bf16.msra.mxu0 0
  %2884 = vmatprep.subr.bf16.mxu0 0
  %2885 = vmatpush1.bf16.msra.mxu0 0
  %2886 = vmatprep.subr.bf16.mxu0 0
  %2887 = vmatpush1.bf16.msra.mxu0 0
  %2888 = vmatprep.subr.bf16.mxu0 0
  %2889 = vmatpush1.bf16.msra.mxu0 0
  %2890 = vmatprep.mubr.bf16.mxu0 0
  %2891 = vmatmul.mubr.bf16.gmra.mrb[0].mxu0 %v2172
  %v2892 = vpop.f32.mrb[0].mxu0
  %v2893 = vadd.f32 %v1098, %v2892
  %v2894 = vpop.f32.mrb[0].mxu0
  %v2895 = vadd.f32 %v1100, %v2894
  %v2896 = vpop.f32.mrb[0].mxu0
  %v2897 = vpop.f32.mrb[0].mxu0
  %2898 = vdwg.mxu0
  %2899 = vmatprep.subr.bf16.mxu0 %v2256
  %2900 = vmatpush1.bf16.msra.mxu0 %v2253
  %2901 = vmatprep.subr.bf16.mxu0 0
  %2902 = vmatpush1.bf16.msra.mxu0 0
  %2903 = vmatprep.subr.bf16.mxu0 0
  %2904 = vmatpush1.bf16.msra.mxu0 0
  %2905 = vmatprep.subr.bf16.mxu0 0
  %2906 = vmatpush1.bf16.msra.mxu0 0
  %2907 = vmatprep.subr.bf16.mxu0 0
  %2908 = vmatpush1.bf16.msra.mxu0 0
  %2909 = vmatprep.subr.bf16.mxu0 0
  %2910 = vmatpush1.bf16.msra.mxu0 0
  %2911 = vmatprep.subr.bf16.mxu0 0
  %2912 = vmatpush1.bf16.msra.mxu0 0
  %2913 = vmatprep.subr.bf16.mxu0 0
  %2914 = vmatpush1.bf16.msra.mxu0 0
  %2915 = vmatprep.subr.bf16.mxu0 0
  %2916 = vmatpush1.bf16.msra.mxu0 0
  %2917 = vmatprep.subr.bf16.mxu0 0
  %2918 = vmatpush1.bf16.msra.mxu0 0
  %2919 = vmatprep.subr.bf16.mxu0 0
  %2920 = vmatpush1.bf16.msra.mxu0 0
  %2921 = vmatprep.subr.bf16.mxu0 0
  %2922 = vmatpush1.bf16.msra.mxu0 0
  %2923 = vmatprep.subr.bf16.mxu0 0
  %2924 = vmatpush1.bf16.msra.mxu0 0
  %2925 = vmatprep.subr.bf16.mxu0 0
  %2926 = vmatpush1.bf16.msra.mxu0 0
  %2927 = vmatprep.subr.bf16.mxu0 0
  %2928 = vmatpush1.bf16.msra.mxu0 0
  %2929 = vmatprep.subr.bf16.mxu0 0
  %2930 = vmatpush1.bf16.msra.mxu0 0
  %2931 = vmatprep.mubr.bf16.mxu0 0
  %2932 = vmatmul.mubr.bf16.gmra.mrb[0].mxu0 %v2172
  %v2933 = vpop.f32.mrb[0].mxu0
  %v2934 = vadd.f32 %v1139, %v2933
  %v2935 = vpop.f32.mrb[0].mxu0
  %v2936 = vadd.f32 %v1141, %v2935
  %v2937 = vpop.f32.mrb[0].mxu0
  %v2938 = vpop.f32.mrb[0].mxu0
  %2939 = vdwg.mxu0
  %2940 = vmatprep.subr.bf16.mxu0 %v2262
  %2941 = vmatpush1.bf16.msra.mxu0 %v2259
  %2942 = vmatprep.subr.bf16.mxu0 0
  %2943 = vmatpush1.bf16.msra.mxu0 0
  %2944 = vmatprep.subr.bf16.mxu0 0
  %2945 = vmatpush1.bf16.msra.mxu0 0
  %2946 = vmatprep.subr.bf16.mxu0 0
  %2947 = vmatpush1.bf16.msra.mxu0 0
  %2948 = vmatprep.subr.bf16.mxu0 0
  %2949 = vmatpush1.bf16.msra.mxu0 0
  %2950 = vmatprep.subr.bf16.mxu0 0
  %2951 = vmatpush1.bf16.msra.mxu0 0
  %2952 = vmatprep.subr.bf16.mxu0 0
  %2953 = vmatpush1.bf16.msra.mxu0 0
  %2954 = vmatprep.subr.bf16.mxu0 0
  %2955 = vmatpush1.bf16.msra.mxu0 0
  %2956 = vmatprep.subr.bf16.mxu0 0
  %2957 = vmatpush1.bf16.msra.mxu0 0
  %2958 = vmatprep.subr.bf16.mxu0 0
  %2959 = vmatpush1.bf16.msra.mxu0 0
  %2960 = vmatprep.subr.bf16.mxu0 0
  %2961 = vmatpush1.bf16.msra.mxu0 0
  %2962 = vmatprep.subr.bf16.mxu0 0
  %2963 = vmatpush1.bf16.msra.mxu0 0
  %2964 = vmatprep.subr.bf16.mxu0 0
  %2965 = vmatpush1.bf16.msra.mxu0 0
  %2966 = vmatprep.subr.bf16.mxu0 0
  %2967 = vmatpush1.bf16.msra.mxu0 0
  %2968 = vmatprep.subr.bf16.mxu0 0
  %2969 = vmatpush1.bf16.msra.mxu0 0
  %2970 = vmatprep.subr.bf16.mxu0 0
  %2971 = vmatpush1.bf16.msra.mxu0 0
  %2972 = vmatprep.mubr.bf16.mxu0 0
  %2973 = vmatmul.mubr.bf16.gmra.mrb[0].mxu0 %v2172
  %v2974 = vpop.f32.mrb[0].mxu0
  %v2975 = vadd.f32 %v1180, %v2974
  %v2976 = vpop.f32.mrb[0].mxu0
  %v2977 = vadd.f32 %v1182, %v2976
  %v2978 = vpop.f32.mrb[0].mxu0
  %v2979 = vpop.f32.mrb[0].mxu0
  %2980 = vdwg.mxu0
  %2981 = vmatprep.subr.bf16.mxu0 %v2268
  %2982 = vmatpush1.bf16.msra.mxu0 %v2265
  %2983 = vmatprep.subr.bf16.mxu0 0
  %2984 = vmatpush1.bf16.msra.mxu0 0
  %2985 = vmatprep.subr.bf16.mxu0 0
  %2986 = vmatpush1.bf16.msra.mxu0 0
  %2987 = vmatprep.subr.bf16.mxu0 0
  %2988 = vmatpush1.bf16.msra.mxu0 0
  %2989 = vmatprep.subr.bf16.mxu0 0
  %2990 = vmatpush1.bf16.msra.mxu0 0
  %2991 = vmatprep.subr.bf16.mxu0 0
  %2992 = vmatpush1.bf16.msra.mxu0 0
  %2993 = vmatprep.subr.bf16.mxu0 0
  %2994 = vmatpush1.bf16.msra.mxu0 0
  %2995 = vmatprep.subr.bf16.mxu0 0
  %2996 = vmatpush1.bf16.msra.mxu0 0
  %2997 = vmatprep.subr.bf16.mxu0 0
  %2998 = vmatpush1.bf16.msra.mxu0 0
  %2999 = vmatprep.subr.bf16.mxu0 0
  %3000 = vmatpush1.bf16.msra.mxu0 0
  %3001 = vmatprep.subr.bf16.mxu0 0
  %3002 = vmatpush1.bf16.msra.mxu0 0
  %3003 = vmatprep.subr.bf16.mxu0 0
  %3004 = vmatpush1.bf16.msra.mxu0 0
  %3005 = vmatprep.subr.bf16.mxu0 0
  %3006 = vmatpush1.bf16.msra.mxu0 0
  %3007 = vmatprep.subr.bf16.mxu0 0
  %3008 = vmatpush1.bf16.msra.mxu0 0
  %3009 = vmatprep.subr.bf16.mxu0 0
  %3010 = vmatpush1.bf16.msra.mxu0 0
  %3011 = vmatprep.subr.bf16.mxu0 0
  %3012 = vmatpush1.bf16.msra.mxu0 0
  %3013 = vmatprep.mubr.bf16.mxu0 0
  %3014 = vmatmul.mubr.bf16.gmra.mrb[0].mxu0 %v2172
  %v3015 = vpop.f32.mrb[0].mxu0
  %v3016 = vadd.f32 %v1221, %v3015
  %v3017 = vpop.f32.mrb[0].mxu0
  %v3018 = vadd.f32 %v1223, %v3017
  %v3019 = vpop.f32.mrb[0].mxu0
  %v3020 = vpop.f32.mrb[0].mxu0
  %3021 = vdwg.mxu0
  %3022 = vmatprep.subr.bf16.mxu0 %v2274
  %3023 = vmatpush1.bf16.msra.mxu0 %v2271
  %3024 = vmatprep.subr.bf16.mxu0 0
  %3025 = vmatpush1.bf16.msra.mxu0 0
  %3026 = vmatprep.subr.bf16.mxu0 0
  %3027 = vmatpush1.bf16.msra.mxu0 0
  %3028 = vmatprep.subr.bf16.mxu0 0
  %3029 = vmatpush1.bf16.msra.mxu0 0
  %3030 = vmatprep.subr.bf16.mxu0 0
  %3031 = vmatpush1.bf16.msra.mxu0 0
  %3032 = vmatprep.subr.bf16.mxu0 0
  %3033 = vmatpush1.bf16.msra.mxu0 0
  %3034 = vmatprep.subr.bf16.mxu0 0
  %3035 = vmatpush1.bf16.msra.mxu0 0
  %3036 = vmatprep.subr.bf16.mxu0 0
  %3037 = vmatpush1.bf16.msra.mxu0 0
  %3038 = vmatprep.subr.bf16.mxu0 0
  %3039 = vmatpush1.bf16.msra.mxu0 0
  %3040 = vmatprep.subr.bf16.mxu0 0
  %3041 = vmatpush1.bf16.msra.mxu0 0
  %3042 = vmatprep.subr.bf16.mxu0 0
  %3043 = vmatpush1.bf16.msra.mxu0 0
  %3044 = vmatprep.subr.bf16.mxu0 0
  %3045 = vmatpush1.bf16.msra.mxu0 0
  %3046 = vmatprep.subr.bf16.mxu0 0
  %3047 = vmatpush1.bf16.msra.mxu0 0
  %3048 = vmatprep.subr.bf16.mxu0 0
  %3049 = vmatpush1.bf16.msra.mxu0 0
  %3050 = vmatprep.subr.bf16.mxu0 0
  %3051 = vmatpush1.bf16.msra.mxu0 0
  %3052 = vmatprep.subr.bf16.mxu0 0
  %3053 = vmatpush1.bf16.msra.mxu0 0
  %3054 = vmatprep.mubr.bf16.mxu0 0
  %3055 = vmatmul.mubr.bf16.gmra.mrb[0].mxu0 %v2172
  %v3056 = vpop.f32.mrb[0].mxu0
  %v3057 = vadd.f32 %v1262, %v3056
  %v3058 = vpop.f32.mrb[0].mxu0
  %v3059 = vadd.f32 %v1264, %v3058
  %v3060 = vpop.f32.mrb[0].mxu0
  %v3061 = vpop.f32.mrb[0].mxu0
  %3062 = vdwg.mxu0
  %3063 = vmatprep.subr.bf16.mxu0 %v2280
  %3064 = vmatpush1.bf16.msra.mxu0 %v2277
  %3065 = vmatprep.subr.bf16.mxu0 0
  %3066 = vmatpush1.bf16.msra.mxu0 0
  %3067 = vmatprep.subr.bf16.mxu0 0
  %3068 = vmatpush1.bf16.msra.mxu0 0
  %3069 = vmatprep.subr.bf16.mxu0 0
  %3070 = vmatpush1.bf16.msra.mxu0 0
  %3071 = vmatprep.subr.bf16.mxu0 0
  %3072 = vmatpush1.bf16.msra.mxu0 0
  %3073 = vmatprep.subr.bf16.mxu0 0
  %3074 = vmatpush1.bf16.msra.mxu0 0
  %3075 = vmatprep.subr.bf16.mxu0 0
  %3076 = vmatpush1.bf16.msra.mxu0 0
  %3077 = vmatprep.subr.bf16.mxu0 0
  %3078 = vmatpush1.bf16.msra.mxu0 0
  %3079 = vmatprep.subr.bf16.mxu0 0
  %3080 = vmatpush1.bf16.msra.mxu0 0
  %3081 = vmatprep.subr.bf16.mxu0 0
  %3082 = vmatpush1.bf16.msra.mxu0 0
  %3083 = vmatprep.subr.bf16.mxu0 0
  %3084 = vmatpush1.bf16.msra.mxu0 0
  %3085 = vmatprep.subr.bf16.mxu0 0
  %3086 = vmatpush1.bf16.msra.mxu0 0
  %3087 = vmatprep.subr.bf16.mxu0 0
  %3088 = vmatpush1.bf16.msra.mxu0 0
  %3089 = vmatprep.subr.bf16.mxu0 0
  %3090 = vmatpush1.bf16.msra.mxu0 0
  %3091 = vmatprep.subr.bf16.mxu0 0
  %3092 = vmatpush1.bf16.msra.mxu0 0
  %3093 = vmatprep.subr.bf16.mxu0 0
  %3094 = vmatpush1.bf16.msra.mxu0 0
  %3095 = vmatprep.mubr.bf16.mxu0 0
  %3096 = vmatmul.mubr.bf16.gmra.mrb[0].mxu0 %v2172
  %v3097 = vpop.f32.mrb[0].mxu0
  %v3098 = vadd.f32 %v1303, %v3097
  %v3099 = vpop.f32.mrb[0].mxu0
  %v3100 = vadd.f32 %v1305, %v3099
  %v3101 = vpop.f32.mrb[0].mxu0
  %v3102 = vpop.f32.mrb[0].mxu0
  %3103 = vdwg.mxu0
  %3104 = vmatprep.subr.bf16.mxu0 %v2286
  %3105 = vmatpush1.bf16.msra.mxu0 %v2283
  %3106 = vmatprep.subr.bf16.mxu0 0
  %3107 = vmatpush1.bf16.msra.mxu0 0
  %3108 = vmatprep.subr.bf16.mxu0 0
  %3109 = vmatpush1.bf16.msra.mxu0 0
  %3110 = vmatprep.subr.bf16.mxu0 0
  %3111 = vmatpush1.bf16.msra.mxu0 0
  %3112 = vmatprep.subr.bf16.mxu0 0
  %3113 = vmatpush1.bf16.msra.mxu0 0
  %3114 = vmatprep.subr.bf16.mxu0 0
  %3115 = vmatpush1.bf16.msra.mxu0 0
  %3116 = vmatprep.subr.bf16.mxu0 0
  %3117 = vmatpush1.bf16.msra.mxu0 0
  %3118 = vmatprep.subr.bf16.mxu0 0
  %3119 = vmatpush1.bf16.msra.mxu0 0
  %3120 = vmatprep.subr.bf16.mxu0 0
  %3121 = vmatpush1.bf16.msra.mxu0 0
  %3122 = vmatprep.subr.bf16.mxu0 0
  %3123 = vmatpush1.bf16.msra.mxu0 0
  %3124 = vmatprep.subr.bf16.mxu0 0
  %3125 = vmatpush1.bf16.msra.mxu0 0
  %3126 = vmatprep.subr.bf16.mxu0 0
  %3127 = vmatpush1.bf16.msra.mxu0 0
  %3128 = vmatprep.subr.bf16.mxu0 0
  %3129 = vmatpush1.bf16.msra.mxu0 0
  %3130 = vmatprep.subr.bf16.mxu0 0
  %3131 = vmatpush1.bf16.msra.mxu0 0
  %3132 = vmatprep.subr.bf16.mxu0 0
  %3133 = vmatpush1.bf16.msra.mxu0 0
  %3134 = vmatprep.subr.bf16.mxu0 0
  %3135 = vmatpush1.bf16.msra.mxu0 0
  %3136 = vmatprep.mubr.bf16.mxu0 0
  %3137 = vmatmul.mubr.bf16.gmra.mrb[0].mxu0 %v2172
  %v3138 = vpop.f32.mrb[0].mxu0
  %v3139 = vadd.f32 %v1344, %v3138
  %v3140 = vpop.f32.mrb[0].mxu0
  %v3141 = vadd.f32 %v1346, %v3140
  %v3142 = vpop.f32.mrb[0].mxu0
  %v3143 = vpop.f32.mrb[0].mxu0
  %3144 = vdwg.mxu0
  %3145 = vmatprep.subr.bf16.mxu0 %v2292
  %3146 = vmatpush1.bf16.msra.mxu0 %v2289
  %3147 = vmatprep.subr.bf16.mxu0 0
  %3148 = vmatpush1.bf16.msra.mxu0 0
  %3149 = vmatprep.subr.bf16.mxu0 0
  %3150 = vmatpush1.bf16.msra.mxu0 0
  %3151 = vmatprep.subr.bf16.mxu0 0
  %3152 = vmatpush1.bf16.msra.mxu0 0
  %3153 = vmatprep.subr.bf16.mxu0 0
  %3154 = vmatpush1.bf16.msra.mxu0 0
  %3155 = vmatprep.subr.bf16.mxu0 0
  %3156 = vmatpush1.bf16.msra.mxu0 0
  %3157 = vmatprep.subr.bf16.mxu0 0
  %3158 = vmatpush1.bf16.msra.mxu0 0
  %3159 = vmatprep.subr.bf16.mxu0 0
  %3160 = vmatpush1.bf16.msra.mxu0 0
  %3161 = vmatprep.subr.bf16.mxu0 0
  %3162 = vmatpush1.bf16.msra.mxu0 0
  %3163 = vmatprep.subr.bf16.mxu0 0
  %3164 = vmatpush1.bf16.msra.mxu0 0
  %3165 = vmatprep.subr.bf16.mxu0 0
  %3166 = vmatpush1.bf16.msra.mxu0 0
  %3167 = vmatprep.subr.bf16.mxu0 0
  %3168 = vmatpush1.bf16.msra.mxu0 0
  %3169 = vmatprep.subr.bf16.mxu0 0
  %3170 = vmatpush1.bf16.msra.mxu0 0
  %3171 = vmatprep.subr.bf16.mxu0 0
  %3172 = vmatpush1.bf16.msra.mxu0 0
  %3173 = vmatprep.subr.bf16.mxu0 0
  %3174 = vmatpush1.bf16.msra.mxu0 0
  %3175 = vmatprep.subr.bf16.mxu0 0
  %3176 = vmatpush1.bf16.msra.mxu0 0
  %3177 = vmatprep.mubr.bf16.mxu0 0
  %3178 = vmatmul.mubr.bf16.gmra.mrb[0].mxu0 %v2172
  %v3179 = vpop.f32.mrb[0].mxu0
  %v3180 = vadd.f32 %v1385, %v3179
  %v3181 = vpop.f32.mrb[0].mxu0
  %v3182 = vadd.f32 %v1387, %v3181
  %v3183 = vpop.f32.mrb[0].mxu0
  %v3184 = vpop.f32.mrb[0].mxu0
  %3185 = vdwg.mxu0
  %3186 = vmatprep.subr.bf16.mxu0 %v2298
  %3187 = vmatpush1.bf16.msra.mxu0 %v2295
  %3188 = vmatprep.subr.bf16.mxu0 0
  %3189 = vmatpush1.bf16.msra.mxu0 0
  %3190 = vmatprep.subr.bf16.mxu0 0
  %3191 = vmatpush1.bf16.msra.mxu0 0
  %3192 = vmatprep.subr.bf16.mxu0 0
  %3193 = vmatpush1.bf16.msra.mxu0 0
  %3194 = vmatprep.subr.bf16.mxu0 0
  %3195 = vmatpush1.bf16.msra.mxu0 0
  %3196 = vmatprep.subr.bf16.mxu0 0
  %3197 = vmatpush1.bf16.msra.mxu0 0
  %3198 = vmatprep.subr.bf16.mxu0 0
  %3199 = vmatpush1.bf16.msra.mxu0 0
  %3200 = vmatprep.subr.bf16.mxu0 0
  %3201 = vmatpush1.bf16.msra.mxu0 0
  %3202 = vmatprep.subr.bf16.mxu0 0
  %3203 = vmatpush1.bf16.msra.mxu0 0
  %3204 = vmatprep.subr.bf16.mxu0 0
  %3205 = vmatpush1.bf16.msra.mxu0 0
  %3206 = vmatprep.subr.bf16.mxu0 0
  %3207 = vmatpush1.bf16.msra.mxu0 0
  %3208 = vmatprep.subr.bf16.mxu0 0
  %3209 = vmatpush1.bf16.msra.mxu0 0
  %3210 = vmatprep.subr.bf16.mxu0 0
  %3211 = vmatpush1.bf16.msra.mxu0 0
  %3212 = vmatprep.subr.bf16.mxu0 0
  %3213 = vmatpush1.bf16.msra.mxu0 0
  %3214 = vmatprep.subr.bf16.mxu0 0
  %3215 = vmatpush1.bf16.msra.mxu0 0
  %3216 = vmatprep.subr.bf16.mxu0 0
  %3217 = vmatpush1.bf16.msra.mxu0 0
  %3218 = vmatprep.mubr.bf16.mxu0 0
  %3219 = vmatmul.mubr.bf16.gmra.mrb[0].mxu0 %v2172
  %v3220 = vpop.f32.mrb[0].mxu0
  %v3221 = vadd.f32 %v1426, %v3220
  %v3222 = vpop.f32.mrb[0].mxu0
  %v3223 = vadd.f32 %v1428, %v3222
  %v3224 = vpop.f32.mrb[0].mxu0
  %v3225 = vpop.f32.mrb[0].mxu0
  %3226 = vdwg.mxu0
  %3227 = vmatprep.subr.bf16.mxu0 %v2304
  %3228 = vmatpush1.bf16.msra.mxu0 %v2301
  %3229 = vmatprep.subr.bf16.mxu0 0
  %3230 = vmatpush1.bf16.msra.mxu0 0
  %3231 = vmatprep.subr.bf16.mxu0 0
  %3232 = vmatpush1.bf16.msra.mxu0 0
  %3233 = vmatprep.subr.bf16.mxu0 0
  %3234 = vmatpush1.bf16.msra.mxu0 0
  %3235 = vmatprep.subr.bf16.mxu0 0
  %3236 = vmatpush1.bf16.msra.mxu0 0
  %3237 = vmatprep.subr.bf16.mxu0 0
  %3238 = vmatpush1.bf16.msra.mxu0 0
  %3239 = vmatprep.subr.bf16.mxu0 0
  %3240 = vmatpush1.bf16.msra.mxu0 0
  %3241 = vmatprep.subr.bf16.mxu0 0
  %3242 = vmatpush1.bf16.msra.mxu0 0
  %3243 = vmatprep.subr.bf16.mxu0 0
  %3244 = vmatpush1.bf16.msra.mxu0 0
  %3245 = vmatprep.subr.bf16.mxu0 0
  %3246 = vmatpush1.bf16.msra.mxu0 0
  %3247 = vmatprep.subr.bf16.mxu0 0
  %3248 = vmatpush1.bf16.msra.mxu0 0
  %3249 = vmatprep.subr.bf16.mxu0 0
  %3250 = vmatpush1.bf16.msra.mxu0 0
  %3251 = vmatprep.subr.bf16.mxu0 0
  %3252 = vmatpush1.bf16.msra.mxu0 0
  %3253 = vmatprep.subr.bf16.mxu0 0
  %3254 = vmatpush1.bf16.msra.mxu0 0
  %3255 = vmatprep.subr.bf16.mxu0 0
  %3256 = vmatpush1.bf16.msra.mxu0 0
  %3257 = vmatprep.subr.bf16.mxu0 0
  %3258 = vmatpush1.bf16.msra.mxu0 0
  %3259 = vmatprep.mubr.bf16.mxu0 0
  %3260 = vmatmul.mubr.bf16.gmra.mrb[0].mxu0 %v2172
  %v3261 = vpop.f32.mrb[0].mxu0
  %v3262 = vadd.f32 %v1467, %v3261
  %v3263 = vpop.f32.mrb[0].mxu0
  %v3264 = vadd.f32 %v1469, %v3263
  %v3265 = vpop.f32.mrb[0].mxu0
  %v3266 = vpop.f32.mrb[0].mxu0
  %3267 = vdwg.mxu0
  %3268 = vmatprep.subr.bf16.mxu0 %v2310
  %3269 = vmatpush1.bf16.msra.mxu0 %v2307
  %3270 = vmatprep.subr.bf16.mxu0 0
  %3271 = vmatpush1.bf16.msra.mxu0 0
  %3272 = vmatprep.subr.bf16.mxu0 0
  %3273 = vmatpush1.bf16.msra.mxu0 0
  %3274 = vmatprep.subr.bf16.mxu0 0
  %3275 = vmatpush1.bf16.msra.mxu0 0
  %3276 = vmatprep.subr.bf16.mxu0 0
  %3277 = vmatpush1.bf16.msra.mxu0 0
  %3278 = vmatprep.subr.bf16.mxu0 0
  %3279 = vmatpush1.bf16.msra.mxu0 0
  %3280 = vmatprep.subr.bf16.mxu0 0
  %3281 = vmatpush1.bf16.msra.mxu0 0
  %3282 = vmatprep.subr.bf16.mxu0 0
  %3283 = vmatpush1.bf16.msra.mxu0 0
  %3284 = vmatprep.subr.bf16.mxu0 0
  %3285 = vmatpush1.bf16.msra.mxu0 0
  %3286 = vmatprep.subr.bf16.mxu0 0
  %3287 = vmatpush1.bf16.msra.mxu0 0
  %3288 = vmatprep.subr.bf16.mxu0 0
  %3289 = vmatpush1.bf16.msra.mxu0 0
  %3290 = vmatprep.subr.bf16.mxu0 0
  %3291 = vmatpush1.bf16.msra.mxu0 0
  %3292 = vmatprep.subr.bf16.mxu0 0
  %3293 = vmatpush1.bf16.msra.mxu0 0
  %3294 = vmatprep.subr.bf16.mxu0 0
  %3295 = vmatpush1.bf16.msra.mxu0 0
  %3296 = vmatprep.subr.bf16.mxu0 0
  %3297 = vmatpush1.bf16.msra.mxu0 0
  %3298 = vmatprep.subr.bf16.mxu0 0
  %3299 = vmatpush1.bf16.msra.mxu0 0
  %3300 = vmatprep.mubr.bf16.mxu0 0
  %3301 = vmatmul.mubr.bf16.gmra.mrb[0].mxu0 %v2172
  %v3302 = vpop.f32.mrb[0].mxu0
  %v3303 = vadd.f32 %v1508, %v3302
  %v3304 = vpop.f32.mrb[0].mxu0
  %v3305 = vadd.f32 %v1510, %v3304
  %v3306 = vpop.f32.mrb[0].mxu0
  %v3307 = vpop.f32.mrb[0].mxu0
  %3308 = vdwg.mxu0
  %3309 = vmatprep.subr.bf16.mxu0 %v2316
  %3310 = vmatpush1.bf16.msra.mxu0 %v2313
  %3311 = vmatprep.subr.bf16.mxu0 0
  %3312 = vmatpush1.bf16.msra.mxu0 0
  %3313 = vmatprep.subr.bf16.mxu0 0
  %3314 = vmatpush1.bf16.msra.mxu0 0
  %3315 = vmatprep.subr.bf16.mxu0 0
  %3316 = vmatpush1.bf16.msra.mxu0 0
  %3317 = vmatprep.subr.bf16.mxu0 0
  %3318 = vmatpush1.bf16.msra.mxu0 0
  %3319 = vmatprep.subr.bf16.mxu0 0
  %3320 = vmatpush1.bf16.msra.mxu0 0
  %3321 = vmatprep.subr.bf16.mxu0 0
  %3322 = vmatpush1.bf16.msra.mxu0 0
  %3323 = vmatprep.subr.bf16.mxu0 0
  %3324 = vmatpush1.bf16.msra.mxu0 0
  %3325 = vmatprep.subr.bf16.mxu0 0
  %3326 = vmatpush1.bf16.msra.mxu0 0
  %3327 = vmatprep.subr.bf16.mxu0 0
  %3328 = vmatpush1.bf16.msra.mxu0 0
  %3329 = vmatprep.subr.bf16.mxu0 0
  %3330 = vmatpush1.bf16.msra.mxu0 0
  %3331 = vmatprep.subr.bf16.mxu0 0
  %3332 = vmatpush1.bf16.msra.mxu0 0
  %3333 = vmatprep.subr.bf16.mxu0 0
  %3334 = vmatpush1.bf16.msra.mxu0 0
  %3335 = vmatprep.subr.bf16.mxu0 0
  %3336 = vmatpush1.bf16.msra.mxu0 0
  %3337 = vmatprep.subr.bf16.mxu0 0
  %3338 = vmatpush1.bf16.msra.mxu0 0
  %3339 = vmatprep.subr.bf16.mxu0 0
  %3340 = vmatpush1.bf16.msra.mxu0 0
  %3341 = vmatprep.mubr.bf16.mxu0 0
  %3342 = vmatmul.mubr.bf16.gmra.mrb[0].mxu0 %v2172
  %v3343 = vpop.f32.mrb[0].mxu0
  %v3344 = vadd.f32 %v1549, %v3343
  %v3345 = vpop.f32.mrb[0].mxu0
  %v3346 = vadd.f32 %v1551, %v3345
  %v3347 = vpop.f32.mrb[0].mxu0
  %v3348 = vpop.f32.mrb[0].mxu0
  %3349 = vdwg.mxu0
  %3350 = vmatprep.subr.bf16.mxu0 %v2322
  %3351 = vmatpush1.bf16.msra.mxu0 %v2319
  %3352 = vmatprep.subr.bf16.mxu0 0
  %3353 = vmatpush1.bf16.msra.mxu0 0
  %3354 = vmatprep.subr.bf16.mxu0 0
  %3355 = vmatpush1.bf16.msra.mxu0 0
  %3356 = vmatprep.subr.bf16.mxu0 0
  %3357 = vmatpush1.bf16.msra.mxu0 0
  %3358 = vmatprep.subr.bf16.mxu0 0
  %3359 = vmatpush1.bf16.msra.mxu0 0
  %3360 = vmatprep.subr.bf16.mxu0 0
  %3361 = vmatpush1.bf16.msra.mxu0 0
  %3362 = vmatprep.subr.bf16.mxu0 0
  %3363 = vmatpush1.bf16.msra.mxu0 0
  %3364 = vmatprep.subr.bf16.mxu0 0
  %3365 = vmatpush1.bf16.msra.mxu0 0
  %3366 = vmatprep.subr.bf16.mxu0 0
  %3367 = vmatpush1.bf16.msra.mxu0 0
  %3368 = vmatprep.subr.bf16.mxu0 0
  %3369 = vmatpush1.bf16.msra.mxu0 0
  %3370 = vmatprep.subr.bf16.mxu0 0
  %3371 = vmatpush1.bf16.msra.mxu0 0
  %3372 = vmatprep.subr.bf16.mxu0 0
  %3373 = vmatpush1.bf16.msra.mxu0 0
  %3374 = vmatprep.subr.bf16.mxu0 0
  %3375 = vmatpush1.bf16.msra.mxu0 0
  %3376 = vmatprep.subr.bf16.mxu0 0
  %3377 = vmatpush1.bf16.msra.mxu0 0
  %3378 = vmatprep.subr.bf16.mxu0 0
  %3379 = vmatpush1.bf16.msra.mxu0 0
  %3380 = vmatprep.subr.bf16.mxu0 0
  %3381 = vmatpush1.bf16.msra.mxu0 0
  %3382 = vmatprep.mubr.bf16.mxu0 0
  %3383 = vmatmul.mubr.bf16.gmra.mrb[0].mxu0 %v2172
  %v3384 = vpop.f32.mrb[0].mxu0
  %v3385 = vadd.f32 %v1590, %v3384
  %v3386 = vpop.f32.mrb[0].mxu0
  %v3387 = vadd.f32 %v1592, %v3386
  %v3388 = vpop.f32.mrb[0].mxu0
  %v3389 = vpop.f32.mrb[0].mxu0
  %3390 = vdwg.mxu0
  %3391 = vmatprep.subr.bf16.mxu0 %v2328
  %3392 = vmatpush1.bf16.msra.mxu0 %v2325
  %3393 = vmatprep.subr.bf16.mxu0 0
  %3394 = vmatpush1.bf16.msra.mxu0 0
  %3395 = vmatprep.subr.bf16.mxu0 0
  %3396 = vmatpush1.bf16.msra.mxu0 0
  %3397 = vmatprep.subr.bf16.mxu0 0
  %3398 = vmatpush1.bf16.msra.mxu0 0
  %3399 = vmatprep.subr.bf16.mxu0 0
  %3400 = vmatpush1.bf16.msra.mxu0 0
  %3401 = vmatprep.subr.bf16.mxu0 0
  %3402 = vmatpush1.bf16.msra.mxu0 0
  %3403 = vmatprep.subr.bf16.mxu0 0
  %3404 = vmatpush1.bf16.msra.mxu0 0
  %3405 = vmatprep.subr.bf16.mxu0 0
  %3406 = vmatpush1.bf16.msra.mxu0 0
  %3407 = vmatprep.subr.bf16.mxu0 0
  %3408 = vmatpush1.bf16.msra.mxu0 0
  %3409 = vmatprep.subr.bf16.mxu0 0
  %3410 = vmatpush1.bf16.msra.mxu0 0
  %3411 = vmatprep.subr.bf16.mxu0 0
  %3412 = vmatpush1.bf16.msra.mxu0 0
  %3413 = vmatprep.subr.bf16.mxu0 0
  %3414 = vmatpush1.bf16.msra.mxu0 0
  %3415 = vmatprep.subr.bf16.mxu0 0
  %3416 = vmatpush1.bf16.msra.mxu0 0
  %3417 = vmatprep.subr.bf16.mxu0 0
  %3418 = vmatpush1.bf16.msra.mxu0 0
  %3419 = vmatprep.subr.bf16.mxu0 0
  %3420 = vmatpush1.bf16.msra.mxu0 0
  %3421 = vmatprep.subr.bf16.mxu0 0
  %3422 = vmatpush1.bf16.msra.mxu0 0
  %3423 = vmatprep.mubr.bf16.mxu0 0
  %3424 = vmatmul.mubr.bf16.gmra.mrb[0].mxu0 %v2172
  %v3425 = vpop.f32.mrb[0].mxu0
  %v3426 = vadd.f32 %v1631, %v3425
  %v3427 = vpop.f32.mrb[0].mxu0
  %v3428 = vadd.f32 %v1633, %v3427
  %v3429 = vpop.f32.mrb[0].mxu0
  %v3430 = vpop.f32.mrb[0].mxu0
  %3431 = vdwg.mxu0
  %3432 = vmatprep.subr.bf16.mxu0 %v2334
  %3433 = vmatpush1.bf16.msra.mxu0 %v2331
  %3434 = vmatprep.subr.bf16.mxu0 0
  %3435 = vmatpush1.bf16.msra.mxu0 0
  %3436 = vmatprep.subr.bf16.mxu0 0
  %3437 = vmatpush1.bf16.msra.mxu0 0
  %3438 = vmatprep.subr.bf16.mxu0 0
  %3439 = vmatpush1.bf16.msra.mxu0 0
  %3440 = vmatprep.subr.bf16.mxu0 0
  %3441 = vmatpush1.bf16.msra.mxu0 0
  %3442 = vmatprep.subr.bf16.mxu0 0
  %3443 = vmatpush1.bf16.msra.mxu0 0
  %3444 = vmatprep.subr.bf16.mxu0 0
  %3445 = vmatpush1.bf16.msra.mxu0 0
  %3446 = vmatprep.subr.bf16.mxu0 0
  %3447 = vmatpush1.bf16.msra.mxu0 0
  %3448 = vmatprep.subr.bf16.mxu0 0
  %3449 = vmatpush1.bf16.msra.mxu0 0
  %3450 = vmatprep.subr.bf16.mxu0 0
  %3451 = vmatpush1.bf16.msra.mxu0 0
  %3452 = vmatprep.subr.bf16.mxu0 0
  %3453 = vmatpush1.bf16.msra.mxu0 0
  %3454 = vmatprep.subr.bf16.mxu0 0
  %3455 = vmatpush1.bf16.msra.mxu0 0
  %3456 = vmatprep.subr.bf16.mxu0 0
  %3457 = vmatpush1.bf16.msra.mxu0 0
  %3458 = vmatprep.subr.bf16.mxu0 0
  %3459 = vmatpush1.bf16.msra.mxu0 0
  %3460 = vmatprep.subr.bf16.mxu0 0
  %3461 = vmatpush1.bf16.msra.mxu0 0
  %3462 = vmatprep.subr.bf16.mxu0 0
  %3463 = vmatpush1.bf16.msra.mxu0 0
  %3464 = vmatprep.mubr.bf16.mxu0 0
  %3465 = vmatmul.mubr.bf16.gmra.mrb[0].mxu0 %v2172
  %v3466 = vpop.f32.mrb[0].mxu0
  %v3467 = vadd.f32 %v1672, %v3466
  %v3468 = vpop.f32.mrb[0].mxu0
  %v3469 = vadd.f32 %v1674, %v3468
  %v3470 = vpop.f32.mrb[0].mxu0
  %v3471 = vpop.f32.mrb[0].mxu0
  %3472 = vdwg.mxu0
  %3473 = vmatprep.subr.bf16.mxu0 %v2340
  %3474 = vmatpush1.bf16.msra.mxu0 %v2337
  %3475 = vmatprep.subr.bf16.mxu0 0
  %3476 = vmatpush1.bf16.msra.mxu0 0
  %3477 = vmatprep.subr.bf16.mxu0 0
  %3478 = vmatpush1.bf16.msra.mxu0 0
  %3479 = vmatprep.subr.bf16.mxu0 0
  %3480 = vmatpush1.bf16.msra.mxu0 0
  %3481 = vmatprep.subr.bf16.mxu0 0
  %3482 = vmatpush1.bf16.msra.mxu0 0
  %3483 = vmatprep.subr.bf16.mxu0 0
  %3484 = vmatpush1.bf16.msra.mxu0 0
  %3485 = vmatprep.subr.bf16.mxu0 0
  %3486 = vmatpush1.bf16.msra.mxu0 0
  %3487 = vmatprep.subr.bf16.mxu0 0
  %3488 = vmatpush1.bf16.msra.mxu0 0
  %3489 = vmatprep.subr.bf16.mxu0 0
  %3490 = vmatpush1.bf16.msra.mxu0 0
  %3491 = vmatprep.subr.bf16.mxu0 0
  %3492 = vmatpush1.bf16.msra.mxu0 0
  %3493 = vmatprep.subr.bf16.mxu0 0
  %3494 = vmatpush1.bf16.msra.mxu0 0
  %3495 = vmatprep.subr.bf16.mxu0 0
  %3496 = vmatpush1.bf16.msra.mxu0 0
  %3497 = vmatprep.subr.bf16.mxu0 0
  %3498 = vmatpush1.bf16.msra.mxu0 0
  %3499 = vmatprep.subr.bf16.mxu0 0
  %3500 = vmatpush1.bf16.msra.mxu0 0
  %3501 = vmatprep.subr.bf16.mxu0 0
  %3502 = vmatpush1.bf16.msra.mxu0 0
  %3503 = vmatprep.subr.bf16.mxu0 0
  %3504 = vmatpush1.bf16.msra.mxu0 0
  %3505 = vmatprep.mubr.bf16.mxu0 0
  %3506 = vmatmul.mubr.bf16.gmra.mrb[0].mxu0 %v2172
  %v3507 = vpop.f32.mrb[0].mxu0
  %v3508 = vadd.f32 %v1713, %v3507
  %v3509 = vpop.f32.mrb[0].mxu0
  %v3510 = vadd.f32 %v1715, %v3509
  %v3511 = vpop.f32.mrb[0].mxu0
  %v3512 = vpop.f32.mrb[0].mxu0
  %3513 = vdwg.mxu0
  %3514 = vmatprep.subr.bf16.mxu0 %v2346
  %3515 = vmatpush1.bf16.msra.mxu0 %v2343
  %3516 = vmatprep.subr.bf16.mxu0 0
  %3517 = vmatpush1.bf16.msra.mxu0 0
  %3518 = vmatprep.subr.bf16.mxu0 0
  %3519 = vmatpush1.bf16.msra.mxu0 0
  %3520 = vmatprep.subr.bf16.mxu0 0
  %3521 = vmatpush1.bf16.msra.mxu0 0
  %3522 = vmatprep.subr.bf16.mxu0 0
  %3523 = vmatpush1.bf16.msra.mxu0 0
  %3524 = vmatprep.subr.bf16.mxu0 0
  %3525 = vmatpush1.bf16.msra.mxu0 0
  %3526 = vmatprep.subr.bf16.mxu0 0
  %3527 = vmatpush1.bf16.msra.mxu0 0
  %3528 = vmatprep.subr.bf16.mxu0 0
  %3529 = vmatpush1.bf16.msra.mxu0 0
  %3530 = vmatprep.subr.bf16.mxu0 0
  %3531 = vmatpush1.bf16.msra.mxu0 0
  %3532 = vmatprep.subr.bf16.mxu0 0
  %3533 = vmatpush1.bf16.msra.mxu0 0
  %3534 = vmatprep.subr.bf16.mxu0 0
  %3535 = vmatpush1.bf16.msra.mxu0 0
  %3536 = vmatprep.subr.bf16.mxu0 0
  %3537 = vmatpush1.bf16.msra.mxu0 0
  %3538 = vmatprep.subr.bf16.mxu0 0
  %3539 = vmatpush1.bf16.msra.mxu0 0
  %3540 = vmatprep.subr.bf16.mxu0 0
  %3541 = vmatpush1.bf16.msra.mxu0 0
  %3542 = vmatprep.subr.bf16.mxu0 0
  %3543 = vmatpush1.bf16.msra.mxu0 0
  %3544 = vmatprep.subr.bf16.mxu0 0
  %3545 = vmatpush1.bf16.msra.mxu0 0
  %3546 = vmatprep.mubr.bf16.mxu0 0
  %3547 = vmatmul.mubr.bf16.gmra.mrb[0].mxu0 %v2172
  %v3548 = vpop.f32.mrb[0].mxu0
  %v3549 = vadd.f32 %v1754, %v3548
  %v3550 = vpop.f32.mrb[0].mxu0
  %v3551 = vadd.f32 %v1756, %v3550
  %v3552 = vpop.f32.mrb[0].mxu0
  %v3553 = vpop.f32.mrb[0].mxu0
  %3554 = vdwg.mxu0
  %3555 = vmatprep.subr.bf16.mxu0 %v2352
  %3556 = vmatpush1.bf16.msra.mxu0 %v2349
  %3557 = vmatprep.subr.bf16.mxu0 0
  %3558 = vmatpush1.bf16.msra.mxu0 0
  %3559 = vmatprep.subr.bf16.mxu0 0
  %3560 = vmatpush1.bf16.msra.mxu0 0
  %3561 = vmatprep.subr.bf16.mxu0 0
  %3562 = vmatpush1.bf16.msra.mxu0 0
  %3563 = vmatprep.subr.bf16.mxu0 0
  %3564 = vmatpush1.bf16.msra.mxu0 0
  %3565 = vmatprep.subr.bf16.mxu0 0
  %3566 = vmatpush1.bf16.msra.mxu0 0
  %3567 = vmatprep.subr.bf16.mxu0 0
  %3568 = vmatpush1.bf16.msra.mxu0 0
  %3569 = vmatprep.subr.bf16.mxu0 0
  %3570 = vmatpush1.bf16.msra.mxu0 0
  %3571 = vmatprep.subr.bf16.mxu0 0
  %3572 = vmatpush1.bf16.msra.mxu0 0
  %3573 = vmatprep.subr.bf16.mxu0 0
  %3574 = vmatpush1.bf16.msra.mxu0 0
  %3575 = vmatprep.subr.bf16.mxu0 0
  %3576 = vmatpush1.bf16.msra.mxu0 0
  %3577 = vmatprep.subr.bf16.mxu0 0
  %3578 = vmatpush1.bf16.msra.mxu0 0
  %3579 = vmatprep.subr.bf16.mxu0 0
  %3580 = vmatpush1.bf16.msra.mxu0 0
  %3581 = vmatprep.subr.bf16.mxu0 0
  %3582 = vmatpush1.bf16.msra.mxu0 0
  %3583 = vmatprep.subr.bf16.mxu0 0
  %3584 = vmatpush1.bf16.msra.mxu0 0
  %3585 = vmatprep.subr.bf16.mxu0 0
  %3586 = vmatpush1.bf16.msra.mxu0 0
  %3587 = vmatprep.mubr.bf16.mxu0 0
  %3588 = vmatmul.mubr.bf16.gmra.mrb[0].mxu0 %v2172
  %v3589 = vpop.f32.mrb[0].mxu0
  %v3590 = vadd.f32 %v1795, %v3589
  %v3591 = vpop.f32.mrb[0].mxu0
  %v3592 = vadd.f32 %v1797, %v3591
  %v3593 = vpop.f32.mrb[0].mxu0
  %v3594 = vpop.f32.mrb[0].mxu0
  %3595 = vdwg.mxu0
  %3596 = vmatprep.subr.bf16.mxu0 %v2358
  %3597 = vmatpush1.bf16.msra.mxu0 %v2355
  %3598 = vmatprep.subr.bf16.mxu0 0
  %3599 = vmatpush1.bf16.msra.mxu0 0
  %3600 = vmatprep.subr.bf16.mxu0 0
  %3601 = vmatpush1.bf16.msra.mxu0 0
  %3602 = vmatprep.subr.bf16.mxu0 0
  %3603 = vmatpush1.bf16.msra.mxu0 0
  %3604 = vmatprep.subr.bf16.mxu0 0
  %3605 = vmatpush1.bf16.msra.mxu0 0
  %3606 = vmatprep.subr.bf16.mxu0 0
  %3607 = vmatpush1.bf16.msra.mxu0 0
  %3608 = vmatprep.subr.bf16.mxu0 0
  %3609 = vmatpush1.bf16.msra.mxu0 0
  %3610 = vmatprep.subr.bf16.mxu0 0
  %3611 = vmatpush1.bf16.msra.mxu0 0
  %3612 = vmatprep.subr.bf16.mxu0 0
  %3613 = vmatpush1.bf16.msra.mxu0 0
  %3614 = vmatprep.subr.bf16.mxu0 0
  %3615 = vmatpush1.bf16.msra.mxu0 0
  %3616 = vmatprep.subr.bf16.mxu0 0
  %3617 = vmatpush1.bf16.msra.mxu0 0
  %3618 = vmatprep.subr.bf16.mxu0 0
  %3619 = vmatpush1.bf16.msra.mxu0 0
  %3620 = vmatprep.subr.bf16.mxu0 0
  %3621 = vmatpush1.bf16.msra.mxu0 0
  %3622 = vmatprep.subr.bf16.mxu0 0
  %3623 = vmatpush1.bf16.msra.mxu0 0
  %3624 = vmatprep.subr.bf16.mxu0 0
  %3625 = vmatpush1.bf16.msra.mxu0 0
  %3626 = vmatprep.subr.bf16.mxu0 0
  %3627 = vmatpush1.bf16.msra.mxu0 0
  %3628 = vmatprep.mubr.bf16.mxu0 0
  %3629 = vmatmul.mubr.bf16.gmra.mrb[0].mxu0 %v2172
  %v3630 = vpop.f32.mrb[0].mxu0
  %v3631 = vadd.f32 %v1836, %v3630
  %v3632 = vpop.f32.mrb[0].mxu0
  %v3633 = vadd.f32 %v1838, %v3632
  %v3634 = vpop.f32.mrb[0].mxu0
  %v3635 = vpop.f32.mrb[0].mxu0
  %3636 = vdwg.mxu0
  %3637 = vmatprep.subr.bf16.mxu0 %v2364
  %3638 = vmatpush1.bf16.msra.mxu0 %v2361
  %3639 = vmatprep.subr.bf16.mxu0 0
  %3640 = vmatpush1.bf16.msra.mxu0 0
  %3641 = vmatprep.subr.bf16.mxu0 0
  %3642 = vmatpush1.bf16.msra.mxu0 0
  %3643 = vmatprep.subr.bf16.mxu0 0
  %3644 = vmatpush1.bf16.msra.mxu0 0
  %3645 = vmatprep.subr.bf16.mxu0 0
  %3646 = vmatpush1.bf16.msra.mxu0 0
  %3647 = vmatprep.subr.bf16.mxu0 0
  %3648 = vmatpush1.bf16.msra.mxu0 0
  %3649 = vmatprep.subr.bf16.mxu0 0
  %3650 = vmatpush1.bf16.msra.mxu0 0
  %3651 = vmatprep.subr.bf16.mxu0 0
  %3652 = vmatpush1.bf16.msra.mxu0 0
  %3653 = vmatprep.subr.bf16.mxu0 0
  %3654 = vmatpush1.bf16.msra.mxu0 0
  %3655 = vmatprep.subr.bf16.mxu0 0
  %3656 = vmatpush1.bf16.msra.mxu0 0
  %3657 = vmatprep.subr.bf16.mxu0 0
  %3658 = vmatpush1.bf16.msra.mxu0 0
  %3659 = vmatprep.subr.bf16.mxu0 0
  %3660 = vmatpush1.bf16.msra.mxu0 0
  %3661 = vmatprep.subr.bf16.mxu0 0
  %3662 = vmatpush1.bf16.msra.mxu0 0
  %3663 = vmatprep.subr.bf16.mxu0 0
  %3664 = vmatpush1.bf16.msra.mxu0 0
  %3665 = vmatprep.subr.bf16.mxu0 0
  %3666 = vmatpush1.bf16.msra.mxu0 0
  %3667 = vmatprep.subr.bf16.mxu0 0
  %3668 = vmatpush1.bf16.msra.mxu0 0
  %3669 = vmatprep.mubr.bf16.mxu0 0
  %3670 = vmatmul.mubr.bf16.gmra.mrb[0].mxu0 %v2172
  %v3671 = vpop.f32.mrb[0].mxu0
  %v3672 = vadd.f32 %v1877, %v3671
  %v3673 = vpop.f32.mrb[0].mxu0
  %v3674 = vadd.f32 %v1879, %v3673
  %v3675 = vpop.f32.mrb[0].mxu0
  %v3676 = vpop.f32.mrb[0].mxu0
  %3677 = vdwg.mxu0
  %v3694 = vcombine.high %v47, %v47
  %v3696 = vunpack.c.l.s4 1983009808
  %v3697 = vunpack.c.0.s8 %v3696
  %v3698 = vlaneseq
  %v3699 = vshrl.u32 %v3698, 7
  %v3700 = vsub.s32 %v3697, %v3699
  %v3701 = vrot.slane %v47, %v3700
  %v3703 = vunpack.c.l.s4 1983009808
  %v3704 = vunpack.c.0.s8 %v3703
  %v3705 = vlaneseq
  %v3706 = vshrl.u32 %v3705, 7
  %v3707 = vsub.s32 %v3704, %v3706
  %v3708 = vrot.slane %v3694, %v3707
  %v3709 = vcombine.high %v3701, %v3701
  %v3710 = vcombine.high %v3708, %v3708
  %v3711 = vcombine.high %v48, %v48
  %v3713 = vunpack.c.l.s4 1983009808
  %v3714 = vunpack.c.0.s8 %v3713
  %v3715 = vlaneseq
  %v3716 = vshrl.u32 %v3715, 7
  %v3717 = vsub.s32 %v3714, %v3716
  %v3718 = vrot.slane %v48, %v3717
  %v3720 = vunpack.c.l.s4 1983009808
  %v3721 = vunpack.c.0.s8 %v3720
  %v3722 = vlaneseq
  %v3723 = vshrl.u32 %v3722, 7
  %v3724 = vsub.s32 %v3721, %v3723
  %v3725 = vrot.slane %v3711, %v3724
  %v3726 = vcombine.high %v3718, %v3718
  %v3727 = vcombine.high %v3725, %v3725
  %v3728 = vcombine.high %v49, %v49
  %v3730 = vunpack.c.l.s4 1983009808
  %v3731 = vunpack.c.0.s8 %v3730
  %v3732 = vlaneseq
  %v3733 = vshrl.u32 %v3732, 7
  %v3734 = vsub.s32 %v3731, %v3733
  %v3735 = vrot.slane %v49, %v3734
  %v3737 = vunpack.c.l.s4 1983009808
  %v3738 = vunpack.c.0.s8 %v3737
  %v3739 = vlaneseq
  %v3740 = vshrl.u32 %v3739, 7
  %v3741 = vsub.s32 %v3738, %v3740
  %v3742 = vrot.slane %v3728, %v3741
  %v3743 = vcombine.high %v3735, %v3735
  %v3744 = vcombine.high %v3742, %v3742
  %v3745 = vcombine.high %v50, %v50
  %v3747 = vunpack.c.l.s4 1983009808
  %v3748 = vunpack.c.0.s8 %v3747
  %v3749 = vlaneseq
  %v3750 = vshrl.u32 %v3749, 7
  %v3751 = vsub.s32 %v3748, %v3750
  %v3752 = vrot.slane %v50, %v3751
  %v3754 = vunpack.c.l.s4 1983009808
  %v3755 = vunpack.c.0.s8 %v3754
  %v3756 = vlaneseq
  %v3757 = vshrl.u32 %v3756, 7
  %v3758 = vsub.s32 %v3755, %v3757
  %v3759 = vrot.slane %v3745, %v3758
  %v3760 = vcombine.high %v3752, %v3752
  %v3761 = vcombine.high %v3759, %v3759
  %v3762 = vcombine.high %v51, %v51
  %v3764 = vunpack.c.l.s4 1983009808
  %v3765 = vunpack.c.0.s8 %v3764
  %v3766 = vlaneseq
  %v3767 = vshrl.u32 %v3766, 7
  %v3768 = vsub.s32 %v3765, %v3767
  %v3769 = vrot.slane %v51, %v3768
  %v3771 = vunpack.c.l.s4 1983009808
  %v3772 = vunpack.c.0.s8 %v3771
  %v3773 = vlaneseq
  %v3774 = vshrl.u32 %v3773, 7
  %v3775 = vsub.s32 %v3772, %v3774
  %v3776 = vrot.slane %v3762, %v3775
  %v3777 = vcombine.high %v3769, %v3769
  %v3778 = vcombine.high %v3776, %v3776
  %v3779 = vcombine.high %v52, %v52
  %v3781 = vunpack.c.l.s4 1983009808
  %v3782 = vunpack.c.0.s8 %v3781
  %v3783 = vlaneseq
  %v3784 = vshrl.u32 %v3783, 7
  %v3785 = vsub.s32 %v3782, %v3784
  %v3786 = vrot.slane %v52, %v3785
  %v3788 = vunpack.c.l.s4 1983009808
  %v3789 = vunpack.c.0.s8 %v3788
  %v3790 = vlaneseq
  %v3791 = vshrl.u32 %v3790, 7
  %v3792 = vsub.s32 %v3789, %v3791
  %v3793 = vrot.slane %v3779, %v3792
  %v3794 = vcombine.high %v3786, %v3786
  %v3795 = vcombine.high %v3793, %v3793
  %v3796 = vcombine.high %v53, %v53
  %v3798 = vunpack.c.l.s4 1983009808
  %v3799 = vunpack.c.0.s8 %v3798
  %v3800 = vlaneseq
  %v3801 = vshrl.u32 %v3800, 7
  %v3802 = vsub.s32 %v3799, %v3801
  %v3803 = vrot.slane %v53, %v3802
  %v3805 = vunpack.c.l.s4 1983009808
  %v3806 = vunpack.c.0.s8 %v3805
  %v3807 = vlaneseq
  %v3808 = vshrl.u32 %v3807, 7
  %v3809 = vsub.s32 %v3806, %v3808
  %v3810 = vrot.slane %v3796, %v3809
  %v3811 = vcombine.high %v3803, %v3803
  %v3812 = vcombine.high %v3810, %v3810
  %v3813 = vcombine.high %v54, %v54
  %v3815 = vunpack.c.l.s4 1983009808
  %v3816 = vunpack.c.0.s8 %v3815
  %v3817 = vlaneseq
  %v3818 = vshrl.u32 %v3817, 7
  %v3819 = vsub.s32 %v3816, %v3818
  %v3820 = vrot.slane %v54, %v3819
  %v3822 = vunpack.c.l.s4 1983009808
  %v3823 = vunpack.c.0.s8 %v3822
  %v3824 = vlaneseq
  %v3825 = vshrl.u32 %v3824, 7
  %v3826 = vsub.s32 %v3823, %v3825
  %v3827 = vrot.slane %v3813, %v3826
  %v3828 = vcombine.high %v3820, %v3820
  %v3829 = vcombine.high %v3827, %v3827
  %v3830 = vcombine.high %v55, %v55
  %v3832 = vunpack.c.l.s4 1983009808
  %v3833 = vunpack.c.0.s8 %v3832
  %v3834 = vlaneseq
  %v3835 = vshrl.u32 %v3834, 7
  %v3836 = vsub.s32 %v3833, %v3835
  %v3837 = vrot.slane %v55, %v3836
  %v3839 = vunpack.c.l.s4 1983009808
  %v3840 = vunpack.c.0.s8 %v3839
  %v3841 = vlaneseq
  %v3842 = vshrl.u32 %v3841, 7
  %v3843 = vsub.s32 %v3840, %v3842
  %v3844 = vrot.slane %v3830, %v3843
  %v3845 = vcombine.high %v3837, %v3837
  %v3846 = vcombine.high %v3844, %v3844
  %v3847 = vcombine.high %v56, %v56
  %v3849 = vunpack.c.l.s4 1983009808
  %v3850 = vunpack.c.0.s8 %v3849
  %v3851 = vlaneseq
  %v3852 = vshrl.u32 %v3851, 7
  %v3853 = vsub.s32 %v3850, %v3852
  %v3854 = vrot.slane %v56, %v3853
  %v3856 = vunpack.c.l.s4 1983009808
  %v3857 = vunpack.c.0.s8 %v3856
  %v3858 = vlaneseq
  %v3859 = vshrl.u32 %v3858, 7
  %v3860 = vsub.s32 %v3857, %v3859
  %v3861 = vrot.slane %v3847, %v3860
  %v3862 = vcombine.high %v3854, %v3854
  %v3863 = vcombine.high %v3861, %v3861
  %v3864 = vcombine.high %v57, %v57
  %v3866 = vunpack.c.l.s4 1983009808
  %v3867 = vunpack.c.0.s8 %v3866
  %v3868 = vlaneseq
  %v3869 = vshrl.u32 %v3868, 7
  %v3870 = vsub.s32 %v3867, %v3869
  %v3871 = vrot.slane %v57, %v3870
  %v3873 = vunpack.c.l.s4 1983009808
  %v3874 = vunpack.c.0.s8 %v3873
  %v3875 = vlaneseq
  %v3876 = vshrl.u32 %v3875, 7
  %v3877 = vsub.s32 %v3874, %v3876
  %v3878 = vrot.slane %v3864, %v3877
  %v3879 = vcombine.high %v3871, %v3871
  %v3880 = vcombine.high %v3878, %v3878
  %v3881 = vcombine.high %v58, %v58
  %v3883 = vunpack.c.l.s4 1983009808
  %v3884 = vunpack.c.0.s8 %v3883
  %v3885 = vlaneseq
  %v3886 = vshrl.u32 %v3885, 7
  %v3887 = vsub.s32 %v3884, %v3886
  %v3888 = vrot.slane %v58, %v3887
  %v3890 = vunpack.c.l.s4 1983009808
  %v3891 = vunpack.c.0.s8 %v3890
  %v3892 = vlaneseq
  %v3893 = vshrl.u32 %v3892, 7
  %v3894 = vsub.s32 %v3891, %v3893
  %v3895 = vrot.slane %v3881, %v3894
  %v3896 = vcombine.high %v3888, %v3888
  %v3897 = vcombine.high %v3895, %v3895
  %v3898 = vcombine.high %v59, %v59
  %v3900 = vunpack.c.l.s4 1983009808
  %v3901 = vunpack.c.0.s8 %v3900
  %v3902 = vlaneseq
  %v3903 = vshrl.u32 %v3902, 7
  %v3904 = vsub.s32 %v3901, %v3903
  %v3905 = vrot.slane %v59, %v3904
  %v3907 = vunpack.c.l.s4 1983009808
  %v3908 = vunpack.c.0.s8 %v3907
  %v3909 = vlaneseq
  %v3910 = vshrl.u32 %v3909, 7
  %v3911 = vsub.s32 %v3908, %v3910
  %v3912 = vrot.slane %v3898, %v3911
  %v3913 = vcombine.high %v3905, %v3905
  %v3914 = vcombine.high %v3912, %v3912
  %v3915 = vcombine.high %v60, %v60
  %v3917 = vunpack.c.l.s4 1983009808
  %v3918 = vunpack.c.0.s8 %v3917
  %v3919 = vlaneseq
  %v3920 = vshrl.u32 %v3919, 7
  %v3921 = vsub.s32 %v3918, %v3920
  %v3922 = vrot.slane %v60, %v3921
  %v3924 = vunpack.c.l.s4 1983009808
  %v3925 = vunpack.c.0.s8 %v3924
  %v3926 = vlaneseq
  %v3927 = vshrl.u32 %v3926, 7
  %v3928 = vsub.s32 %v3925, %v3927
  %v3929 = vrot.slane %v3915, %v3928
  %v3930 = vcombine.high %v3922, %v3922
  %v3931 = vcombine.high %v3929, %v3929
  %v3932 = vcombine.high %v61, %v61
  %v3934 = vunpack.c.l.s4 1983009808
  %v3935 = vunpack.c.0.s8 %v3934
  %v3936 = vlaneseq
  %v3937 = vshrl.u32 %v3936, 7
  %v3938 = vsub.s32 %v3935, %v3937
  %v3939 = vrot.slane %v61, %v3938
  %v3941 = vunpack.c.l.s4 1983009808
  %v3942 = vunpack.c.0.s8 %v3941
  %v3943 = vlaneseq
  %v3944 = vshrl.u32 %v3943, 7
  %v3945 = vsub.s32 %v3942, %v3944
  %v3946 = vrot.slane %v3932, %v3945
  %v3947 = vcombine.high %v3939, %v3939
  %v3948 = vcombine.high %v3946, %v3946
  %v3949 = vcombine.high %v62, %v62
  %v3951 = vunpack.c.l.s4 1983009808
  %v3952 = vunpack.c.0.s8 %v3951
  %v3953 = vlaneseq
  %v3954 = vshrl.u32 %v3953, 7
  %v3955 = vsub.s32 %v3952, %v3954
  %v3956 = vrot.slane %v62, %v3955
  %v3958 = vunpack.c.l.s4 1983009808
  %v3959 = vunpack.c.0.s8 %v3958
  %v3960 = vlaneseq
  %v3961 = vshrl.u32 %v3960, 7
  %v3962 = vsub.s32 %v3959, %v3961
  %v3963 = vrot.slane %v3949, %v3962
  %v3964 = vcombine.high %v3956, %v3956
  %v3965 = vcombine.high %v3963, %v3963
  %v3967 = vsel %vm371, %v81, 0
  %v3970 = vand.u32 %v3701, %v378
  %v3973 = vand.u32 %v3709, %v378
  %v3976 = vand.u32 %v3708, %v378
  %v3979 = vand.u32 %v3710, %v378
  %v3982 = vand.u32 %v3718, %v378
  %v3985 = vand.u32 %v3726, %v378
  %v3988 = vand.u32 %v3725, %v378
  %v3991 = vand.u32 %v3727, %v378
  %v3994 = vand.u32 %v3735, %v378
  %v3997 = vand.u32 %v3743, %v378
  %v4000 = vand.u32 %v3742, %v378
  %v4003 = vand.u32 %v3744, %v378
  %v4006 = vand.u32 %v3752, %v378
  %v4009 = vand.u32 %v3760, %v378
  %v4012 = vand.u32 %v3759, %v378
  %v4015 = vand.u32 %v3761, %v378
  %v4018 = vand.u32 %v3769, %v378
  %v4021 = vand.u32 %v3777, %v378
  %v4024 = vand.u32 %v3776, %v378
  %v4027 = vand.u32 %v3778, %v378
  %v4030 = vand.u32 %v3786, %v378
  %v4033 = vand.u32 %v3794, %v378
  %v4036 = vand.u32 %v3793, %v378
  %v4039 = vand.u32 %v3795, %v378
  %v4042 = vand.u32 %v3803, %v378
  %v4045 = vand.u32 %v3811, %v378
  %v4048 = vand.u32 %v3810, %v378
  %v4051 = vand.u32 %v3812, %v378
  %v4054 = vand.u32 %v3820, %v378
  %v4057 = vand.u32 %v3828, %v378
  %v4060 = vand.u32 %v3827, %v378
  %v4063 = vand.u32 %v3829, %v378
  %v4066 = vand.u32 %v3837, %v378
  %v4069 = vand.u32 %v3845, %v378
  %v4072 = vand.u32 %v3844, %v378
  %v4075 = vand.u32 %v3846, %v378
  %v4078 = vand.u32 %v3854, %v378
  %v4081 = vand.u32 %v3862, %v378
  %v4084 = vand.u32 %v3861, %v378
  %v4087 = vand.u32 %v3863, %v378
  %v4090 = vand.u32 %v3871, %v378
  %v4093 = vand.u32 %v3879, %v378
  %v4096 = vand.u32 %v3878, %v378
  %v4099 = vand.u32 %v3880, %v378
  %v4102 = vand.u32 %v3888, %v378
  %v4105 = vand.u32 %v3896, %v378
  %v4108 = vand.u32 %v3895, %v378
  %v4111 = vand.u32 %v3897, %v378
  %v4114 = vand.u32 %v3905, %v378
  %v4117 = vand.u32 %v3913, %v378
  %v4120 = vand.u32 %v3912, %v378
  %v4123 = vand.u32 %v3914, %v378
  %v4126 = vand.u32 %v3922, %v378
  %v4129 = vand.u32 %v3930, %v378
  %v4132 = vand.u32 %v3929, %v378
  %v4135 = vand.u32 %v3931, %v378
  %v4138 = vand.u32 %v3939, %v378
  %v4141 = vand.u32 %v3947, %v378
  %v4144 = vand.u32 %v3946, %v378
  %v4147 = vand.u32 %v3948, %v378
  %v4150 = vand.u32 %v3956, %v378
  %v4153 = vand.u32 %v3964, %v378
  %v4156 = vand.u32 %v3963, %v378
  %v4159 = vand.u32 %v3965, %v378
  %4161 = vmatprep.subr.bf16.mxu0 %v3973
  %4162 = vmatpush1.bf16.msra.mxu0 %v3970
  %4163 = vmatprep.subr.bf16.mxu0 0
  %4164 = vmatpush1.bf16.msra.mxu0 0
  %4165 = vmatprep.subr.bf16.mxu0 0
  %4166 = vmatpush1.bf16.msra.mxu0 0
  %4167 = vmatprep.subr.bf16.mxu0 0
  %4168 = vmatpush1.bf16.msra.mxu0 0
  %4169 = vmatprep.subr.bf16.mxu0 0
  %4170 = vmatpush1.bf16.msra.mxu0 0
  %4171 = vmatprep.subr.bf16.mxu0 0
  %4172 = vmatpush1.bf16.msra.mxu0 0
  %4173 = vmatprep.subr.bf16.mxu0 0
  %4174 = vmatpush1.bf16.msra.mxu0 0
  %4175 = vmatprep.subr.bf16.mxu0 0
  %4176 = vmatpush1.bf16.msra.mxu0 0
  %4177 = vmatprep.subr.bf16.mxu0 0
  %4178 = vmatpush1.bf16.msra.mxu0 0
  %4179 = vmatprep.subr.bf16.mxu0 0
  %4180 = vmatpush1.bf16.msra.mxu0 0
  %4181 = vmatprep.subr.bf16.mxu0 0
  %4182 = vmatpush1.bf16.msra.mxu0 0
  %4183 = vmatprep.subr.bf16.mxu0 0
  %4184 = vmatpush1.bf16.msra.mxu0 0
  %4185 = vmatprep.subr.bf16.mxu0 0
  %4186 = vmatpush1.bf16.msra.mxu0 0
  %4187 = vmatprep.subr.bf16.mxu0 0
  %4188 = vmatpush1.bf16.msra.mxu0 0
  %4189 = vmatprep.subr.bf16.mxu0 0
  %4190 = vmatpush1.bf16.msra.mxu0 0
  %4191 = vmatprep.subr.bf16.mxu0 0
  %4192 = vmatpush1.bf16.msra.mxu0 0
  %4193 = vmatprep.mubr.bf16.mxu0 0
  %4194 = vmatmul.mubr.bf16.gmra.mrb[0].mxu0 %v3967
  %v4195 = vpop.f32.mrb[0].mxu0
  %v4196 = vadd.f32 0.0, %v4195
  %v4197 = vpop.f32.mrb[0].mxu0
  %v4198 = vadd.f32 0.0, %v4197
  %v4199 = vpop.f32.mrb[0].mxu0
  %v4200 = vpop.f32.mrb[0].mxu0
  %4201 = vdwg.mxu0
  %4202 = vmatprep.subr.bf16.mxu0 %v3979
  %4203 = vmatpush1.bf16.msra.mxu0 %v3976
  %4204 = vmatprep.subr.bf16.mxu0 0
  %4205 = vmatpush1.bf16.msra.mxu0 0
  %4206 = vmatprep.subr.bf16.mxu0 0
  %4207 = vmatpush1.bf16.msra.mxu0 0
  %4208 = vmatprep.subr.bf16.mxu0 0
  %4209 = vmatpush1.bf16.msra.mxu0 0
  %4210 = vmatprep.subr.bf16.mxu0 0
  %4211 = vmatpush1.bf16.msra.mxu0 0
  %4212 = vmatprep.subr.bf16.mxu0 0
  %4213 = vmatpush1.bf16.msra.mxu0 0
  %4214 = vmatprep.subr.bf16.mxu0 0
  %4215 = vmatpush1.bf16.msra.mxu0 0
  %4216 = vmatprep.subr.bf16.mxu0 0
  %4217 = vmatpush1.bf16.msra.mxu0 0
  %4218 = vmatprep.subr.bf16.mxu0 0
  %4219 = vmatpush1.bf16.msra.mxu0 0
  %4220 = vmatprep.subr.bf16.mxu0 0
  %4221 = vmatpush1.bf16.msra.mxu0 0
  %4222 = vmatprep.subr.bf16.mxu0 0
  %4223 = vmatpush1.bf16.msra.mxu0 0
  %4224 = vmatprep.subr.bf16.mxu0 0
  %4225 = vmatpush1.bf16.msra.mxu0 0
  %4226 = vmatprep.subr.bf16.mxu0 0
  %4227 = vmatpush1.bf16.msra.mxu0 0
  %4228 = vmatprep.subr.bf16.mxu0 0
  %4229 = vmatpush1.bf16.msra.mxu0 0
  %4230 = vmatprep.subr.bf16.mxu0 0
  %4231 = vmatpush1.bf16.msra.mxu0 0
  %4232 = vmatprep.subr.bf16.mxu0 0
  %4233 = vmatpush1.bf16.msra.mxu0 0
  %4234 = vmatprep.mubr.bf16.mxu0 0
  %4235 = vmatmul.mubr.bf16.gmra.mrb[0].mxu0 %v3967
  %v4236 = vpop.f32.mrb[0].mxu0
  %v4237 = vadd.f32 0.0, %v4236
  %v4238 = vpop.f32.mrb[0].mxu0
  %v4239 = vadd.f32 0.0, %v4238
  %v4240 = vpop.f32.mrb[0].mxu0
  %v4241 = vpop.f32.mrb[0].mxu0
  %4242 = vdwg.mxu0
  %4243 = vmatprep.subr.bf16.mxu0 %v3985
  %4244 = vmatpush1.bf16.msra.mxu0 %v3982
  %4245 = vmatprep.subr.bf16.mxu0 0
  %4246 = vmatpush1.bf16.msra.mxu0 0
  %4247 = vmatprep.subr.bf16.mxu0 0
  %4248 = vmatpush1.bf16.msra.mxu0 0
  %4249 = vmatprep.subr.bf16.mxu0 0
  %4250 = vmatpush1.bf16.msra.mxu0 0
  %4251 = vmatprep.subr.bf16.mxu0 0
  %4252 = vmatpush1.bf16.msra.mxu0 0
  %4253 = vmatprep.subr.bf16.mxu0 0
  %4254 = vmatpush1.bf16.msra.mxu0 0
  %4255 = vmatprep.subr.bf16.mxu0 0
  %4256 = vmatpush1.bf16.msra.mxu0 0
  %4257 = vmatprep.subr.bf16.mxu0 0
  %4258 = vmatpush1.bf16.msra.mxu0 0
  %4259 = vmatprep.subr.bf16.mxu0 0
  %4260 = vmatpush1.bf16.msra.mxu0 0
  %4261 = vmatprep.subr.bf16.mxu0 0
  %4262 = vmatpush1.bf16.msra.mxu0 0
  %4263 = vmatprep.subr.bf16.mxu0 0
  %4264 = vmatpush1.bf16.msra.mxu0 0
  %4265 = vmatprep.subr.bf16.mxu0 0
  %4266 = vmatpush1.bf16.msra.mxu0 0
  %4267 = vmatprep.subr.bf16.mxu0 0
  %4268 = vmatpush1.bf16.msra.mxu0 0
  %4269 = vmatprep.subr.bf16.mxu0 0
  %4270 = vmatpush1.bf16.msra.mxu0 0
  %4271 = vmatprep.subr.bf16.mxu0 0
  %4272 = vmatpush1.bf16.msra.mxu0 0
  %4273 = vmatprep.subr.bf16.mxu0 0
  %4274 = vmatpush1.bf16.msra.mxu0 0
  %4275 = vmatprep.mubr.bf16.mxu0 0
  %4276 = vmatmul.mubr.bf16.gmra.mrb[0].mxu0 %v3967
  %v4277 = vpop.f32.mrb[0].mxu0
  %v4278 = vadd.f32 0.0, %v4277
  %v4279 = vpop.f32.mrb[0].mxu0
  %v4280 = vadd.f32 0.0, %v4279
  %v4281 = vpop.f32.mrb[0].mxu0
  %v4282 = vpop.f32.mrb[0].mxu0
  %4283 = vdwg.mxu0
  %4284 = vmatprep.subr.bf16.mxu0 %v3991
  %4285 = vmatpush1.bf16.msra.mxu0 %v3988
  %4286 = vmatprep.subr.bf16.mxu0 0
  %4287 = vmatpush1.bf16.msra.mxu0 0
  %4288 = vmatprep.subr.bf16.mxu0 0
  %4289 = vmatpush1.bf16.msra.mxu0 0
  %4290 = vmatprep.subr.bf16.mxu0 0
  %4291 = vmatpush1.bf16.msra.mxu0 0
  %4292 = vmatprep.subr.bf16.mxu0 0
  %4293 = vmatpush1.bf16.msra.mxu0 0
  %4294 = vmatprep.subr.bf16.mxu0 0
  %4295 = vmatpush1.bf16.msra.mxu0 0
  %4296 = vmatprep.subr.bf16.mxu0 0
  %4297 = vmatpush1.bf16.msra.mxu0 0
  %4298 = vmatprep.subr.bf16.mxu0 0
  %4299 = vmatpush1.bf16.msra.mxu0 0
  %4300 = vmatprep.subr.bf16.mxu0 0
  %4301 = vmatpush1.bf16.msra.mxu0 0
  %4302 = vmatprep.subr.bf16.mxu0 0
  %4303 = vmatpush1.bf16.msra.mxu0 0
  %4304 = vmatprep.subr.bf16.mxu0 0
  %4305 = vmatpush1.bf16.msra.mxu0 0
  %4306 = vmatprep.subr.bf16.mxu0 0
  %4307 = vmatpush1.bf16.msra.mxu0 0
  %4308 = vmatprep.subr.bf16.mxu0 0
  %4309 = vmatpush1.bf16.msra.mxu0 0
  %4310 = vmatprep.subr.bf16.mxu0 0
  %4311 = vmatpush1.bf16.msra.mxu0 0
  %4312 = vmatprep.subr.bf16.mxu0 0
  %4313 = vmatpush1.bf16.msra.mxu0 0
  %4314 = vmatprep.subr.bf16.mxu0 0
  %4315 = vmatpush1.bf16.msra.mxu0 0
  %4316 = vmatprep.mubr.bf16.mxu0 0
  %4317 = vmatmul.mubr.bf16.gmra.mrb[0].mxu0 %v3967
  %v4318 = vpop.f32.mrb[0].mxu0
  %v4319 = vadd.f32 0.0, %v4318
  %v4320 = vpop.f32.mrb[0].mxu0
  %v4321 = vadd.f32 0.0, %v4320
  %v4322 = vpop.f32.mrb[0].mxu0
  %v4323 = vpop.f32.mrb[0].mxu0
  %4324 = vdwg.mxu0
  %4325 = vmatprep.subr.bf16.mxu0 %v3997
  %4326 = vmatpush1.bf16.msra.mxu0 %v3994
  %4327 = vmatprep.subr.bf16.mxu0 0
  %4328 = vmatpush1.bf16.msra.mxu0 0
  %4329 = vmatprep.subr.bf16.mxu0 0
  %4330 = vmatpush1.bf16.msra.mxu0 0
  %4331 = vmatprep.subr.bf16.mxu0 0
  %4332 = vmatpush1.bf16.msra.mxu0 0
  %4333 = vmatprep.subr.bf16.mxu0 0
  %4334 = vmatpush1.bf16.msra.mxu0 0
  %4335 = vmatprep.subr.bf16.mxu0 0
  %4336 = vmatpush1.bf16.msra.mxu0 0
  %4337 = vmatprep.subr.bf16.mxu0 0
  %4338 = vmatpush1.bf16.msra.mxu0 0
  %4339 = vmatprep.subr.bf16.mxu0 0
  %4340 = vmatpush1.bf16.msra.mxu0 0
  %4341 = vmatprep.subr.bf16.mxu0 0
  %4342 = vmatpush1.bf16.msra.mxu0 0
  %4343 = vmatprep.subr.bf16.mxu0 0
  %4344 = vmatpush1.bf16.msra.mxu0 0
  %4345 = vmatprep.subr.bf16.mxu0 0
  %4346 = vmatpush1.bf16.msra.mxu0 0
  %4347 = vmatprep.subr.bf16.mxu0 0
  %4348 = vmatpush1.bf16.msra.mxu0 0
  %4349 = vmatprep.subr.bf16.mxu0 0
  %4350 = vmatpush1.bf16.msra.mxu0 0
  %4351 = vmatprep.subr.bf16.mxu0 0
  %4352 = vmatpush1.bf16.msra.mxu0 0
  %4353 = vmatprep.subr.bf16.mxu0 0
  %4354 = vmatpush1.bf16.msra.mxu0 0
  %4355 = vmatprep.subr.bf16.mxu0 0
  %4356 = vmatpush1.bf16.msra.mxu0 0
  %4357 = vmatprep.mubr.bf16.mxu0 0
  %4358 = vmatmul.mubr.bf16.gmra.mrb[0].mxu0 %v3967
  %v4359 = vpop.f32.mrb[0].mxu0
  %v4360 = vadd.f32 0.0, %v4359
  %v4361 = vpop.f32.mrb[0].mxu0
  %v4362 = vadd.f32 0.0, %v4361
  %v4363 = vpop.f32.mrb[0].mxu0
  %v4364 = vpop.f32.mrb[0].mxu0
  %4365 = vdwg.mxu0
  %4366 = vmatprep.subr.bf16.mxu0 %v4003
  %4367 = vmatpush1.bf16.msra.mxu0 %v4000
  %4368 = vmatprep.subr.bf16.mxu0 0
  %4369 = vmatpush1.bf16.msra.mxu0 0
  %4370 = vmatprep.subr.bf16.mxu0 0
  %4371 = vmatpush1.bf16.msra.mxu0 0
  %4372 = vmatprep.subr.bf16.mxu0 0
  %4373 = vmatpush1.bf16.msra.mxu0 0
  %4374 = vmatprep.subr.bf16.mxu0 0
  %4375 = vmatpush1.bf16.msra.mxu0 0
  %4376 = vmatprep.subr.bf16.mxu0 0
  %4377 = vmatpush1.bf16.msra.mxu0 0
  %4378 = vmatprep.subr.bf16.mxu0 0
  %4379 = vmatpush1.bf16.msra.mxu0 0
  %4380 = vmatprep.subr.bf16.mxu0 0
  %4381 = vmatpush1.bf16.msra.mxu0 0
  %4382 = vmatprep.subr.bf16.mxu0 0
  %4383 = vmatpush1.bf16.msra.mxu0 0
  %4384 = vmatprep.subr.bf16.mxu0 0
  %4385 = vmatpush1.bf16.msra.mxu0 0
  %4386 = vmatprep.subr.bf16.mxu0 0
  %4387 = vmatpush1.bf16.msra.mxu0 0
  %4388 = vmatprep.subr.bf16.mxu0 0
  %4389 = vmatpush1.bf16.msra.mxu0 0
  %4390 = vmatprep.subr.bf16.mxu0 0
  %4391 = vmatpush1.bf16.msra.mxu0 0
  %4392 = vmatprep.subr.bf16.mxu0 0
  %4393 = vmatpush1.bf16.msra.mxu0 0
  %4394 = vmatprep.subr.bf16.mxu0 0
  %4395 = vmatpush1.bf16.msra.mxu0 0
  %4396 = vmatprep.subr.bf16.mxu0 0
  %4397 = vmatpush1.bf16.msra.mxu0 0
  %4398 = vmatprep.mubr.bf16.mxu0 0
  %4399 = vmatmul.mubr.bf16.gmra.mrb[0].mxu0 %v3967
  %v4400 = vpop.f32.mrb[0].mxu0
  %v4401 = vadd.f32 0.0, %v4400
  %v4402 = vpop.f32.mrb[0].mxu0
  %v4403 = vadd.f32 0.0, %v4402
  %v4404 = vpop.f32.mrb[0].mxu0
  %v4405 = vpop.f32.mrb[0].mxu0
  %4406 = vdwg.mxu0
  %4407 = vmatprep.subr.bf16.mxu0 %v4009
  %4408 = vmatpush1.bf16.msra.mxu0 %v4006
  %4409 = vmatprep.subr.bf16.mxu0 0
  %4410 = vmatpush1.bf16.msra.mxu0 0
  %4411 = vmatprep.subr.bf16.mxu0 0
  %4412 = vmatpush1.bf16.msra.mxu0 0
  %4413 = vmatprep.subr.bf16.mxu0 0
  %4414 = vmatpush1.bf16.msra.mxu0 0
  %4415 = vmatprep.subr.bf16.mxu0 0
  %4416 = vmatpush1.bf16.msra.mxu0 0
  %4417 = vmatprep.subr.bf16.mxu0 0
  %4418 = vmatpush1.bf16.msra.mxu0 0
  %4419 = vmatprep.subr.bf16.mxu0 0
  %4420 = vmatpush1.bf16.msra.mxu0 0
  %4421 = vmatprep.subr.bf16.mxu0 0
  %4422 = vmatpush1.bf16.msra.mxu0 0
  %4423 = vmatprep.subr.bf16.mxu0 0
  %4424 = vmatpush1.bf16.msra.mxu0 0
  %4425 = vmatprep.subr.bf16.mxu0 0
  %4426 = vmatpush1.bf16.msra.mxu0 0
  %4427 = vmatprep.subr.bf16.mxu0 0
  %4428 = vmatpush1.bf16.msra.mxu0 0
  %4429 = vmatprep.subr.bf16.mxu0 0
  %4430 = vmatpush1.bf16.msra.mxu0 0
  %4431 = vmatprep.subr.bf16.mxu0 0
  %4432 = vmatpush1.bf16.msra.mxu0 0
  %4433 = vmatprep.subr.bf16.mxu0 0
  %4434 = vmatpush1.bf16.msra.mxu0 0
  %4435 = vmatprep.subr.bf16.mxu0 0
  %4436 = vmatpush1.bf16.msra.mxu0 0
  %4437 = vmatprep.subr.bf16.mxu0 0
  %4438 = vmatpush1.bf16.msra.mxu0 0
  %4439 = vmatprep.mubr.bf16.mxu0 0
  %4440 = vmatmul.mubr.bf16.gmra.mrb[0].mxu0 %v3967
  %v4441 = vpop.f32.mrb[0].mxu0
  %v4442 = vadd.f32 0.0, %v4441
  %v4443 = vpop.f32.mrb[0].mxu0
  %v4444 = vadd.f32 0.0, %v4443
  %v4445 = vpop.f32.mrb[0].mxu0
  %v4446 = vpop.f32.mrb[0].mxu0
  %4447 = vdwg.mxu0
  %4448 = vmatprep.subr.bf16.mxu0 %v4015
  %4449 = vmatpush1.bf16.msra.mxu0 %v4012
  %4450 = vmatprep.subr.bf16.mxu0 0
  %4451 = vmatpush1.bf16.msra.mxu0 0
  %4452 = vmatprep.subr.bf16.mxu0 0
  %4453 = vmatpush1.bf16.msra.mxu0 0
  %4454 = vmatprep.subr.bf16.mxu0 0
  %4455 = vmatpush1.bf16.msra.mxu0 0
  %4456 = vmatprep.subr.bf16.mxu0 0
  %4457 = vmatpush1.bf16.msra.mxu0 0
  %4458 = vmatprep.subr.bf16.mxu0 0
  %4459 = vmatpush1.bf16.msra.mxu0 0
  %4460 = vmatprep.subr.bf16.mxu0 0
  %4461 = vmatpush1.bf16.msra.mxu0 0
  %4462 = vmatprep.subr.bf16.mxu0 0
  %4463 = vmatpush1.bf16.msra.mxu0 0
  %4464 = vmatprep.subr.bf16.mxu0 0
  %4465 = vmatpush1.bf16.msra.mxu0 0
  %4466 = vmatprep.subr.bf16.mxu0 0
  %4467 = vmatpush1.bf16.msra.mxu0 0
  %4468 = vmatprep.subr.bf16.mxu0 0
  %4469 = vmatpush1.bf16.msra.mxu0 0
  %4470 = vmatprep.subr.bf16.mxu0 0
  %4471 = vmatpush1.bf16.msra.mxu0 0
  %4472 = vmatprep.subr.bf16.mxu0 0
  %4473 = vmatpush1.bf16.msra.mxu0 0
  %4474 = vmatprep.subr.bf16.mxu0 0
  %4475 = vmatpush1.bf16.msra.mxu0 0
  %4476 = vmatprep.subr.bf16.mxu0 0
  %4477 = vmatpush1.bf16.msra.mxu0 0
  %4478 = vmatprep.subr.bf16.mxu0 0
  %4479 = vmatpush1.bf16.msra.mxu0 0
  %4480 = vmatprep.mubr.bf16.mxu0 0
  %4481 = vmatmul.mubr.bf16.gmra.mrb[0].mxu0 %v3967
  %v4482 = vpop.f32.mrb[0].mxu0
  %v4483 = vadd.f32 0.0, %v4482
  %v4484 = vpop.f32.mrb[0].mxu0
  %v4485 = vadd.f32 0.0, %v4484
  %v4486 = vpop.f32.mrb[0].mxu0
  %v4487 = vpop.f32.mrb[0].mxu0
  %4488 = vdwg.mxu0
  %4489 = vmatprep.subr.bf16.mxu0 %v4021
  %4490 = vmatpush1.bf16.msra.mxu0 %v4018
  %4491 = vmatprep.subr.bf16.mxu0 0
  %4492 = vmatpush1.bf16.msra.mxu0 0
  %4493 = vmatprep.subr.bf16.mxu0 0
  %4494 = vmatpush1.bf16.msra.mxu0 0
  %4495 = vmatprep.subr.bf16.mxu0 0
  %4496 = vmatpush1.bf16.msra.mxu0 0
  %4497 = vmatprep.subr.bf16.mxu0 0
  %4498 = vmatpush1.bf16.msra.mxu0 0
  %4499 = vmatprep.subr.bf16.mxu0 0
  %4500 = vmatpush1.bf16.msra.mxu0 0
  %4501 = vmatprep.subr.bf16.mxu0 0
  %4502 = vmatpush1.bf16.msra.mxu0 0
  %4503 = vmatprep.subr.bf16.mxu0 0
  %4504 = vmatpush1.bf16.msra.mxu0 0
  %4505 = vmatprep.subr.bf16.mxu0 0
  %4506 = vmatpush1.bf16.msra.mxu0 0
  %4507 = vmatprep.subr.bf16.mxu0 0
  %4508 = vmatpush1.bf16.msra.mxu0 0
  %4509 = vmatprep.subr.bf16.mxu0 0
  %4510 = vmatpush1.bf16.msra.mxu0 0
  %4511 = vmatprep.subr.bf16.mxu0 0
  %4512 = vmatpush1.bf16.msra.mxu0 0
  %4513 = vmatprep.subr.bf16.mxu0 0
  %4514 = vmatpush1.bf16.msra.mxu0 0
  %4515 = vmatprep.subr.bf16.mxu0 0
  %4516 = vmatpush1.bf16.msra.mxu0 0
  %4517 = vmatprep.subr.bf16.mxu0 0
  %4518 = vmatpush1.bf16.msra.mxu0 0
  %4519 = vmatprep.subr.bf16.mxu0 0
  %4520 = vmatpush1.bf16.msra.mxu0 0
  %4521 = vmatprep.mubr.bf16.mxu0 0
  %4522 = vmatmul.mubr.bf16.gmra.mrb[0].mxu0 %v3967
  %v4523 = vpop.f32.mrb[0].mxu0
  %v4524 = vadd.f32 0.0, %v4523
  %v4525 = vpop.f32.mrb[0].mxu0
  %v4526 = vadd.f32 0.0, %v4525
  %v4527 = vpop.f32.mrb[0].mxu0
  %v4528 = vpop.f32.mrb[0].mxu0
  %4529 = vdwg.mxu0
  %4530 = vmatprep.subr.bf16.mxu0 %v4027
  %4531 = vmatpush1.bf16.msra.mxu0 %v4024
  %4532 = vmatprep.subr.bf16.mxu0 0
  %4533 = vmatpush1.bf16.msra.mxu0 0
  %4534 = vmatprep.subr.bf16.mxu0 0
  %4535 = vmatpush1.bf16.msra.mxu0 0
  %4536 = vmatprep.subr.bf16.mxu0 0
  %4537 = vmatpush1.bf16.msra.mxu0 0
  %4538 = vmatprep.subr.bf16.mxu0 0
  %4539 = vmatpush1.bf16.msra.mxu0 0
  %4540 = vmatprep.subr.bf16.mxu0 0
  %4541 = vmatpush1.bf16.msra.mxu0 0
  %4542 = vmatprep.subr.bf16.mxu0 0
  %4543 = vmatpush1.bf16.msra.mxu0 0
  %4544 = vmatprep.subr.bf16.mxu0 0
  %4545 = vmatpush1.bf16.msra.mxu0 0
  %4546 = vmatprep.subr.bf16.mxu0 0
  %4547 = vmatpush1.bf16.msra.mxu0 0
  %4548 = vmatprep.subr.bf16.mxu0 0
  %4549 = vmatpush1.bf16.msra.mxu0 0
  %4550 = vmatprep.subr.bf16.mxu0 0
  %4551 = vmatpush1.bf16.msra.mxu0 0
  %4552 = vmatprep.subr.bf16.mxu0 0
  %4553 = vmatpush1.bf16.msra.mxu0 0
  %4554 = vmatprep.subr.bf16.mxu0 0
  %4555 = vmatpush1.bf16.msra.mxu0 0
  %4556 = vmatprep.subr.bf16.mxu0 0
  %4557 = vmatpush1.bf16.msra.mxu0 0
  %4558 = vmatprep.subr.bf16.mxu0 0
  %4559 = vmatpush1.bf16.msra.mxu0 0
  %4560 = vmatprep.subr.bf16.mxu0 0
  %4561 = vmatpush1.bf16.msra.mxu0 0
  %4562 = vmatprep.mubr.bf16.mxu0 0
  %4563 = vmatmul.mubr.bf16.gmra.mrb[0].mxu0 %v3967
  %v4564 = vpop.f32.mrb[0].mxu0
  %v4565 = vadd.f32 0.0, %v4564
  %v4566 = vpop.f32.mrb[0].mxu0
  %v4567 = vadd.f32 0.0, %v4566
  %v4568 = vpop.f32.mrb[0].mxu0
  %v4569 = vpop.f32.mrb[0].mxu0
  %4570 = vdwg.mxu0
  %4571 = vmatprep.subr.bf16.mxu0 %v4033
  %4572 = vmatpush1.bf16.msra.mxu0 %v4030
  %4573 = vmatprep.subr.bf16.mxu0 0
  %4574 = vmatpush1.bf16.msra.mxu0 0
  %4575 = vmatprep.subr.bf16.mxu0 0
  %4576 = vmatpush1.bf16.msra.mxu0 0
  %4577 = vmatprep.subr.bf16.mxu0 0
  %4578 = vmatpush1.bf16.msra.mxu0 0
  %4579 = vmatprep.subr.bf16.mxu0 0
  %4580 = vmatpush1.bf16.msra.mxu0 0
  %4581 = vmatprep.subr.bf16.mxu0 0
  %4582 = vmatpush1.bf16.msra.mxu0 0
  %4583 = vmatprep.subr.bf16.mxu0 0
  %4584 = vmatpush1.bf16.msra.mxu0 0
  %4585 = vmatprep.subr.bf16.mxu0 0
  %4586 = vmatpush1.bf16.msra.mxu0 0
  %4587 = vmatprep.subr.bf16.mxu0 0
  %4588 = vmatpush1.bf16.msra.mxu0 0
  %4589 = vmatprep.subr.bf16.mxu0 0
  %4590 = vmatpush1.bf16.msra.mxu0 0
  %4591 = vmatprep.subr.bf16.mxu0 0
  %4592 = vmatpush1.bf16.msra.mxu0 0
  %4593 = vmatprep.subr.bf16.mxu0 0
  %4594 = vmatpush1.bf16.msra.mxu0 0
  %4595 = vmatprep.subr.bf16.mxu0 0
  %4596 = vmatpush1.bf16.msra.mxu0 0
  %4597 = vmatprep.subr.bf16.mxu0 0
  %4598 = vmatpush1.bf16.msra.mxu0 0
  %4599 = vmatprep.subr.bf16.mxu0 0
  %4600 = vmatpush1.bf16.msra.mxu0 0
  %4601 = vmatprep.subr.bf16.mxu0 0
  %4602 = vmatpush1.bf16.msra.mxu0 0
  %4603 = vmatprep.mubr.bf16.mxu0 0
  %4604 = vmatmul.mubr.bf16.gmra.mrb[0].mxu0 %v3967
  %v4605 = vpop.f32.mrb[0].mxu0
  %v4606 = vadd.f32 0.0, %v4605
  %v4607 = vpop.f32.mrb[0].mxu0
  %v4608 = vadd.f32 0.0, %v4607
  %v4609 = vpop.f32.mrb[0].mxu0
  %v4610 = vpop.f32.mrb[0].mxu0
  %4611 = vdwg.mxu0
  %4612 = vmatprep.subr.bf16.mxu0 %v4039
  %4613 = vmatpush1.bf16.msra.mxu0 %v4036
  %4614 = vmatprep.subr.bf16.mxu0 0
  %4615 = vmatpush1.bf16.msra.mxu0 0
  %4616 = vmatprep.subr.bf16.mxu0 0
  %4617 = vmatpush1.bf16.msra.mxu0 0
  %4618 = vmatprep.subr.bf16.mxu0 0
  %4619 = vmatpush1.bf16.msra.mxu0 0
  %4620 = vmatprep.subr.bf16.mxu0 0
  %4621 = vmatpush1.bf16.msra.mxu0 0
  %4622 = vmatprep.subr.bf16.mxu0 0
  %4623 = vmatpush1.bf16.msra.mxu0 0
  %4624 = vmatprep.subr.bf16.mxu0 0
  %4625 = vmatpush1.bf16.msra.mxu0 0
  %4626 = vmatprep.subr.bf16.mxu0 0
  %4627 = vmatpush1.bf16.msra.mxu0 0
  %4628 = vmatprep.subr.bf16.mxu0 0
  %4629 = vmatpush1.bf16.msra.mxu0 0
  %4630 = vmatprep.subr.bf16.mxu0 0
  %4631 = vmatpush1.bf16.msra.mxu0 0
  %4632 = vmatprep.subr.bf16.mxu0 0
  %4633 = vmatpush1.bf16.msra.mxu0 0
  %4634 = vmatprep.subr.bf16.mxu0 0
  %4635 = vmatpush1.bf16.msra.mxu0 0
  %4636 = vmatprep.subr.bf16.mxu0 0
  %4637 = vmatpush1.bf16.msra.mxu0 0
  %4638 = vmatprep.subr.bf16.mxu0 0
  %4639 = vmatpush1.bf16.msra.mxu0 0
  %4640 = vmatprep.subr.bf16.mxu0 0
  %4641 = vmatpush1.bf16.msra.mxu0 0
  %4642 = vmatprep.subr.bf16.mxu0 0
  %4643 = vmatpush1.bf16.msra.mxu0 0
  %4644 = vmatprep.mubr.bf16.mxu0 0
  %4645 = vmatmul.mubr.bf16.gmra.mrb[0].mxu0 %v3967
  %v4646 = vpop.f32.mrb[0].mxu0
  %v4647 = vadd.f32 0.0, %v4646
  %v4648 = vpop.f32.mrb[0].mxu0
  %v4649 = vadd.f32 0.0, %v4648
  %v4650 = vpop.f32.mrb[0].mxu0
  %v4651 = vpop.f32.mrb[0].mxu0
  %4652 = vdwg.mxu0
  %4653 = vmatprep.subr.bf16.mxu0 %v4045
  %4654 = vmatpush1.bf16.msra.mxu0 %v4042
  %4655 = vmatprep.subr.bf16.mxu0 0
  %4656 = vmatpush1.bf16.msra.mxu0 0
  %4657 = vmatprep.subr.bf16.mxu0 0
  %4658 = vmatpush1.bf16.msra.mxu0 0
  %4659 = vmatprep.subr.bf16.mxu0 0
  %4660 = vmatpush1.bf16.msra.mxu0 0
  %4661 = vmatprep.subr.bf16.mxu0 0
  %4662 = vmatpush1.bf16.msra.mxu0 0
  %4663 = vmatprep.subr.bf16.mxu0 0
  %4664 = vmatpush1.bf16.msra.mxu0 0
  %4665 = vmatprep.subr.bf16.mxu0 0
  %4666 = vmatpush1.bf16.msra.mxu0 0
  %4667 = vmatprep.subr.bf16.mxu0 0
  %4668 = vmatpush1.bf16.msra.mxu0 0
  %4669 = vmatprep.subr.bf16.mxu0 0
  %4670 = vmatpush1.bf16.msra.mxu0 0
  %4671 = vmatprep.subr.bf16.mxu0 0
  %4672 = vmatpush1.bf16.msra.mxu0 0
  %4673 = vmatprep.subr.bf16.mxu0 0
  %4674 = vmatpush1.bf16.msra.mxu0 0
  %4675 = vmatprep.subr.bf16.mxu0 0
  %4676 = vmatpush1.bf16.msra.mxu0 0
  %4677 = vmatprep.subr.bf16.mxu0 0
  %4678 = vmatpush1.bf16.msra.mxu0 0
  %4679 = vmatprep.subr.bf16.mxu0 0
  %4680 = vmatpush1.bf16.msra.mxu0 0
  %4681 = vmatprep.subr.bf16.mxu0 0
  %4682 = vmatpush1.bf16.msra.mxu0 0
  %4683 = vmatprep.subr.bf16.mxu0 0
  %4684 = vmatpush1.bf16.msra.mxu0 0
  %4685 = vmatprep.mubr.bf16.mxu0 0
  %4686 = vmatmul.mubr.bf16.gmra.mrb[0].mxu0 %v3967
  %v4687 = vpop.f32.mrb[0].mxu0
  %v4688 = vadd.f32 0.0, %v4687
  %v4689 = vpop.f32.mrb[0].mxu0
  %v4690 = vadd.f32 0.0, %v4689
  %v4691 = vpop.f32.mrb[0].mxu0
  %v4692 = vpop.f32.mrb[0].mxu0
  %4693 = vdwg.mxu0
  %4694 = vmatprep.subr.bf16.mxu0 %v4051
  %4695 = vmatpush1.bf16.msra.mxu0 %v4048
  %4696 = vmatprep.subr.bf16.mxu0 0
  %4697 = vmatpush1.bf16.msra.mxu0 0
  %4698 = vmatprep.subr.bf16.mxu0 0
  %4699 = vmatpush1.bf16.msra.mxu0 0
  %4700 = vmatprep.subr.bf16.mxu0 0
  %4701 = vmatpush1.bf16.msra.mxu0 0
  %4702 = vmatprep.subr.bf16.mxu0 0
  %4703 = vmatpush1.bf16.msra.mxu0 0
  %4704 = vmatprep.subr.bf16.mxu0 0
  %4705 = vmatpush1.bf16.msra.mxu0 0
  %4706 = vmatprep.subr.bf16.mxu0 0
  %4707 = vmatpush1.bf16.msra.mxu0 0
  %4708 = vmatprep.subr.bf16.mxu0 0
  %4709 = vmatpush1.bf16.msra.mxu0 0
  %4710 = vmatprep.subr.bf16.mxu0 0
  %4711 = vmatpush1.bf16.msra.mxu0 0
  %4712 = vmatprep.subr.bf16.mxu0 0
  %4713 = vmatpush1.bf16.msra.mxu0 0
  %4714 = vmatprep.subr.bf16.mxu0 0
  %4715 = vmatpush1.bf16.msra.mxu0 0
  %4716 = vmatprep.subr.bf16.mxu0 0
  %4717 = vmatpush1.bf16.msra.mxu0 0
  %4718 = vmatprep.subr.bf16.mxu0 0
  %4719 = vmatpush1.bf16.msra.mxu0 0
  %4720 = vmatprep.subr.bf16.mxu0 0
  %4721 = vmatpush1.bf16.msra.mxu0 0
  %4722 = vmatprep.subr.bf16.mxu0 0
  %4723 = vmatpush1.bf16.msra.mxu0 0
  %4724 = vmatprep.subr.bf16.mxu0 0
  %4725 = vmatpush1.bf16.msra.mxu0 0
  %4726 = vmatprep.mubr.bf16.mxu0 0
  %4727 = vmatmul.mubr.bf16.gmra.mrb[0].mxu0 %v3967
  %v4728 = vpop.f32.mrb[0].mxu0
  %v4729 = vadd.f32 0.0, %v4728
  %v4730 = vpop.f32.mrb[0].mxu0
  %v4731 = vadd.f32 0.0, %v4730
  %v4732 = vpop.f32.mrb[0].mxu0
  %v4733 = vpop.f32.mrb[0].mxu0
  %4734 = vdwg.mxu0
  %4735 = vmatprep.subr.bf16.mxu0 %v4057
  %4736 = vmatpush1.bf16.msra.mxu0 %v4054
  %4737 = vmatprep.subr.bf16.mxu0 0
  %4738 = vmatpush1.bf16.msra.mxu0 0
  %4739 = vmatprep.subr.bf16.mxu0 0
  %4740 = vmatpush1.bf16.msra.mxu0 0
  %4741 = vmatprep.subr.bf16.mxu0 0
  %4742 = vmatpush1.bf16.msra.mxu0 0
  %4743 = vmatprep.subr.bf16.mxu0 0
  %4744 = vmatpush1.bf16.msra.mxu0 0
  %4745 = vmatprep.subr.bf16.mxu0 0
  %4746 = vmatpush1.bf16.msra.mxu0 0
  %4747 = vmatprep.subr.bf16.mxu0 0
  %4748 = vmatpush1.bf16.msra.mxu0 0
  %4749 = vmatprep.subr.bf16.mxu0 0
  %4750 = vmatpush1.bf16.msra.mxu0 0
  %4751 = vmatprep.subr.bf16.mxu0 0
  %4752 = vmatpush1.bf16.msra.mxu0 0
  %4753 = vmatprep.subr.bf16.mxu0 0
  %4754 = vmatpush1.bf16.msra.mxu0 0
  %4755 = vmatprep.subr.bf16.mxu0 0
  %4756 = vmatpush1.bf16.msra.mxu0 0
  %4757 = vmatprep.subr.bf16.mxu0 0
  %4758 = vmatpush1.bf16.msra.mxu0 0
  %4759 = vmatprep.subr.bf16.mxu0 0
  %4760 = vmatpush1.bf16.msra.mxu0 0
  %4761 = vmatprep.subr.bf16.mxu0 0
  %4762 = vmatpush1.bf16.msra.mxu0 0
  %4763 = vmatprep.subr.bf16.mxu0 0
  %4764 = vmatpush1.bf16.msra.mxu0 0
  %4765 = vmatprep.subr.bf16.mxu0 0
  %4766 = vmatpush1.bf16.msra.mxu0 0
  %4767 = vmatprep.mubr.bf16.mxu0 0
  %4768 = vmatmul.mubr.bf16.gmra.mrb[0].mxu0 %v3967
  %v4769 = vpop.f32.mrb[0].mxu0
  %v4770 = vadd.f32 0.0, %v4769
  %v4771 = vpop.f32.mrb[0].mxu0
  %v4772 = vadd.f32 0.0, %v4771
  %v4773 = vpop.f32.mrb[0].mxu0
  %v4774 = vpop.f32.mrb[0].mxu0
  %4775 = vdwg.mxu0
  %4776 = vmatprep.subr.bf16.mxu0 %v4063
  %4777 = vmatpush1.bf16.msra.mxu0 %v4060
  %4778 = vmatprep.subr.bf16.mxu0 0
  %4779 = vmatpush1.bf16.msra.mxu0 0
  %4780 = vmatprep.subr.bf16.mxu0 0
  %4781 = vmatpush1.bf16.msra.mxu0 0
  %4782 = vmatprep.subr.bf16.mxu0 0
  %4783 = vmatpush1.bf16.msra.mxu0 0
  %4784 = vmatprep.subr.bf16.mxu0 0
  %4785 = vmatpush1.bf16.msra.mxu0 0
  %4786 = vmatprep.subr.bf16.mxu0 0
  %4787 = vmatpush1.bf16.msra.mxu0 0
  %4788 = vmatprep.subr.bf16.mxu0 0
  %4789 = vmatpush1.bf16.msra.mxu0 0
  %4790 = vmatprep.subr.bf16.mxu0 0
  %4791 = vmatpush1.bf16.msra.mxu0 0
  %4792 = vmatprep.subr.bf16.mxu0 0
  %4793 = vmatpush1.bf16.msra.mxu0 0
  %4794 = vmatprep.subr.bf16.mxu0 0
  %4795 = vmatpush1.bf16.msra.mxu0 0
  %4796 = vmatprep.subr.bf16.mxu0 0
  %4797 = vmatpush1.bf16.msra.mxu0 0
  %4798 = vmatprep.subr.bf16.mxu0 0
  %4799 = vmatpush1.bf16.msra.mxu0 0
  %4800 = vmatprep.subr.bf16.mxu0 0
  %4801 = vmatpush1.bf16.msra.mxu0 0
  %4802 = vmatprep.subr.bf16.mxu0 0
  %4803 = vmatpush1.bf16.msra.mxu0 0
  %4804 = vmatprep.subr.bf16.mxu0 0
  %4805 = vmatpush1.bf16.msra.mxu0 0
  %4806 = vmatprep.subr.bf16.mxu0 0
  %4807 = vmatpush1.bf16.msra.mxu0 0
  %4808 = vmatprep.mubr.bf16.mxu0 0
  %4809 = vmatmul.mubr.bf16.gmra.mrb[0].mxu0 %v3967
  %v4810 = vpop.f32.mrb[0].mxu0
  %v4811 = vadd.f32 0.0, %v4810
  %v4812 = vpop.f32.mrb[0].mxu0
  %v4813 = vadd.f32 0.0, %v4812
  %v4814 = vpop.f32.mrb[0].mxu0
  %v4815 = vpop.f32.mrb[0].mxu0
  %4816 = vdwg.mxu0
  %4817 = vmatprep.subr.bf16.mxu0 %v4069
  %4818 = vmatpush1.bf16.msra.mxu0 %v4066
  %4819 = vmatprep.subr.bf16.mxu0 0
  %4820 = vmatpush1.bf16.msra.mxu0 0
  %4821 = vmatprep.subr.bf16.mxu0 0
  %4822 = vmatpush1.bf16.msra.mxu0 0
  %4823 = vmatprep.subr.bf16.mxu0 0
  %4824 = vmatpush1.bf16.msra.mxu0 0
  %4825 = vmatprep.subr.bf16.mxu0 0
  %4826 = vmatpush1.bf16.msra.mxu0 0
  %4827 = vmatprep.subr.bf16.mxu0 0
  %4828 = vmatpush1.bf16.msra.mxu0 0
  %4829 = vmatprep.subr.bf16.mxu0 0
  %4830 = vmatpush1.bf16.msra.mxu0 0
  %4831 = vmatprep.subr.bf16.mxu0 0
  %4832 = vmatpush1.bf16.msra.mxu0 0
  %4833 = vmatprep.subr.bf16.mxu0 0
  %4834 = vmatpush1.bf16.msra.mxu0 0
  %4835 = vmatprep.subr.bf16.mxu0 0
  %4836 = vmatpush1.bf16.msra.mxu0 0
  %4837 = vmatprep.subr.bf16.mxu0 0
  %4838 = vmatpush1.bf16.msra.mxu0 0
  %4839 = vmatprep.subr.bf16.mxu0 0
  %4840 = vmatpush1.bf16.msra.mxu0 0
  %4841 = vmatprep.subr.bf16.mxu0 0
  %4842 = vmatpush1.bf16.msra.mxu0 0
  %4843 = vmatprep.subr.bf16.mxu0 0
  %4844 = vmatpush1.bf16.msra.mxu0 0
  %4845 = vmatprep.subr.bf16.mxu0 0
  %4846 = vmatpush1.bf16.msra.mxu0 0
  %4847 = vmatprep.subr.bf16.mxu0 0
  %4848 = vmatpush1.bf16.msra.mxu0 0
  %4849 = vmatprep.mubr.bf16.mxu0 0
  %4850 = vmatmul.mubr.bf16.gmra.mrb[0].mxu0 %v3967
  %v4851 = vpop.f32.mrb[0].mxu0
  %v4852 = vadd.f32 0.0, %v4851
  %v4853 = vpop.f32.mrb[0].mxu0
  %v4854 = vadd.f32 0.0, %v4853
  %v4855 = vpop.f32.mrb[0].mxu0
  %v4856 = vpop.f32.mrb[0].mxu0
  %4857 = vdwg.mxu0
  %4858 = vmatprep.subr.bf16.mxu0 %v4075
  %4859 = vmatpush1.bf16.msra.mxu0 %v4072
  %4860 = vmatprep.subr.bf16.mxu0 0
  %4861 = vmatpush1.bf16.msra.mxu0 0
  %4862 = vmatprep.subr.bf16.mxu0 0
  %4863 = vmatpush1.bf16.msra.mxu0 0
  %4864 = vmatprep.subr.bf16.mxu0 0
  %4865 = vmatpush1.bf16.msra.mxu0 0
  %4866 = vmatprep.subr.bf16.mxu0 0
  %4867 = vmatpush1.bf16.msra.mxu0 0
  %4868 = vmatprep.subr.bf16.mxu0 0
  %4869 = vmatpush1.bf16.msra.mxu0 0
  %4870 = vmatprep.subr.bf16.mxu0 0
  %4871 = vmatpush1.bf16.msra.mxu0 0
  %4872 = vmatprep.subr.bf16.mxu0 0
  %4873 = vmatpush1.bf16.msra.mxu0 0
  %4874 = vmatprep.subr.bf16.mxu0 0
  %4875 = vmatpush1.bf16.msra.mxu0 0
  %4876 = vmatprep.subr.bf16.mxu0 0
  %4877 = vmatpush1.bf16.msra.mxu0 0
  %4878 = vmatprep.subr.bf16.mxu0 0
  %4879 = vmatpush1.bf16.msra.mxu0 0
  %4880 = vmatprep.subr.bf16.mxu0 0
  %4881 = vmatpush1.bf16.msra.mxu0 0
  %4882 = vmatprep.subr.bf16.mxu0 0
  %4883 = vmatpush1.bf16.msra.mxu0 0
  %4884 = vmatprep.subr.bf16.mxu0 0
  %4885 = vmatpush1.bf16.msra.mxu0 0
  %4886 = vmatprep.subr.bf16.mxu0 0
  %4887 = vmatpush1.bf16.msra.mxu0 0
  %4888 = vmatprep.subr.bf16.mxu0 0
  %4889 = vmatpush1.bf16.msra.mxu0 0
  %4890 = vmatprep.mubr.bf16.mxu0 0
  %4891 = vmatmul.mubr.bf16.gmra.mrb[0].mxu0 %v3967
  %v4892 = vpop.f32.mrb[0].mxu0
  %v4893 = vadd.f32 0.0, %v4892
  %v4894 = vpop.f32.mrb[0].mxu0
  %v4895 = vadd.f32 0.0, %v4894
  %v4896 = vpop.f32.mrb[0].mxu0
  %v4897 = vpop.f32.mrb[0].mxu0
  %4898 = vdwg.mxu0
  %4899 = vmatprep.subr.bf16.mxu0 %v4081
  %4900 = vmatpush1.bf16.msra.mxu0 %v4078
  %4901 = vmatprep.subr.bf16.mxu0 0
  %4902 = vmatpush1.bf16.msra.mxu0 0
  %4903 = vmatprep.subr.bf16.mxu0 0
  %4904 = vmatpush1.bf16.msra.mxu0 0
  %4905 = vmatprep.subr.bf16.mxu0 0
  %4906 = vmatpush1.bf16.msra.mxu0 0
  %4907 = vmatprep.subr.bf16.mxu0 0
  %4908 = vmatpush1.bf16.msra.mxu0 0
  %4909 = vmatprep.subr.bf16.mxu0 0
  %4910 = vmatpush1.bf16.msra.mxu0 0
  %4911 = vmatprep.subr.bf16.mxu0 0
  %4912 = vmatpush1.bf16.msra.mxu0 0
  %4913 = vmatprep.subr.bf16.mxu0 0
  %4914 = vmatpush1.bf16.msra.mxu0 0
  %4915 = vmatprep.subr.bf16.mxu0 0
  %4916 = vmatpush1.bf16.msra.mxu0 0
  %4917 = vmatprep.subr.bf16.mxu0 0
  %4918 = vmatpush1.bf16.msra.mxu0 0
  %4919 = vmatprep.subr.bf16.mxu0 0
  %4920 = vmatpush1.bf16.msra.mxu0 0
  %4921 = vmatprep.subr.bf16.mxu0 0
  %4922 = vmatpush1.bf16.msra.mxu0 0
  %4923 = vmatprep.subr.bf16.mxu0 0
  %4924 = vmatpush1.bf16.msra.mxu0 0
  %4925 = vmatprep.subr.bf16.mxu0 0
  %4926 = vmatpush1.bf16.msra.mxu0 0
  %4927 = vmatprep.subr.bf16.mxu0 0
  %4928 = vmatpush1.bf16.msra.mxu0 0
  %4929 = vmatprep.subr.bf16.mxu0 0
  %4930 = vmatpush1.bf16.msra.mxu0 0
  %4931 = vmatprep.mubr.bf16.mxu0 0
  %4932 = vmatmul.mubr.bf16.gmra.mrb[0].mxu0 %v3967
  %v4933 = vpop.f32.mrb[0].mxu0
  %v4934 = vadd.f32 0.0, %v4933
  %v4935 = vpop.f32.mrb[0].mxu0
  %v4936 = vadd.f32 0.0, %v4935
  %v4937 = vpop.f32.mrb[0].mxu0
  %v4938 = vpop.f32.mrb[0].mxu0
  %4939 = vdwg.mxu0
  %4940 = vmatprep.subr.bf16.mxu0 %v4087
  %4941 = vmatpush1.bf16.msra.mxu0 %v4084
  %4942 = vmatprep.subr.bf16.mxu0 0
  %4943 = vmatpush1.bf16.msra.mxu0 0
  %4944 = vmatprep.subr.bf16.mxu0 0
  %4945 = vmatpush1.bf16.msra.mxu0 0
  %4946 = vmatprep.subr.bf16.mxu0 0
  %4947 = vmatpush1.bf16.msra.mxu0 0
  %4948 = vmatprep.subr.bf16.mxu0 0
  %4949 = vmatpush1.bf16.msra.mxu0 0
  %4950 = vmatprep.subr.bf16.mxu0 0
  %4951 = vmatpush1.bf16.msra.mxu0 0
  %4952 = vmatprep.subr.bf16.mxu0 0
  %4953 = vmatpush1.bf16.msra.mxu0 0
  %4954 = vmatprep.subr.bf16.mxu0 0
  %4955 = vmatpush1.bf16.msra.mxu0 0
  %4956 = vmatprep.subr.bf16.mxu0 0
  %4957 = vmatpush1.bf16.msra.mxu0 0
  %4958 = vmatprep.subr.bf16.mxu0 0
  %4959 = vmatpush1.bf16.msra.mxu0 0
  %4960 = vmatprep.subr.bf16.mxu0 0
  %4961 = vmatpush1.bf16.msra.mxu0 0
  %4962 = vmatprep.subr.bf16.mxu0 0
  %4963 = vmatpush1.bf16.msra.mxu0 0
  %4964 = vmatprep.subr.bf16.mxu0 0
  %4965 = vmatpush1.bf16.msra.mxu0 0
  %4966 = vmatprep.subr.bf16.mxu0 0
  %4967 = vmatpush1.bf16.msra.mxu0 0
  %4968 = vmatprep.subr.bf16.mxu0 0
  %4969 = vmatpush1.bf16.msra.mxu0 0
  %4970 = vmatprep.subr.bf16.mxu0 0
  %4971 = vmatpush1.bf16.msra.mxu0 0
  %4972 = vmatprep.mubr.bf16.mxu0 0
  %4973 = vmatmul.mubr.bf16.gmra.mrb[0].mxu0 %v3967
  %v4974 = vpop.f32.mrb[0].mxu0
  %v4975 = vadd.f32 0.0, %v4974
  %v4976 = vpop.f32.mrb[0].mxu0
  %v4977 = vadd.f32 0.0, %v4976
  %v4978 = vpop.f32.mrb[0].mxu0
  %v4979 = vpop.f32.mrb[0].mxu0
  %4980 = vdwg.mxu0
  %4981 = vmatprep.subr.bf16.mxu0 %v4093
  %4982 = vmatpush1.bf16.msra.mxu0 %v4090
  %4983 = vmatprep.subr.bf16.mxu0 0
  %4984 = vmatpush1.bf16.msra.mxu0 0
  %4985 = vmatprep.subr.bf16.mxu0 0
  %4986 = vmatpush1.bf16.msra.mxu0 0
  %4987 = vmatprep.subr.bf16.mxu0 0
  %4988 = vmatpush1.bf16.msra.mxu0 0
  %4989 = vmatprep.subr.bf16.mxu0 0
  %4990 = vmatpush1.bf16.msra.mxu0 0
  %4991 = vmatprep.subr.bf16.mxu0 0
  %4992 = vmatpush1.bf16.msra.mxu0 0
  %4993 = vmatprep.subr.bf16.mxu0 0
  %4994 = vmatpush1.bf16.msra.mxu0 0
  %4995 = vmatprep.subr.bf16.mxu0 0
  %4996 = vmatpush1.bf16.msra.mxu0 0
  %4997 = vmatprep.subr.bf16.mxu0 0
  %4998 = vmatpush1.bf16.msra.mxu0 0
  %4999 = vmatprep.subr.bf16.mxu0 0
  %5000 = vmatpush1.bf16.msra.mxu0 0
  %5001 = vmatprep.subr.bf16.mxu0 0
  %5002 = vmatpush1.bf16.msra.mxu0 0
  %5003 = vmatprep.subr.bf16.mxu0 0
  %5004 = vmatpush1.bf16.msra.mxu0 0
  %5005 = vmatprep.subr.bf16.mxu0 0
  %5006 = vmatpush1.bf16.msra.mxu0 0
  %5007 = vmatprep.subr.bf16.mxu0 0
  %5008 = vmatpush1.bf16.msra.mxu0 0
  %5009 = vmatprep.subr.bf16.mxu0 0
  %5010 = vmatpush1.bf16.msra.mxu0 0
  %5011 = vmatprep.subr.bf16.mxu0 0
  %5012 = vmatpush1.bf16.msra.mxu0 0
  %5013 = vmatprep.mubr.bf16.mxu0 0
  %5014 = vmatmul.mubr.bf16.gmra.mrb[0].mxu0 %v3967
  %v5015 = vpop.f32.mrb[0].mxu0
  %v5016 = vadd.f32 0.0, %v5015
  %v5017 = vpop.f32.mrb[0].mxu0
  %v5018 = vadd.f32 0.0, %v5017
  %v5019 = vpop.f32.mrb[0].mxu0
  %v5020 = vpop.f32.mrb[0].mxu0
  %5021 = vdwg.mxu0
  %5022 = vmatprep.subr.bf16.mxu0 %v4099
  %5023 = vmatpush1.bf16.msra.mxu0 %v4096
  %5024 = vmatprep.subr.bf16.mxu0 0
  %5025 = vmatpush1.bf16.msra.mxu0 0
  %5026 = vmatprep.subr.bf16.mxu0 0
  %5027 = vmatpush1.bf16.msra.mxu0 0
  %5028 = vmatprep.subr.bf16.mxu0 0
  %5029 = vmatpush1.bf16.msra.mxu0 0
  %5030 = vmatprep.subr.bf16.mxu0 0
  %5031 = vmatpush1.bf16.msra.mxu0 0
  %5032 = vmatprep.subr.bf16.mxu0 0
  %5033 = vmatpush1.bf16.msra.mxu0 0
  %5034 = vmatprep.subr.bf16.mxu0 0
  %5035 = vmatpush1.bf16.msra.mxu0 0
  %5036 = vmatprep.subr.bf16.mxu0 0
  %5037 = vmatpush1.bf16.msra.mxu0 0
  %5038 = vmatprep.subr.bf16.mxu0 0
  %5039 = vmatpush1.bf16.msra.mxu0 0
  %5040 = vmatprep.subr.bf16.mxu0 0
  %5041 = vmatpush1.bf16.msra.mxu0 0
  %5042 = vmatprep.subr.bf16.mxu0 0
  %5043 = vmatpush1.bf16.msra.mxu0 0
  %5044 = vmatprep.subr.bf16.mxu0 0
  %5045 = vmatpush1.bf16.msra.mxu0 0
  %5046 = vmatprep.subr.bf16.mxu0 0
  %5047 = vmatpush1.bf16.msra.mxu0 0
  %5048 = vmatprep.subr.bf16.mxu0 0
  %5049 = vmatpush1.bf16.msra.mxu0 0
  %5050 = vmatprep.subr.bf16.mxu0 0
  %5051 = vmatpush1.bf16.msra.mxu0 0
  %5052 = vmatprep.subr.bf16.mxu0 0
  %5053 = vmatpush1.bf16.msra.mxu0 0
  %5054 = vmatprep.mubr.bf16.mxu0 0
  %5055 = vmatmul.mubr.bf16.gmra.mrb[0].mxu0 %v3967
  %v5056 = vpop.f32.mrb[0].mxu0
  %v5057 = vadd.f32 0.0, %v5056
  %v5058 = vpop.f32.mrb[0].mxu0
  %v5059 = vadd.f32 0.0, %v5058
  %v5060 = vpop.f32.mrb[0].mxu0
  %v5061 = vpop.f32.mrb[0].mxu0
  %5062 = vdwg.mxu0
  %5063 = vmatprep.subr.bf16.mxu0 %v4105
  %5064 = vmatpush1.bf16.msra.mxu0 %v4102
  %5065 = vmatprep.subr.bf16.mxu0 0
  %5066 = vmatpush1.bf16.msra.mxu0 0
  %5067 = vmatprep.subr.bf16.mxu0 0
  %5068 = vmatpush1.bf16.msra.mxu0 0
  %5069 = vmatprep.subr.bf16.mxu0 0
  %5070 = vmatpush1.bf16.msra.mxu0 0
  %5071 = vmatprep.subr.bf16.mxu0 0
  %5072 = vmatpush1.bf16.msra.mxu0 0
  %5073 = vmatprep.subr.bf16.mxu0 0
  %5074 = vmatpush1.bf16.msra.mxu0 0
  %5075 = vmatprep.subr.bf16.mxu0 0
  %5076 = vmatpush1.bf16.msra.mxu0 0
  %5077 = vmatprep.subr.bf16.mxu0 0
  %5078 = vmatpush1.bf16.msra.mxu0 0
  %5079 = vmatprep.subr.bf16.mxu0 0
  %5080 = vmatpush1.bf16.msra.mxu0 0
  %5081 = vmatprep.subr.bf16.mxu0 0
  %5082 = vmatpush1.bf16.msra.mxu0 0
  %5083 = vmatprep.subr.bf16.mxu0 0
  %5084 = vmatpush1.bf16.msra.mxu0 0
  %5085 = vmatprep.subr.bf16.mxu0 0
  %5086 = vmatpush1.bf16.msra.mxu0 0
  %5087 = vmatprep.subr.bf16.mxu0 0
  %5088 = vmatpush1.bf16.msra.mxu0 0
  %5089 = vmatprep.subr.bf16.mxu0 0
  %5090 = vmatpush1.bf16.msra.mxu0 0
  %5091 = vmatprep.subr.bf16.mxu0 0
  %5092 = vmatpush1.bf16.msra.mxu0 0
  %5093 = vmatprep.subr.bf16.mxu0 0
  %5094 = vmatpush1.bf16.msra.mxu0 0
  %5095 = vmatprep.mubr.bf16.mxu0 0
  %5096 = vmatmul.mubr.bf16.gmra.mrb[0].mxu0 %v3967
  %v5097 = vpop.f32.mrb[0].mxu0
  %v5098 = vadd.f32 0.0, %v5097
  %v5099 = vpop.f32.mrb[0].mxu0
  %v5100 = vadd.f32 0.0, %v5099
  %v5101 = vpop.f32.mrb[0].mxu0
  %v5102 = vpop.f32.mrb[0].mxu0
  %5103 = vdwg.mxu0
  %5104 = vmatprep.subr.bf16.mxu0 %v4111
  %5105 = vmatpush1.bf16.msra.mxu0 %v4108
  %5106 = vmatprep.subr.bf16.mxu0 0
  %5107 = vmatpush1.bf16.msra.mxu0 0
  %5108 = vmatprep.subr.bf16.mxu0 0
  %5109 = vmatpush1.bf16.msra.mxu0 0
  %5110 = vmatprep.subr.bf16.mxu0 0
  %5111 = vmatpush1.bf16.msra.mxu0 0
  %5112 = vmatprep.subr.bf16.mxu0 0
  %5113 = vmatpush1.bf16.msra.mxu0 0
  %5114 = vmatprep.subr.bf16.mxu0 0
  %5115 = vmatpush1.bf16.msra.mxu0 0
  %5116 = vmatprep.subr.bf16.mxu0 0
  %5117 = vmatpush1.bf16.msra.mxu0 0
  %5118 = vmatprep.subr.bf16.mxu0 0
  %5119 = vmatpush1.bf16.msra.mxu0 0
  %5120 = vmatprep.subr.bf16.mxu0 0
  %5121 = vmatpush1.bf16.msra.mxu0 0
  %5122 = vmatprep.subr.bf16.mxu0 0
  %5123 = vmatpush1.bf16.msra.mxu0 0
  %5124 = vmatprep.subr.bf16.mxu0 0
  %5125 = vmatpush1.bf16.msra.mxu0 0
  %5126 = vmatprep.subr.bf16.mxu0 0
  %5127 = vmatpush1.bf16.msra.mxu0 0
  %5128 = vmatprep.subr.bf16.mxu0 0
  %5129 = vmatpush1.bf16.msra.mxu0 0
  %5130 = vmatprep.subr.bf16.mxu0 0
  %5131 = vmatpush1.bf16.msra.mxu0 0
  %5132 = vmatprep.subr.bf16.mxu0 0
  %5133 = vmatpush1.bf16.msra.mxu0 0
  %5134 = vmatprep.subr.bf16.mxu0 0
  %5135 = vmatpush1.bf16.msra.mxu0 0
  %5136 = vmatprep.mubr.bf16.mxu0 0
  %5137 = vmatmul.mubr.bf16.gmra.mrb[0].mxu0 %v3967
  %v5138 = vpop.f32.mrb[0].mxu0
  %v5139 = vadd.f32 0.0, %v5138
  %v5140 = vpop.f32.mrb[0].mxu0
  %v5141 = vadd.f32 0.0, %v5140
  %v5142 = vpop.f32.mrb[0].mxu0
  %v5143 = vpop.f32.mrb[0].mxu0
  %5144 = vdwg.mxu0
  %5145 = vmatprep.subr.bf16.mxu0 %v4117
  %5146 = vmatpush1.bf16.msra.mxu0 %v4114
  %5147 = vmatprep.subr.bf16.mxu0 0
  %5148 = vmatpush1.bf16.msra.mxu0 0
  %5149 = vmatprep.subr.bf16.mxu0 0
  %5150 = vmatpush1.bf16.msra.mxu0 0
  %5151 = vmatprep.subr.bf16.mxu0 0
  %5152 = vmatpush1.bf16.msra.mxu0 0
  %5153 = vmatprep.subr.bf16.mxu0 0
  %5154 = vmatpush1.bf16.msra.mxu0 0
  %5155 = vmatprep.subr.bf16.mxu0 0
  %5156 = vmatpush1.bf16.msra.mxu0 0
  %5157 = vmatprep.subr.bf16.mxu0 0
  %5158 = vmatpush1.bf16.msra.mxu0 0
  %5159 = vmatprep.subr.bf16.mxu0 0
  %5160 = vmatpush1.bf16.msra.mxu0 0
  %5161 = vmatprep.subr.bf16.mxu0 0
  %5162 = vmatpush1.bf16.msra.mxu0 0
  %5163 = vmatprep.subr.bf16.mxu0 0
  %5164 = vmatpush1.bf16.msra.mxu0 0
  %5165 = vmatprep.subr.bf16.mxu0 0
  %5166 = vmatpush1.bf16.msra.mxu0 0
  %5167 = vmatprep.subr.bf16.mxu0 0
  %5168 = vmatpush1.bf16.msra.mxu0 0
  %5169 = vmatprep.subr.bf16.mxu0 0
  %5170 = vmatpush1.bf16.msra.mxu0 0
  %5171 = vmatprep.subr.bf16.mxu0 0
  %5172 = vmatpush1.bf16.msra.mxu0 0
  %5173 = vmatprep.subr.bf16.mxu0 0
  %5174 = vmatpush1.bf16.msra.mxu0 0
  %5175 = vmatprep.subr.bf16.mxu0 0
  %5176 = vmatpush1.bf16.msra.mxu0 0
  %5177 = vmatprep.mubr.bf16.mxu0 0
  %5178 = vmatmul.mubr.bf16.gmra.mrb[0].mxu0 %v3967
  %v5179 = vpop.f32.mrb[0].mxu0
  %v5180 = vadd.f32 0.0, %v5179
  %v5181 = vpop.f32.mrb[0].mxu0
  %v5182 = vadd.f32 0.0, %v5181
  %v5183 = vpop.f32.mrb[0].mxu0
  %v5184 = vpop.f32.mrb[0].mxu0
  %5185 = vdwg.mxu0
  %5186 = vmatprep.subr.bf16.mxu0 %v4123
  %5187 = vmatpush1.bf16.msra.mxu0 %v4120
  %5188 = vmatprep.subr.bf16.mxu0 0
  %5189 = vmatpush1.bf16.msra.mxu0 0
  %5190 = vmatprep.subr.bf16.mxu0 0
  %5191 = vmatpush1.bf16.msra.mxu0 0
  %5192 = vmatprep.subr.bf16.mxu0 0
  %5193 = vmatpush1.bf16.msra.mxu0 0
  %5194 = vmatprep.subr.bf16.mxu0 0
  %5195 = vmatpush1.bf16.msra.mxu0 0
  %5196 = vmatprep.subr.bf16.mxu0 0
  %5197 = vmatpush1.bf16.msra.mxu0 0
  %5198 = vmatprep.subr.bf16.mxu0 0
  %5199 = vmatpush1.bf16.msra.mxu0 0
  %5200 = vmatprep.subr.bf16.mxu0 0
  %5201 = vmatpush1.bf16.msra.mxu0 0
  %5202 = vmatprep.subr.bf16.mxu0 0
  %5203 = vmatpush1.bf16.msra.mxu0 0
  %5204 = vmatprep.subr.bf16.mxu0 0
  %5205 = vmatpush1.bf16.msra.mxu0 0
  %5206 = vmatprep.subr.bf16.mxu0 0
  %5207 = vmatpush1.bf16.msra.mxu0 0
  %5208 = vmatprep.subr.bf16.mxu0 0
  %5209 = vmatpush1.bf16.msra.mxu0 0
  %5210 = vmatprep.subr.bf16.mxu0 0
  %5211 = vmatpush1.bf16.msra.mxu0 0
  %5212 = vmatprep.subr.bf16.mxu0 0
  %5213 = vmatpush1.bf16.msra.mxu0 0
  %5214 = vmatprep.subr.bf16.mxu0 0
  %5215 = vmatpush1.bf16.msra.mxu0 0
  %5216 = vmatprep.subr.bf16.mxu0 0
  %5217 = vmatpush1.bf16.msra.mxu0 0
  %5218 = vmatprep.mubr.bf16.mxu0 0
  %5219 = vmatmul.mubr.bf16.gmra.mrb[0].mxu0 %v3967
  %v5220 = vpop.f32.mrb[0].mxu0
  %v5221 = vadd.f32 0.0, %v5220
  %v5222 = vpop.f32.mrb[0].mxu0
  %v5223 = vadd.f32 0.0, %v5222
  %v5224 = vpop.f32.mrb[0].mxu0
  %v5225 = vpop.f32.mrb[0].mxu0
  %5226 = vdwg.mxu0
  %5227 = vmatprep.subr.bf16.mxu0 %v4129
  %5228 = vmatpush1.bf16.msra.mxu0 %v4126
  %5229 = vmatprep.subr.bf16.mxu0 0
  %5230 = vmatpush1.bf16.msra.mxu0 0
  %5231 = vmatprep.subr.bf16.mxu0 0
  %5232 = vmatpush1.bf16.msra.mxu0 0
  %5233 = vmatprep.subr.bf16.mxu0 0
  %5234 = vmatpush1.bf16.msra.mxu0 0
  %5235 = vmatprep.subr.bf16.mxu0 0
  %5236 = vmatpush1.bf16.msra.mxu0 0
  %5237 = vmatprep.subr.bf16.mxu0 0
  %5238 = vmatpush1.bf16.msra.mxu0 0
  %5239 = vmatprep.subr.bf16.mxu0 0
  %5240 = vmatpush1.bf16.msra.mxu0 0
  %5241 = vmatprep.subr.bf16.mxu0 0
  %5242 = vmatpush1.bf16.msra.mxu0 0
  %5243 = vmatprep.subr.bf16.mxu0 0
  %5244 = vmatpush1.bf16.msra.mxu0 0
  %5245 = vmatprep.subr.bf16.mxu0 0
  %5246 = vmatpush1.bf16.msra.mxu0 0
  %5247 = vmatprep.subr.bf16.mxu0 0
  %5248 = vmatpush1.bf16.msra.mxu0 0
  %5249 = vmatprep.subr.bf16.mxu0 0
  %5250 = vmatpush1.bf16.msra.mxu0 0
  %5251 = vmatprep.subr.bf16.mxu0 0
  %5252 = vmatpush1.bf16.msra.mxu0 0
  %5253 = vmatprep.subr.bf16.mxu0 0
  %5254 = vmatpush1.bf16.msra.mxu0 0
  %5255 = vmatprep.subr.bf16.mxu0 0
  %5256 = vmatpush1.bf16.msra.mxu0 0
  %5257 = vmatprep.subr.bf16.mxu0 0
  %5258 = vmatpush1.bf16.msra.mxu0 0
  %5259 = vmatprep.mubr.bf16.mxu0 0
  %5260 = vmatmul.mubr.bf16.gmra.mrb[0].mxu0 %v3967
  %v5261 = vpop.f32.mrb[0].mxu0
  %v5262 = vadd.f32 0.0, %v5261
  %v5263 = vpop.f32.mrb[0].mxu0
  %v5264 = vadd.f32 0.0, %v5263
  %v5265 = vpop.f32.mrb[0].mxu0
  %v5266 = vpop.f32.mrb[0].mxu0
  %5267 = vdwg.mxu0
  %5268 = vmatprep.subr.bf16.mxu0 %v4135
  %5269 = vmatpush1.bf16.msra.mxu0 %v4132
  %5270 = vmatprep.subr.bf16.mxu0 0
  %5271 = vmatpush1.bf16.msra.mxu0 0
  %5272 = vmatprep.subr.bf16.mxu0 0
  %5273 = vmatpush1.bf16.msra.mxu0 0
  %5274 = vmatprep.subr.bf16.mxu0 0
  %5275 = vmatpush1.bf16.msra.mxu0 0
  %5276 = vmatprep.subr.bf16.mxu0 0
  %5277 = vmatpush1.bf16.msra.mxu0 0
  %5278 = vmatprep.subr.bf16.mxu0 0
  %5279 = vmatpush1.bf16.msra.mxu0 0
  %5280 = vmatprep.subr.bf16.mxu0 0
  %5281 = vmatpush1.bf16.msra.mxu0 0
  %5282 = vmatprep.subr.bf16.mxu0 0
  %5283 = vmatpush1.bf16.msra.mxu0 0
  %5284 = vmatprep.subr.bf16.mxu0 0
  %5285 = vmatpush1.bf16.msra.mxu0 0
  %5286 = vmatprep.subr.bf16.mxu0 0
  %5287 = vmatpush1.bf16.msra.mxu0 0
  %5288 = vmatprep.subr.bf16.mxu0 0
  %5289 = vmatpush1.bf16.msra.mxu0 0
  %5290 = vmatprep.subr.bf16.mxu0 0
  %5291 = vmatpush1.bf16.msra.mxu0 0
  %5292 = vmatprep.subr.bf16.mxu0 0
  %5293 = vmatpush1.bf16.msra.mxu0 0
  %5294 = vmatprep.subr.bf16.mxu0 0
  %5295 = vmatpush1.bf16.msra.mxu0 0
  %5296 = vmatprep.subr.bf16.mxu0 0
  %5297 = vmatpush1.bf16.msra.mxu0 0
  %5298 = vmatprep.subr.bf16.mxu0 0
  %5299 = vmatpush1.bf16.msra.mxu0 0
  %5300 = vmatprep.mubr.bf16.mxu0 0
  %5301 = vmatmul.mubr.bf16.gmra.mrb[0].mxu0 %v3967
  %v5302 = vpop.f32.mrb[0].mxu0
  %v5303 = vadd.f32 0.0, %v5302
  %v5304 = vpop.f32.mrb[0].mxu0
  %v5305 = vadd.f32 0.0, %v5304
  %v5306 = vpop.f32.mrb[0].mxu0
  %v5307 = vpop.f32.mrb[0].mxu0
  %5308 = vdwg.mxu0
  %5309 = vmatprep.subr.bf16.mxu0 %v4141
  %5310 = vmatpush1.bf16.msra.mxu0 %v4138
  %5311 = vmatprep.subr.bf16.mxu0 0
  %5312 = vmatpush1.bf16.msra.mxu0 0
  %5313 = vmatprep.subr.bf16.mxu0 0
  %5314 = vmatpush1.bf16.msra.mxu0 0
  %5315 = vmatprep.subr.bf16.mxu0 0
  %5316 = vmatpush1.bf16.msra.mxu0 0
  %5317 = vmatprep.subr.bf16.mxu0 0
  %5318 = vmatpush1.bf16.msra.mxu0 0
  %5319 = vmatprep.subr.bf16.mxu0 0
  %5320 = vmatpush1.bf16.msra.mxu0 0
  %5321 = vmatprep.subr.bf16.mxu0 0
  %5322 = vmatpush1.bf16.msra.mxu0 0
  %5323 = vmatprep.subr.bf16.mxu0 0
  %5324 = vmatpush1.bf16.msra.mxu0 0
  %5325 = vmatprep.subr.bf16.mxu0 0
  %5326 = vmatpush1.bf16.msra.mxu0 0
  %5327 = vmatprep.subr.bf16.mxu0 0
  %5328 = vmatpush1.bf16.msra.mxu0 0
  %5329 = vmatprep.subr.bf16.mxu0 0
  %5330 = vmatpush1.bf16.msra.mxu0 0
  %5331 = vmatprep.subr.bf16.mxu0 0
  %5332 = vmatpush1.bf16.msra.mxu0 0
  %5333 = vmatprep.subr.bf16.mxu0 0
  %5334 = vmatpush1.bf16.msra.mxu0 0
  %5335 = vmatprep.subr.bf16.mxu0 0
  %5336 = vmatpush1.bf16.msra.mxu0 0
  %5337 = vmatprep.subr.bf16.mxu0 0
  %5338 = vmatpush1.bf16.msra.mxu0 0
  %5339 = vmatprep.subr.bf16.mxu0 0
  %5340 = vmatpush1.bf16.msra.mxu0 0
  %5341 = vmatprep.mubr.bf16.mxu0 0
  %5342 = vmatmul.mubr.bf16.gmra.mrb[0].mxu0 %v3967
  %v5343 = vpop.f32.mrb[0].mxu0
  %v5344 = vadd.f32 0.0, %v5343
  %v5345 = vpop.f32.mrb[0].mxu0
  %v5346 = vadd.f32 0.0, %v5345
  %v5347 = vpop.f32.mrb[0].mxu0
  %v5348 = vpop.f32.mrb[0].mxu0
  %5349 = vdwg.mxu0
  %5350 = vmatprep.subr.bf16.mxu0 %v4147
  %5351 = vmatpush1.bf16.msra.mxu0 %v4144
  %5352 = vmatprep.subr.bf16.mxu0 0
  %5353 = vmatpush1.bf16.msra.mxu0 0
  %5354 = vmatprep.subr.bf16.mxu0 0
  %5355 = vmatpush1.bf16.msra.mxu0 0
  %5356 = vmatprep.subr.bf16.mxu0 0
  %5357 = vmatpush1.bf16.msra.mxu0 0
  %5358 = vmatprep.subr.bf16.mxu0 0
  %5359 = vmatpush1.bf16.msra.mxu0 0
  %5360 = vmatprep.subr.bf16.mxu0 0
  %5361 = vmatpush1.bf16.msra.mxu0 0
  %5362 = vmatprep.subr.bf16.mxu0 0
  %5363 = vmatpush1.bf16.msra.mxu0 0
  %5364 = vmatprep.subr.bf16.mxu0 0
  %5365 = vmatpush1.bf16.msra.mxu0 0
  %5366 = vmatprep.subr.bf16.mxu0 0
  %5367 = vmatpush1.bf16.msra.mxu0 0
  %5368 = vmatprep.subr.bf16.mxu0 0
  %5369 = vmatpush1.bf16.msra.mxu0 0
  %5370 = vmatprep.subr.bf16.mxu0 0
  %5371 = vmatpush1.bf16.msra.mxu0 0
  %5372 = vmatprep.subr.bf16.mxu0 0
  %5373 = vmatpush1.bf16.msra.mxu0 0
  %5374 = vmatprep.subr.bf16.mxu0 0
  %5375 = vmatpush1.bf16.msra.mxu0 0
  %5376 = vmatprep.subr.bf16.mxu0 0
  %5377 = vmatpush1.bf16.msra.mxu0 0
  %5378 = vmatprep.subr.bf16.mxu0 0
  %5379 = vmatpush1.bf16.msra.mxu0 0
  %5380 = vmatprep.subr.bf16.mxu0 0
  %5381 = vmatpush1.bf16.msra.mxu0 0
  %5382 = vmatprep.mubr.bf16.mxu0 0
  %5383 = vmatmul.mubr.bf16.gmra.mrb[0].mxu0 %v3967
  %v5384 = vpop.f32.mrb[0].mxu0
  %v5385 = vadd.f32 0.0, %v5384
  %v5386 = vpop.f32.mrb[0].mxu0
  %v5387 = vadd.f32 0.0, %v5386
  %v5388 = vpop.f32.mrb[0].mxu0
  %v5389 = vpop.f32.mrb[0].mxu0
  %5390 = vdwg.mxu0
  %5391 = vmatprep.subr.bf16.mxu0 %v4153
  %5392 = vmatpush1.bf16.msra.mxu0 %v4150
  %5393 = vmatprep.subr.bf16.mxu0 0
  %5394 = vmatpush1.bf16.msra.mxu0 0
  %5395 = vmatprep.subr.bf16.mxu0 0
  %5396 = vmatpush1.bf16.msra.mxu0 0
  %5397 = vmatprep.subr.bf16.mxu0 0
  %5398 = vmatpush1.bf16.msra.mxu0 0
  %5399 = vmatprep.subr.bf16.mxu0 0
  %5400 = vmatpush1.bf16.msra.mxu0 0
  %5401 = vmatprep.subr.bf16.mxu0 0
  %5402 = vmatpush1.bf16.msra.mxu0 0
  %5403 = vmatprep.subr.bf16.mxu0 0
  %5404 = vmatpush1.bf16.msra.mxu0 0
  %5405 = vmatprep.subr.bf16.mxu0 0
  %5406 = vmatpush1.bf16.msra.mxu0 0
  %5407 = vmatprep.subr.bf16.mxu0 0
  %5408 = vmatpush1.bf16.msra.mxu0 0
  %5409 = vmatprep.subr.bf16.mxu0 0
  %5410 = vmatpush1.bf16.msra.mxu0 0
  %5411 = vmatprep.subr.bf16.mxu0 0
  %5412 = vmatpush1.bf16.msra.mxu0 0
  %5413 = vmatprep.subr.bf16.mxu0 0
  %5414 = vmatpush1.bf16.msra.mxu0 0
  %5415 = vmatprep.subr.bf16.mxu0 0
  %5416 = vmatpush1.bf16.msra.mxu0 0
  %5417 = vmatprep.subr.bf16.mxu0 0
  %5418 = vmatpush1.bf16.msra.mxu0 0
  %5419 = vmatprep.subr.bf16.mxu0 0
  %5420 = vmatpush1.bf16.msra.mxu0 0
  %5421 = vmatprep.subr.bf16.mxu0 0
  %5422 = vmatpush1.bf16.msra.mxu0 0
  %5423 = vmatprep.mubr.bf16.mxu0 0
  %5424 = vmatmul.mubr.bf16.gmra.mrb[0].mxu0 %v3967
  %v5425 = vpop.f32.mrb[0].mxu0
  %v5426 = vadd.f32 0.0, %v5425
  %v5427 = vpop.f32.mrb[0].mxu0
  %v5428 = vadd.f32 0.0, %v5427
  %v5429 = vpop.f32.mrb[0].mxu0
  %v5430 = vpop.f32.mrb[0].mxu0
  %5431 = vdwg.mxu0
  %5432 = vmatprep.subr.bf16.mxu0 %v4159
  %5433 = vmatpush1.bf16.msra.mxu0 %v4156
  %5434 = vmatprep.subr.bf16.mxu0 0
  %5435 = vmatpush1.bf16.msra.mxu0 0
  %5436 = vmatprep.subr.bf16.mxu0 0
  %5437 = vmatpush1.bf16.msra.mxu0 0
  %5438 = vmatprep.subr.bf16.mxu0 0
  %5439 = vmatpush1.bf16.msra.mxu0 0
  %5440 = vmatprep.subr.bf16.mxu0 0
  %5441 = vmatpush1.bf16.msra.mxu0 0
  %5442 = vmatprep.subr.bf16.mxu0 0
  %5443 = vmatpush1.bf16.msra.mxu0 0
  %5444 = vmatprep.subr.bf16.mxu0 0
  %5445 = vmatpush1.bf16.msra.mxu0 0
  %5446 = vmatprep.subr.bf16.mxu0 0
  %5447 = vmatpush1.bf16.msra.mxu0 0
  %5448 = vmatprep.subr.bf16.mxu0 0
  %5449 = vmatpush1.bf16.msra.mxu0 0
  %5450 = vmatprep.subr.bf16.mxu0 0
  %5451 = vmatpush1.bf16.msra.mxu0 0
  %5452 = vmatprep.subr.bf16.mxu0 0
  %5453 = vmatpush1.bf16.msra.mxu0 0
  %5454 = vmatprep.subr.bf16.mxu0 0
  %5455 = vmatpush1.bf16.msra.mxu0 0
  %5456 = vmatprep.subr.bf16.mxu0 0
  %5457 = vmatpush1.bf16.msra.mxu0 0
  %5458 = vmatprep.subr.bf16.mxu0 0
  %5459 = vmatpush1.bf16.msra.mxu0 0
  %5460 = vmatprep.subr.bf16.mxu0 0
  %5461 = vmatpush1.bf16.msra.mxu0 0
  %5462 = vmatprep.subr.bf16.mxu0 0
  %5463 = vmatpush1.bf16.msra.mxu0 0
  %5464 = vmatprep.mubr.bf16.mxu0 0
  %5465 = vmatmul.mubr.bf16.gmra.mrb[0].mxu0 %v3967
  %v5466 = vpop.f32.mrb[0].mxu0
  %v5467 = vadd.f32 0.0, %v5466
  %v5468 = vpop.f32.mrb[0].mxu0
  %v5469 = vadd.f32 0.0, %v5468
  %v5470 = vpop.f32.mrb[0].mxu0
  %v5471 = vpop.f32.mrb[0].mxu0
  %5472 = vdwg.mxu0
  %v5473 = vadd.f32 %v2401, %v4196
  %v5474 = vadd.f32 %v2403, %v4198
  %v5475 = vadd.f32 %v2442, %v4237
  %v5476 = vadd.f32 %v2444, %v4239
  %v5477 = vadd.f32 %v2483, %v4278
  %v5478 = vadd.f32 %v2485, %v4280
  %v5479 = vadd.f32 %v2524, %v4319
  %v5480 = vadd.f32 %v2526, %v4321
  %v5481 = vadd.f32 %v2565, %v4360
  %v5482 = vadd.f32 %v2567, %v4362
  %v5483 = vadd.f32 %v2606, %v4401
  %v5484 = vadd.f32 %v2608, %v4403
  %v5485 = vadd.f32 %v2647, %v4442
  %v5486 = vadd.f32 %v2649, %v4444
  %v5487 = vadd.f32 %v2688, %v4483
  %v5488 = vadd.f32 %v2690, %v4485
  %v5489 = vadd.f32 %v2729, %v4524
  %v5490 = vadd.f32 %v2731, %v4526
  %v5491 = vadd.f32 %v2770, %v4565
  %v5492 = vadd.f32 %v2772, %v4567
  %v5493 = vadd.f32 %v2811, %v4606
  %v5494 = vadd.f32 %v2813, %v4608
  %v5495 = vadd.f32 %v2852, %v4647
  %v5496 = vadd.f32 %v2854, %v4649
  %v5497 = vadd.f32 %v2893, %v4688
  %v5498 = vadd.f32 %v2895, %v4690
  %v5499 = vadd.f32 %v2934, %v4729
  %v5500 = vadd.f32 %v2936, %v4731
  %v5501 = vadd.f32 %v2975, %v4770
  %v5502 = vadd.f32 %v2977, %v4772
  %v5503 = vadd.f32 %v3016, %v4811
  %v5504 = vadd.f32 %v3018, %v4813
  %v5505 = vadd.f32 %v3057, %v4852
  %v5506 = vadd.f32 %v3059, %v4854
  %v5507 = vadd.f32 %v3098, %v4893
  %v5508 = vadd.f32 %v3100, %v4895
  %v5509 = vadd.f32 %v3139, %v4934
  %v5510 = vadd.f32 %v3141, %v4936
  %v5511 = vadd.f32 %v3180, %v4975
  %v5512 = vadd.f32 %v3182, %v4977
  %v5513 = vadd.f32 %v3221, %v5016
  %v5514 = vadd.f32 %v3223, %v5018
  %v5515 = vadd.f32 %v3262, %v5057
  %v5516 = vadd.f32 %v3264, %v5059
  %v5517 = vadd.f32 %v3303, %v5098
  %v5518 = vadd.f32 %v3305, %v5100
  %v5519 = vadd.f32 %v3344, %v5139
  %v5520 = vadd.f32 %v3346, %v5141
  %v5521 = vadd.f32 %v3385, %v5180
  %v5522 = vadd.f32 %v3387, %v5182
  %v5523 = vadd.f32 %v3426, %v5221
  %v5524 = vadd.f32 %v3428, %v5223
  %v5525 = vadd.f32 %v3467, %v5262
  %v5526 = vadd.f32 %v3469, %v5264
  %v5527 = vadd.f32 %v3508, %v5303
  %v5528 = vadd.f32 %v3510, %v5305
  %v5529 = vadd.f32 %v3549, %v5344
  %v5530 = vadd.f32 %v3551, %v5346
  %v5531 = vadd.f32 %v3590, %v5385
  %v5532 = vadd.f32 %v3592, %v5387
  %v5533 = vadd.f32 %v3631, %v5426
  %v5534 = vadd.f32 %v3633, %v5428
  %v5535 = vadd.f32 %v3672, %v5467
  %v5536 = vadd.f32 %v3674, %v5469
  %v5553 = vcombine.high %v63, %v63
  %v5555 = vunpack.c.l.s4 1983009808
  %v5556 = vunpack.c.0.s8 %v5555
  %v5557 = vlaneseq
  %v5558 = vshrl.u32 %v5557, 7
  %v5559 = vsub.s32 %v5556, %v5558
  %v5560 = vrot.slane %v63, %v5559
  %v5562 = vunpack.c.l.s4 1983009808
  %v5563 = vunpack.c.0.s8 %v5562
  %v5564 = vlaneseq
  %v5565 = vshrl.u32 %v5564, 7
  %v5566 = vsub.s32 %v5563, %v5565
  %v5567 = vrot.slane %v5553, %v5566
  %v5568 = vcombine.high %v5560, %v5560
  %v5569 = vcombine.high %v5567, %v5567
  %v5570 = vcombine.high %v64, %v64
  %v5572 = vunpack.c.l.s4 1983009808
  %v5573 = vunpack.c.0.s8 %v5572
  %v5574 = vlaneseq
  %v5575 = vshrl.u32 %v5574, 7
  %v5576 = vsub.s32 %v5573, %v5575
  %v5577 = vrot.slane %v64, %v5576
  %v5579 = vunpack.c.l.s4 1983009808
  %v5580 = vunpack.c.0.s8 %v5579
  %v5581 = vlaneseq
  %v5582 = vshrl.u32 %v5581, 7
  %v5583 = vsub.s32 %v5580, %v5582
  %v5584 = vrot.slane %v5570, %v5583
  %v5585 = vcombine.high %v5577, %v5577
  %v5586 = vcombine.high %v5584, %v5584
  %v5587 = vcombine.high %v65, %v65
  %v5589 = vunpack.c.l.s4 1983009808
  %v5590 = vunpack.c.0.s8 %v5589
  %v5591 = vlaneseq
  %v5592 = vshrl.u32 %v5591, 7
  %v5593 = vsub.s32 %v5590, %v5592
  %v5594 = vrot.slane %v65, %v5593
  %v5596 = vunpack.c.l.s4 1983009808
  %v5597 = vunpack.c.0.s8 %v5596
  %v5598 = vlaneseq
  %v5599 = vshrl.u32 %v5598, 7
  %v5600 = vsub.s32 %v5597, %v5599
  %v5601 = vrot.slane %v5587, %v5600
  %v5602 = vcombine.high %v5594, %v5594
  %v5603 = vcombine.high %v5601, %v5601
  %v5604 = vcombine.high %v66, %v66
  %v5606 = vunpack.c.l.s4 1983009808
  %v5607 = vunpack.c.0.s8 %v5606
  %v5608 = vlaneseq
  %v5609 = vshrl.u32 %v5608, 7
  %v5610 = vsub.s32 %v5607, %v5609
  %v5611 = vrot.slane %v66, %v5610
  %v5613 = vunpack.c.l.s4 1983009808
  %v5614 = vunpack.c.0.s8 %v5613
  %v5615 = vlaneseq
  %v5616 = vshrl.u32 %v5615, 7
  %v5617 = vsub.s32 %v5614, %v5616
  %v5618 = vrot.slane %v5604, %v5617
  %v5619 = vcombine.high %v5611, %v5611
  %v5620 = vcombine.high %v5618, %v5618
  %v5621 = vcombine.high %v67, %v67
  %v5623 = vunpack.c.l.s4 1983009808
  %v5624 = vunpack.c.0.s8 %v5623
  %v5625 = vlaneseq
  %v5626 = vshrl.u32 %v5625, 7
  %v5627 = vsub.s32 %v5624, %v5626
  %v5628 = vrot.slane %v67, %v5627
  %v5630 = vunpack.c.l.s4 1983009808
  %v5631 = vunpack.c.0.s8 %v5630
  %v5632 = vlaneseq
  %v5633 = vshrl.u32 %v5632, 7
  %v5634 = vsub.s32 %v5631, %v5633
  %v5635 = vrot.slane %v5621, %v5634
  %v5636 = vcombine.high %v5628, %v5628
  %v5637 = vcombine.high %v5635, %v5635
  %v5638 = vcombine.high %v68, %v68
  %v5640 = vunpack.c.l.s4 1983009808
  %v5641 = vunpack.c.0.s8 %v5640
  %v5642 = vlaneseq
  %v5643 = vshrl.u32 %v5642, 7
  %v5644 = vsub.s32 %v5641, %v5643
  %v5645 = vrot.slane %v68, %v5644
  %v5647 = vunpack.c.l.s4 1983009808
  %v5648 = vunpack.c.0.s8 %v5647
  %v5649 = vlaneseq
  %v5650 = vshrl.u32 %v5649, 7
  %v5651 = vsub.s32 %v5648, %v5650
  %v5652 = vrot.slane %v5638, %v5651
  %v5653 = vcombine.high %v5645, %v5645
  %v5654 = vcombine.high %v5652, %v5652
  %v5655 = vcombine.high %v69, %v69
  %v5657 = vunpack.c.l.s4 1983009808
  %v5658 = vunpack.c.0.s8 %v5657
  %v5659 = vlaneseq
  %v5660 = vshrl.u32 %v5659, 7
  %v5661 = vsub.s32 %v5658, %v5660
  %v5662 = vrot.slane %v69, %v5661
  %v5664 = vunpack.c.l.s4 1983009808
  %v5665 = vunpack.c.0.s8 %v5664
  %v5666 = vlaneseq
  %v5667 = vshrl.u32 %v5666, 7
  %v5668 = vsub.s32 %v5665, %v5667
  %v5669 = vrot.slane %v5655, %v5668
  %v5670 = vcombine.high %v5662, %v5662
  %v5671 = vcombine.high %v5669, %v5669
  %v5672 = vcombine.high %v70, %v70
  %v5674 = vunpack.c.l.s4 1983009808
  %v5675 = vunpack.c.0.s8 %v5674
  %v5676 = vlaneseq
  %v5677 = vshrl.u32 %v5676, 7
  %v5678 = vsub.s32 %v5675, %v5677
  %v5679 = vrot.slane %v70, %v5678
  %v5681 = vunpack.c.l.s4 1983009808
  %v5682 = vunpack.c.0.s8 %v5681
  %v5683 = vlaneseq
  %v5684 = vshrl.u32 %v5683, 7
  %v5685 = vsub.s32 %v5682, %v5684
  %v5686 = vrot.slane %v5672, %v5685
  %v5687 = vcombine.high %v5679, %v5679
  %v5688 = vcombine.high %v5686, %v5686
  %v5689 = vcombine.high %v71, %v71
  %v5691 = vunpack.c.l.s4 1983009808
  %v5692 = vunpack.c.0.s8 %v5691
  %v5693 = vlaneseq
  %v5694 = vshrl.u32 %v5693, 7
  %v5695 = vsub.s32 %v5692, %v5694
  %v5696 = vrot.slane %v71, %v5695
  %v5698 = vunpack.c.l.s4 1983009808
  %v5699 = vunpack.c.0.s8 %v5698
  %v5700 = vlaneseq
  %v5701 = vshrl.u32 %v5700, 7
  %v5702 = vsub.s32 %v5699, %v5701
  %v5703 = vrot.slane %v5689, %v5702
  %v5704 = vcombine.high %v5696, %v5696
  %v5705 = vcombine.high %v5703, %v5703
  %v5706 = vcombine.high %v72, %v72
  %v5708 = vunpack.c.l.s4 1983009808
  %v5709 = vunpack.c.0.s8 %v5708
  %v5710 = vlaneseq
  %v5711 = vshrl.u32 %v5710, 7
  %v5712 = vsub.s32 %v5709, %v5711
  %v5713 = vrot.slane %v72, %v5712
  %v5715 = vunpack.c.l.s4 1983009808
  %v5716 = vunpack.c.0.s8 %v5715
  %v5717 = vlaneseq
  %v5718 = vshrl.u32 %v5717, 7
  %v5719 = vsub.s32 %v5716, %v5718
  %v5720 = vrot.slane %v5706, %v5719
  %v5721 = vcombine.high %v5713, %v5713
  %v5722 = vcombine.high %v5720, %v5720
  %v5723 = vcombine.high %v73, %v73
  %v5725 = vunpack.c.l.s4 1983009808
  %v5726 = vunpack.c.0.s8 %v5725
  %v5727 = vlaneseq
  %v5728 = vshrl.u32 %v5727, 7
  %v5729 = vsub.s32 %v5726, %v5728
  %v5730 = vrot.slane %v73, %v5729
  %v5732 = vunpack.c.l.s4 1983009808
  %v5733 = vunpack.c.0.s8 %v5732
  %v5734 = vlaneseq
  %v5735 = vshrl.u32 %v5734, 7
  %v5736 = vsub.s32 %v5733, %v5735
  %v5737 = vrot.slane %v5723, %v5736
  %v5738 = vcombine.high %v5730, %v5730
  %v5739 = vcombine.high %v5737, %v5737
  %v5740 = vcombine.high %v74, %v74
  %v5742 = vunpack.c.l.s4 1983009808
  %v5743 = vunpack.c.0.s8 %v5742
  %v5744 = vlaneseq
  %v5745 = vshrl.u32 %v5744, 7
  %v5746 = vsub.s32 %v5743, %v5745
  %v5747 = vrot.slane %v74, %v5746
  %v5749 = vunpack.c.l.s4 1983009808
  %v5750 = vunpack.c.0.s8 %v5749
  %v5751 = vlaneseq
  %v5752 = vshrl.u32 %v5751, 7
  %v5753 = vsub.s32 %v5750, %v5752
  %v5754 = vrot.slane %v5740, %v5753
  %v5755 = vcombine.high %v5747, %v5747
  %v5756 = vcombine.high %v5754, %v5754
  %v5757 = vcombine.high %v75, %v75
  %v5759 = vunpack.c.l.s4 1983009808
  %v5760 = vunpack.c.0.s8 %v5759
  %v5761 = vlaneseq
  %v5762 = vshrl.u32 %v5761, 7
  %v5763 = vsub.s32 %v5760, %v5762
  %v5764 = vrot.slane %v75, %v5763
  %v5766 = vunpack.c.l.s4 1983009808
  %v5767 = vunpack.c.0.s8 %v5766
  %v5768 = vlaneseq
  %v5769 = vshrl.u32 %v5768, 7
  %v5770 = vsub.s32 %v5767, %v5769
  %v5771 = vrot.slane %v5757, %v5770
  %v5772 = vcombine.high %v5764, %v5764
  %v5773 = vcombine.high %v5771, %v5771
  %v5774 = vcombine.high %v76, %v76
  %v5776 = vunpack.c.l.s4 1983009808
  %v5777 = vunpack.c.0.s8 %v5776
  %v5778 = vlaneseq
  %v5779 = vshrl.u32 %v5778, 7
  %v5780 = vsub.s32 %v5777, %v5779
  %v5781 = vrot.slane %v76, %v5780
  %v5783 = vunpack.c.l.s4 1983009808
  %v5784 = vunpack.c.0.s8 %v5783
  %v5785 = vlaneseq
  %v5786 = vshrl.u32 %v5785, 7
  %v5787 = vsub.s32 %v5784, %v5786
  %v5788 = vrot.slane %v5774, %v5787
  %v5789 = vcombine.high %v5781, %v5781
  %v5790 = vcombine.high %v5788, %v5788
  %v5791 = vcombine.high %v77, %v77
  %v5793 = vunpack.c.l.s4 1983009808
  %v5794 = vunpack.c.0.s8 %v5793
  %v5795 = vlaneseq
  %v5796 = vshrl.u32 %v5795, 7
  %v5797 = vsub.s32 %v5794, %v5796
  %v5798 = vrot.slane %v77, %v5797
  %v5800 = vunpack.c.l.s4 1983009808
  %v5801 = vunpack.c.0.s8 %v5800
  %v5802 = vlaneseq
  %v5803 = vshrl.u32 %v5802, 7
  %v5804 = vsub.s32 %v5801, %v5803
  %v5805 = vrot.slane %v5791, %v5804
  %v5806 = vcombine.high %v5798, %v5798
  %v5807 = vcombine.high %v5805, %v5805
  %v5808 = vcombine.high %v78, %v78
  %v5810 = vunpack.c.l.s4 1983009808
  %v5811 = vunpack.c.0.s8 %v5810
  %v5812 = vlaneseq
  %v5813 = vshrl.u32 %v5812, 7
  %v5814 = vsub.s32 %v5811, %v5813
  %v5815 = vrot.slane %v78, %v5814
  %v5817 = vunpack.c.l.s4 1983009808
  %v5818 = vunpack.c.0.s8 %v5817
  %v5819 = vlaneseq
  %v5820 = vshrl.u32 %v5819, 7
  %v5821 = vsub.s32 %v5818, %v5820
  %v5822 = vrot.slane %v5808, %v5821
  %v5823 = vcombine.high %v5815, %v5815
  %v5824 = vcombine.high %v5822, %v5822
  %v5826 = vsel %vm371, %v82, 0
  %v5829 = vand.u32 %v5560, %v378
  %v5832 = vand.u32 %v5568, %v378
  %v5835 = vand.u32 %v5567, %v378
  %v5838 = vand.u32 %v5569, %v378
  %v5841 = vand.u32 %v5577, %v378
  %v5844 = vand.u32 %v5585, %v378
  %v5847 = vand.u32 %v5584, %v378
  %v5850 = vand.u32 %v5586, %v378
  %v5853 = vand.u32 %v5594, %v378
  %v5856 = vand.u32 %v5602, %v378
  %v5859 = vand.u32 %v5601, %v378
  %v5862 = vand.u32 %v5603, %v378
  %v5865 = vand.u32 %v5611, %v378
  %v5868 = vand.u32 %v5619, %v378
  %v5871 = vand.u32 %v5618, %v378
  %v5874 = vand.u32 %v5620, %v378
  %v5877 = vand.u32 %v5628, %v378
  %v5880 = vand.u32 %v5636, %v378
  %v5883 = vand.u32 %v5635, %v378
  %v5886 = vand.u32 %v5637, %v378
  %v5889 = vand.u32 %v5645, %v378
  %v5892 = vand.u32 %v5653, %v378
  %v5895 = vand.u32 %v5652, %v378
  %v5898 = vand.u32 %v5654, %v378
  %v5901 = vand.u32 %v5662, %v378
  %v5904 = vand.u32 %v5670, %v378
  %v5907 = vand.u32 %v5669, %v378
  %v5910 = vand.u32 %v5671, %v378
  %v5913 = vand.u32 %v5679, %v378
  %v5916 = vand.u32 %v5687, %v378
  %v5919 = vand.u32 %v5686, %v378
  %v5922 = vand.u32 %v5688, %v378
  %v5925 = vand.u32 %v5696, %v378
  %v5928 = vand.u32 %v5704, %v378
  %v5931 = vand.u32 %v5703, %v378
  %v5934 = vand.u32 %v5705, %v378
  %v5937 = vand.u32 %v5713, %v378
  %v5940 = vand.u32 %v5721, %v378
  %v5943 = vand.u32 %v5720, %v378
  %v5946 = vand.u32 %v5722, %v378
  %v5949 = vand.u32 %v5730, %v378
  %v5952 = vand.u32 %v5738, %v378
  %v5955 = vand.u32 %v5737, %v378
  %v5958 = vand.u32 %v5739, %v378
  %v5961 = vand.u32 %v5747, %v378
  %v5964 = vand.u32 %v5755, %v378
  %v5967 = vand.u32 %v5754, %v378
  %v5970 = vand.u32 %v5756, %v378
  %v5973 = vand.u32 %v5764, %v378
  %v5976 = vand.u32 %v5772, %v378
  %v5979 = vand.u32 %v5771, %v378
  %v5982 = vand.u32 %v5773, %v378
  %v5985 = vand.u32 %v5781, %v378
  %v5988 = vand.u32 %v5789, %v378
  %v5991 = vand.u32 %v5788, %v378
  %v5994 = vand.u32 %v5790, %v378
  %v5997 = vand.u32 %v5798, %v378
  %v6000 = vand.u32 %v5806, %v378
  %v6003 = vand.u32 %v5805, %v378
  %v6006 = vand.u32 %v5807, %v378
  %v6009 = vand.u32 %v5815, %v378
  %v6012 = vand.u32 %v5823, %v378
  %v6015 = vand.u32 %v5822, %v378
  %v6018 = vand.u32 %v5824, %v378
  %6020 = vmatprep.subr.bf16.mxu0 %v5832
  %6021 = vmatpush1.bf16.msra.mxu0 %v5829
  %6022 = vmatprep.subr.bf16.mxu0 0
  %6023 = vmatpush1.bf16.msra.mxu0 0
  %6024 = vmatprep.subr.bf16.mxu0 0
  %6025 = vmatpush1.bf16.msra.mxu0 0
  %6026 = vmatprep.subr.bf16.mxu0 0
  %6027 = vmatpush1.bf16.msra.mxu0 0
  %6028 = vmatprep.subr.bf16.mxu0 0
  %6029 = vmatpush1.bf16.msra.mxu0 0
  %6030 = vmatprep.subr.bf16.mxu0 0
  %6031 = vmatpush1.bf16.msra.mxu0 0
  %6032 = vmatprep.subr.bf16.mxu0 0
  %6033 = vmatpush1.bf16.msra.mxu0 0
  %6034 = vmatprep.subr.bf16.mxu0 0
  %6035 = vmatpush1.bf16.msra.mxu0 0
  %6036 = vmatprep.subr.bf16.mxu0 0
  %6037 = vmatpush1.bf16.msra.mxu0 0
  %6038 = vmatprep.subr.bf16.mxu0 0
  %6039 = vmatpush1.bf16.msra.mxu0 0
  %6040 = vmatprep.subr.bf16.mxu0 0
  %6041 = vmatpush1.bf16.msra.mxu0 0
  %6042 = vmatprep.subr.bf16.mxu0 0
  %6043 = vmatpush1.bf16.msra.mxu0 0
  %6044 = vmatprep.subr.bf16.mxu0 0
  %6045 = vmatpush1.bf16.msra.mxu0 0
  %6046 = vmatprep.subr.bf16.mxu0 0
  %6047 = vmatpush1.bf16.msra.mxu0 0
  %6048 = vmatprep.subr.bf16.mxu0 0
  %6049 = vmatpush1.bf16.msra.mxu0 0
  %6050 = vmatprep.subr.bf16.mxu0 0
  %6051 = vmatpush1.bf16.msra.mxu0 0
  %6052 = vmatprep.mubr.bf16.mxu0 0
  %6053 = vmatmul.mubr.bf16.gmra.mrb[0].mxu0 %v5826
  %v6054 = vpop.f32.mrb[0].mxu0
  %v6055 = vadd.f32 0.0, %v6054
  %v6056 = vpop.f32.mrb[0].mxu0
  %v6057 = vadd.f32 0.0, %v6056
  %v6058 = vpop.f32.mrb[0].mxu0
  %v6059 = vpop.f32.mrb[0].mxu0
  %6060 = vdwg.mxu0
  %6061 = vmatprep.subr.bf16.mxu0 %v5838
  %6062 = vmatpush1.bf16.msra.mxu0 %v5835
  %6063 = vmatprep.subr.bf16.mxu0 0
  %6064 = vmatpush1.bf16.msra.mxu0 0
  %6065 = vmatprep.subr.bf16.mxu0 0
  %6066 = vmatpush1.bf16.msra.mxu0 0
  %6067 = vmatprep.subr.bf16.mxu0 0
  %6068 = vmatpush1.bf16.msra.mxu0 0
  %6069 = vmatprep.subr.bf16.mxu0 0
  %6070 = vmatpush1.bf16.msra.mxu0 0
  %6071 = vmatprep.subr.bf16.mxu0 0
  %6072 = vmatpush1.bf16.msra.mxu0 0
  %6073 = vmatprep.subr.bf16.mxu0 0
  %6074 = vmatpush1.bf16.msra.mxu0 0
  %6075 = vmatprep.subr.bf16.mxu0 0
  %6076 = vmatpush1.bf16.msra.mxu0 0
  %6077 = vmatprep.subr.bf16.mxu0 0
  %6078 = vmatpush1.bf16.msra.mxu0 0
  %6079 = vmatprep.subr.bf16.mxu0 0
  %6080 = vmatpush1.bf16.msra.mxu0 0
  %6081 = vmatprep.subr.bf16.mxu0 0
  %6082 = vmatpush1.bf16.msra.mxu0 0
  %6083 = vmatprep.subr.bf16.mxu0 0
  %6084 = vmatpush1.bf16.msra.mxu0 0
  %6085 = vmatprep.subr.bf16.mxu0 0
  %6086 = vmatpush1.bf16.msra.mxu0 0
  %6087 = vmatprep.subr.bf16.mxu0 0
  %6088 = vmatpush1.bf16.msra.mxu0 0
  %6089 = vmatprep.subr.bf16.mxu0 0
  %6090 = vmatpush1.bf16.msra.mxu0 0
  %6091 = vmatprep.subr.bf16.mxu0 0
  %6092 = vmatpush1.bf16.msra.mxu0 0
  %6093 = vmatprep.mubr.bf16.mxu0 0
  %6094 = vmatmul.mubr.bf16.gmra.mrb[0].mxu0 %v5826
  %v6095 = vpop.f32.mrb[0].mxu0
  %v6096 = vadd.f32 0.0, %v6095
  %v6097 = vpop.f32.mrb[0].mxu0
  %v6098 = vadd.f32 0.0, %v6097
  %v6099 = vpop.f32.mrb[0].mxu0
  %v6100 = vpop.f32.mrb[0].mxu0
  %6101 = vdwg.mxu0
  %6102 = vmatprep.subr.bf16.mxu0 %v5844
  %6103 = vmatpush1.bf16.msra.mxu0 %v5841
  %6104 = vmatprep.subr.bf16.mxu0 0
  %6105 = vmatpush1.bf16.msra.mxu0 0
  %6106 = vmatprep.subr.bf16.mxu0 0
  %6107 = vmatpush1.bf16.msra.mxu0 0
  %6108 = vmatprep.subr.bf16.mxu0 0
  %6109 = vmatpush1.bf16.msra.mxu0 0
  %6110 = vmatprep.subr.bf16.mxu0 0
  %6111 = vmatpush1.bf16.msra.mxu0 0
  %6112 = vmatprep.subr.bf16.mxu0 0
  %6113 = vmatpush1.bf16.msra.mxu0 0
  %6114 = vmatprep.subr.bf16.mxu0 0
  %6115 = vmatpush1.bf16.msra.mxu0 0
  %6116 = vmatprep.subr.bf16.mxu0 0
  %6117 = vmatpush1.bf16.msra.mxu0 0
  %6118 = vmatprep.subr.bf16.mxu0 0
  %6119 = vmatpush1.bf16.msra.mxu0 0
  %6120 = vmatprep.subr.bf16.mxu0 0
  %6121 = vmatpush1.bf16.msra.mxu0 0
  %6122 = vmatprep.subr.bf16.mxu0 0
  %6123 = vmatpush1.bf16.msra.mxu0 0
  %6124 = vmatprep.subr.bf16.mxu0 0
  %6125 = vmatpush1.bf16.msra.mxu0 0
  %6126 = vmatprep.subr.bf16.mxu0 0
  %6127 = vmatpush1.bf16.msra.mxu0 0
  %6128 = vmatprep.subr.bf16.mxu0 0
  %6129 = vmatpush1.bf16.msra.mxu0 0
  %6130 = vmatprep.subr.bf16.mxu0 0
  %6131 = vmatpush1.bf16.msra.mxu0 0
  %6132 = vmatprep.subr.bf16.mxu0 0
  %6133 = vmatpush1.bf16.msra.mxu0 0
  %6134 = vmatprep.mubr.bf16.mxu0 0
  %6135 = vmatmul.mubr.bf16.gmra.mrb[0].mxu0 %v5826
  %v6136 = vpop.f32.mrb[0].mxu0
  %v6137 = vadd.f32 0.0, %v6136
  %v6138 = vpop.f32.mrb[0].mxu0
  %v6139 = vadd.f32 0.0, %v6138
  %v6140 = vpop.f32.mrb[0].mxu0
  %v6141 = vpop.f32.mrb[0].mxu0
  %6142 = vdwg.mxu0
  %6143 = vmatprep.subr.bf16.mxu0 %v5850
  %6144 = vmatpush1.bf16.msra.mxu0 %v5847
  %6145 = vmatprep.subr.bf16.mxu0 0
  %6146 = vmatpush1.bf16.msra.mxu0 0
  %6147 = vmatprep.subr.bf16.mxu0 0
  %6148 = vmatpush1.bf16.msra.mxu0 0
  %6149 = vmatprep.subr.bf16.mxu0 0
  %6150 = vmatpush1.bf16.msra.mxu0 0
  %6151 = vmatprep.subr.bf16.mxu0 0
  %6152 = vmatpush1.bf16.msra.mxu0 0
  %6153 = vmatprep.subr.bf16.mxu0 0
  %6154 = vmatpush1.bf16.msra.mxu0 0
  %6155 = vmatprep.subr.bf16.mxu0 0
  %6156 = vmatpush1.bf16.msra.mxu0 0
  %6157 = vmatprep.subr.bf16.mxu0 0
  %6158 = vmatpush1.bf16.msra.mxu0 0
  %6159 = vmatprep.subr.bf16.mxu0 0
  %6160 = vmatpush1.bf16.msra.mxu0 0
  %6161 = vmatprep.subr.bf16.mxu0 0
  %6162 = vmatpush1.bf16.msra.mxu0 0
  %6163 = vmatprep.subr.bf16.mxu0 0
  %6164 = vmatpush1.bf16.msra.mxu0 0
  %6165 = vmatprep.subr.bf16.mxu0 0
  %6166 = vmatpush1.bf16.msra.mxu0 0
  %6167 = vmatprep.subr.bf16.mxu0 0
  %6168 = vmatpush1.bf16.msra.mxu0 0
  %6169 = vmatprep.subr.bf16.mxu0 0
  %6170 = vmatpush1.bf16.msra.mxu0 0
  %6171 = vmatprep.subr.bf16.mxu0 0
  %6172 = vmatpush1.bf16.msra.mxu0 0
  %6173 = vmatprep.subr.bf16.mxu0 0
  %6174 = vmatpush1.bf16.msra.mxu0 0
  %6175 = vmatprep.mubr.bf16.mxu0 0
  %6176 = vmatmul.mubr.bf16.gmra.mrb[0].mxu0 %v5826
  %v6177 = vpop.f32.mrb[0].mxu0
  %v6178 = vadd.f32 0.0, %v6177
  %v6179 = vpop.f32.mrb[0].mxu0
  %v6180 = vadd.f32 0.0, %v6179
  %v6181 = vpop.f32.mrb[0].mxu0
  %v6182 = vpop.f32.mrb[0].mxu0
  %6183 = vdwg.mxu0
  %6184 = vmatprep.subr.bf16.mxu0 %v5856
  %6185 = vmatpush1.bf16.msra.mxu0 %v5853
  %6186 = vmatprep.subr.bf16.mxu0 0
  %6187 = vmatpush1.bf16.msra.mxu0 0
  %6188 = vmatprep.subr.bf16.mxu0 0
  %6189 = vmatpush1.bf16.msra.mxu0 0
  %6190 = vmatprep.subr.bf16.mxu0 0
  %6191 = vmatpush1.bf16.msra.mxu0 0
  %6192 = vmatprep.subr.bf16.mxu0 0
  %6193 = vmatpush1.bf16.msra.mxu0 0
  %6194 = vmatprep.subr.bf16.mxu0 0
  %6195 = vmatpush1.bf16.msra.mxu0 0
  %6196 = vmatprep.subr.bf16.mxu0 0
  %6197 = vmatpush1.bf16.msra.mxu0 0
  %6198 = vmatprep.subr.bf16.mxu0 0
  %6199 = vmatpush1.bf16.msra.mxu0 0
  %6200 = vmatprep.subr.bf16.mxu0 0
  %6201 = vmatpush1.bf16.msra.mxu0 0
  %6202 = vmatprep.subr.bf16.mxu0 0
  %6203 = vmatpush1.bf16.msra.mxu0 0
  %6204 = vmatprep.subr.bf16.mxu0 0
  %6205 = vmatpush1.bf16.msra.mxu0 0
  %6206 = vmatprep.subr.bf16.mxu0 0
  %6207 = vmatpush1.bf16.msra.mxu0 0
  %6208 = vmatprep.subr.bf16.mxu0 0
  %6209 = vmatpush1.bf16.msra.mxu0 0
  %6210 = vmatprep.subr.bf16.mxu0 0
  %6211 = vmatpush1.bf16.msra.mxu0 0
  %6212 = vmatprep.subr.bf16.mxu0 0
  %6213 = vmatpush1.bf16.msra.mxu0 0
  %6214 = vmatprep.subr.bf16.mxu0 0
  %6215 = vmatpush1.bf16.msra.mxu0 0
  %6216 = vmatprep.mubr.bf16.mxu0 0
  %6217 = vmatmul.mubr.bf16.gmra.mrb[0].mxu0 %v5826
  %v6218 = vpop.f32.mrb[0].mxu0
  %v6219 = vadd.f32 0.0, %v6218
  %v6220 = vpop.f32.mrb[0].mxu0
  %v6221 = vadd.f32 0.0, %v6220
  %v6222 = vpop.f32.mrb[0].mxu0
  %v6223 = vpop.f32.mrb[0].mxu0
  %6224 = vdwg.mxu0
  %6225 = vmatprep.subr.bf16.mxu0 %v5862
  %6226 = vmatpush1.bf16.msra.mxu0 %v5859
  %6227 = vmatprep.subr.bf16.mxu0 0
  %6228 = vmatpush1.bf16.msra.mxu0 0
  %6229 = vmatprep.subr.bf16.mxu0 0
  %6230 = vmatpush1.bf16.msra.mxu0 0
  %6231 = vmatprep.subr.bf16.mxu0 0
  %6232 = vmatpush1.bf16.msra.mxu0 0
  %6233 = vmatprep.subr.bf16.mxu0 0
  %6234 = vmatpush1.bf16.msra.mxu0 0
  %6235 = vmatprep.subr.bf16.mxu0 0
  %6236 = vmatpush1.bf16.msra.mxu0 0
  %6237 = vmatprep.subr.bf16.mxu0 0
  %6238 = vmatpush1.bf16.msra.mxu0 0
  %6239 = vmatprep.subr.bf16.mxu0 0
  %6240 = vmatpush1.bf16.msra.mxu0 0
  %6241 = vmatprep.subr.bf16.mxu0 0
  %6242 = vmatpush1.bf16.msra.mxu0 0
  %6243 = vmatprep.subr.bf16.mxu0 0
  %6244 = vmatpush1.bf16.msra.mxu0 0
  %6245 = vmatprep.subr.bf16.mxu0 0
  %6246 = vmatpush1.bf16.msra.mxu0 0
  %6247 = vmatprep.subr.bf16.mxu0 0
  %6248 = vmatpush1.bf16.msra.mxu0 0
  %6249 = vmatprep.subr.bf16.mxu0 0
  %6250 = vmatpush1.bf16.msra.mxu0 0
  %6251 = vmatprep.subr.bf16.mxu0 0
  %6252 = vmatpush1.bf16.msra.mxu0 0
  %6253 = vmatprep.subr.bf16.mxu0 0
  %6254 = vmatpush1.bf16.msra.mxu0 0
  %6255 = vmatprep.subr.bf16.mxu0 0
  %6256 = vmatpush1.bf16.msra.mxu0 0
  %6257 = vmatprep.mubr.bf16.mxu0 0
  %6258 = vmatmul.mubr.bf16.gmra.mrb[0].mxu0 %v5826
  %v6259 = vpop.f32.mrb[0].mxu0
  %v6260 = vadd.f32 0.0, %v6259
  %v6261 = vpop.f32.mrb[0].mxu0
  %v6262 = vadd.f32 0.0, %v6261
  %v6263 = vpop.f32.mrb[0].mxu0
  %v6264 = vpop.f32.mrb[0].mxu0
  %6265 = vdwg.mxu0
  %6266 = vmatprep.subr.bf16.mxu0 %v5868
  %6267 = vmatpush1.bf16.msra.mxu0 %v5865
  %6268 = vmatprep.subr.bf16.mxu0 0
  %6269 = vmatpush1.bf16.msra.mxu0 0
  %6270 = vmatprep.subr.bf16.mxu0 0
  %6271 = vmatpush1.bf16.msra.mxu0 0
  %6272 = vmatprep.subr.bf16.mxu0 0
  %6273 = vmatpush1.bf16.msra.mxu0 0
  %6274 = vmatprep.subr.bf16.mxu0 0
  %6275 = vmatpush1.bf16.msra.mxu0 0
  %6276 = vmatprep.subr.bf16.mxu0 0
  %6277 = vmatpush1.bf16.msra.mxu0 0
  %6278 = vmatprep.subr.bf16.mxu0 0
  %6279 = vmatpush1.bf16.msra.mxu0 0
  %6280 = vmatprep.subr.bf16.mxu0 0
  %6281 = vmatpush1.bf16.msra.mxu0 0
  %6282 = vmatprep.subr.bf16.mxu0 0
  %6283 = vmatpush1.bf16.msra.mxu0 0
  %6284 = vmatprep.subr.bf16.mxu0 0
  %6285 = vmatpush1.bf16.msra.mxu0 0
  %6286 = vmatprep.subr.bf16.mxu0 0
  %6287 = vmatpush1.bf16.msra.mxu0 0
  %6288 = vmatprep.subr.bf16.mxu0 0
  %6289 = vmatpush1.bf16.msra.mxu0 0
  %6290 = vmatprep.subr.bf16.mxu0 0
  %6291 = vmatpush1.bf16.msra.mxu0 0
  %6292 = vmatprep.subr.bf16.mxu0 0
  %6293 = vmatpush1.bf16.msra.mxu0 0
  %6294 = vmatprep.subr.bf16.mxu0 0
  %6295 = vmatpush1.bf16.msra.mxu0 0
  %6296 = vmatprep.subr.bf16.mxu0 0
  %6297 = vmatpush1.bf16.msra.mxu0 0
  %6298 = vmatprep.mubr.bf16.mxu0 0
  %6299 = vmatmul.mubr.bf16.gmra.mrb[0].mxu0 %v5826
  %v6300 = vpop.f32.mrb[0].mxu0
  %v6301 = vadd.f32 0.0, %v6300
  %v6302 = vpop.f32.mrb[0].mxu0
  %v6303 = vadd.f32 0.0, %v6302
  %v6304 = vpop.f32.mrb[0].mxu0
  %v6305 = vpop.f32.mrb[0].mxu0
  %6306 = vdwg.mxu0
  %6307 = vmatprep.subr.bf16.mxu0 %v5874
  %6308 = vmatpush1.bf16.msra.mxu0 %v5871
  %6309 = vmatprep.subr.bf16.mxu0 0
  %6310 = vmatpush1.bf16.msra.mxu0 0
  %6311 = vmatprep.subr.bf16.mxu0 0
  %6312 = vmatpush1.bf16.msra.mxu0 0
  %6313 = vmatprep.subr.bf16.mxu0 0
  %6314 = vmatpush1.bf16.msra.mxu0 0
  %6315 = vmatprep.subr.bf16.mxu0 0
  %6316 = vmatpush1.bf16.msra.mxu0 0
  %6317 = vmatprep.subr.bf16.mxu0 0
  %6318 = vmatpush1.bf16.msra.mxu0 0
  %6319 = vmatprep.subr.bf16.mxu0 0
  %6320 = vmatpush1.bf16.msra.mxu0 0
  %6321 = vmatprep.subr.bf16.mxu0 0
  %6322 = vmatpush1.bf16.msra.mxu0 0
  %6323 = vmatprep.subr.bf16.mxu0 0
  %6324 = vmatpush1.bf16.msra.mxu0 0
  %6325 = vmatprep.subr.bf16.mxu0 0
  %6326 = vmatpush1.bf16.msra.mxu0 0
  %6327 = vmatprep.subr.bf16.mxu0 0
  %6328 = vmatpush1.bf16.msra.mxu0 0
  %6329 = vmatprep.subr.bf16.mxu0 0
  %6330 = vmatpush1.bf16.msra.mxu0 0
  %6331 = vmatprep.subr.bf16.mxu0 0
  %6332 = vmatpush1.bf16.msra.mxu0 0
  %6333 = vmatprep.subr.bf16.mxu0 0
  %6334 = vmatpush1.bf16.msra.mxu0 0
  %6335 = vmatprep.subr.bf16.mxu0 0
  %6336 = vmatpush1.bf16.msra.mxu0 0
  %6337 = vmatprep.subr.bf16.mxu0 0
  %6338 = vmatpush1.bf16.msra.mxu0 0
  %6339 = vmatprep.mubr.bf16.mxu0 0
  %6340 = vmatmul.mubr.bf16.gmra.mrb[0].mxu0 %v5826
  %v6341 = vpop.f32.mrb[0].mxu0
  %v6342 = vadd.f32 0.0, %v6341
  %v6343 = vpop.f32.mrb[0].mxu0
  %v6344 = vadd.f32 0.0, %v6343
  %v6345 = vpop.f32.mrb[0].mxu0
  %v6346 = vpop.f32.mrb[0].mxu0
  %6347 = vdwg.mxu0
  %6348 = vmatprep.subr.bf16.mxu0 %v5880
  %6349 = vmatpush1.bf16.msra.mxu0 %v5877
  %6350 = vmatprep.subr.bf16.mxu0 0
  %6351 = vmatpush1.bf16.msra.mxu0 0
  %6352 = vmatprep.subr.bf16.mxu0 0
  %6353 = vmatpush1.bf16.msra.mxu0 0
  %6354 = vmatprep.subr.bf16.mxu0 0
  %6355 = vmatpush1.bf16.msra.mxu0 0
  %6356 = vmatprep.subr.bf16.mxu0 0
  %6357 = vmatpush1.bf16.msra.mxu0 0
  %6358 = vmatprep.subr.bf16.mxu0 0
  %6359 = vmatpush1.bf16.msra.mxu0 0
  %6360 = vmatprep.subr.bf16.mxu0 0
  %6361 = vmatpush1.bf16.msra.mxu0 0
  %6362 = vmatprep.subr.bf16.mxu0 0
  %6363 = vmatpush1.bf16.msra.mxu0 0
  %6364 = vmatprep.subr.bf16.mxu0 0
  %6365 = vmatpush1.bf16.msra.mxu0 0
  %6366 = vmatprep.subr.bf16.mxu0 0
  %6367 = vmatpush1.bf16.msra.mxu0 0
  %6368 = vmatprep.subr.bf16.mxu0 0
  %6369 = vmatpush1.bf16.msra.mxu0 0
  %6370 = vmatprep.subr.bf16.mxu0 0
  %6371 = vmatpush1.bf16.msra.mxu0 0
  %6372 = vmatprep.subr.bf16.mxu0 0
  %6373 = vmatpush1.bf16.msra.mxu0 0
  %6374 = vmatprep.subr.bf16.mxu0 0
  %6375 = vmatpush1.bf16.msra.mxu0 0
  %6376 = vmatprep.subr.bf16.mxu0 0
  %6377 = vmatpush1.bf16.msra.mxu0 0
  %6378 = vmatprep.subr.bf16.mxu0 0
  %6379 = vmatpush1.bf16.msra.mxu0 0
  %6380 = vmatprep.mubr.bf16.mxu0 0
  %6381 = vmatmul.mubr.bf16.gmra.mrb[0].mxu0 %v5826
  %v6382 = vpop.f32.mrb[0].mxu0
  %v6383 = vadd.f32 0.0, %v6382
  %v6384 = vpop.f32.mrb[0].mxu0
  %v6385 = vadd.f32 0.0, %v6384
  %v6386 = vpop.f32.mrb[0].mxu0
  %v6387 = vpop.f32.mrb[0].mxu0
  %6388 = vdwg.mxu0
  %6389 = vmatprep.subr.bf16.mxu0 %v5886
  %6390 = vmatpush1.bf16.msra.mxu0 %v5883
  %6391 = vmatprep.subr.bf16.mxu0 0
  %6392 = vmatpush1.bf16.msra.mxu0 0
  %6393 = vmatprep.subr.bf16.mxu0 0
  %6394 = vmatpush1.bf16.msra.mxu0 0
  %6395 = vmatprep.subr.bf16.mxu0 0
  %6396 = vmatpush1.bf16.msra.mxu0 0
  %6397 = vmatprep.subr.bf16.mxu0 0
  %6398 = vmatpush1.bf16.msra.mxu0 0
  %6399 = vmatprep.subr.bf16.mxu0 0
  %6400 = vmatpush1.bf16.msra.mxu0 0
  %6401 = vmatprep.subr.bf16.mxu0 0
  %6402 = vmatpush1.bf16.msra.mxu0 0
  %6403 = vmatprep.subr.bf16.mxu0 0
  %6404 = vmatpush1.bf16.msra.mxu0 0
  %6405 = vmatprep.subr.bf16.mxu0 0
  %6406 = vmatpush1.bf16.msra.mxu0 0
  %6407 = vmatprep.subr.bf16.mxu0 0
  %6408 = vmatpush1.bf16.msra.mxu0 0
  %6409 = vmatprep.subr.bf16.mxu0 0
  %6410 = vmatpush1.bf16.msra.mxu0 0
  %6411 = vmatprep.subr.bf16.mxu0 0
  %6412 = vmatpush1.bf16.msra.mxu0 0
  %6413 = vmatprep.subr.bf16.mxu0 0
  %6414 = vmatpush1.bf16.msra.mxu0 0
  %6415 = vmatprep.subr.bf16.mxu0 0
  %6416 = vmatpush1.bf16.msra.mxu0 0
  %6417 = vmatprep.subr.bf16.mxu0 0
  %6418 = vmatpush1.bf16.msra.mxu0 0
  %6419 = vmatprep.subr.bf16.mxu0 0
  %6420 = vmatpush1.bf16.msra.mxu0 0
  %6421 = vmatprep.mubr.bf16.mxu0 0
  %6422 = vmatmul.mubr.bf16.gmra.mrb[0].mxu0 %v5826
  %v6423 = vpop.f32.mrb[0].mxu0
  %v6424 = vadd.f32 0.0, %v6423
  %v6425 = vpop.f32.mrb[0].mxu0
  %v6426 = vadd.f32 0.0, %v6425
  %v6427 = vpop.f32.mrb[0].mxu0
  %v6428 = vpop.f32.mrb[0].mxu0
  %6429 = vdwg.mxu0
  %6430 = vmatprep.subr.bf16.mxu0 %v5892
  %6431 = vmatpush1.bf16.msra.mxu0 %v5889
  %6432 = vmatprep.subr.bf16.mxu0 0
  %6433 = vmatpush1.bf16.msra.mxu0 0
  %6434 = vmatprep.subr.bf16.mxu0 0
  %6435 = vmatpush1.bf16.msra.mxu0 0
  %6436 = vmatprep.subr.bf16.mxu0 0
  %6437 = vmatpush1.bf16.msra.mxu0 0
  %6438 = vmatprep.subr.bf16.mxu0 0
  %6439 = vmatpush1.bf16.msra.mxu0 0
  %6440 = vmatprep.subr.bf16.mxu0 0
  %6441 = vmatpush1.bf16.msra.mxu0 0
  %6442 = vmatprep.subr.bf16.mxu0 0
  %6443 = vmatpush1.bf16.msra.mxu0 0
  %6444 = vmatprep.subr.bf16.mxu0 0
  %6445 = vmatpush1.bf16.msra.mxu0 0
  %6446 = vmatprep.subr.bf16.mxu0 0
  %6447 = vmatpush1.bf16.msra.mxu0 0
  %6448 = vmatprep.subr.bf16.mxu0 0
  %6449 = vmatpush1.bf16.msra.mxu0 0
  %6450 = vmatprep.subr.bf16.mxu0 0
  %6451 = vmatpush1.bf16.msra.mxu0 0
  %6452 = vmatprep.subr.bf16.mxu0 0
  %6453 = vmatpush1.bf16.msra.mxu0 0
  %6454 = vmatprep.subr.bf16.mxu0 0
  %6455 = vmatpush1.bf16.msra.mxu0 0
  %6456 = vmatprep.subr.bf16.mxu0 0
  %6457 = vmatpush1.bf16.msra.mxu0 0
  %6458 = vmatprep.subr.bf16.mxu0 0
  %6459 = vmatpush1.bf16.msra.mxu0 0
  %6460 = vmatprep.subr.bf16.mxu0 0
  %6461 = vmatpush1.bf16.msra.mxu0 0
  %6462 = vmatprep.mubr.bf16.mxu0 0
  %6463 = vmatmul.mubr.bf16.gmra.mrb[0].mxu0 %v5826
  %v6464 = vpop.f32.mrb[0].mxu0
  %v6465 = vadd.f32 0.0, %v6464
  %v6466 = vpop.f32.mrb[0].mxu0
  %v6467 = vadd.f32 0.0, %v6466
  %v6468 = vpop.f32.mrb[0].mxu0
  %v6469 = vpop.f32.mrb[0].mxu0
  %6470 = vdwg.mxu0
  %6471 = vmatprep.subr.bf16.mxu0 %v5898
  %6472 = vmatpush1.bf16.msra.mxu0 %v5895
  %6473 = vmatprep.subr.bf16.mxu0 0
  %6474 = vmatpush1.bf16.msra.mxu0 0
  %6475 = vmatprep.subr.bf16.mxu0 0
  %6476 = vmatpush1.bf16.msra.mxu0 0
  %6477 = vmatprep.subr.bf16.mxu0 0
  %6478 = vmatpush1.bf16.msra.mxu0 0
  %6479 = vmatprep.subr.bf16.mxu0 0
  %6480 = vmatpush1.bf16.msra.mxu0 0
  %6481 = vmatprep.subr.bf16.mxu0 0
  %6482 = vmatpush1.bf16.msra.mxu0 0
  %6483 = vmatprep.subr.bf16.mxu0 0
  %6484 = vmatpush1.bf16.msra.mxu0 0
  %6485 = vmatprep.subr.bf16.mxu0 0
  %6486 = vmatpush1.bf16.msra.mxu0 0
  %6487 = vmatprep.subr.bf16.mxu0 0
  %6488 = vmatpush1.bf16.msra.mxu0 0
  %6489 = vmatprep.subr.bf16.mxu0 0
  %6490 = vmatpush1.bf16.msra.mxu0 0
  %6491 = vmatprep.subr.bf16.mxu0 0
  %6492 = vmatpush1.bf16.msra.mxu0 0
  %6493 = vmatprep.subr.bf16.mxu0 0
  %6494 = vmatpush1.bf16.msra.mxu0 0
  %6495 = vmatprep.subr.bf16.mxu0 0
  %6496 = vmatpush1.bf16.msra.mxu0 0
  %6497 = vmatprep.subr.bf16.mxu0 0
  %6498 = vmatpush1.bf16.msra.mxu0 0
  %6499 = vmatprep.subr.bf16.mxu0 0
  %6500 = vmatpush1.bf16.msra.mxu0 0
  %6501 = vmatprep.subr.bf16.mxu0 0
  %6502 = vmatpush1.bf16.msra.mxu0 0
  %6503 = vmatprep.mubr.bf16.mxu0 0
  %6504 = vmatmul.mubr.bf16.gmra.mrb[0].mxu0 %v5826
  %v6505 = vpop.f32.mrb[0].mxu0
  %v6506 = vadd.f32 0.0, %v6505
  %v6507 = vpop.f32.mrb[0].mxu0
  %v6508 = vadd.f32 0.0, %v6507
  %v6509 = vpop.f32.mrb[0].mxu0
  %v6510 = vpop.f32.mrb[0].mxu0
  %6511 = vdwg.mxu0
  %6512 = vmatprep.subr.bf16.mxu0 %v5904
  %6513 = vmatpush1.bf16.msra.mxu0 %v5901
  %6514 = vmatprep.subr.bf16.mxu0 0
  %6515 = vmatpush1.bf16.msra.mxu0 0
  %6516 = vmatprep.subr.bf16.mxu0 0
  %6517 = vmatpush1.bf16.msra.mxu0 0
  %6518 = vmatprep.subr.bf16.mxu0 0
  %6519 = vmatpush1.bf16.msra.mxu0 0
  %6520 = vmatprep.subr.bf16.mxu0 0
  %6521 = vmatpush1.bf16.msra.mxu0 0
  %6522 = vmatprep.subr.bf16.mxu0 0
  %6523 = vmatpush1.bf16.msra.mxu0 0
  %6524 = vmatprep.subr.bf16.mxu0 0
  %6525 = vmatpush1.bf16.msra.mxu0 0
  %6526 = vmatprep.subr.bf16.mxu0 0
  %6527 = vmatpush1.bf16.msra.mxu0 0
  %6528 = vmatprep.subr.bf16.mxu0 0
  %6529 = vmatpush1.bf16.msra.mxu0 0
  %6530 = vmatprep.subr.bf16.mxu0 0
  %6531 = vmatpush1.bf16.msra.mxu0 0
  %6532 = vmatprep.subr.bf16.mxu0 0
  %6533 = vmatpush1.bf16.msra.mxu0 0
  %6534 = vmatprep.subr.bf16.mxu0 0
  %6535 = vmatpush1.bf16.msra.mxu0 0
  %6536 = vmatprep.subr.bf16.mxu0 0
  %6537 = vmatpush1.bf16.msra.mxu0 0
  %6538 = vmatprep.subr.bf16.mxu0 0
  %6539 = vmatpush1.bf16.msra.mxu0 0
  %6540 = vmatprep.subr.bf16.mxu0 0
  %6541 = vmatpush1.bf16.msra.mxu0 0
  %6542 = vmatprep.subr.bf16.mxu0 0
  %6543 = vmatpush1.bf16.msra.mxu0 0
  %6544 = vmatprep.mubr.bf16.mxu0 0
  %6545 = vmatmul.mubr.bf16.gmra.mrb[0].mxu0 %v5826
  %v6546 = vpop.f32.mrb[0].mxu0
  %v6547 = vadd.f32 0.0, %v6546
  %v6548 = vpop.f32.mrb[0].mxu0
  %v6549 = vadd.f32 0.0, %v6548
  %v6550 = vpop.f32.mrb[0].mxu0
  %v6551 = vpop.f32.mrb[0].mxu0
  %6552 = vdwg.mxu0
  %6553 = vmatprep.subr.bf16.mxu0 %v5910
  %6554 = vmatpush1.bf16.msra.mxu0 %v5907
  %6555 = vmatprep.subr.bf16.mxu0 0
  %6556 = vmatpush1.bf16.msra.mxu0 0
  %6557 = vmatprep.subr.bf16.mxu0 0
  %6558 = vmatpush1.bf16.msra.mxu0 0
  %6559 = vmatprep.subr.bf16.mxu0 0
  %6560 = vmatpush1.bf16.msra.mxu0 0
  %6561 = vmatprep.subr.bf16.mxu0 0
  %6562 = vmatpush1.bf16.msra.mxu0 0
  %6563 = vmatprep.subr.bf16.mxu0 0
  %6564 = vmatpush1.bf16.msra.mxu0 0
  %6565 = vmatprep.subr.bf16.mxu0 0
  %6566 = vmatpush1.bf16.msra.mxu0 0
  %6567 = vmatprep.subr.bf16.mxu0 0
  %6568 = vmatpush1.bf16.msra.mxu0 0
  %6569 = vmatprep.subr.bf16.mxu0 0
  %6570 = vmatpush1.bf16.msra.mxu0 0
  %6571 = vmatprep.subr.bf16.mxu0 0
  %6572 = vmatpush1.bf16.msra.mxu0 0
  %6573 = vmatprep.subr.bf16.mxu0 0
  %6574 = vmatpush1.bf16.msra.mxu0 0
  %6575 = vmatprep.subr.bf16.mxu0 0
  %6576 = vmatpush1.bf16.msra.mxu0 0
  %6577 = vmatprep.subr.bf16.mxu0 0
  %6578 = vmatpush1.bf16.msra.mxu0 0
  %6579 = vmatprep.subr.bf16.mxu0 0
  %6580 = vmatpush1.bf16.msra.mxu0 0
  %6581 = vmatprep.subr.bf16.mxu0 0
  %6582 = vmatpush1.bf16.msra.mxu0 0
  %6583 = vmatprep.subr.bf16.mxu0 0
  %6584 = vmatpush1.bf16.msra.mxu0 0
  %6585 = vmatprep.mubr.bf16.mxu0 0
  %6586 = vmatmul.mubr.bf16.gmra.mrb[0].mxu0 %v5826
  %v6587 = vpop.f32.mrb[0].mxu0
  %v6588 = vadd.f32 0.0, %v6587
  %v6589 = vpop.f32.mrb[0].mxu0
  %v6590 = vadd.f32 0.0, %v6589
  %v6591 = vpop.f32.mrb[0].mxu0
  %v6592 = vpop.f32.mrb[0].mxu0
  %6593 = vdwg.mxu0
  %6594 = vmatprep.subr.bf16.mxu0 %v5916
  %6595 = vmatpush1.bf16.msra.mxu0 %v5913
  %6596 = vmatprep.subr.bf16.mxu0 0
  %6597 = vmatpush1.bf16.msra.mxu0 0
  %6598 = vmatprep.subr.bf16.mxu0 0
  %6599 = vmatpush1.bf16.msra.mxu0 0
  %6600 = vmatprep.subr.bf16.mxu0 0
  %6601 = vmatpush1.bf16.msra.mxu0 0
  %6602 = vmatprep.subr.bf16.mxu0 0
  %6603 = vmatpush1.bf16.msra.mxu0 0
  %6604 = vmatprep.subr.bf16.mxu0 0
  %6605 = vmatpush1.bf16.msra.mxu0 0
  %6606 = vmatprep.subr.bf16.mxu0 0
  %6607 = vmatpush1.bf16.msra.mxu0 0
  %6608 = vmatprep.subr.bf16.mxu0 0
  %6609 = vmatpush1.bf16.msra.mxu0 0
  %6610 = vmatprep.subr.bf16.mxu0 0
  %6611 = vmatpush1.bf16.msra.mxu0 0
  %6612 = vmatprep.subr.bf16.mxu0 0
  %6613 = vmatpush1.bf16.msra.mxu0 0
  %6614 = vmatprep.subr.bf16.mxu0 0
  %6615 = vmatpush1.bf16.msra.mxu0 0
  %6616 = vmatprep.subr.bf16.mxu0 0
  %6617 = vmatpush1.bf16.msra.mxu0 0
  %6618 = vmatprep.subr.bf16.mxu0 0
  %6619 = vmatpush1.bf16.msra.mxu0 0
  %6620 = vmatprep.subr.bf16.mxu0 0
  %6621 = vmatpush1.bf16.msra.mxu0 0
  %6622 = vmatprep.subr.bf16.mxu0 0
  %6623 = vmatpush1.bf16.msra.mxu0 0
  %6624 = vmatprep.subr.bf16.mxu0 0
  %6625 = vmatpush1.bf16.msra.mxu0 0
  %6626 = vmatprep.mubr.bf16.mxu0 0
  %6627 = vmatmul.mubr.bf16.gmra.mrb[0].mxu0 %v5826
  %v6628 = vpop.f32.mrb[0].mxu0
  %v6629 = vadd.f32 0.0, %v6628
  %v6630 = vpop.f32.mrb[0].mxu0
  %v6631 = vadd.f32 0.0, %v6630
  %v6632 = vpop.f32.mrb[0].mxu0
  %v6633 = vpop.f32.mrb[0].mxu0
  %6634 = vdwg.mxu0
  %6635 = vmatprep.subr.bf16.mxu0 %v5922
  %6636 = vmatpush1.bf16.msra.mxu0 %v5919
  %6637 = vmatprep.subr.bf16.mxu0 0
  %6638 = vmatpush1.bf16.msra.mxu0 0
  %6639 = vmatprep.subr.bf16.mxu0 0
  %6640 = vmatpush1.bf16.msra.mxu0 0
  %6641 = vmatprep.subr.bf16.mxu0 0
  %6642 = vmatpush1.bf16.msra.mxu0 0
  %6643 = vmatprep.subr.bf16.mxu0 0
  %6644 = vmatpush1.bf16.msra.mxu0 0
  %6645 = vmatprep.subr.bf16.mxu0 0
  %6646 = vmatpush1.bf16.msra.mxu0 0
  %6647 = vmatprep.subr.bf16.mxu0 0
  %6648 = vmatpush1.bf16.msra.mxu0 0
  %6649 = vmatprep.subr.bf16.mxu0 0
  %6650 = vmatpush1.bf16.msra.mxu0 0
  %6651 = vmatprep.subr.bf16.mxu0 0
  %6652 = vmatpush1.bf16.msra.mxu0 0
  %6653 = vmatprep.subr.bf16.mxu0 0
  %6654 = vmatpush1.bf16.msra.mxu0 0
  %6655 = vmatprep.subr.bf16.mxu0 0
  %6656 = vmatpush1.bf16.msra.mxu0 0
  %6657 = vmatprep.subr.bf16.mxu0 0
  %6658 = vmatpush1.bf16.msra.mxu0 0
  %6659 = vmatprep.subr.bf16.mxu0 0
  %6660 = vmatpush1.bf16.msra.mxu0 0
  %6661 = vmatprep.subr.bf16.mxu0 0
  %6662 = vmatpush1.bf16.msra.mxu0 0
  %6663 = vmatprep.subr.bf16.mxu0 0
  %6664 = vmatpush1.bf16.msra.mxu0 0
  %6665 = vmatprep.subr.bf16.mxu0 0
  %6666 = vmatpush1.bf16.msra.mxu0 0
  %6667 = vmatprep.mubr.bf16.mxu0 0
  %6668 = vmatmul.mubr.bf16.gmra.mrb[0].mxu0 %v5826
  %v6669 = vpop.f32.mrb[0].mxu0
  %v6670 = vadd.f32 0.0, %v6669
  %v6671 = vpop.f32.mrb[0].mxu0
  %v6672 = vadd.f32 0.0, %v6671
  %v6673 = vpop.f32.mrb[0].mxu0
  %v6674 = vpop.f32.mrb[0].mxu0
  %6675 = vdwg.mxu0
  %6676 = vmatprep.subr.bf16.mxu0 %v5928
  %6677 = vmatpush1.bf16.msra.mxu0 %v5925
  %6678 = vmatprep.subr.bf16.mxu0 0
  %6679 = vmatpush1.bf16.msra.mxu0 0
  %6680 = vmatprep.subr.bf16.mxu0 0
  %6681 = vmatpush1.bf16.msra.mxu0 0
  %6682 = vmatprep.subr.bf16.mxu0 0
  %6683 = vmatpush1.bf16.msra.mxu0 0
  %6684 = vmatprep.subr.bf16.mxu0 0
  %6685 = vmatpush1.bf16.msra.mxu0 0
  %6686 = vmatprep.subr.bf16.mxu0 0
  %6687 = vmatpush1.bf16.msra.mxu0 0
  %6688 = vmatprep.subr.bf16.mxu0 0
  %6689 = vmatpush1.bf16.msra.mxu0 0
  %6690 = vmatprep.subr.bf16.mxu0 0
  %6691 = vmatpush1.bf16.msra.mxu0 0
  %6692 = vmatprep.subr.bf16.mxu0 0
  %6693 = vmatpush1.bf16.msra.mxu0 0
  %6694 = vmatprep.subr.bf16.mxu0 0
  %6695 = vmatpush1.bf16.msra.mxu0 0
  %6696 = vmatprep.subr.bf16.mxu0 0
  %6697 = vmatpush1.bf16.msra.mxu0 0
  %6698 = vmatprep.subr.bf16.mxu0 0
  %6699 = vmatpush1.bf16.msra.mxu0 0
  %6700 = vmatprep.subr.bf16.mxu0 0
  %6701 = vmatpush1.bf16.msra.mxu0 0
  %6702 = vmatprep.subr.bf16.mxu0 0
  %6703 = vmatpush1.bf16.msra.mxu0 0
  %6704 = vmatprep.subr.bf16.mxu0 0
  %6705 = vmatpush1.bf16.msra.mxu0 0
  %6706 = vmatprep.subr.bf16.mxu0 0
  %6707 = vmatpush1.bf16.msra.mxu0 0
  %6708 = vmatprep.mubr.bf16.mxu0 0
  %6709 = vmatmul.mubr.bf16.gmra.mrb[0].mxu0 %v5826
  %v6710 = vpop.f32.mrb[0].mxu0
  %v6711 = vadd.f32 0.0, %v6710
  %v6712 = vpop.f32.mrb[0].mxu0
  %v6713 = vadd.f32 0.0, %v6712
  %v6714 = vpop.f32.mrb[0].mxu0
  %v6715 = vpop.f32.mrb[0].mxu0
  %6716 = vdwg.mxu0
  %6717 = vmatprep.subr.bf16.mxu0 %v5934
  %6718 = vmatpush1.bf16.msra.mxu0 %v5931
  %6719 = vmatprep.subr.bf16.mxu0 0
  %6720 = vmatpush1.bf16.msra.mxu0 0
  %6721 = vmatprep.subr.bf16.mxu0 0
  %6722 = vmatpush1.bf16.msra.mxu0 0
  %6723 = vmatprep.subr.bf16.mxu0 0
  %6724 = vmatpush1.bf16.msra.mxu0 0
  %6725 = vmatprep.subr.bf16.mxu0 0
  %6726 = vmatpush1.bf16.msra.mxu0 0
  %6727 = vmatprep.subr.bf16.mxu0 0
  %6728 = vmatpush1.bf16.msra.mxu0 0
  %6729 = vmatprep.subr.bf16.mxu0 0
  %6730 = vmatpush1.bf16.msra.mxu0 0
  %6731 = vmatprep.subr.bf16.mxu0 0
  %6732 = vmatpush1.bf16.msra.mxu0 0
  %6733 = vmatprep.subr.bf16.mxu0 0
  %6734 = vmatpush1.bf16.msra.mxu0 0
  %6735 = vmatprep.subr.bf16.mxu0 0
  %6736 = vmatpush1.bf16.msra.mxu0 0
  %6737 = vmatprep.subr.bf16.mxu0 0
  %6738 = vmatpush1.bf16.msra.mxu0 0
  %6739 = vmatprep.subr.bf16.mxu0 0
  %6740 = vmatpush1.bf16.msra.mxu0 0
  %6741 = vmatprep.subr.bf16.mxu0 0
  %6742 = vmatpush1.bf16.msra.mxu0 0
  %6743 = vmatprep.subr.bf16.mxu0 0
  %6744 = vmatpush1.bf16.msra.mxu0 0
  %6745 = vmatprep.subr.bf16.mxu0 0
  %6746 = vmatpush1.bf16.msra.mxu0 0
  %6747 = vmatprep.subr.bf16.mxu0 0
  %6748 = vmatpush1.bf16.msra.mxu0 0
  %6749 = vmatprep.mubr.bf16.mxu0 0
  %6750 = vmatmul.mubr.bf16.gmra.mrb[0].mxu0 %v5826
  %v6751 = vpop.f32.mrb[0].mxu0
  %v6752 = vadd.f32 0.0, %v6751
  %v6753 = vpop.f32.mrb[0].mxu0
  %v6754 = vadd.f32 0.0, %v6753
  %v6755 = vpop.f32.mrb[0].mxu0
  %v6756 = vpop.f32.mrb[0].mxu0
  %6757 = vdwg.mxu0
  %6758 = vmatprep.subr.bf16.mxu0 %v5940
  %6759 = vmatpush1.bf16.msra.mxu0 %v5937
  %6760 = vmatprep.subr.bf16.mxu0 0
  %6761 = vmatpush1.bf16.msra.mxu0 0
  %6762 = vmatprep.subr.bf16.mxu0 0
  %6763 = vmatpush1.bf16.msra.mxu0 0
  %6764 = vmatprep.subr.bf16.mxu0 0
  %6765 = vmatpush1.bf16.msra.mxu0 0
  %6766 = vmatprep.subr.bf16.mxu0 0
  %6767 = vmatpush1.bf16.msra.mxu0 0
  %6768 = vmatprep.subr.bf16.mxu0 0
  %6769 = vmatpush1.bf16.msra.mxu0 0
  %6770 = vmatprep.subr.bf16.mxu0 0
  %6771 = vmatpush1.bf16.msra.mxu0 0
  %6772 = vmatprep.subr.bf16.mxu0 0
  %6773 = vmatpush1.bf16.msra.mxu0 0
  %6774 = vmatprep.subr.bf16.mxu0 0
  %6775 = vmatpush1.bf16.msra.mxu0 0
  %6776 = vmatprep.subr.bf16.mxu0 0
  %6777 = vmatpush1.bf16.msra.mxu0 0
  %6778 = vmatprep.subr.bf16.mxu0 0
  %6779 = vmatpush1.bf16.msra.mxu0 0
  %6780 = vmatprep.subr.bf16.mxu0 0
  %6781 = vmatpush1.bf16.msra.mxu0 0
  %6782 = vmatprep.subr.bf16.mxu0 0
  %6783 = vmatpush1.bf16.msra.mxu0 0
  %6784 = vmatprep.subr.bf16.mxu0 0
  %6785 = vmatpush1.bf16.msra.mxu0 0
  %6786 = vmatprep.subr.bf16.mxu0 0
  %6787 = vmatpush1.bf16.msra.mxu0 0
  %6788 = vmatprep.subr.bf16.mxu0 0
  %6789 = vmatpush1.bf16.msra.mxu0 0
  %6790 = vmatprep.mubr.bf16.mxu0 0
  %6791 = vmatmul.mubr.bf16.gmra.mrb[0].mxu0 %v5826
  %v6792 = vpop.f32.mrb[0].mxu0
  %v6793 = vadd.f32 0.0, %v6792
  %v6794 = vpop.f32.mrb[0].mxu0
  %v6795 = vadd.f32 0.0, %v6794
  %v6796 = vpop.f32.mrb[0].mxu0
  %v6797 = vpop.f32.mrb[0].mxu0
  %6798 = vdwg.mxu0
  %6799 = vmatprep.subr.bf16.mxu0 %v5946
  %6800 = vmatpush1.bf16.msra.mxu0 %v5943
  %6801 = vmatprep.subr.bf16.mxu0 0
  %6802 = vmatpush1.bf16.msra.mxu0 0
  %6803 = vmatprep.subr.bf16.mxu0 0
  %6804 = vmatpush1.bf16.msra.mxu0 0
  %6805 = vmatprep.subr.bf16.mxu0 0
  %6806 = vmatpush1.bf16.msra.mxu0 0
  %6807 = vmatprep.subr.bf16.mxu0 0
  %6808 = vmatpush1.bf16.msra.mxu0 0
  %6809 = vmatprep.subr.bf16.mxu0 0
  %6810 = vmatpush1.bf16.msra.mxu0 0
  %6811 = vmatprep.subr.bf16.mxu0 0
  %6812 = vmatpush1.bf16.msra.mxu0 0
  %6813 = vmatprep.subr.bf16.mxu0 0
  %6814 = vmatpush1.bf16.msra.mxu0 0
  %6815 = vmatprep.subr.bf16.mxu0 0
  %6816 = vmatpush1.bf16.msra.mxu0 0
  %6817 = vmatprep.subr.bf16.mxu0 0
  %6818 = vmatpush1.bf16.msra.mxu0 0
  %6819 = vmatprep.subr.bf16.mxu0 0
  %6820 = vmatpush1.bf16.msra.mxu0 0
  %6821 = vmatprep.subr.bf16.mxu0 0
  %6822 = vmatpush1.bf16.msra.mxu0 0
  %6823 = vmatprep.subr.bf16.mxu0 0
  %6824 = vmatpush1.bf16.msra.mxu0 0
  %6825 = vmatprep.subr.bf16.mxu0 0
  %6826 = vmatpush1.bf16.msra.mxu0 0
  %6827 = vmatprep.subr.bf16.mxu0 0
  %6828 = vmatpush1.bf16.msra.mxu0 0
  %6829 = vmatprep.subr.bf16.mxu0 0
  %6830 = vmatpush1.bf16.msra.mxu0 0
  %6831 = vmatprep.mubr.bf16.mxu0 0
  %6832 = vmatmul.mubr.bf16.gmra.mrb[0].mxu0 %v5826
  %v6833 = vpop.f32.mrb[0].mxu0
  %v6834 = vadd.f32 0.0, %v6833
  %v6835 = vpop.f32.mrb[0].mxu0
  %v6836 = vadd.f32 0.0, %v6835
  %v6837 = vpop.f32.mrb[0].mxu0
  %v6838 = vpop.f32.mrb[0].mxu0
  %6839 = vdwg.mxu0
  %6840 = vmatprep.subr.bf16.mxu0 %v5952
  %6841 = vmatpush1.bf16.msra.mxu0 %v5949
  %6842 = vmatprep.subr.bf16.mxu0 0
  %6843 = vmatpush1.bf16.msra.mxu0 0
  %6844 = vmatprep.subr.bf16.mxu0 0
  %6845 = vmatpush1.bf16.msra.mxu0 0
  %6846 = vmatprep.subr.bf16.mxu0 0
  %6847 = vmatpush1.bf16.msra.mxu0 0
  %6848 = vmatprep.subr.bf16.mxu0 0
  %6849 = vmatpush1.bf16.msra.mxu0 0
  %6850 = vmatprep.subr.bf16.mxu0 0
  %6851 = vmatpush1.bf16.msra.mxu0 0
  %6852 = vmatprep.subr.bf16.mxu0 0
  %6853 = vmatpush1.bf16.msra.mxu0 0
  %6854 = vmatprep.subr.bf16.mxu0 0
  %6855 = vmatpush1.bf16.msra.mxu0 0
  %6856 = vmatprep.subr.bf16.mxu0 0
  %6857 = vmatpush1.bf16.msra.mxu0 0
  %6858 = vmatprep.subr.bf16.mxu0 0
  %6859 = vmatpush1.bf16.msra.mxu0 0
  %6860 = vmatprep.subr.bf16.mxu0 0
  %6861 = vmatpush1.bf16.msra.mxu0 0
  %6862 = vmatprep.subr.bf16.mxu0 0
  %6863 = vmatpush1.bf16.msra.mxu0 0
  %6864 = vmatprep.subr.bf16.mxu0 0
  %6865 = vmatpush1.bf16.msra.mxu0 0
  %6866 = vmatprep.subr.bf16.mxu0 0
  %6867 = vmatpush1.bf16.msra.mxu0 0
  %6868 = vmatprep.subr.bf16.mxu0 0
  %6869 = vmatpush1.bf16.msra.mxu0 0
  %6870 = vmatprep.subr.bf16.mxu0 0
  %6871 = vmatpush1.bf16.msra.mxu0 0
  %6872 = vmatprep.mubr.bf16.mxu0 0
  %6873 = vmatmul.mubr.bf16.gmra.mrb[0].mxu0 %v5826
  %v6874 = vpop.f32.mrb[0].mxu0
  %v6875 = vadd.f32 0.0, %v6874
  %v6876 = vpop.f32.mrb[0].mxu0
  %v6877 = vadd.f32 0.0, %v6876
  %v6878 = vpop.f32.mrb[0].mxu0
  %v6879 = vpop.f32.mrb[0].mxu0
  %6880 = vdwg.mxu0
  %6881 = vmatprep.subr.bf16.mxu0 %v5958
  %6882 = vmatpush1.bf16.msra.mxu0 %v5955
  %6883 = vmatprep.subr.bf16.mxu0 0
  %6884 = vmatpush1.bf16.msra.mxu0 0
  %6885 = vmatprep.subr.bf16.mxu0 0
  %6886 = vmatpush1.bf16.msra.mxu0 0
  %6887 = vmatprep.subr.bf16.mxu0 0
  %6888 = vmatpush1.bf16.msra.mxu0 0
  %6889 = vmatprep.subr.bf16.mxu0 0
  %6890 = vmatpush1.bf16.msra.mxu0 0
  %6891 = vmatprep.subr.bf16.mxu0 0
  %6892 = vmatpush1.bf16.msra.mxu0 0
  %6893 = vmatprep.subr.bf16.mxu0 0
  %6894 = vmatpush1.bf16.msra.mxu0 0
  %6895 = vmatprep.subr.bf16.mxu0 0
  %6896 = vmatpush1.bf16.msra.mxu0 0
  %6897 = vmatprep.subr.bf16.mxu0 0
  %6898 = vmatpush1.bf16.msra.mxu0 0
  %6899 = vmatprep.subr.bf16.mxu0 0
  %6900 = vmatpush1.bf16.msra.mxu0 0
  %6901 = vmatprep.subr.bf16.mxu0 0
  %6902 = vmatpush1.bf16.msra.mxu0 0
  %6903 = vmatprep.subr.bf16.mxu0 0
  %6904 = vmatpush1.bf16.msra.mxu0 0
  %6905 = vmatprep.subr.bf16.mxu0 0
  %6906 = vmatpush1.bf16.msra.mxu0 0
  %6907 = vmatprep.subr.bf16.mxu0 0
  %6908 = vmatpush1.bf16.msra.mxu0 0
  %6909 = vmatprep.subr.bf16.mxu0 0
  %6910 = vmatpush1.bf16.msra.mxu0 0
  %6911 = vmatprep.subr.bf16.mxu0 0
  %6912 = vmatpush1.bf16.msra.mxu0 0
  %6913 = vmatprep.mubr.bf16.mxu0 0
  %6914 = vmatmul.mubr.bf16.gmra.mrb[0].mxu0 %v5826
  %v6915 = vpop.f32.mrb[0].mxu0
  %v6916 = vadd.f32 0.0, %v6915
  %v6917 = vpop.f32.mrb[0].mxu0
  %v6918 = vadd.f32 0.0, %v6917
  %v6919 = vpop.f32.mrb[0].mxu0
  %v6920 = vpop.f32.mrb[0].mxu0
  %6921 = vdwg.mxu0
  %6922 = vmatprep.subr.bf16.mxu0 %v5964
  %6923 = vmatpush1.bf16.msra.mxu0 %v5961
  %6924 = vmatprep.subr.bf16.mxu0 0
  %6925 = vmatpush1.bf16.msra.mxu0 0
  %6926 = vmatprep.subr.bf16.mxu0 0
  %6927 = vmatpush1.bf16.msra.mxu0 0
  %6928 = vmatprep.subr.bf16.mxu0 0
  %6929 = vmatpush1.bf16.msra.mxu0 0
  %6930 = vmatprep.subr.bf16.mxu0 0
  %6931 = vmatpush1.bf16.msra.mxu0 0
  %6932 = vmatprep.subr.bf16.mxu0 0
  %6933 = vmatpush1.bf16.msra.mxu0 0
  %6934 = vmatprep.subr.bf16.mxu0 0
  %6935 = vmatpush1.bf16.msra.mxu0 0
  %6936 = vmatprep.subr.bf16.mxu0 0
  %6937 = vmatpush1.bf16.msra.mxu0 0
  %6938 = vmatprep.subr.bf16.mxu0 0
  %6939 = vmatpush1.bf16.msra.mxu0 0
  %6940 = vmatprep.subr.bf16.mxu0 0
  %6941 = vmatpush1.bf16.msra.mxu0 0
  %6942 = vmatprep.subr.bf16.mxu0 0
  %6943 = vmatpush1.bf16.msra.mxu0 0
  %6944 = vmatprep.subr.bf16.mxu0 0
  %6945 = vmatpush1.bf16.msra.mxu0 0
  %6946 = vmatprep.subr.bf16.mxu0 0
  %6947 = vmatpush1.bf16.msra.mxu0 0
  %6948 = vmatprep.subr.bf16.mxu0 0
  %6949 = vmatpush1.bf16.msra.mxu0 0
  %6950 = vmatprep.subr.bf16.mxu0 0
  %6951 = vmatpush1.bf16.msra.mxu0 0
  %6952 = vmatprep.subr.bf16.mxu0 0
  %6953 = vmatpush1.bf16.msra.mxu0 0
  %6954 = vmatprep.mubr.bf16.mxu0 0
  %6955 = vmatmul.mubr.bf16.gmra.mrb[0].mxu0 %v5826
  %v6956 = vpop.f32.mrb[0].mxu0
  %v6957 = vadd.f32 0.0, %v6956
  %v6958 = vpop.f32.mrb[0].mxu0
  %v6959 = vadd.f32 0.0, %v6958
  %v6960 = vpop.f32.mrb[0].mxu0
  %v6961 = vpop.f32.mrb[0].mxu0
  %6962 = vdwg.mxu0
  %6963 = vmatprep.subr.bf16.mxu0 %v5970
  %6964 = vmatpush1.bf16.msra.mxu0 %v5967
  %6965 = vmatprep.subr.bf16.mxu0 0
  %6966 = vmatpush1.bf16.msra.mxu0 0
  %6967 = vmatprep.subr.bf16.mxu0 0
  %6968 = vmatpush1.bf16.msra.mxu0 0
  %6969 = vmatprep.subr.bf16.mxu0 0
  %6970 = vmatpush1.bf16.msra.mxu0 0
  %6971 = vmatprep.subr.bf16.mxu0 0
  %6972 = vmatpush1.bf16.msra.mxu0 0
  %6973 = vmatprep.subr.bf16.mxu0 0
  %6974 = vmatpush1.bf16.msra.mxu0 0
  %6975 = vmatprep.subr.bf16.mxu0 0
  %6976 = vmatpush1.bf16.msra.mxu0 0
  %6977 = vmatprep.subr.bf16.mxu0 0
  %6978 = vmatpush1.bf16.msra.mxu0 0
  %6979 = vmatprep.subr.bf16.mxu0 0
  %6980 = vmatpush1.bf16.msra.mxu0 0
  %6981 = vmatprep.subr.bf16.mxu0 0
  %6982 = vmatpush1.bf16.msra.mxu0 0
  %6983 = vmatprep.subr.bf16.mxu0 0
  %6984 = vmatpush1.bf16.msra.mxu0 0
  %6985 = vmatprep.subr.bf16.mxu0 0
  %6986 = vmatpush1.bf16.msra.mxu0 0
  %6987 = vmatprep.subr.bf16.mxu0 0
  %6988 = vmatpush1.bf16.msra.mxu0 0
  %6989 = vmatprep.subr.bf16.mxu0 0
  %6990 = vmatpush1.bf16.msra.mxu0 0
  %6991 = vmatprep.subr.bf16.mxu0 0
  %6992 = vmatpush1.bf16.msra.mxu0 0
  %6993 = vmatprep.subr.bf16.mxu0 0
  %6994 = vmatpush1.bf16.msra.mxu0 0
  %6995 = vmatprep.mubr.bf16.mxu0 0
  %6996 = vmatmul.mubr.bf16.gmra.mrb[0].mxu0 %v5826
  %v6997 = vpop.f32.mrb[0].mxu0
  %v6998 = vadd.f32 0.0, %v6997
  %v6999 = vpop.f32.mrb[0].mxu0
  %v7000 = vadd.f32 0.0, %v6999
  %v7001 = vpop.f32.mrb[0].mxu0
  %v7002 = vpop.f32.mrb[0].mxu0
  %7003 = vdwg.mxu0
  %7004 = vmatprep.subr.bf16.mxu0 %v5976
  %7005 = vmatpush1.bf16.msra.mxu0 %v5973
  %7006 = vmatprep.subr.bf16.mxu0 0
  %7007 = vmatpush1.bf16.msra.mxu0 0
  %7008 = vmatprep.subr.bf16.mxu0 0
  %7009 = vmatpush1.bf16.msra.mxu0 0
  %7010 = vmatprep.subr.bf16.mxu0 0
  %7011 = vmatpush1.bf16.msra.mxu0 0
  %7012 = vmatprep.subr.bf16.mxu0 0
  %7013 = vmatpush1.bf16.msra.mxu0 0
  %7014 = vmatprep.subr.bf16.mxu0 0
  %7015 = vmatpush1.bf16.msra.mxu0 0
  %7016 = vmatprep.subr.bf16.mxu0 0
  %7017 = vmatpush1.bf16.msra.mxu0 0
  %7018 = vmatprep.subr.bf16.mxu0 0
  %7019 = vmatpush1.bf16.msra.mxu0 0
  %7020 = vmatprep.subr.bf16.mxu0 0
  %7021 = vmatpush1.bf16.msra.mxu0 0
  %7022 = vmatprep.subr.bf16.mxu0 0
  %7023 = vmatpush1.bf16.msra.mxu0 0
  %7024 = vmatprep.subr.bf16.mxu0 0
  %7025 = vmatpush1.bf16.msra.mxu0 0
  %7026 = vmatprep.subr.bf16.mxu0 0
  %7027 = vmatpush1.bf16.msra.mxu0 0
  %7028 = vmatprep.subr.bf16.mxu0 0
  %7029 = vmatpush1.bf16.msra.mxu0 0
  %7030 = vmatprep.subr.bf16.mxu0 0
  %7031 = vmatpush1.bf16.msra.mxu0 0
  %7032 = vmatprep.subr.bf16.mxu0 0
  %7033 = vmatpush1.bf16.msra.mxu0 0
  %7034 = vmatprep.subr.bf16.mxu0 0
  %7035 = vmatpush1.bf16.msra.mxu0 0
  %7036 = vmatprep.mubr.bf16.mxu0 0
  %7037 = vmatmul.mubr.bf16.gmra.mrb[0].mxu0 %v5826
  %v7038 = vpop.f32.mrb[0].mxu0
  %v7039 = vadd.f32 0.0, %v7038
  %v7040 = vpop.f32.mrb[0].mxu0
  %v7041 = vadd.f32 0.0, %v7040
  %v7042 = vpop.f32.mrb[0].mxu0
  %v7043 = vpop.f32.mrb[0].mxu0
  %7044 = vdwg.mxu0
  %7045 = vmatprep.subr.bf16.mxu0 %v5982
  %7046 = vmatpush1.bf16.msra.mxu0 %v5979
  %7047 = vmatprep.subr.bf16.mxu0 0
  %7048 = vmatpush1.bf16.msra.mxu0 0
  %7049 = vmatprep.subr.bf16.mxu0 0
  %7050 = vmatpush1.bf16.msra.mxu0 0
  %7051 = vmatprep.subr.bf16.mxu0 0
  %7052 = vmatpush1.bf16.msra.mxu0 0
  %7053 = vmatprep.subr.bf16.mxu0 0
  %7054 = vmatpush1.bf16.msra.mxu0 0
  %7055 = vmatprep.subr.bf16.mxu0 0
  %7056 = vmatpush1.bf16.msra.mxu0 0
  %7057 = vmatprep.subr.bf16.mxu0 0
  %7058 = vmatpush1.bf16.msra.mxu0 0
  %7059 = vmatprep.subr.bf16.mxu0 0
  %7060 = vmatpush1.bf16.msra.mxu0 0
  %7061 = vmatprep.subr.bf16.mxu0 0
  %7062 = vmatpush1.bf16.msra.mxu0 0
  %7063 = vmatprep.subr.bf16.mxu0 0
  %7064 = vmatpush1.bf16.msra.mxu0 0
  %7065 = vmatprep.subr.bf16.mxu0 0
  %7066 = vmatpush1.bf16.msra.mxu0 0
  %7067 = vmatprep.subr.bf16.mxu0 0
  %7068 = vmatpush1.bf16.msra.mxu0 0
  %7069 = vmatprep.subr.bf16.mxu0 0
  %7070 = vmatpush1.bf16.msra.mxu0 0
  %7071 = vmatprep.subr.bf16.mxu0 0
  %7072 = vmatpush1.bf16.msra.mxu0 0
  %7073 = vmatprep.subr.bf16.mxu0 0
  %7074 = vmatpush1.bf16.msra.mxu0 0
  %7075 = vmatprep.subr.bf16.mxu0 0
  %7076 = vmatpush1.bf16.msra.mxu0 0
  %7077 = vmatprep.mubr.bf16.mxu0 0
  %7078 = vmatmul.mubr.bf16.gmra.mrb[0].mxu0 %v5826
  %v7079 = vpop.f32.mrb[0].mxu0
  %v7080 = vadd.f32 0.0, %v7079
  %v7081 = vpop.f32.mrb[0].mxu0
  %v7082 = vadd.f32 0.0, %v7081
  %v7083 = vpop.f32.mrb[0].mxu0
  %v7084 = vpop.f32.mrb[0].mxu0
  %7085 = vdwg.mxu0
  %7086 = vmatprep.subr.bf16.mxu0 %v5988
  %7087 = vmatpush1.bf16.msra.mxu0 %v5985
  %7088 = vmatprep.subr.bf16.mxu0 0
  %7089 = vmatpush1.bf16.msra.mxu0 0
  %7090 = vmatprep.subr.bf16.mxu0 0
  %7091 = vmatpush1.bf16.msra.mxu0 0
  %7092 = vmatprep.subr.bf16.mxu0 0
  %7093 = vmatpush1.bf16.msra.mxu0 0
  %7094 = vmatprep.subr.bf16.mxu0 0
  %7095 = vmatpush1.bf16.msra.mxu0 0
  %7096 = vmatprep.subr.bf16.mxu0 0
  %7097 = vmatpush1.bf16.msra.mxu0 0
  %7098 = vmatprep.subr.bf16.mxu0 0
  %7099 = vmatpush1.bf16.msra.mxu0 0
  %7100 = vmatprep.subr.bf16.mxu0 0
  %7101 = vmatpush1.bf16.msra.mxu0 0
  %7102 = vmatprep.subr.bf16.mxu0 0
  %7103 = vmatpush1.bf16.msra.mxu0 0
  %7104 = vmatprep.subr.bf16.mxu0 0
  %7105 = vmatpush1.bf16.msra.mxu0 0
  %7106 = vmatprep.subr.bf16.mxu0 0
  %7107 = vmatpush1.bf16.msra.mxu0 0
  %7108 = vmatprep.subr.bf16.mxu0 0
  %7109 = vmatpush1.bf16.msra.mxu0 0
  %7110 = vmatprep.subr.bf16.mxu0 0
  %7111 = vmatpush1.bf16.msra.mxu0 0
  %7112 = vmatprep.subr.bf16.mxu0 0
  %7113 = vmatpush1.bf16.msra.mxu0 0
  %7114 = vmatprep.subr.bf16.mxu0 0
  %7115 = vmatpush1.bf16.msra.mxu0 0
  %7116 = vmatprep.subr.bf16.mxu0 0
  %7117 = vmatpush1.bf16.msra.mxu0 0
  %7118 = vmatprep.mubr.bf16.mxu0 0
  %7119 = vmatmul.mubr.bf16.gmra.mrb[0].mxu0 %v5826
  %v7120 = vpop.f32.mrb[0].mxu0
  %v7121 = vadd.f32 0.0, %v7120
  %v7122 = vpop.f32.mrb[0].mxu0
  %v7123 = vadd.f32 0.0, %v7122
  %v7124 = vpop.f32.mrb[0].mxu0
  %v7125 = vpop.f32.mrb[0].mxu0
  %7126 = vdwg.mxu0
  %7127 = vmatprep.subr.bf16.mxu0 %v5994
  %7128 = vmatpush1.bf16.msra.mxu0 %v5991
  %7129 = vmatprep.subr.bf16.mxu0 0
  %7130 = vmatpush1.bf16.msra.mxu0 0
  %7131 = vmatprep.subr.bf16.mxu0 0
  %7132 = vmatpush1.bf16.msra.mxu0 0
  %7133 = vmatprep.subr.bf16.mxu0 0
  %7134 = vmatpush1.bf16.msra.mxu0 0
  %7135 = vmatprep.subr.bf16.mxu0 0
  %7136 = vmatpush1.bf16.msra.mxu0 0
  %7137 = vmatprep.subr.bf16.mxu0 0
  %7138 = vmatpush1.bf16.msra.mxu0 0
  %7139 = vmatprep.subr.bf16.mxu0 0
  %7140 = vmatpush1.bf16.msra.mxu0 0
  %7141 = vmatprep.subr.bf16.mxu0 0
  %7142 = vmatpush1.bf16.msra.mxu0 0
  %7143 = vmatprep.subr.bf16.mxu0 0
  %7144 = vmatpush1.bf16.msra.mxu0 0
  %7145 = vmatprep.subr.bf16.mxu0 0
  %7146 = vmatpush1.bf16.msra.mxu0 0
  %7147 = vmatprep.subr.bf16.mxu0 0
  %7148 = vmatpush1.bf16.msra.mxu0 0
  %7149 = vmatprep.subr.bf16.mxu0 0
  %7150 = vmatpush1.bf16.msra.mxu0 0
  %7151 = vmatprep.subr.bf16.mxu0 0
  %7152 = vmatpush1.bf16.msra.mxu0 0
  %7153 = vmatprep.subr.bf16.mxu0 0
  %7154 = vmatpush1.bf16.msra.mxu0 0
  %7155 = vmatprep.subr.bf16.mxu0 0
  %7156 = vmatpush1.bf16.msra.mxu0 0
  %7157 = vmatprep.subr.bf16.mxu0 0
  %7158 = vmatpush1.bf16.msra.mxu0 0
  %7159 = vmatprep.mubr.bf16.mxu0 0
  %7160 = vmatmul.mubr.bf16.gmra.mrb[0].mxu0 %v5826
  %v7161 = vpop.f32.mrb[0].mxu0
  %v7162 = vadd.f32 0.0, %v7161
  %v7163 = vpop.f32.mrb[0].mxu0
  %v7164 = vadd.f32 0.0, %v7163
  %v7165 = vpop.f32.mrb[0].mxu0
  %v7166 = vpop.f32.mrb[0].mxu0
  %7167 = vdwg.mxu0
  %7168 = vmatprep.subr.bf16.mxu0 %v6000
  %7169 = vmatpush1.bf16.msra.mxu0 %v5997
  %7170 = vmatprep.subr.bf16.mxu0 0
  %7171 = vmatpush1.bf16.msra.mxu0 0
  %7172 = vmatprep.subr.bf16.mxu0 0
  %7173 = vmatpush1.bf16.msra.mxu0 0
  %7174 = vmatprep.subr.bf16.mxu0 0
  %7175 = vmatpush1.bf16.msra.mxu0 0
  %7176 = vmatprep.subr.bf16.mxu0 0
  %7177 = vmatpush1.bf16.msra.mxu0 0
  %7178 = vmatprep.subr.bf16.mxu0 0
  %7179 = vmatpush1.bf16.msra.mxu0 0
  %7180 = vmatprep.subr.bf16.mxu0 0
  %7181 = vmatpush1.bf16.msra.mxu0 0
  %7182 = vmatprep.subr.bf16.mxu0 0
  %7183 = vmatpush1.bf16.msra.mxu0 0
  %7184 = vmatprep.subr.bf16.mxu0 0
  %7185 = vmatpush1.bf16.msra.mxu0 0
  %7186 = vmatprep.subr.bf16.mxu0 0
  %7187 = vmatpush1.bf16.msra.mxu0 0
  %7188 = vmatprep.subr.bf16.mxu0 0
  %7189 = vmatpush1.bf16.msra.mxu0 0
  %7190 = vmatprep.subr.bf16.mxu0 0
  %7191 = vmatpush1.bf16.msra.mxu0 0
  %7192 = vmatprep.subr.bf16.mxu0 0
  %7193 = vmatpush1.bf16.msra.mxu0 0
  %7194 = vmatprep.subr.bf16.mxu0 0
  %7195 = vmatpush1.bf16.msra.mxu0 0
  %7196 = vmatprep.subr.bf16.mxu0 0
  %7197 = vmatpush1.bf16.msra.mxu0 0
  %7198 = vmatprep.subr.bf16.mxu0 0
  %7199 = vmatpush1.bf16.msra.mxu0 0
  %7200 = vmatprep.mubr.bf16.mxu0 0
  %7201 = vmatmul.mubr.bf16.gmra.mrb[0].mxu0 %v5826
  %v7202 = vpop.f32.mrb[0].mxu0
  %v7203 = vadd.f32 0.0, %v7202
  %v7204 = vpop.f32.mrb[0].mxu0
  %v7205 = vadd.f32 0.0, %v7204
  %v7206 = vpop.f32.mrb[0].mxu0
  %v7207 = vpop.f32.mrb[0].mxu0
  %7208 = vdwg.mxu0
  %7209 = vmatprep.subr.bf16.mxu0 %v6006
  %7210 = vmatpush1.bf16.msra.mxu0 %v6003
  %7211 = vmatprep.subr.bf16.mxu0 0
  %7212 = vmatpush1.bf16.msra.mxu0 0
  %7213 = vmatprep.subr.bf16.mxu0 0
  %7214 = vmatpush1.bf16.msra.mxu0 0
  %7215 = vmatprep.subr.bf16.mxu0 0
  %7216 = vmatpush1.bf16.msra.mxu0 0
  %7217 = vmatprep.subr.bf16.mxu0 0
  %7218 = vmatpush1.bf16.msra.mxu0 0
  %7219 = vmatprep.subr.bf16.mxu0 0
  %7220 = vmatpush1.bf16.msra.mxu0 0
  %7221 = vmatprep.subr.bf16.mxu0 0
  %7222 = vmatpush1.bf16.msra.mxu0 0
  %7223 = vmatprep.subr.bf16.mxu0 0
  %7224 = vmatpush1.bf16.msra.mxu0 0
  %7225 = vmatprep.subr.bf16.mxu0 0
  %7226 = vmatpush1.bf16.msra.mxu0 0
  %7227 = vmatprep.subr.bf16.mxu0 0
  %7228 = vmatpush1.bf16.msra.mxu0 0
  %7229 = vmatprep.subr.bf16.mxu0 0
  %7230 = vmatpush1.bf16.msra.mxu0 0
  %7231 = vmatprep.subr.bf16.mxu0 0
  %7232 = vmatpush1.bf16.msra.mxu0 0
  %7233 = vmatprep.subr.bf16.mxu0 0
  %7234 = vmatpush1.bf16.msra.mxu0 0
  %7235 = vmatprep.subr.bf16.mxu0 0
  %7236 = vmatpush1.bf16.msra.mxu0 0
  %7237 = vmatprep.subr.bf16.mxu0 0
  %7238 = vmatpush1.bf16.msra.mxu0 0
  %7239 = vmatprep.subr.bf16.mxu0 0
  %7240 = vmatpush1.bf16.msra.mxu0 0
  %7241 = vmatprep.mubr.bf16.mxu0 0
  %7242 = vmatmul.mubr.bf16.gmra.mrb[0].mxu0 %v5826
  %v7243 = vpop.f32.mrb[0].mxu0
  %v7244 = vadd.f32 0.0, %v7243
  %v7245 = vpop.f32.mrb[0].mxu0
  %v7246 = vadd.f32 0.0, %v7245
  %v7247 = vpop.f32.mrb[0].mxu0
  %v7248 = vpop.f32.mrb[0].mxu0
  %7249 = vdwg.mxu0
  %7250 = vmatprep.subr.bf16.mxu0 %v6012
  %7251 = vmatpush1.bf16.msra.mxu0 %v6009
  %7252 = vmatprep.subr.bf16.mxu0 0
  %7253 = vmatpush1.bf16.msra.mxu0 0
  %7254 = vmatprep.subr.bf16.mxu0 0
  %7255 = vmatpush1.bf16.msra.mxu0 0
  %7256 = vmatprep.subr.bf16.mxu0 0
  %7257 = vmatpush1.bf16.msra.mxu0 0
  %7258 = vmatprep.subr.bf16.mxu0 0
  %7259 = vmatpush1.bf16.msra.mxu0 0
  %7260 = vmatprep.subr.bf16.mxu0 0
  %7261 = vmatpush1.bf16.msra.mxu0 0
  %7262 = vmatprep.subr.bf16.mxu0 0
  %7263 = vmatpush1.bf16.msra.mxu0 0
  %7264 = vmatprep.subr.bf16.mxu0 0
  %7265 = vmatpush1.bf16.msra.mxu0 0
  %7266 = vmatprep.subr.bf16.mxu0 0
  %7267 = vmatpush1.bf16.msra.mxu0 0
  %7268 = vmatprep.subr.bf16.mxu0 0
  %7269 = vmatpush1.bf16.msra.mxu0 0
  %7270 = vmatprep.subr.bf16.mxu0 0
  %7271 = vmatpush1.bf16.msra.mxu0 0
  %7272 = vmatprep.subr.bf16.mxu0 0
  %7273 = vmatpush1.bf16.msra.mxu0 0
  %7274 = vmatprep.subr.bf16.mxu0 0
  %7275 = vmatpush1.bf16.msra.mxu0 0
  %7276 = vmatprep.subr.bf16.mxu0 0
  %7277 = vmatpush1.bf16.msra.mxu0 0
  %7278 = vmatprep.subr.bf16.mxu0 0
  %7279 = vmatpush1.bf16.msra.mxu0 0
  %7280 = vmatprep.subr.bf16.mxu0 0
  %7281 = vmatpush1.bf16.msra.mxu0 0
  %7282 = vmatprep.mubr.bf16.mxu0 0
  %7283 = vmatmul.mubr.bf16.gmra.mrb[0].mxu0 %v5826
  %v7284 = vpop.f32.mrb[0].mxu0
  %v7285 = vadd.f32 0.0, %v7284
  %v7286 = vpop.f32.mrb[0].mxu0
  %v7287 = vadd.f32 0.0, %v7286
  %v7288 = vpop.f32.mrb[0].mxu0
  %v7289 = vpop.f32.mrb[0].mxu0
  %7290 = vdwg.mxu0
  %7291 = vmatprep.subr.bf16.mxu0 %v6018
  %7292 = vmatpush1.bf16.msra.mxu0 %v6015
  %7293 = vmatprep.subr.bf16.mxu0 0
  %7294 = vmatpush1.bf16.msra.mxu0 0
  %7295 = vmatprep.subr.bf16.mxu0 0
  %7296 = vmatpush1.bf16.msra.mxu0 0
  %7297 = vmatprep.subr.bf16.mxu0 0
  %7298 = vmatpush1.bf16.msra.mxu0 0
  %7299 = vmatprep.subr.bf16.mxu0 0
  %7300 = vmatpush1.bf16.msra.mxu0 0
  %7301 = vmatprep.subr.bf16.mxu0 0
  %7302 = vmatpush1.bf16.msra.mxu0 0
  %7303 = vmatprep.subr.bf16.mxu0 0
  %7304 = vmatpush1.bf16.msra.mxu0 0
  %7305 = vmatprep.subr.bf16.mxu0 0
  %7306 = vmatpush1.bf16.msra.mxu0 0
  %7307 = vmatprep.subr.bf16.mxu0 0
  %7308 = vmatpush1.bf16.msra.mxu0 0
  %7309 = vmatprep.subr.bf16.mxu0 0
  %7310 = vmatpush1.bf16.msra.mxu0 0
  %7311 = vmatprep.subr.bf16.mxu0 0
  %7312 = vmatpush1.bf16.msra.mxu0 0
  %7313 = vmatprep.subr.bf16.mxu0 0
  %7314 = vmatpush1.bf16.msra.mxu0 0
  %7315 = vmatprep.subr.bf16.mxu0 0
  %7316 = vmatpush1.bf16.msra.mxu0 0
  %7317 = vmatprep.subr.bf16.mxu0 0
  %7318 = vmatpush1.bf16.msra.mxu0 0
  %7319 = vmatprep.subr.bf16.mxu0 0
  %7320 = vmatpush1.bf16.msra.mxu0 0
  %7321 = vmatprep.subr.bf16.mxu0 0
  %7322 = vmatpush1.bf16.msra.mxu0 0
  %7323 = vmatprep.mubr.bf16.mxu0 0
  %7324 = vmatmul.mubr.bf16.gmra.mrb[0].mxu0 %v5826
  %v7325 = vpop.f32.mrb[0].mxu0
  %v7326 = vadd.f32 0.0, %v7325
  %v7327 = vpop.f32.mrb[0].mxu0
  %v7328 = vadd.f32 0.0, %v7327
  %v7329 = vpop.f32.mrb[0].mxu0
  %v7330 = vpop.f32.mrb[0].mxu0
  %7331 = vdwg.mxu0
  %v7332 = vadd.f32 %v5473, %v6055
  %v7333 = vadd.f32 %v5474, %v6057
  %v7334 = vadd.f32 %v5475, %v6096
  %v7335 = vadd.f32 %v5476, %v6098
  %v7336 = vadd.f32 %v5477, %v6137
  %v7337 = vadd.f32 %v5478, %v6139
  %v7338 = vadd.f32 %v5479, %v6178
  %v7339 = vadd.f32 %v5480, %v6180
  %v7340 = vadd.f32 %v5481, %v6219
  %v7341 = vadd.f32 %v5482, %v6221
  %v7342 = vadd.f32 %v5483, %v6260
  %v7343 = vadd.f32 %v5484, %v6262
  %v7344 = vadd.f32 %v5485, %v6301
  %v7345 = vadd.f32 %v5486, %v6303
  %v7346 = vadd.f32 %v5487, %v6342
  %v7347 = vadd.f32 %v5488, %v6344
  %v7348 = vadd.f32 %v5489, %v6383
  %v7349 = vadd.f32 %v5490, %v6385
  %v7350 = vadd.f32 %v5491, %v6424
  %v7351 = vadd.f32 %v5492, %v6426
  %v7352 = vadd.f32 %v5493, %v6465
  %v7353 = vadd.f32 %v5494, %v6467
  %v7354 = vadd.f32 %v5495, %v6506
  %v7355 = vadd.f32 %v5496, %v6508
  %v7356 = vadd.f32 %v5497, %v6547
  %v7357 = vadd.f32 %v5498, %v6549
  %v7358 = vadd.f32 %v5499, %v6588
  %v7359 = vadd.f32 %v5500, %v6590
  %v7360 = vadd.f32 %v5501, %v6629
  %v7361 = vadd.f32 %v5502, %v6631
  %v7362 = vadd.f32 %v5503, %v6670
  %v7363 = vadd.f32 %v5504, %v6672
  %v7364 = vadd.f32 %v5505, %v6711
  %v7365 = vadd.f32 %v5506, %v6713
  %v7366 = vadd.f32 %v5507, %v6752
  %v7367 = vadd.f32 %v5508, %v6754
  %v7368 = vadd.f32 %v5509, %v6793
  %v7369 = vadd.f32 %v5510, %v6795
  %v7370 = vadd.f32 %v5511, %v6834
  %v7371 = vadd.f32 %v5512, %v6836
  %v7372 = vadd.f32 %v5513, %v6875
  %v7373 = vadd.f32 %v5514, %v6877
  %v7374 = vadd.f32 %v5515, %v6916
  %v7375 = vadd.f32 %v5516, %v6918
  %v7376 = vadd.f32 %v5517, %v6957
  %v7377 = vadd.f32 %v5518, %v6959
  %v7378 = vadd.f32 %v5519, %v6998
  %v7379 = vadd.f32 %v5520, %v7000
  %v7380 = vadd.f32 %v5521, %v7039
  %v7381 = vadd.f32 %v5522, %v7041
  %v7382 = vadd.f32 %v5523, %v7080
  %v7383 = vadd.f32 %v5524, %v7082
  %v7384 = vadd.f32 %v5525, %v7121
  %v7385 = vadd.f32 %v5526, %v7123
  %v7386 = vadd.f32 %v5527, %v7162
  %v7387 = vadd.f32 %v5528, %v7164
  %v7388 = vadd.f32 %v5529, %v7203
  %v7389 = vadd.f32 %v5530, %v7205
  %v7390 = vadd.f32 %v5531, %v7244
  %v7391 = vadd.f32 %v5532, %v7246
  %v7392 = vadd.f32 %v5533, %v7285
  %v7393 = vadd.f32 %v5534, %v7287
  %v7394 = vadd.f32 %v5535, %v7326
  %v7395 = vadd.f32 %v5536, %v7328
  %vm7396 = vcmask 1043456
  %v7397 = vsel %vm7396, %v7332, 0.0
  %v7398 = vsel %vm7396, %v7333, 0.0
  %v7399 = vadd.f32 %v7397, %v7398
  %v7400 = vsel %vm7396, %v7334, 0.0
  %v7401 = vadd.f32 %v7399, %v7400
  %v7402 = vsel %vm7396, %v7335, 0.0
  %v7403 = vadd.f32 %v7401, %v7402
  %v7404 = vsel %vm7396, %v7336, 0.0
  %v7405 = vadd.f32 %v7403, %v7404
  %v7406 = vsel %vm7396, %v7337, 0.0
  %v7407 = vadd.f32 %v7405, %v7406
  %v7408 = vsel %vm7396, %v7338, 0.0
  %v7409 = vadd.f32 %v7407, %v7408
  %v7410 = vsel %vm7396, %v7339, 0.0
  %v7411 = vadd.f32 %v7409, %v7410
  %v7412 = vsel %vm7396, %v7340, 0.0
  %v7413 = vadd.f32 %v7411, %v7412
  %v7414 = vsel %vm7396, %v7341, 0.0
  %v7415 = vadd.f32 %v7413, %v7414
  %v7416 = vsel %vm7396, %v7342, 0.0
  %v7417 = vadd.f32 %v7415, %v7416
  %v7418 = vsel %vm7396, %v7343, 0.0
  %v7419 = vadd.f32 %v7417, %v7418
  %v7420 = vsel %vm7396, %v7344, 0.0
  %v7421 = vadd.f32 %v7419, %v7420
  %v7422 = vsel %vm7396, %v7345, 0.0
  %v7423 = vadd.f32 %v7421, %v7422
  %v7424 = vsel %vm7396, %v7346, 0.0
  %v7425 = vadd.f32 %v7423, %v7424
  %v7426 = vsel %vm7396, %v7347, 0.0
  %v7427 = vadd.f32 %v7425, %v7426
  %v7428 = vsel %vm7396, %v7348, 0.0
  %v7429 = vadd.f32 %v7427, %v7428
  %v7430 = vsel %vm7396, %v7349, 0.0
  %v7431 = vadd.f32 %v7429, %v7430
  %v7432 = vsel %vm7396, %v7350, 0.0
  %v7433 = vadd.f32 %v7431, %v7432
  %v7434 = vsel %vm7396, %v7351, 0.0
  %v7435 = vadd.f32 %v7433, %v7434
  %v7436 = vsel %vm7396, %v7352, 0.0
  %v7437 = vadd.f32 %v7435, %v7436
  %v7438 = vsel %vm7396, %v7353, 0.0
  %v7439 = vadd.f32 %v7437, %v7438
  %v7440 = vsel %vm7396, %v7354, 0.0
  %v7441 = vadd.f32 %v7439, %v7440
  %v7442 = vsel %vm7396, %v7355, 0.0
  %v7443 = vadd.f32 %v7441, %v7442
  %v7444 = vsel %vm7396, %v7356, 0.0
  %v7445 = vadd.f32 %v7443, %v7444
  %v7446 = vsel %vm7396, %v7357, 0.0
  %v7447 = vadd.f32 %v7445, %v7446
  %v7448 = vsel %vm7396, %v7358, 0.0
  %v7449 = vadd.f32 %v7447, %v7448
  %v7450 = vsel %vm7396, %v7359, 0.0
  %v7451 = vadd.f32 %v7449, %v7450
  %v7452 = vsel %vm7396, %v7360, 0.0
  %v7453 = vadd.f32 %v7451, %v7452
  %v7454 = vsel %vm7396, %v7361, 0.0
  %v7455 = vadd.f32 %v7453, %v7454
  %v7456 = vsel %vm7396, %v7362, 0.0
  %v7457 = vadd.f32 %v7455, %v7456
  %v7458 = vsel %vm7396, %v7363, 0.0
  %v7459 = vadd.f32 %v7457, %v7458
  %v7460 = vsel %vm7396, %v7364, 0.0
  %v7461 = vadd.f32 %v7459, %v7460
  %v7462 = vsel %vm7396, %v7365, 0.0
  %v7463 = vadd.f32 %v7461, %v7462
  %v7464 = vsel %vm7396, %v7366, 0.0
  %v7465 = vadd.f32 %v7463, %v7464
  %v7466 = vsel %vm7396, %v7367, 0.0
  %v7467 = vadd.f32 %v7465, %v7466
  %v7468 = vsel %vm7396, %v7368, 0.0
  %v7469 = vadd.f32 %v7467, %v7468
  %v7470 = vsel %vm7396, %v7369, 0.0
  %v7471 = vadd.f32 %v7469, %v7470
  %v7472 = vsel %vm7396, %v7370, 0.0
  %v7473 = vadd.f32 %v7471, %v7472
  %v7474 = vsel %vm7396, %v7371, 0.0
  %v7475 = vadd.f32 %v7473, %v7474
  %v7476 = vsel %vm7396, %v7372, 0.0
  %v7477 = vadd.f32 %v7475, %v7476
  %v7478 = vsel %vm7396, %v7373, 0.0
  %v7479 = vadd.f32 %v7477, %v7478
  %v7480 = vsel %vm7396, %v7374, 0.0
  %v7481 = vadd.f32 %v7479, %v7480
  %v7482 = vsel %vm7396, %v7375, 0.0
  %v7483 = vadd.f32 %v7481, %v7482
  %v7484 = vsel %vm7396, %v7376, 0.0
  %v7485 = vadd.f32 %v7483, %v7484
  %v7486 = vsel %vm7396, %v7377, 0.0
  %v7487 = vadd.f32 %v7485, %v7486
  %v7488 = vsel %vm7396, %v7378, 0.0
  %v7489 = vadd.f32 %v7487, %v7488
  %v7490 = vsel %vm7396, %v7379, 0.0
  %v7491 = vadd.f32 %v7489, %v7490
  %v7492 = vsel %vm7396, %v7380, 0.0
  %v7493 = vadd.f32 %v7491, %v7492
  %v7494 = vsel %vm7396, %v7381, 0.0
  %v7495 = vadd.f32 %v7493, %v7494
  %v7496 = vsel %vm7396, %v7382, 0.0
  %v7497 = vadd.f32 %v7495, %v7496
  %v7498 = vsel %vm7396, %v7383, 0.0
  %v7499 = vadd.f32 %v7497, %v7498
  %v7500 = vsel %vm7396, %v7384, 0.0
  %v7501 = vadd.f32 %v7499, %v7500
  %v7502 = vsel %vm7396, %v7385, 0.0
  %v7503 = vadd.f32 %v7501, %v7502
  %v7504 = vsel %vm7396, %v7386, 0.0
  %v7505 = vadd.f32 %v7503, %v7504
  %v7506 = vsel %vm7396, %v7387, 0.0
  %v7507 = vadd.f32 %v7505, %v7506
  %v7508 = vsel %vm7396, %v7388, 0.0
  %v7509 = vadd.f32 %v7507, %v7508
  %v7510 = vsel %vm7396, %v7389, 0.0
  %v7511 = vadd.f32 %v7509, %v7510
  %v7512 = vsel %vm7396, %v7390, 0.0
  %v7513 = vadd.f32 %v7511, %v7512
  %v7514 = vsel %vm7396, %v7391, 0.0
  %v7515 = vadd.f32 %v7513, %v7514
  %v7516 = vsel %vm7396, %v7392, 0.0
  %v7517 = vadd.f32 %v7515, %v7516
  %v7518 = vsel %vm7396, %v7393, 0.0
  %v7519 = vadd.f32 %v7517, %v7518
  %v7520 = vsel %vm7396, %v7394, 0.0
  %v7521 = vadd.f32 %v7519, %v7520
  %v7522 = vsel %vm7396, %v7395, 0.0
  %v7523 = vadd.f32 %v7521, %v7522
  %7524 = vadd.xlane.f32.xlu0 %v7523
  %v7525 = vpop.xlane.xlu0 %7524
  %v7526 = vmul.f32 %v7332, %v7332
  %v7527 = vmul.f32 %v7333, %v7333
  %v7528 = vmul.f32 %v7334, %v7334
  %v7529 = vmul.f32 %v7335, %v7335
  %v7530 = vmul.f32 %v7336, %v7336
  %v7531 = vmul.f32 %v7337, %v7337
  %v7532 = vmul.f32 %v7338, %v7338
  %v7533 = vmul.f32 %v7339, %v7339
  %v7534 = vmul.f32 %v7340, %v7340
  %v7535 = vmul.f32 %v7341, %v7341
  %v7536 = vmul.f32 %v7342, %v7342
  %v7537 = vmul.f32 %v7343, %v7343
  %v7538 = vmul.f32 %v7344, %v7344
  %v7539 = vmul.f32 %v7345, %v7345
  %v7540 = vmul.f32 %v7346, %v7346
  %v7541 = vmul.f32 %v7347, %v7347
  %v7542 = vmul.f32 %v7348, %v7348
  %v7543 = vmul.f32 %v7349, %v7349
  %v7544 = vmul.f32 %v7350, %v7350
  %v7545 = vmul.f32 %v7351, %v7351
  %v7546 = vmul.f32 %v7352, %v7352
  %v7547 = vmul.f32 %v7353, %v7353
  %v7548 = vmul.f32 %v7354, %v7354
  %v7549 = vmul.f32 %v7355, %v7355
  %v7550 = vmul.f32 %v7356, %v7356
  %v7551 = vmul.f32 %v7357, %v7357
  %v7552 = vmul.f32 %v7358, %v7358
  %v7553 = vmul.f32 %v7359, %v7359
  %v7554 = vmul.f32 %v7360, %v7360
  %v7555 = vmul.f32 %v7361, %v7361
  %v7556 = vmul.f32 %v7362, %v7362
  %v7557 = vmul.f32 %v7363, %v7363
  %v7558 = vmul.f32 %v7364, %v7364
  %v7559 = vmul.f32 %v7365, %v7365
  %v7560 = vmul.f32 %v7366, %v7366
  %v7561 = vmul.f32 %v7367, %v7367
  %v7562 = vmul.f32 %v7368, %v7368
  %v7563 = vmul.f32 %v7369, %v7369
  %v7564 = vmul.f32 %v7370, %v7370
  %v7565 = vmul.f32 %v7371, %v7371
  %v7566 = vmul.f32 %v7372, %v7372
  %v7567 = vmul.f32 %v7373, %v7373
  %v7568 = vmul.f32 %v7374, %v7374
  %v7569 = vmul.f32 %v7375, %v7375
  %v7570 = vmul.f32 %v7376, %v7376
  %v7571 = vmul.f32 %v7377, %v7377
  %v7572 = vmul.f32 %v7378, %v7378
  %v7573 = vmul.f32 %v7379, %v7379
  %v7574 = vmul.f32 %v7380, %v7380
  %v7575 = vmul.f32 %v7381, %v7381
  %v7576 = vmul.f32 %v7382, %v7382
  %v7577 = vmul.f32 %v7383, %v7383
  %v7578 = vmul.f32 %v7384, %v7384
  %v7579 = vmul.f32 %v7385, %v7385
  %v7580 = vmul.f32 %v7386, %v7386
  %v7581 = vmul.f32 %v7387, %v7387
  %v7582 = vmul.f32 %v7388, %v7388
  %v7583 = vmul.f32 %v7389, %v7389
  %v7584 = vmul.f32 %v7390, %v7390
  %v7585 = vmul.f32 %v7391, %v7391
  %v7586 = vmul.f32 %v7392, %v7392
  %v7587 = vmul.f32 %v7393, %v7393
  %v7588 = vmul.f32 %v7394, %v7394
  %v7589 = vmul.f32 %v7395, %v7395
  %v7590 = vsel %vm7396, %v7526, 0.0
  %v7591 = vsel %vm7396, %v7527, 0.0
  %v7592 = vadd.f32 %v7590, %v7591
  %v7593 = vsel %vm7396, %v7528, 0.0
  %v7594 = vadd.f32 %v7592, %v7593
  %v7595 = vsel %vm7396, %v7529, 0.0
  %v7596 = vadd.f32 %v7594, %v7595
  %v7597 = vsel %vm7396, %v7530, 0.0
  %v7598 = vadd.f32 %v7596, %v7597
  %v7599 = vsel %vm7396, %v7531, 0.0
  %v7600 = vadd.f32 %v7598, %v7599
  %v7601 = vsel %vm7396, %v7532, 0.0
  %v7602 = vadd.f32 %v7600, %v7601
  %v7603 = vsel %vm7396, %v7533, 0.0
  %v7604 = vadd.f32 %v7602, %v7603
  %v7605 = vsel %vm7396, %v7534, 0.0
  %v7606 = vadd.f32 %v7604, %v7605
  %v7607 = vsel %vm7396, %v7535, 0.0
  %v7608 = vadd.f32 %v7606, %v7607
  %v7609 = vsel %vm7396, %v7536, 0.0
  %v7610 = vadd.f32 %v7608, %v7609
  %v7611 = vsel %vm7396, %v7537, 0.0
  %v7612 = vadd.f32 %v7610, %v7611
  %v7613 = vsel %vm7396, %v7538, 0.0
  %v7614 = vadd.f32 %v7612, %v7613
  %v7615 = vsel %vm7396, %v7539, 0.0
  %v7616 = vadd.f32 %v7614, %v7615
  %v7617 = vsel %vm7396, %v7540, 0.0
  %v7618 = vadd.f32 %v7616, %v7617
  %v7619 = vsel %vm7396, %v7541, 0.0
  %v7620 = vadd.f32 %v7618, %v7619
  %v7621 = vsel %vm7396, %v7542, 0.0
  %v7622 = vadd.f32 %v7620, %v7621
  %v7623 = vsel %vm7396, %v7543, 0.0
  %v7624 = vadd.f32 %v7622, %v7623
  %v7625 = vsel %vm7396, %v7544, 0.0
  %v7626 = vadd.f32 %v7624, %v7625
  %v7627 = vsel %vm7396, %v7545, 0.0
  %v7628 = vadd.f32 %v7626, %v7627
  %v7629 = vsel %vm7396, %v7546, 0.0
  %v7630 = vadd.f32 %v7628, %v7629
  %v7631 = vsel %vm7396, %v7547, 0.0
  %v7632 = vadd.f32 %v7630, %v7631
  %v7633 = vsel %vm7396, %v7548, 0.0
  %v7634 = vadd.f32 %v7632, %v7633
  %v7635 = vsel %vm7396, %v7549, 0.0
  %v7636 = vadd.f32 %v7634, %v7635
  %v7637 = vsel %vm7396, %v7550, 0.0
  %v7638 = vadd.f32 %v7636, %v7637
  %v7639 = vsel %vm7396, %v7551, 0.0
  %v7640 = vadd.f32 %v7638, %v7639
  %v7641 = vsel %vm7396, %v7552, 0.0
  %v7642 = vadd.f32 %v7640, %v7641
  %v7643 = vsel %vm7396, %v7553, 0.0
  %v7644 = vadd.f32 %v7642, %v7643
  %v7645 = vsel %vm7396, %v7554, 0.0
  %v7646 = vadd.f32 %v7644, %v7645
  %v7647 = vsel %vm7396, %v7555, 0.0
  %v7648 = vadd.f32 %v7646, %v7647
  %v7649 = vsel %vm7396, %v7556, 0.0
  %v7650 = vadd.f32 %v7648, %v7649
  %v7651 = vsel %vm7396, %v7557, 0.0
  %v7652 = vadd.f32 %v7650, %v7651
  %v7653 = vsel %vm7396, %v7558, 0.0
  %v7654 = vadd.f32 %v7652, %v7653
  %v7655 = vsel %vm7396, %v7559, 0.0
  %v7656 = vadd.f32 %v7654, %v7655
  %v7657 = vsel %vm7396, %v7560, 0.0
  %v7658 = vadd.f32 %v7656, %v7657
  %v7659 = vsel %vm7396, %v7561, 0.0
  %v7660 = vadd.f32 %v7658, %v7659
  %v7661 = vsel %vm7396, %v7562, 0.0
  %v7662 = vadd.f32 %v7660, %v7661
  %v7663 = vsel %vm7396, %v7563, 0.0
  %v7664 = vadd.f32 %v7662, %v7663
  %v7665 = vsel %vm7396, %v7564, 0.0
  %v7666 = vadd.f32 %v7664, %v7665
  %v7667 = vsel %vm7396, %v7565, 0.0
  %v7668 = vadd.f32 %v7666, %v7667
  %v7669 = vsel %vm7396, %v7566, 0.0
  %v7670 = vadd.f32 %v7668, %v7669
  %v7671 = vsel %vm7396, %v7567, 0.0
  %v7672 = vadd.f32 %v7670, %v7671
  %v7673 = vsel %vm7396, %v7568, 0.0
  %v7674 = vadd.f32 %v7672, %v7673
  %v7675 = vsel %vm7396, %v7569, 0.0
  %v7676 = vadd.f32 %v7674, %v7675
  %v7677 = vsel %vm7396, %v7570, 0.0
  %v7678 = vadd.f32 %v7676, %v7677
  %v7679 = vsel %vm7396, %v7571, 0.0
  %v7680 = vadd.f32 %v7678, %v7679
  %v7681 = vsel %vm7396, %v7572, 0.0
  %v7682 = vadd.f32 %v7680, %v7681
  %v7683 = vsel %vm7396, %v7573, 0.0
  %v7684 = vadd.f32 %v7682, %v7683
  %v7685 = vsel %vm7396, %v7574, 0.0
  %v7686 = vadd.f32 %v7684, %v7685
  %v7687 = vsel %vm7396, %v7575, 0.0
  %v7688 = vadd.f32 %v7686, %v7687
  %v7689 = vsel %vm7396, %v7576, 0.0
  %v7690 = vadd.f32 %v7688, %v7689
  %v7691 = vsel %vm7396, %v7577, 0.0
  %v7692 = vadd.f32 %v7690, %v7691
  %v7693 = vsel %vm7396, %v7578, 0.0
  %v7694 = vadd.f32 %v7692, %v7693
  %v7695 = vsel %vm7396, %v7579, 0.0
  %v7696 = vadd.f32 %v7694, %v7695
  %v7697 = vsel %vm7396, %v7580, 0.0
  %v7698 = vadd.f32 %v7696, %v7697
  %v7699 = vsel %vm7396, %v7581, 0.0
  %v7700 = vadd.f32 %v7698, %v7699
  %v7701 = vsel %vm7396, %v7582, 0.0
  %v7702 = vadd.f32 %v7700, %v7701
  %v7703 = vsel %vm7396, %v7583, 0.0
  %v7704 = vadd.f32 %v7702, %v7703
  %v7705 = vsel %vm7396, %v7584, 0.0
  %v7706 = vadd.f32 %v7704, %v7705
  %v7707 = vsel %vm7396, %v7585, 0.0
  %v7708 = vadd.f32 %v7706, %v7707
  %v7709 = vsel %vm7396, %v7586, 0.0
  %v7710 = vadd.f32 %v7708, %v7709
  %v7711 = vsel %vm7396, %v7587, 0.0
  %v7712 = vadd.f32 %v7710, %v7711
  %v7713 = vsel %vm7396, %v7588, 0.0
  %v7714 = vadd.f32 %v7712, %v7713
  %v7715 = vsel %vm7396, %v7589, 0.0
  %v7716 = vadd.f32 %v7714, %v7715
  %7717 = vadd.xlane.f32.xlu0 %v7716
  %v7718 = vpop.xlane.xlu0 %7717
  %v7719 = vmul.f32 %v7525, 0.00012207031
  %v7720 = vmul.f32 %v7718, 0.00012207031
  %v7721 = vmul.f32 %v7719, %v7719
  %v7722 = vsub.f32 %v7720, %v7721
  %v7723 = vmax.f32 %v7722, 0.0
  %v7724 = vld [vmem:[%s2] sm:$0xff]
  %v7725 = vadd.f32 %v7723, 1e-05
  %v7726 = vrsqrt.pop %v7725
  %v7727 = vmul.f32 %v7724, %v7726
  %v7728 = vmul.f32 %v7719, %v7727
  %7730 = vrot.lane.b32.xlu0 %v7728, 1
  %v7731 = vpop.permute.xlu0 %7730
  %v7733 = vsub.f32 %v7724, %v7731
  %7735 = vset.pattern.permute.xlu0 0
  %7736 = vperm.xlu0 %7735, %v7727
  %v7737 = vpop.permute.xlu0 %7736
  %v7739 = vmul.f32 %v7332, %v7737
  %v7740 = vmul.f32 %v7333, %v7737
  %v7741 = vmul.f32 %v7334, %v7737
  %v7742 = vmul.f32 %v7335, %v7737
  %v7743 = vmul.f32 %v7336, %v7737
  %v7744 = vmul.f32 %v7337, %v7737
  %v7745 = vmul.f32 %v7338, %v7737
  %v7746 = vmul.f32 %v7339, %v7737
  %v7747 = vmul.f32 %v7340, %v7737
  %v7748 = vmul.f32 %v7341, %v7737
  %v7749 = vmul.f32 %v7342, %v7737
  %v7750 = vmul.f32 %v7343, %v7737
  %v7751 = vmul.f32 %v7344, %v7737
  %v7752 = vmul.f32 %v7345, %v7737
  %v7753 = vmul.f32 %v7346, %v7737
  %v7754 = vmul.f32 %v7347, %v7737
  %v7755 = vmul.f32 %v7348, %v7737
  %v7756 = vmul.f32 %v7349, %v7737
  %v7757 = vmul.f32 %v7350, %v7737
  %v7758 = vmul.f32 %v7351, %v7737
  %v7759 = vmul.f32 %v7352, %v7737
  %v7760 = vmul.f32 %v7353, %v7737
  %v7761 = vmul.f32 %v7354, %v7737
  %v7762 = vmul.f32 %v7355, %v7737
  %v7763 = vmul.f32 %v7356, %v7737
  %v7764 = vmul.f32 %v7357, %v7737
  %v7765 = vmul.f32 %v7358, %v7737
  %v7766 = vmul.f32 %v7359, %v7737
  %v7767 = vmul.f32 %v7360, %v7737
  %v7768 = vmul.f32 %v7361, %v7737
  %v7769 = vmul.f32 %v7362, %v7737
  %v7770 = vmul.f32 %v7363, %v7737
  %v7771 = vmul.f32 %v7364, %v7737
  %v7772 = vmul.f32 %v7365, %v7737
  %v7773 = vmul.f32 %v7366, %v7737
  %v7774 = vmul.f32 %v7367, %v7737
  %v7775 = vmul.f32 %v7368, %v7737
  %v7776 = vmul.f32 %v7369, %v7737
  %v7777 = vmul.f32 %v7370, %v7737
  %v7778 = vmul.f32 %v7371, %v7737
  %v7779 = vmul.f32 %v7372, %v7737
  %v7780 = vmul.f32 %v7373, %v7737
  %v7781 = vmul.f32 %v7374, %v7737
  %v7782 = vmul.f32 %v7375, %v7737
  %v7783 = vmul.f32 %v7376, %v7737
  %v7784 = vmul.f32 %v7377, %v7737
  %v7785 = vmul.f32 %v7378, %v7737
  %v7786 = vmul.f32 %v7379, %v7737
  %v7787 = vmul.f32 %v7380, %v7737
  %v7788 = vmul.f32 %v7381, %v7737
  %v7789 = vmul.f32 %v7382, %v7737
  %v7790 = vmul.f32 %v7383, %v7737
  %v7791 = vmul.f32 %v7384, %v7737
  %v7792 = vmul.f32 %v7385, %v7737
  %v7793 = vmul.f32 %v7386, %v7737
  %v7794 = vmul.f32 %v7387, %v7737
  %v7795 = vmul.f32 %v7388, %v7737
  %v7796 = vmul.f32 %v7389, %v7737
  %v7797 = vmul.f32 %v7390, %v7737
  %v7798 = vmul.f32 %v7391, %v7737
  %v7799 = vmul.f32 %v7392, %v7737
  %v7800 = vmul.f32 %v7393, %v7737
  %v7801 = vmul.f32 %v7394, %v7737
  %v7802 = vmul.f32 %v7395, %v7737
  %7804 = vset.pattern.permute.xlu0 1
  %7805 = vperm.xlu0 %7804, %v7733
  %v7806 = vpop.permute.xlu0 %7805
  %v7808 = vadd.f32 %v7739, %v7806
  %v7809 = vadd.f32 %v7740, %v7806
  %v7810 = vadd.f32 %v7741, %v7806
  %v7811 = vadd.f32 %v7742, %v7806
  %v7812 = vadd.f32 %v7743, %v7806
  %v7813 = vadd.f32 %v7744, %v7806
  %v7814 = vadd.f32 %v7745, %v7806
  %v7815 = vadd.f32 %v7746, %v7806
  %v7816 = vadd.f32 %v7747, %v7806
  %v7817 = vadd.f32 %v7748, %v7806
  %v7818 = vadd.f32 %v7749, %v7806
  %v7819 = vadd.f32 %v7750, %v7806
  %v7820 = vadd.f32 %v7751, %v7806
  %v7821 = vadd.f32 %v7752, %v7806
  %v7822 = vadd.f32 %v7753, %v7806
  %v7823 = vadd.f32 %v7754, %v7806
  %v7824 = vadd.f32 %v7755, %v7806
  %v7825 = vadd.f32 %v7756, %v7806
  %v7826 = vadd.f32 %v7757, %v7806
  %v7827 = vadd.f32 %v7758, %v7806
  %v7828 = vadd.f32 %v7759, %v7806
  %v7829 = vadd.f32 %v7760, %v7806
  %v7830 = vadd.f32 %v7761, %v7806
  %v7831 = vadd.f32 %v7762, %v7806
  %v7832 = vadd.f32 %v7763, %v7806
  %v7833 = vadd.f32 %v7764, %v7806
  %v7834 = vadd.f32 %v7765, %v7806
  %v7835 = vadd.f32 %v7766, %v7806
  %v7836 = vadd.f32 %v7767, %v7806
  %v7837 = vadd.f32 %v7768, %v7806
  %v7838 = vadd.f32 %v7769, %v7806
  %v7839 = vadd.f32 %v7770, %v7806
  %v7840 = vadd.f32 %v7771, %v7806
  %v7841 = vadd.f32 %v7772, %v7806
  %v7842 = vadd.f32 %v7773, %v7806
  %v7843 = vadd.f32 %v7774, %v7806
  %v7844 = vadd.f32 %v7775, %v7806
  %v7845 = vadd.f32 %v7776, %v7806
  %v7846 = vadd.f32 %v7777, %v7806
  %v7847 = vadd.f32 %v7778, %v7806
  %v7848 = vadd.f32 %v7779, %v7806
  %v7849 = vadd.f32 %v7780, %v7806
  %v7850 = vadd.f32 %v7781, %v7806
  %v7851 = vadd.f32 %v7782, %v7806
  %v7852 = vadd.f32 %v7783, %v7806
  %v7853 = vadd.f32 %v7784, %v7806
  %v7854 = vadd.f32 %v7785, %v7806
  %v7855 = vadd.f32 %v7786, %v7806
  %v7856 = vadd.f32 %v7787, %v7806
  %v7857 = vadd.f32 %v7788, %v7806
  %v7858 = vadd.f32 %v7789, %v7806
  %v7859 = vadd.f32 %v7790, %v7806
  %v7860 = vadd.f32 %v7791, %v7806
  %v7861 = vadd.f32 %v7792, %v7806
  %v7862 = vadd.f32 %v7793, %v7806
  %v7863 = vadd.f32 %v7794, %v7806
  %v7864 = vadd.f32 %v7795, %v7806
  %v7865 = vadd.f32 %v7796, %v7806
  %v7866 = vadd.f32 %v7797, %v7806
  %v7867 = vadd.f32 %v7798, %v7806
  %v7868 = vadd.f32 %v7799, %v7806
  %v7869 = vadd.f32 %v7800, %v7806
  %v7870 = vadd.f32 %v7801, %v7806
  %v7871 = vadd.f32 %v7802, %v7806
  %v7872 = vmax.f32 %v7808, 0.0
  %v7873 = vmax.f32 %v7809, 0.0
  %v7874 = vmax.f32 %v7810, 0.0
  %v7875 = vmax.f32 %v7811, 0.0
  %v7876 = vmax.f32 %v7812, 0.0
  %v7877 = vmax.f32 %v7813, 0.0
  %v7878 = vmax.f32 %v7814, 0.0
  %v7879 = vmax.f32 %v7815, 0.0
  %v7880 = vmax.f32 %v7816, 0.0
  %v7881 = vmax.f32 %v7817, 0.0
  %v7882 = vmax.f32 %v7818, 0.0
  %v7883 = vmax.f32 %v7819, 0.0
  %v7884 = vmax.f32 %v7820, 0.0
  %v7885 = vmax.f32 %v7821, 0.0
  %v7886 = vmax.f32 %v7822, 0.0
  %v7887 = vmax.f32 %v7823, 0.0
  %v7888 = vmax.f32 %v7824, 0.0
  %v7889 = vmax.f32 %v7825, 0.0
  %v7890 = vmax.f32 %v7826, 0.0
  %v7891 = vmax.f32 %v7827, 0.0
  %v7892 = vmax.f32 %v7828, 0.0
  %v7893 = vmax.f32 %v7829, 0.0
  %v7894 = vmax.f32 %v7830, 0.0
  %v7895 = vmax.f32 %v7831, 0.0
  %v7896 = vmax.f32 %v7832, 0.0
  %v7897 = vmax.f32 %v7833, 0.0
  %v7898 = vmax.f32 %v7834, 0.0
  %v7899 = vmax.f32 %v7835, 0.0
  %v7900 = vmax.f32 %v7836, 0.0
  %v7901 = vmax.f32 %v7837, 0.0
  %v7902 = vmax.f32 %v7838, 0.0
  %v7903 = vmax.f32 %v7839, 0.0
  %v7904 = vmax.f32 %v7840, 0.0
  %v7905 = vmax.f32 %v7841, 0.0
  %v7906 = vmax.f32 %v7842, 0.0
  %v7907 = vmax.f32 %v7843, 0.0
  %v7908 = vmax.f32 %v7844, 0.0
  %v7909 = vmax.f32 %v7845, 0.0
  %v7910 = vmax.f32 %v7846, 0.0
  %v7911 = vmax.f32 %v7847, 0.0
  %v7912 = vmax.f32 %v7848, 0.0
  %v7913 = vmax.f32 %v7849, 0.0
  %v7914 = vmax.f32 %v7850, 0.0
  %v7915 = vmax.f32 %v7851, 0.0
  %v7916 = vmax.f32 %v7852, 0.0
  %v7917 = vmax.f32 %v7853, 0.0
  %v7918 = vmax.f32 %v7854, 0.0
  %v7919 = vmax.f32 %v7855, 0.0
  %v7920 = vmax.f32 %v7856, 0.0
  %v7921 = vmax.f32 %v7857, 0.0
  %v7922 = vmax.f32 %v7858, 0.0
  %v7923 = vmax.f32 %v7859, 0.0
  %v7924 = vmax.f32 %v7860, 0.0
  %v7925 = vmax.f32 %v7861, 0.0
  %v7926 = vmax.f32 %v7862, 0.0
  %v7927 = vmax.f32 %v7863, 0.0
  %v7928 = vmax.f32 %v7864, 0.0
  %v7929 = vmax.f32 %v7865, 0.0
  %v7930 = vmax.f32 %v7866, 0.0
  %v7931 = vmax.f32 %v7867, 0.0
  %v7932 = vmax.f32 %v7868, 0.0
  %v7933 = vmax.f32 %v7869, 0.0
  %v7934 = vmax.f32 %v7870, 0.0
  %v7935 = vmax.f32 %v7871, 0.0
  %v7936 = vpack.c.bf16 %v7872, %v7872
  %v7937 = vpack.c.bf16 %v7873, %v7873
  %v7938 = vpack.c.bf16 %v7874, %v7874
  %v7939 = vpack.c.bf16 %v7875, %v7875
  %v7940 = vpack.c.bf16 %v7876, %v7876
  %v7941 = vpack.c.bf16 %v7877, %v7877
  %v7942 = vpack.c.bf16 %v7878, %v7878
  %v7943 = vpack.c.bf16 %v7879, %v7879
  %v7944 = vpack.c.bf16 %v7880, %v7880
  %v7945 = vpack.c.bf16 %v7881, %v7881
  %v7946 = vpack.c.bf16 %v7882, %v7882
  %v7947 = vpack.c.bf16 %v7883, %v7883
  %v7948 = vpack.c.bf16 %v7884, %v7884
  %v7949 = vpack.c.bf16 %v7885, %v7885
  %v7950 = vpack.c.bf16 %v7886, %v7886
  %v7951 = vpack.c.bf16 %v7887, %v7887
  %v7952 = vpack.c.bf16 %v7888, %v7888
  %v7953 = vpack.c.bf16 %v7889, %v7889
  %v7954 = vpack.c.bf16 %v7890, %v7890
  %v7955 = vpack.c.bf16 %v7891, %v7891
  %v7956 = vpack.c.bf16 %v7892, %v7892
  %v7957 = vpack.c.bf16 %v7893, %v7893
  %v7958 = vpack.c.bf16 %v7894, %v7894
  %v7959 = vpack.c.bf16 %v7895, %v7895
  %v7960 = vpack.c.bf16 %v7896, %v7896
  %v7961 = vpack.c.bf16 %v7897, %v7897
  %v7962 = vpack.c.bf16 %v7898, %v7898
  %v7963 = vpack.c.bf16 %v7899, %v7899
  %v7964 = vpack.c.bf16 %v7900, %v7900
  %v7965 = vpack.c.bf16 %v7901, %v7901
  %v7966 = vpack.c.bf16 %v7902, %v7902
  %v7967 = vpack.c.bf16 %v7903, %v7903
  %v7968 = vpack.c.bf16 %v7904, %v7904
  %v7969 = vpack.c.bf16 %v7905, %v7905
  %v7970 = vpack.c.bf16 %v7906, %v7906
  %v7971 = vpack.c.bf16 %v7907, %v7907
  %v7972 = vpack.c.bf16 %v7908, %v7908
  %v7973 = vpack.c.bf16 %v7909, %v7909
  %v7974 = vpack.c.bf16 %v7910, %v7910
  %v7975 = vpack.c.bf16 %v7911, %v7911
  %v7976 = vpack.c.bf16 %v7912, %v7912
  %v7977 = vpack.c.bf16 %v7913, %v7913
  %v7978 = vpack.c.bf16 %v7914, %v7914
  %v7979 = vpack.c.bf16 %v7915, %v7915
  %v7980 = vpack.c.bf16 %v7916, %v7916
  %v7981 = vpack.c.bf16 %v7917, %v7917
  %v7982 = vpack.c.bf16 %v7918, %v7918
  %v7983 = vpack.c.bf16 %v7919, %v7919
  %v7984 = vpack.c.bf16 %v7920, %v7920
  %v7985 = vpack.c.bf16 %v7921, %v7921
  %v7986 = vpack.c.bf16 %v7922, %v7922
  %v7987 = vpack.c.bf16 %v7923, %v7923
  %v7988 = vpack.c.bf16 %v7924, %v7924
  %v7989 = vpack.c.bf16 %v7925, %v7925
  %v7990 = vpack.c.bf16 %v7926, %v7926
  %v7991 = vpack.c.bf16 %v7927, %v7927
  %v7992 = vpack.c.bf16 %v7928, %v7928
  %v7993 = vpack.c.bf16 %v7929, %v7929
  %v7994 = vpack.c.bf16 %v7930, %v7930
  %v7995 = vpack.c.bf16 %v7931, %v7931
  %v7996 = vpack.c.bf16 %v7932, %v7932
  %v7997 = vpack.c.bf16 %v7933, %v7933
  %v7998 = vpack.c.bf16 %v7934, %v7934
  %v7999 = vpack.c.bf16 %v7935, %v7935
  %s8000 = scalar_lea.vmem %s1, 64
  %v8001 = vld [vmem:[%s8000] sm:$0xf]
  %v8002 = vld [vmem:[%s8000 + $0x10] sm:$0xf]
  %v8003 = vld [vmem:[%s8000 + $0x20] sm:$0xf]
  %v8004 = vld [vmem:[%s8000 + $0x30] sm:$0xf]
  %vm8005 = vcmask 31744
  %v8007 = vsel %vm8005, %v8002, 0
  %v8010 = vsel %vm376, %v7952, 0
  %v8013 = vsel %vm376, %v7953, 0
  %v8016 = vsel %vm376, %v7954, 0
  %v8019 = vsel %vm376, %v7955, 0
  %v8022 = vsel %vm376, %v7956, 0
  %v8025 = vsel %vm376, %v7957, 0
  %v8028 = vsel %vm376, %v7958, 0
  %v8031 = vsel %vm376, %v7959, 0
  %v8034 = vsel %vm376, %v7960, 0
  %v8037 = vsel %vm376, %v7961, 0
  %v8040 = vsel %vm376, %v7962, 0
  %v8043 = vsel %vm376, %v7963, 0
  %v8046 = vsel %vm376, %v7964, 0
  %v8049 = vsel %vm376, %v7965, 0
  %v8052 = vsel %vm376, %v7966, 0
  %v8055 = vsel %vm376, %v7967, 0
  %8057 = vmatprep.subr.bf16.mxu0 %v8013
  %8058 = vmatpush1.bf16.msra.mxu0 %v8010
  %8059 = vmatprep.subr.bf16.mxu0 0
  %8060 = vmatpush1.bf16.msra.mxu0 0
  %8061 = vmatprep.subr.bf16.mxu0 0
  %8062 = vmatpush1.bf16.msra.mxu0 0
  %8063 = vmatprep.subr.bf16.mxu0 0
  %8064 = vmatpush1.bf16.msra.mxu0 0
  %8065 = vmatprep.subr.bf16.mxu0 0
  %8066 = vmatpush1.bf16.msra.mxu0 0
  %8067 = vmatprep.subr.bf16.mxu0 0
  %8068 = vmatpush1.bf16.msra.mxu0 0
  %8069 = vmatprep.subr.bf16.mxu0 0
  %8070 = vmatpush1.bf16.msra.mxu0 0
  %8071 = vmatprep.subr.bf16.mxu0 0
  %8072 = vmatpush1.bf16.msra.mxu0 0
  %8073 = vmatprep.subr.bf16.mxu0 0
  %8074 = vmatpush1.bf16.msra.mxu0 0
  %8075 = vmatprep.subr.bf16.mxu0 0
  %8076 = vmatpush1.bf16.msra.mxu0 0
  %8077 = vmatprep.subr.bf16.mxu0 0
  %8078 = vmatpush1.bf16.msra.mxu0 0
  %8079 = vmatprep.subr.bf16.mxu0 0
  %8080 = vmatpush1.bf16.msra.mxu0 0
  %8081 = vmatprep.subr.bf16.mxu0 0
  %8082 = vmatpush1.bf16.msra.mxu0 0
  %8083 = vmatprep.subr.bf16.mxu0 0
  %8084 = vmatpush1.bf16.msra.mxu0 0
  %8085 = vmatprep.subr.bf16.mxu0 0
  %8086 = vmatpush1.bf16.msra.mxu0 0
  %8087 = vmatprep.subr.bf16.mxu0 0
  %8088 = vmatpush1.bf16.msra.mxu0 0
  %8089 = vmatprep.mubr.bf16.mxu0 0
  %8090 = vmatmul.mubr.bf16.gmra.mrb[0].mxu0 %v8007
  %v8091 = vpop.f32.mrb[0].mxu0
  %v8092 = vadd.f32 0.0, %v8091
  %v8093 = vpop.f32.mrb[0].mxu0
  %v8094 = vadd.f32 0.0, %v8093
  %v8095 = vpop.f32.mrb[0].mxu0
  %v8096 = vpop.f32.mrb[0].mxu0
  %8097 = vdwg.mxu0
  %8098 = vmatprep.subr.bf16.mxu0 %v8019
  %8099 = vmatpush1.bf16.msra.mxu0 %v8016
  %8100 = vmatprep.subr.bf16.mxu0 0
  %8101 = vmatpush1.bf16.msra.mxu0 0
  %8102 = vmatprep.subr.bf16.mxu0 0
  %8103 = vmatpush1.bf16.msra.mxu0 0
  %8104 = vmatprep.subr.bf16.mxu0 0
  %8105 = vmatpush1.bf16.msra.mxu0 0
  %8106 = vmatprep.subr.bf16.mxu0 0
  %8107 = vmatpush1.bf16.msra.mxu0 0
  %8108 = vmatprep.subr.bf16.mxu0 0
  %8109 = vmatpush1.bf16.msra.mxu0 0
  %8110 = vmatprep.subr.bf16.mxu0 0
  %8111 = vmatpush1.bf16.msra.mxu0 0
  %8112 = vmatprep.subr.bf16.mxu0 0
  %8113 = vmatpush1.bf16.msra.mxu0 0
  %8114 = vmatprep.subr.bf16.mxu0 0
  %8115 = vmatpush1.bf16.msra.mxu0 0
  %8116 = vmatprep.subr.bf16.mxu0 0
  %8117 = vmatpush1.bf16.msra.mxu0 0
  %8118 = vmatprep.subr.bf16.mxu0 0
  %8119 = vmatpush1.bf16.msra.mxu0 0
  %8120 = vmatprep.subr.bf16.mxu0 0
  %8121 = vmatpush1.bf16.msra.mxu0 0
  %8122 = vmatprep.subr.bf16.mxu0 0
  %8123 = vmatpush1.bf16.msra.mxu0 0
  %8124 = vmatprep.subr.bf16.mxu0 0
  %8125 = vmatpush1.bf16.msra.mxu0 0
  %8126 = vmatprep.subr.bf16.mxu0 0
  %8127 = vmatpush1.bf16.msra.mxu0 0
  %8128 = vmatprep.subr.bf16.mxu0 0
  %8129 = vmatpush1.bf16.msra.mxu0 0
  %8130 = vmatprep.mubr.bf16.mxu0 0
  %8131 = vmatmul.mubr.bf16.gmra.mrb[0].mxu0 %v8007
  %v8132 = vpop.f32.mrb[0].mxu0
  %v8133 = vadd.f32 0.0, %v8132
  %v8134 = vpop.f32.mrb[0].mxu0
  %v8135 = vadd.f32 0.0, %v8134
  %v8136 = vpop.f32.mrb[0].mxu0
  %v8137 = vpop.f32.mrb[0].mxu0
  %8138 = vdwg.mxu0
  %8139 = vmatprep.subr.bf16.mxu0 %v8025
  %8140 = vmatpush1.bf16.msra.mxu0 %v8022
  %8141 = vmatprep.subr.bf16.mxu0 0
  %8142 = vmatpush1.bf16.msra.mxu0 0
  %8143 = vmatprep.subr.bf16.mxu0 0
  %8144 = vmatpush1.bf16.msra.mxu0 0
  %8145 = vmatprep.subr.bf16.mxu0 0
  %8146 = vmatpush1.bf16.msra.mxu0 0
  %8147 = vmatprep.subr.bf16.mxu0 0
  %8148 = vmatpush1.bf16.msra.mxu0 0
  %8149 = vmatprep.subr.bf16.mxu0 0
  %8150 = vmatpush1.bf16.msra.mxu0 0
  %8151 = vmatprep.subr.bf16.mxu0 0
  %8152 = vmatpush1.bf16.msra.mxu0 0
  %8153 = vmatprep.subr.bf16.mxu0 0
  %8154 = vmatpush1.bf16.msra.mxu0 0
  %8155 = vmatprep.subr.bf16.mxu0 0
  %8156 = vmatpush1.bf16.msra.mxu0 0
  %8157 = vmatprep.subr.bf16.mxu0 0
  %8158 = vmatpush1.bf16.msra.mxu0 0
  %8159 = vmatprep.subr.bf16.mxu0 0
  %8160 = vmatpush1.bf16.msra.mxu0 0
  %8161 = vmatprep.subr.bf16.mxu0 0
  %8162 = vmatpush1.bf16.msra.mxu0 0
  %8163 = vmatprep.subr.bf16.mxu0 0
  %8164 = vmatpush1.bf16.msra.mxu0 0
  %8165 = vmatprep.subr.bf16.mxu0 0
  %8166 = vmatpush1.bf16.msra.mxu0 0
  %8167 = vmatprep.subr.bf16.mxu0 0
  %8168 = vmatpush1.bf16.msra.mxu0 0
  %8169 = vmatprep.subr.bf16.mxu0 0
  %8170 = vmatpush1.bf16.msra.mxu0 0
  %8171 = vmatprep.mubr.bf16.mxu0 0
  %8172 = vmatmul.mubr.bf16.gmra.mrb[0].mxu0 %v8007
  %v8173 = vpop.f32.mrb[0].mxu0
  %v8174 = vadd.f32 0.0, %v8173
  %v8175 = vpop.f32.mrb[0].mxu0
  %v8176 = vadd.f32 0.0, %v8175
  %v8177 = vpop.f32.mrb[0].mxu0
  %v8178 = vpop.f32.mrb[0].mxu0
  %8179 = vdwg.mxu0
  %8180 = vmatprep.subr.bf16.mxu0 %v8031
  %8181 = vmatpush1.bf16.msra.mxu0 %v8028
  %8182 = vmatprep.subr.bf16.mxu0 0
  %8183 = vmatpush1.bf16.msra.mxu0 0
  %8184 = vmatprep.subr.bf16.mxu0 0
  %8185 = vmatpush1.bf16.msra.mxu0 0
  %8186 = vmatprep.subr.bf16.mxu0 0
  %8187 = vmatpush1.bf16.msra.mxu0 0
  %8188 = vmatprep.subr.bf16.mxu0 0
  %8189 = vmatpush1.bf16.msra.mxu0 0
  %8190 = vmatprep.subr.bf16.mxu0 0
  %8191 = vmatpush1.bf16.msra.mxu0 0
  %8192 = vmatprep.subr.bf16.mxu0 0
  %8193 = vmatpush1.bf16.msra.mxu0 0
  %8194 = vmatprep.subr.bf16.mxu0 0
  %8195 = vmatpush1.bf16.msra.mxu0 0
  %8196 = vmatprep.subr.bf16.mxu0 0
  %8197 = vmatpush1.bf16.msra.mxu0 0
  %8198 = vmatprep.subr.bf16.mxu0 0
  %8199 = vmatpush1.bf16.msra.mxu0 0
  %8200 = vmatprep.subr.bf16.mxu0 0
  %8201 = vmatpush1.bf16.msra.mxu0 0
  %8202 = vmatprep.subr.bf16.mxu0 0
  %8203 = vmatpush1.bf16.msra.mxu0 0
  %8204 = vmatprep.subr.bf16.mxu0 0
  %8205 = vmatpush1.bf16.msra.mxu0 0
  %8206 = vmatprep.subr.bf16.mxu0 0
  %8207 = vmatpush1.bf16.msra.mxu0 0
  %8208 = vmatprep.subr.bf16.mxu0 0
  %8209 = vmatpush1.bf16.msra.mxu0 0
  %8210 = vmatprep.subr.bf16.mxu0 0
  %8211 = vmatpush1.bf16.msra.mxu0 0
  %8212 = vmatprep.mubr.bf16.mxu0 0
  %8213 = vmatmul.mubr.bf16.gmra.mrb[0].mxu0 %v8007
  %v8214 = vpop.f32.mrb[0].mxu0
  %v8215 = vadd.f32 0.0, %v8214
  %v8216 = vpop.f32.mrb[0].mxu0
  %v8217 = vadd.f32 0.0, %v8216
  %v8218 = vpop.f32.mrb[0].mxu0
  %v8219 = vpop.f32.mrb[0].mxu0
  %8220 = vdwg.mxu0
  %8221 = vmatprep.subr.bf16.mxu0 %v8037
  %8222 = vmatpush1.bf16.msra.mxu0 %v8034
  %8223 = vmatprep.subr.bf16.mxu0 0
  %8224 = vmatpush1.bf16.msra.mxu0 0
  %8225 = vmatprep.subr.bf16.mxu0 0
  %8226 = vmatpush1.bf16.msra.mxu0 0
  %8227 = vmatprep.subr.bf16.mxu0 0
  %8228 = vmatpush1.bf16.msra.mxu0 0
  %8229 = vmatprep.subr.bf16.mxu0 0
  %8230 = vmatpush1.bf16.msra.mxu0 0
  %8231 = vmatprep.subr.bf16.mxu0 0
  %8232 = vmatpush1.bf16.msra.mxu0 0
  %8233 = vmatprep.subr.bf16.mxu0 0
  %8234 = vmatpush1.bf16.msra.mxu0 0
  %8235 = vmatprep.subr.bf16.mxu0 0
  %8236 = vmatpush1.bf16.msra.mxu0 0
  %8237 = vmatprep.subr.bf16.mxu0 0
  %8238 = vmatpush1.bf16.msra.mxu0 0
  %8239 = vmatprep.subr.bf16.mxu0 0
  %8240 = vmatpush1.bf16.msra.mxu0 0
  %8241 = vmatprep.subr.bf16.mxu0 0
  %8242 = vmatpush1.bf16.msra.mxu0 0
  %8243 = vmatprep.subr.bf16.mxu0 0
  %8244 = vmatpush1.bf16.msra.mxu0 0
  %8245 = vmatprep.subr.bf16.mxu0 0
  %8246 = vmatpush1.bf16.msra.mxu0 0
  %8247 = vmatprep.subr.bf16.mxu0 0
  %8248 = vmatpush1.bf16.msra.mxu0 0
  %8249 = vmatprep.subr.bf16.mxu0 0
  %8250 = vmatpush1.bf16.msra.mxu0 0
  %8251 = vmatprep.subr.bf16.mxu0 0
  %8252 = vmatpush1.bf16.msra.mxu0 0
  %8253 = vmatprep.mubr.bf16.mxu0 0
  %8254 = vmatmul.mubr.bf16.gmra.mrb[0].mxu0 %v8007
  %v8255 = vpop.f32.mrb[0].mxu0
  %v8256 = vadd.f32 0.0, %v8255
  %v8257 = vpop.f32.mrb[0].mxu0
  %v8258 = vadd.f32 0.0, %v8257
  %v8259 = vpop.f32.mrb[0].mxu0
  %v8260 = vpop.f32.mrb[0].mxu0
  %8261 = vdwg.mxu0
  %8262 = vmatprep.subr.bf16.mxu0 %v8043
  %8263 = vmatpush1.bf16.msra.mxu0 %v8040
  %8264 = vmatprep.subr.bf16.mxu0 0
  %8265 = vmatpush1.bf16.msra.mxu0 0
  %8266 = vmatprep.subr.bf16.mxu0 0
  %8267 = vmatpush1.bf16.msra.mxu0 0
  %8268 = vmatprep.subr.bf16.mxu0 0
  %8269 = vmatpush1.bf16.msra.mxu0 0
  %8270 = vmatprep.subr.bf16.mxu0 0
  %8271 = vmatpush1.bf16.msra.mxu0 0
  %8272 = vmatprep.subr.bf16.mxu0 0
  %8273 = vmatpush1.bf16.msra.mxu0 0
  %8274 = vmatprep.subr.bf16.mxu0 0
  %8275 = vmatpush1.bf16.msra.mxu0 0
  %8276 = vmatprep.subr.bf16.mxu0 0
  %8277 = vmatpush1.bf16.msra.mxu0 0
  %8278 = vmatprep.subr.bf16.mxu0 0
  %8279 = vmatpush1.bf16.msra.mxu0 0
  %8280 = vmatprep.subr.bf16.mxu0 0
  %8281 = vmatpush1.bf16.msra.mxu0 0
  %8282 = vmatprep.subr.bf16.mxu0 0
  %8283 = vmatpush1.bf16.msra.mxu0 0
  %8284 = vmatprep.subr.bf16.mxu0 0
  %8285 = vmatpush1.bf16.msra.mxu0 0
  %8286 = vmatprep.subr.bf16.mxu0 0
  %8287 = vmatpush1.bf16.msra.mxu0 0
  %8288 = vmatprep.subr.bf16.mxu0 0
  %8289 = vmatpush1.bf16.msra.mxu0 0
  %8290 = vmatprep.subr.bf16.mxu0 0
  %8291 = vmatpush1.bf16.msra.mxu0 0
  %8292 = vmatprep.subr.bf16.mxu0 0
  %8293 = vmatpush1.bf16.msra.mxu0 0
  %8294 = vmatprep.mubr.bf16.mxu0 0
  %8295 = vmatmul.mubr.bf16.gmra.mrb[0].mxu0 %v8007
  %v8296 = vpop.f32.mrb[0].mxu0
  %v8297 = vadd.f32 0.0, %v8296
  %v8298 = vpop.f32.mrb[0].mxu0
  %v8299 = vadd.f32 0.0, %v8298
  %v8300 = vpop.f32.mrb[0].mxu0
  %v8301 = vpop.f32.mrb[0].mxu0
  %8302 = vdwg.mxu0
  %8303 = vmatprep.subr.bf16.mxu0 %v8049
  %8304 = vmatpush1.bf16.msra.mxu0 %v8046
  %8305 = vmatprep.subr.bf16.mxu0 0
  %8306 = vmatpush1.bf16.msra.mxu0 0
  %8307 = vmatprep.subr.bf16.mxu0 0
  %8308 = vmatpush1.bf16.msra.mxu0 0
  %8309 = vmatprep.subr.bf16.mxu0 0
  %8310 = vmatpush1.bf16.msra.mxu0 0
  %8311 = vmatprep.subr.bf16.mxu0 0
  %8312 = vmatpush1.bf16.msra.mxu0 0
  %8313 = vmatprep.subr.bf16.mxu0 0
  %8314 = vmatpush1.bf16.msra.mxu0 0
  %8315 = vmatprep.subr.bf16.mxu0 0
  %8316 = vmatpush1.bf16.msra.mxu0 0
  %8317 = vmatprep.subr.bf16.mxu0 0
  %8318 = vmatpush1.bf16.msra.mxu0 0
  %8319 = vmatprep.subr.bf16.mxu0 0
  %8320 = vmatpush1.bf16.msra.mxu0 0
  %8321 = vmatprep.subr.bf16.mxu0 0
  %8322 = vmatpush1.bf16.msra.mxu0 0
  %8323 = vmatprep.subr.bf16.mxu0 0
  %8324 = vmatpush1.bf16.msra.mxu0 0
  %8325 = vmatprep.subr.bf16.mxu0 0
  %8326 = vmatpush1.bf16.msra.mxu0 0
  %8327 = vmatprep.subr.bf16.mxu0 0
  %8328 = vmatpush1.bf16.msra.mxu0 0
  %8329 = vmatprep.subr.bf16.mxu0 0
  %8330 = vmatpush1.bf16.msra.mxu0 0
  %8331 = vmatprep.subr.bf16.mxu0 0
  %8332 = vmatpush1.bf16.msra.mxu0 0
  %8333 = vmatprep.subr.bf16.mxu0 0
  %8334 = vmatpush1.bf16.msra.mxu0 0
  %8335 = vmatprep.mubr.bf16.mxu0 0
  %8336 = vmatmul.mubr.bf16.gmra.mrb[0].mxu0 %v8007
  %v8337 = vpop.f32.mrb[0].mxu0
  %v8338 = vadd.f32 0.0, %v8337
  %v8339 = vpop.f32.mrb[0].mxu0
  %v8340 = vadd.f32 0.0, %v8339
  %v8341 = vpop.f32.mrb[0].mxu0
  %v8342 = vpop.f32.mrb[0].mxu0
  %8343 = vdwg.mxu0
  %8344 = vmatprep.subr.bf16.mxu0 %v8055
  %8345 = vmatpush1.bf16.msra.mxu0 %v8052
  %8346 = vmatprep.subr.bf16.mxu0 0
  %8347 = vmatpush1.bf16.msra.mxu0 0
  %8348 = vmatprep.subr.bf16.mxu0 0
  %8349 = vmatpush1.bf16.msra.mxu0 0
  %8350 = vmatprep.subr.bf16.mxu0 0
  %8351 = vmatpush1.bf16.msra.mxu0 0
  %8352 = vmatprep.subr.bf16.mxu0 0
  %8353 = vmatpush1.bf16.msra.mxu0 0
  %8354 = vmatprep.subr.bf16.mxu0 0
  %8355 = vmatpush1.bf16.msra.mxu0 0
  %8356 = vmatprep.subr.bf16.mxu0 0
  %8357 = vmatpush1.bf16.msra.mxu0 0
  %8358 = vmatprep.subr.bf16.mxu0 0
  %8359 = vmatpush1.bf16.msra.mxu0 0
  %8360 = vmatprep.subr.bf16.mxu0 0
  %8361 = vmatpush1.bf16.msra.mxu0 0
  %8362 = vmatprep.subr.bf16.mxu0 0
  %8363 = vmatpush1.bf16.msra.mxu0 0
  %8364 = vmatprep.subr.bf16.mxu0 0
  %8365 = vmatpush1.bf16.msra.mxu0 0
  %8366 = vmatprep.subr.bf16.mxu0 0
  %8367 = vmatpush1.bf16.msra.mxu0 0
  %8368 = vmatprep.subr.bf16.mxu0 0
  %8369 = vmatpush1.bf16.msra.mxu0 0
  %8370 = vmatprep.subr.bf16.mxu0 0
  %8371 = vmatpush1.bf16.msra.mxu0 0
  %8372 = vmatprep.subr.bf16.mxu0 0
  %8373 = vmatpush1.bf16.msra.mxu0 0
  %8374 = vmatprep.subr.bf16.mxu0 0
  %8375 = vmatpush1.bf16.msra.mxu0 0
  %8376 = vmatprep.mubr.bf16.mxu0 0
  %8377 = vmatmul.mubr.bf16.gmra.mrb[0].mxu0 %v8007
  %v8378 = vpop.f32.mrb[0].mxu0
  %v8379 = vadd.f32 0.0, %v8378
  %v8380 = vpop.f32.mrb[0].mxu0
  %v8381 = vadd.f32 0.0, %v8380
  %v8382 = vpop.f32.mrb[0].mxu0
  %v8383 = vpop.f32.mrb[0].mxu0
  %8384 = vdwg.mxu0
  %v8386 = vsel %vm8005, %v8001, 0
  %v8389 = vsel %vm376, %v7936, 0
  %v8392 = vsel %vm376, %v7937, 0
  %v8395 = vsel %vm376, %v7938, 0
  %v8398 = vsel %vm376, %v7939, 0
  %v8401 = vsel %vm376, %v7940, 0
  %v8404 = vsel %vm376, %v7941, 0
  %v8407 = vsel %vm376, %v7942, 0
  %v8410 = vsel %vm376, %v7943, 0
  %v8413 = vsel %vm376, %v7944, 0
  %v8416 = vsel %vm376, %v7945, 0
  %v8419 = vsel %vm376, %v7946, 0
  %v8422 = vsel %vm376, %v7947, 0
  %v8425 = vsel %vm376, %v7948, 0
  %v8428 = vsel %vm376, %v7949, 0
  %v8431 = vsel %vm376, %v7950, 0
  %v8434 = vsel %vm376, %v7951, 0
  %8436 = vmatprep.subr.bf16.mxu0 %v8392
  %8437 = vmatpush1.bf16.msra.mxu0 %v8389
  %8438 = vmatprep.subr.bf16.mxu0 0
  %8439 = vmatpush1.bf16.msra.mxu0 0
  %8440 = vmatprep.subr.bf16.mxu0 0
  %8441 = vmatpush1.bf16.msra.mxu0 0
  %8442 = vmatprep.subr.bf16.mxu0 0
  %8443 = vmatpush1.bf16.msra.mxu0 0
  %8444 = vmatprep.subr.bf16.mxu0 0
  %8445 = vmatpush1.bf16.msra.mxu0 0
  %8446 = vmatprep.subr.bf16.mxu0 0
  %8447 = vmatpush1.bf16.msra.mxu0 0
  %8448 = vmatprep.subr.bf16.mxu0 0
  %8449 = vmatpush1.bf16.msra.mxu0 0
  %8450 = vmatprep.subr.bf16.mxu0 0
  %8451 = vmatpush1.bf16.msra.mxu0 0
  %8452 = vmatprep.subr.bf16.mxu0 0
  %8453 = vmatpush1.bf16.msra.mxu0 0
  %8454 = vmatprep.subr.bf16.mxu0 0
  %8455 = vmatpush1.bf16.msra.mxu0 0
  %8456 = vmatprep.subr.bf16.mxu0 0
  %8457 = vmatpush1.bf16.msra.mxu0 0
  %8458 = vmatprep.subr.bf16.mxu0 0
  %8459 = vmatpush1.bf16.msra.mxu0 0
  %8460 = vmatprep.subr.bf16.mxu0 0
  %8461 = vmatpush1.bf16.msra.mxu0 0
  %8462 = vmatprep.subr.bf16.mxu0 0
  %8463 = vmatpush1.bf16.msra.mxu0 0
  %8464 = vmatprep.subr.bf16.mxu0 0
  %8465 = vmatpush1.bf16.msra.mxu0 0
  %8466 = vmatprep.subr.bf16.mxu0 0
  %8467 = vmatpush1.bf16.msra.mxu0 0
  %8468 = vmatprep.mubr.bf16.mxu0 0
  %8469 = vmatmul.mubr.bf16.gmra.mrb[0].mxu0 %v8386
  %v8470 = vpop.f32.mrb[0].mxu0
  %v8471 = vadd.f32 %v8092, %v8470
  %v8472 = vpop.f32.mrb[0].mxu0
  %v8473 = vadd.f32 %v8094, %v8472
  %v8474 = vpop.f32.mrb[0].mxu0
  %v8475 = vpop.f32.mrb[0].mxu0
  %8476 = vdwg.mxu0
  %8477 = vmatprep.subr.bf16.mxu0 %v8398
  %8478 = vmatpush1.bf16.msra.mxu0 %v8395
  %8479 = vmatprep.subr.bf16.mxu0 0
  %8480 = vmatpush1.bf16.msra.mxu0 0
  %8481 = vmatprep.subr.bf16.mxu0 0
  %8482 = vmatpush1.bf16.msra.mxu0 0
  %8483 = vmatprep.subr.bf16.mxu0 0
  %8484 = vmatpush1.bf16.msra.mxu0 0
  %8485 = vmatprep.subr.bf16.mxu0 0
  %8486 = vmatpush1.bf16.msra.mxu0 0
  %8487 = vmatprep.subr.bf16.mxu0 0
  %8488 = vmatpush1.bf16.msra.mxu0 0
  %8489 = vmatprep.subr.bf16.mxu0 0
  %8490 = vmatpush1.bf16.msra.mxu0 0
  %8491 = vmatprep.subr.bf16.mxu0 0
  %8492 = vmatpush1.bf16.msra.mxu0 0
  %8493 = vmatprep.subr.bf16.mxu0 0
  %8494 = vmatpush1.bf16.msra.mxu0 0
  %8495 = vmatprep.subr.bf16.mxu0 0
  %8496 = vmatpush1.bf16.msra.mxu0 0
  %8497 = vmatprep.subr.bf16.mxu0 0
  %8498 = vmatpush1.bf16.msra.mxu0 0
  %8499 = vmatprep.subr.bf16.mxu0 0
  %8500 = vmatpush1.bf16.msra.mxu0 0
  %8501 = vmatprep.subr.bf16.mxu0 0
  %8502 = vmatpush1.bf16.msra.mxu0 0
  %8503 = vmatprep.subr.bf16.mxu0 0
  %8504 = vmatpush1.bf16.msra.mxu0 0
  %8505 = vmatprep.subr.bf16.mxu0 0
  %8506 = vmatpush1.bf16.msra.mxu0 0
  %8507 = vmatprep.subr.bf16.mxu0 0
  %8508 = vmatpush1.bf16.msra.mxu0 0
  %8509 = vmatprep.mubr.bf16.mxu0 0
  %8510 = vmatmul.mubr.bf16.gmra.mrb[0].mxu0 %v8386
  %v8511 = vpop.f32.mrb[0].mxu0
  %v8512 = vadd.f32 %v8133, %v8511
  %v8513 = vpop.f32.mrb[0].mxu0
  %v8514 = vadd.f32 %v8135, %v8513
  %v8515 = vpop.f32.mrb[0].mxu0
  %v8516 = vpop.f32.mrb[0].mxu0
  %8517 = vdwg.mxu0
  %8518 = vmatprep.subr.bf16.mxu0 %v8404
  %8519 = vmatpush1.bf16.msra.mxu0 %v8401
  %8520 = vmatprep.subr.bf16.mxu0 0
  %8521 = vmatpush1.bf16.msra.mxu0 0
  %8522 = vmatprep.subr.bf16.mxu0 0
  %8523 = vmatpush1.bf16.msra.mxu0 0
  %8524 = vmatprep.subr.bf16.mxu0 0
  %8525 = vmatpush1.bf16.msra.mxu0 0
  %8526 = vmatprep.subr.bf16.mxu0 0
  %8527 = vmatpush1.bf16.msra.mxu0 0
  %8528 = vmatprep.subr.bf16.mxu0 0
  %8529 = vmatpush1.bf16.msra.mxu0 0
  %8530 = vmatprep.subr.bf16.mxu0 0
  %8531 = vmatpush1.bf16.msra.mxu0 0
  %8532 = vmatprep.subr.bf16.mxu0 0
  %8533 = vmatpush1.bf16.msra.mxu0 0
  %8534 = vmatprep.subr.bf16.mxu0 0
  %8535 = vmatpush1.bf16.msra.mxu0 0
  %8536 = vmatprep.subr.bf16.mxu0 0
  %8537 = vmatpush1.bf16.msra.mxu0 0
  %8538 = vmatprep.subr.bf16.mxu0 0
  %8539 = vmatpush1.bf16.msra.mxu0 0
  %8540 = vmatprep.subr.bf16.mxu0 0
  %8541 = vmatpush1.bf16.msra.mxu0 0
  %8542 = vmatprep.subr.bf16.mxu0 0
  %8543 = vmatpush1.bf16.msra.mxu0 0
  %8544 = vmatprep.subr.bf16.mxu0 0
  %8545 = vmatpush1.bf16.msra.mxu0 0
  %8546 = vmatprep.subr.bf16.mxu0 0
  %8547 = vmatpush1.bf16.msra.mxu0 0
  %8548 = vmatprep.subr.bf16.mxu0 0
  %8549 = vmatpush1.bf16.msra.mxu0 0
  %8550 = vmatprep.mubr.bf16.mxu0 0
  %8551 = vmatmul.mubr.bf16.gmra.mrb[0].mxu0 %v8386
  %v8552 = vpop.f32.mrb[0].mxu0
  %v8553 = vadd.f32 %v8174, %v8552
  %v8554 = vpop.f32.mrb[0].mxu0
  %v8555 = vadd.f32 %v8176, %v8554
  %v8556 = vpop.f32.mrb[0].mxu0
  %v8557 = vpop.f32.mrb[0].mxu0
  %8558 = vdwg.mxu0
  %8559 = vmatprep.subr.bf16.mxu0 %v8410
  %8560 = vmatpush1.bf16.msra.mxu0 %v8407
  %8561 = vmatprep.subr.bf16.mxu0 0
  %8562 = vmatpush1.bf16.msra.mxu0 0
  %8563 = vmatprep.subr.bf16.mxu0 0
  %8564 = vmatpush1.bf16.msra.mxu0 0
  %8565 = vmatprep.subr.bf16.mxu0 0
  %8566 = vmatpush1.bf16.msra.mxu0 0
  %8567 = vmatprep.subr.bf16.mxu0 0
  %8568 = vmatpush1.bf16.msra.mxu0 0
  %8569 = vmatprep.subr.bf16.mxu0 0
  %8570 = vmatpush1.bf16.msra.mxu0 0
  %8571 = vmatprep.subr.bf16.mxu0 0
  %8572 = vmatpush1.bf16.msra.mxu0 0
  %8573 = vmatprep.subr.bf16.mxu0 0
  %8574 = vmatpush1.bf16.msra.mxu0 0
  %8575 = vmatprep.subr.bf16.mxu0 0
  %8576 = vmatpush1.bf16.msra.mxu0 0
  %8577 = vmatprep.subr.bf16.mxu0 0
  %8578 = vmatpush1.bf16.msra.mxu0 0
  %8579 = vmatprep.subr.bf16.mxu0 0
  %8580 = vmatpush1.bf16.msra.mxu0 0
  %8581 = vmatprep.subr.bf16.mxu0 0
  %8582 = vmatpush1.bf16.msra.mxu0 0
  %8583 = vmatprep.subr.bf16.mxu0 0
  %8584 = vmatpush1.bf16.msra.mxu0 0
  %8585 = vmatprep.subr.bf16.mxu0 0
  %8586 = vmatpush1.bf16.msra.mxu0 0
  %8587 = vmatprep.subr.bf16.mxu0 0
  %8588 = vmatpush1.bf16.msra.mxu0 0
  %8589 = vmatprep.subr.bf16.mxu0 0
  %8590 = vmatpush1.bf16.msra.mxu0 0
  %8591 = vmatprep.mubr.bf16.mxu0 0
  %8592 = vmatmul.mubr.bf16.gmra.mrb[0].mxu0 %v8386
  %v8593 = vpop.f32.mrb[0].mxu0
  %v8594 = vadd.f32 %v8215, %v8593
  %v8595 = vpop.f32.mrb[0].mxu0
  %v8596 = vadd.f32 %v8217, %v8595
  %v8597 = vpop.f32.mrb[0].mxu0
  %v8598 = vpop.f32.mrb[0].mxu0
  %8599 = vdwg.mxu0
  %8600 = vmatprep.subr.bf16.mxu0 %v8416
  %8601 = vmatpush1.bf16.msra.mxu0 %v8413
  %8602 = vmatprep.subr.bf16.mxu0 0
  %8603 = vmatpush1.bf16.msra.mxu0 0
  %8604 = vmatprep.subr.bf16.mxu0 0
  %8605 = vmatpush1.bf16.msra.mxu0 0
  %8606 = vmatprep.subr.bf16.mxu0 0
  %8607 = vmatpush1.bf16.msra.mxu0 0
  %8608 = vmatprep.subr.bf16.mxu0 0
  %8609 = vmatpush1.bf16.msra.mxu0 0
  %8610 = vmatprep.subr.bf16.mxu0 0
  %8611 = vmatpush1.bf16.msra.mxu0 0
  %8612 = vmatprep.subr.bf16.mxu0 0
  %8613 = vmatpush1.bf16.msra.mxu0 0
  %8614 = vmatprep.subr.bf16.mxu0 0
  %8615 = vmatpush1.bf16.msra.mxu0 0
  %8616 = vmatprep.subr.bf16.mxu0 0
  %8617 = vmatpush1.bf16.msra.mxu0 0
  %8618 = vmatprep.subr.bf16.mxu0 0
  %8619 = vmatpush1.bf16.msra.mxu0 0
  %8620 = vmatprep.subr.bf16.mxu0 0
  %8621 = vmatpush1.bf16.msra.mxu0 0
  %8622 = vmatprep.subr.bf16.mxu0 0
  %8623 = vmatpush1.bf16.msra.mxu0 0
  %8624 = vmatprep.subr.bf16.mxu0 0
  %8625 = vmatpush1.bf16.msra.mxu0 0
  %8626 = vmatprep.subr.bf16.mxu0 0
  %8627 = vmatpush1.bf16.msra.mxu0 0
  %8628 = vmatprep.subr.bf16.mxu0 0
  %8629 = vmatpush1.bf16.msra.mxu0 0
  %8630 = vmatprep.subr.bf16.mxu0 0
  %8631 = vmatpush1.bf16.msra.mxu0 0
  %8632 = vmatprep.mubr.bf16.mxu0 0
  %8633 = vmatmul.mubr.bf16.gmra.mrb[0].mxu0 %v8386
  %v8634 = vpop.f32.mrb[0].mxu0
  %v8635 = vadd.f32 %v8256, %v8634
  %v8636 = vpop.f32.mrb[0].mxu0
  %v8637 = vadd.f32 %v8258, %v8636
  %v8638 = vpop.f32.mrb[0].mxu0
  %v8639 = vpop.f32.mrb[0].mxu0
  %8640 = vdwg.mxu0
  %8641 = vmatprep.subr.bf16.mxu0 %v8422
  %8642 = vmatpush1.bf16.msra.mxu0 %v8419
  %8643 = vmatprep.subr.bf16.mxu0 0
  %8644 = vmatpush1.bf16.msra.mxu0 0
  %8645 = vmatprep.subr.bf16.mxu0 0
  %8646 = vmatpush1.bf16.msra.mxu0 0
  %8647 = vmatprep.subr.bf16.mxu0 0
  %8648 = vmatpush1.bf16.msra.mxu0 0
  %8649 = vmatprep.subr.bf16.mxu0 0
  %8650 = vmatpush1.bf16.msra.mxu0 0
  %8651 = vmatprep.subr.bf16.mxu0 0
  %8652 = vmatpush1.bf16.msra.mxu0 0
  %8653 = vmatprep.subr.bf16.mxu0 0
  %8654 = vmatpush1.bf16.msra.mxu0 0
  %8655 = vmatprep.subr.bf16.mxu0 0
  %8656 = vmatpush1.bf16.msra.mxu0 0
  %8657 = vmatprep.subr.bf16.mxu0 0
  %8658 = vmatpush1.bf16.msra.mxu0 0
  %8659 = vmatprep.subr.bf16.mxu0 0
  %8660 = vmatpush1.bf16.msra.mxu0 0
  %8661 = vmatprep.subr.bf16.mxu0 0
  %8662 = vmatpush1.bf16.msra.mxu0 0
  %8663 = vmatprep.subr.bf16.mxu0 0
  %8664 = vmatpush1.bf16.msra.mxu0 0
  %8665 = vmatprep.subr.bf16.mxu0 0
  %8666 = vmatpush1.bf16.msra.mxu0 0
  %8667 = vmatprep.subr.bf16.mxu0 0
  %8668 = vmatpush1.bf16.msra.mxu0 0
  %8669 = vmatprep.subr.bf16.mxu0 0
  %8670 = vmatpush1.bf16.msra.mxu0 0
  %8671 = vmatprep.subr.bf16.mxu0 0
  %8672 = vmatpush1.bf16.msra.mxu0 0
  %8673 = vmatprep.mubr.bf16.mxu0 0
  %8674 = vmatmul.mubr.bf16.gmra.mrb[0].mxu0 %v8386
  %v8675 = vpop.f32.mrb[0].mxu0
  %v8676 = vadd.f32 %v8297, %v8675
  %v8677 = vpop.f32.mrb[0].mxu0
  %v8678 = vadd.f32 %v8299, %v8677
  %v8679 = vpop.f32.mrb[0].mxu0
  %v8680 = vpop.f32.mrb[0].mxu0
  %8681 = vdwg.mxu0
  %8682 = vmatprep.subr.bf16.mxu0 %v8428
  %8683 = vmatpush1.bf16.msra.mxu0 %v8425
  %8684 = vmatprep.subr.bf16.mxu0 0
  %8685 = vmatpush1.bf16.msra.mxu0 0
  %8686 = vmatprep.subr.bf16.mxu0 0
  %8687 = vmatpush1.bf16.msra.mxu0 0
  %8688 = vmatprep.subr.bf16.mxu0 0
  %8689 = vmatpush1.bf16.msra.mxu0 0
  %8690 = vmatprep.subr.bf16.mxu0 0
  %8691 = vmatpush1.bf16.msra.mxu0 0
  %8692 = vmatprep.subr.bf16.mxu0 0
  %8693 = vmatpush1.bf16.msra.mxu0 0
  %8694 = vmatprep.subr.bf16.mxu0 0
  %8695 = vmatpush1.bf16.msra.mxu0 0
  %8696 = vmatprep.subr.bf16.mxu0 0
  %8697 = vmatpush1.bf16.msra.mxu0 0
  %8698 = vmatprep.subr.bf16.mxu0 0
  %8699 = vmatpush1.bf16.msra.mxu0 0
  %8700 = vmatprep.subr.bf16.mxu0 0
  %8701 = vmatpush1.bf16.msra.mxu0 0
  %8702 = vmatprep.subr.bf16.mxu0 0
  %8703 = vmatpush1.bf16.msra.mxu0 0
  %8704 = vmatprep.subr.bf16.mxu0 0
  %8705 = vmatpush1.bf16.msra.mxu0 0
  %8706 = vmatprep.subr.bf16.mxu0 0
  %8707 = vmatpush1.bf16.msra.mxu0 0
  %8708 = vmatprep.subr.bf16.mxu0 0
  %8709 = vmatpush1.bf16.msra.mxu0 0
  %8710 = vmatprep.subr.bf16.mxu0 0
  %8711 = vmatpush1.bf16.msra.mxu0 0
  %8712 = vmatprep.subr.bf16.mxu0 0
  %8713 = vmatpush1.bf16.msra.mxu0 0
  %8714 = vmatprep.mubr.bf16.mxu0 0
  %8715 = vmatmul.mubr.bf16.gmra.mrb[0].mxu0 %v8386
  %v8716 = vpop.f32.mrb[0].mxu0
  %v8717 = vadd.f32 %v8338, %v8716
  %v8718 = vpop.f32.mrb[0].mxu0
  %v8719 = vadd.f32 %v8340, %v8718
  %v8720 = vpop.f32.mrb[0].mxu0
  %v8721 = vpop.f32.mrb[0].mxu0
  %8722 = vdwg.mxu0
  %8723 = vmatprep.subr.bf16.mxu0 %v8434
  %8724 = vmatpush1.bf16.msra.mxu0 %v8431
  %8725 = vmatprep.subr.bf16.mxu0 0
  %8726 = vmatpush1.bf16.msra.mxu0 0
  %8727 = vmatprep.subr.bf16.mxu0 0
  %8728 = vmatpush1.bf16.msra.mxu0 0
  %8729 = vmatprep.subr.bf16.mxu0 0
  %8730 = vmatpush1.bf16.msra.mxu0 0
  %8731 = vmatprep.subr.bf16.mxu0 0
  %8732 = vmatpush1.bf16.msra.mxu0 0
  %8733 = vmatprep.subr.bf16.mxu0 0
  %8734 = vmatpush1.bf16.msra.mxu0 0
  %8735 = vmatprep.subr.bf16.mxu0 0
  %8736 = vmatpush1.bf16.msra.mxu0 0
  %8737 = vmatprep.subr.bf16.mxu0 0
  %8738 = vmatpush1.bf16.msra.mxu0 0
  %8739 = vmatprep.subr.bf16.mxu0 0
  %8740 = vmatpush1.bf16.msra.mxu0 0
  %8741 = vmatprep.subr.bf16.mxu0 0
  %8742 = vmatpush1.bf16.msra.mxu0 0
  %8743 = vmatprep.subr.bf16.mxu0 0
  %8744 = vmatpush1.bf16.msra.mxu0 0
  %8745 = vmatprep.subr.bf16.mxu0 0
  %8746 = vmatpush1.bf16.msra.mxu0 0
  %8747 = vmatprep.subr.bf16.mxu0 0
  %8748 = vmatpush1.bf16.msra.mxu0 0
  %8749 = vmatprep.subr.bf16.mxu0 0
  %8750 = vmatpush1.bf16.msra.mxu0 0
  %8751 = vmatprep.subr.bf16.mxu0 0
  %8752 = vmatpush1.bf16.msra.mxu0 0
  %8753 = vmatprep.subr.bf16.mxu0 0
  %8754 = vmatpush1.bf16.msra.mxu0 0
  %8755 = vmatprep.mubr.bf16.mxu0 0
  %8756 = vmatmul.mubr.bf16.gmra.mrb[0].mxu0 %v8386
  %v8757 = vpop.f32.mrb[0].mxu0
  %v8758 = vadd.f32 %v8379, %v8757
  %v8759 = vpop.f32.mrb[0].mxu0
  %v8760 = vadd.f32 %v8381, %v8759
  %v8761 = vpop.f32.mrb[0].mxu0
  %v8762 = vpop.f32.mrb[0].mxu0
  %8763 = vdwg.mxu0
  %v8765 = vsel %vm8005, %v8003, 0
  %v8768 = vsel %vm376, %v7968, 0
  %v8771 = vsel %vm376, %v7969, 0
  %v8774 = vsel %vm376, %v7970, 0
  %v8777 = vsel %vm376, %v7971, 0
  %v8780 = vsel %vm376, %v7972, 0
  %v8783 = vsel %vm376, %v7973, 0
  %v8786 = vsel %vm376, %v7974, 0
  %v8789 = vsel %vm376, %v7975, 0
  %v8792 = vsel %vm376, %v7976, 0
  %v8795 = vsel %vm376, %v7977, 0
  %v8798 = vsel %vm376, %v7978, 0
  %v8801 = vsel %vm376, %v7979, 0
  %v8804 = vsel %vm376, %v7980, 0
  %v8807 = vsel %vm376, %v7981, 0
  %v8810 = vsel %vm376, %v7982, 0
  %v8813 = vsel %vm376, %v7983, 0
  %8815 = vmatprep.subr.bf16.mxu0 %v8771
  %8816 = vmatpush1.bf16.msra.mxu0 %v8768
  %8817 = vmatprep.subr.bf16.mxu0 0
  %8818 = vmatpush1.bf16.msra.mxu0 0
  %8819 = vmatprep.subr.bf16.mxu0 0
  %8820 = vmatpush1.bf16.msra.mxu0 0
  %8821 = vmatprep.subr.bf16.mxu0 0
  %8822 = vmatpush1.bf16.msra.mxu0 0
  %8823 = vmatprep.subr.bf16.mxu0 0
  %8824 = vmatpush1.bf16.msra.mxu0 0
  %8825 = vmatprep.subr.bf16.mxu0 0
  %8826 = vmatpush1.bf16.msra.mxu0 0
  %8827 = vmatprep.subr.bf16.mxu0 0
  %8828 = vmatpush1.bf16.msra.mxu0 0
  %8829 = vmatprep.subr.bf16.mxu0 0
  %8830 = vmatpush1.bf16.msra.mxu0 0
  %8831 = vmatprep.subr.bf16.mxu0 0
  %8832 = vmatpush1.bf16.msra.mxu0 0
  %8833 = vmatprep.subr.bf16.mxu0 0
  %8834 = vmatpush1.bf16.msra.mxu0 0
  %8835 = vmatprep.subr.bf16.mxu0 0
  %8836 = vmatpush1.bf16.msra.mxu0 0
  %8837 = vmatprep.subr.bf16.mxu0 0
  %8838 = vmatpush1.bf16.msra.mxu0 0
  %8839 = vmatprep.subr.bf16.mxu0 0
  %8840 = vmatpush1.bf16.msra.mxu0 0
  %8841 = vmatprep.subr.bf16.mxu0 0
  %8842 = vmatpush1.bf16.msra.mxu0 0
  %8843 = vmatprep.subr.bf16.mxu0 0
  %8844 = vmatpush1.bf16.msra.mxu0 0
  %8845 = vmatprep.subr.bf16.mxu0 0
  %8846 = vmatpush1.bf16.msra.mxu0 0
  %8847 = vmatprep.mubr.bf16.mxu0 0
  %8848 = vmatmul.mubr.bf16.gmra.mrb[0].mxu0 %v8765
  %v8849 = vpop.f32.mrb[0].mxu0
  %v8850 = vadd.f32 0.0, %v8849
  %v8851 = vpop.f32.mrb[0].mxu0
  %v8852 = vadd.f32 0.0, %v8851
  %v8853 = vpop.f32.mrb[0].mxu0
  %v8854 = vpop.f32.mrb[0].mxu0
  %8855 = vdwg.mxu0
  %8856 = vmatprep.subr.bf16.mxu0 %v8777
  %8857 = vmatpush1.bf16.msra.mxu0 %v8774
  %8858 = vmatprep.subr.bf16.mxu0 0
  %8859 = vmatpush1.bf16.msra.mxu0 0
  %8860 = vmatprep.subr.bf16.mxu0 0
  %8861 = vmatpush1.bf16.msra.mxu0 0
  %8862 = vmatprep.subr.bf16.mxu0 0
  %8863 = vmatpush1.bf16.msra.mxu0 0
  %8864 = vmatprep.subr.bf16.mxu0 0
  %8865 = vmatpush1.bf16.msra.mxu0 0
  %8866 = vmatprep.subr.bf16.mxu0 0
  %8867 = vmatpush1.bf16.msra.mxu0 0
  %8868 = vmatprep.subr.bf16.mxu0 0
  %8869 = vmatpush1.bf16.msra.mxu0 0
  %8870 = vmatprep.subr.bf16.mxu0 0
  %8871 = vmatpush1.bf16.msra.mxu0 0
  %8872 = vmatprep.subr.bf16.mxu0 0
  %8873 = vmatpush1.bf16.msra.mxu0 0
  %8874 = vmatprep.subr.bf16.mxu0 0
  %8875 = vmatpush1.bf16.msra.mxu0 0
  %8876 = vmatprep.subr.bf16.mxu0 0
  %8877 = vmatpush1.bf16.msra.mxu0 0
  %8878 = vmatprep.subr.bf16.mxu0 0
  %8879 = vmatpush1.bf16.msra.mxu0 0
  %8880 = vmatprep.subr.bf16.mxu0 0
  %8881 = vmatpush1.bf16.msra.mxu0 0
  %8882 = vmatprep.subr.bf16.mxu0 0
  %8883 = vmatpush1.bf16.msra.mxu0 0
  %8884 = vmatprep.subr.bf16.mxu0 0
  %8885 = vmatpush1.bf16.msra.mxu0 0
  %8886 = vmatprep.subr.bf16.mxu0 0
  %8887 = vmatpush1.bf16.msra.mxu0 0
  %8888 = vmatprep.mubr.bf16.mxu0 0
  %8889 = vmatmul.mubr.bf16.gmra.mrb[0].mxu0 %v8765
  %v8890 = vpop.f32.mrb[0].mxu0
  %v8891 = vadd.f32 0.0, %v8890
  %v8892 = vpop.f32.mrb[0].mxu0
  %v8893 = vadd.f32 0.0, %v8892
  %v8894 = vpop.f32.mrb[0].mxu0
  %v8895 = vpop.f32.mrb[0].mxu0
  %8896 = vdwg.mxu0
  %8897 = vmatprep.subr.bf16.mxu0 %v8783
  %8898 = vmatpush1.bf16.msra.mxu0 %v8780
  %8899 = vmatprep.subr.bf16.mxu0 0
  %8900 = vmatpush1.bf16.msra.mxu0 0
  %8901 = vmatprep.subr.bf16.mxu0 0
  %8902 = vmatpush1.bf16.msra.mxu0 0
  %8903 = vmatprep.subr.bf16.mxu0 0
  %8904 = vmatpush1.bf16.msra.mxu0 0
  %8905 = vmatprep.subr.bf16.mxu0 0
  %8906 = vmatpush1.bf16.msra.mxu0 0
  %8907 = vmatprep.subr.bf16.mxu0 0
  %8908 = vmatpush1.bf16.msra.mxu0 0
  %8909 = vmatprep.subr.bf16.mxu0 0
  %8910 = vmatpush1.bf16.msra.mxu0 0
  %8911 = vmatprep.subr.bf16.mxu0 0
  %8912 = vmatpush1.bf16.msra.mxu0 0
  %8913 = vmatprep.subr.bf16.mxu0 0
  %8914 = vmatpush1.bf16.msra.mxu0 0
  %8915 = vmatprep.subr.bf16.mxu0 0
  %8916 = vmatpush1.bf16.msra.mxu0 0
  %8917 = vmatprep.subr.bf16.mxu0 0
  %8918 = vmatpush1.bf16.msra.mxu0 0
  %8919 = vmatprep.subr.bf16.mxu0 0
  %8920 = vmatpush1.bf16.msra.mxu0 0
  %8921 = vmatprep.subr.bf16.mxu0 0
  %8922 = vmatpush1.bf16.msra.mxu0 0
  %8923 = vmatprep.subr.bf16.mxu0 0
  %8924 = vmatpush1.bf16.msra.mxu0 0
  %8925 = vmatprep.subr.bf16.mxu0 0
  %8926 = vmatpush1.bf16.msra.mxu0 0
  %8927 = vmatprep.subr.bf16.mxu0 0
  %8928 = vmatpush1.bf16.msra.mxu0 0
  %8929 = vmatprep.mubr.bf16.mxu0 0
  %8930 = vmatmul.mubr.bf16.gmra.mrb[0].mxu0 %v8765
  %v8931 = vpop.f32.mrb[0].mxu0
  %v8932 = vadd.f32 0.0, %v8931
  %v8933 = vpop.f32.mrb[0].mxu0
  %v8934 = vadd.f32 0.0, %v8933
  %v8935 = vpop.f32.mrb[0].mxu0
  %v8936 = vpop.f32.mrb[0].mxu0
  %8937 = vdwg.mxu0
  %8938 = vmatprep.subr.bf16.mxu0 %v8789
  %8939 = vmatpush1.bf16.msra.mxu0 %v8786
  %8940 = vmatprep.subr.bf16.mxu0 0
  %8941 = vmatpush1.bf16.msra.mxu0 0
  %8942 = vmatprep.subr.bf16.mxu0 0
  %8943 = vmatpush1.bf16.msra.mxu0 0
  %8944 = vmatprep.subr.bf16.mxu0 0
  %8945 = vmatpush1.bf16.msra.mxu0 0
  %8946 = vmatprep.subr.bf16.mxu0 0
  %8947 = vmatpush1.bf16.msra.mxu0 0
  %8948 = vmatprep.subr.bf16.mxu0 0
  %8949 = vmatpush1.bf16.msra.mxu0 0
  %8950 = vmatprep.subr.bf16.mxu0 0
  %8951 = vmatpush1.bf16.msra.mxu0 0
  %8952 = vmatprep.subr.bf16.mxu0 0
  %8953 = vmatpush1.bf16.msra.mxu0 0
  %8954 = vmatprep.subr.bf16.mxu0 0
  %8955 = vmatpush1.bf16.msra.mxu0 0
  %8956 = vmatprep.subr.bf16.mxu0 0
  %8957 = vmatpush1.bf16.msra.mxu0 0
  %8958 = vmatprep.subr.bf16.mxu0 0
  %8959 = vmatpush1.bf16.msra.mxu0 0
  %8960 = vmatprep.subr.bf16.mxu0 0
  %8961 = vmatpush1.bf16.msra.mxu0 0
  %8962 = vmatprep.subr.bf16.mxu0 0
  %8963 = vmatpush1.bf16.msra.mxu0 0
  %8964 = vmatprep.subr.bf16.mxu0 0
  %8965 = vmatpush1.bf16.msra.mxu0 0
  %8966 = vmatprep.subr.bf16.mxu0 0
  %8967 = vmatpush1.bf16.msra.mxu0 0
  %8968 = vmatprep.subr.bf16.mxu0 0
  %8969 = vmatpush1.bf16.msra.mxu0 0
  %8970 = vmatprep.mubr.bf16.mxu0 0
  %8971 = vmatmul.mubr.bf16.gmra.mrb[0].mxu0 %v8765
  %v8972 = vpop.f32.mrb[0].mxu0
  %v8973 = vadd.f32 0.0, %v8972
  %v8974 = vpop.f32.mrb[0].mxu0
  %v8975 = vadd.f32 0.0, %v8974
  %v8976 = vpop.f32.mrb[0].mxu0
  %v8977 = vpop.f32.mrb[0].mxu0
  %8978 = vdwg.mxu0
  %8979 = vmatprep.subr.bf16.mxu0 %v8795
  %8980 = vmatpush1.bf16.msra.mxu0 %v8792
  %8981 = vmatprep.subr.bf16.mxu0 0
  %8982 = vmatpush1.bf16.msra.mxu0 0
  %8983 = vmatprep.subr.bf16.mxu0 0
  %8984 = vmatpush1.bf16.msra.mxu0 0
  %8985 = vmatprep.subr.bf16.mxu0 0
  %8986 = vmatpush1.bf16.msra.mxu0 0
  %8987 = vmatprep.subr.bf16.mxu0 0
  %8988 = vmatpush1.bf16.msra.mxu0 0
  %8989 = vmatprep.subr.bf16.mxu0 0
  %8990 = vmatpush1.bf16.msra.mxu0 0
  %8991 = vmatprep.subr.bf16.mxu0 0
  %8992 = vmatpush1.bf16.msra.mxu0 0
  %8993 = vmatprep.subr.bf16.mxu0 0
  %8994 = vmatpush1.bf16.msra.mxu0 0
  %8995 = vmatprep.subr.bf16.mxu0 0
  %8996 = vmatpush1.bf16.msra.mxu0 0
  %8997 = vmatprep.subr.bf16.mxu0 0
  %8998 = vmatpush1.bf16.msra.mxu0 0
  %8999 = vmatprep.subr.bf16.mxu0 0
  %9000 = vmatpush1.bf16.msra.mxu0 0
  %9001 = vmatprep.subr.bf16.mxu0 0
  %9002 = vmatpush1.bf16.msra.mxu0 0
  %9003 = vmatprep.subr.bf16.mxu0 0
  %9004 = vmatpush1.bf16.msra.mxu0 0
  %9005 = vmatprep.subr.bf16.mxu0 0
  %9006 = vmatpush1.bf16.msra.mxu0 0
  %9007 = vmatprep.subr.bf16.mxu0 0
  %9008 = vmatpush1.bf16.msra.mxu0 0
  %9009 = vmatprep.subr.bf16.mxu0 0
  %9010 = vmatpush1.bf16.msra.mxu0 0
  %9011 = vmatprep.mubr.bf16.mxu0 0
  %9012 = vmatmul.mubr.bf16.gmra.mrb[0].mxu0 %v8765
  %v9013 = vpop.f32.mrb[0].mxu0
  %v9014 = vadd.f32 0.0, %v9013
  %v9015 = vpop.f32.mrb[0].mxu0
  %v9016 = vadd.f32 0.0, %v9015
  %v9017 = vpop.f32.mrb[0].mxu0
  %v9018 = vpop.f32.mrb[0].mxu0
  %9019 = vdwg.mxu0
  %9020 = vmatprep.subr.bf16.mxu0 %v8801
  %9021 = vmatpush1.bf16.msra.mxu0 %v8798
  %9022 = vmatprep.subr.bf16.mxu0 0
  %9023 = vmatpush1.bf16.msra.mxu0 0
  %9024 = vmatprep.subr.bf16.mxu0 0
  %9025 = vmatpush1.bf16.msra.mxu0 0
  %9026 = vmatprep.subr.bf16.mxu0 0
  %9027 = vmatpush1.bf16.msra.mxu0 0
  %9028 = vmatprep.subr.bf16.mxu0 0
  %9029 = vmatpush1.bf16.msra.mxu0 0
  %9030 = vmatprep.subr.bf16.mxu0 0
  %9031 = vmatpush1.bf16.msra.mxu0 0
  %9032 = vmatprep.subr.bf16.mxu0 0
  %9033 = vmatpush1.bf16.msra.mxu0 0
  %9034 = vmatprep.subr.bf16.mxu0 0
  %9035 = vmatpush1.bf16.msra.mxu0 0
  %9036 = vmatprep.subr.bf16.mxu0 0
  %9037 = vmatpush1.bf16.msra.mxu0 0
  %9038 = vmatprep.subr.bf16.mxu0 0
  %9039 = vmatpush1.bf16.msra.mxu0 0
  %9040 = vmatprep.subr.bf16.mxu0 0
  %9041 = vmatpush1.bf16.msra.mxu0 0
  %9042 = vmatprep.subr.bf16.mxu0 0
  %9043 = vmatpush1.bf16.msra.mxu0 0
  %9044 = vmatprep.subr.bf16.mxu0 0
  %9045 = vmatpush1.bf16.msra.mxu0 0
  %9046 = vmatprep.subr.bf16.mxu0 0
  %9047 = vmatpush1.bf16.msra.mxu0 0
  %9048 = vmatprep.subr.bf16.mxu0 0
  %9049 = vmatpush1.bf16.msra.mxu0 0
  %9050 = vmatprep.subr.bf16.mxu0 0
  %9051 = vmatpush1.bf16.msra.mxu0 0
  %9052 = vmatprep.mubr.bf16.mxu0 0
  %9053 = vmatmul.mubr.bf16.gmra.mrb[0].mxu0 %v8765
  %v9054 = vpop.f32.mrb[0].mxu0
  %v9055 = vadd.f32 0.0, %v9054
  %v9056 = vpop.f32.mrb[0].mxu0
  %v9057 = vadd.f32 0.0, %v9056
  %v9058 = vpop.f32.mrb[0].mxu0
  %v9059 = vpop.f32.mrb[0].mxu0
  %9060 = vdwg.mxu0
  %9061 = vmatprep.subr.bf16.mxu0 %v8807
  %9062 = vmatpush1.bf16.msra.mxu0 %v8804
  %9063 = vmatprep.subr.bf16.mxu0 0
  %9064 = vmatpush1.bf16.msra.mxu0 0
  %9065 = vmatprep.subr.bf16.mxu0 0
  %9066 = vmatpush1.bf16.msra.mxu0 0
  %9067 = vmatprep.subr.bf16.mxu0 0
  %9068 = vmatpush1.bf16.msra.mxu0 0
  %9069 = vmatprep.subr.bf16.mxu0 0
  %9070 = vmatpush1.bf16.msra.mxu0 0
  %9071 = vmatprep.subr.bf16.mxu0 0
  %9072 = vmatpush1.bf16.msra.mxu0 0
  %9073 = vmatprep.subr.bf16.mxu0 0
  %9074 = vmatpush1.bf16.msra.mxu0 0
  %9075 = vmatprep.subr.bf16.mxu0 0
  %9076 = vmatpush1.bf16.msra.mxu0 0
  %9077 = vmatprep.subr.bf16.mxu0 0
  %9078 = vmatpush1.bf16.msra.mxu0 0
  %9079 = vmatprep.subr.bf16.mxu0 0
  %9080 = vmatpush1.bf16.msra.mxu0 0
  %9081 = vmatprep.subr.bf16.mxu0 0
  %9082 = vmatpush1.bf16.msra.mxu0 0
  %9083 = vmatprep.subr.bf16.mxu0 0
  %9084 = vmatpush1.bf16.msra.mxu0 0
  %9085 = vmatprep.subr.bf16.mxu0 0
  %9086 = vmatpush1.bf16.msra.mxu0 0
  %9087 = vmatprep.subr.bf16.mxu0 0
  %9088 = vmatpush1.bf16.msra.mxu0 0
  %9089 = vmatprep.subr.bf16.mxu0 0
  %9090 = vmatpush1.bf16.msra.mxu0 0
  %9091 = vmatprep.subr.bf16.mxu0 0
  %9092 = vmatpush1.bf16.msra.mxu0 0
  %9093 = vmatprep.mubr.bf16.mxu0 0
  %9094 = vmatmul.mubr.bf16.gmra.mrb[0].mxu0 %v8765
  %v9095 = vpop.f32.mrb[0].mxu0
  %v9096 = vadd.f32 0.0, %v9095
  %v9097 = vpop.f32.mrb[0].mxu0
  %v9098 = vadd.f32 0.0, %v9097
  %v9099 = vpop.f32.mrb[0].mxu0
  %v9100 = vpop.f32.mrb[0].mxu0
  %9101 = vdwg.mxu0
  %9102 = vmatprep.subr.bf16.mxu0 %v8813
  %9103 = vmatpush1.bf16.msra.mxu0 %v8810
  %9104 = vmatprep.subr.bf16.mxu0 0
  %9105 = vmatpush1.bf16.msra.mxu0 0
  %9106 = vmatprep.subr.bf16.mxu0 0
  %9107 = vmatpush1.bf16.msra.mxu0 0
  %9108 = vmatprep.subr.bf16.mxu0 0
  %9109 = vmatpush1.bf16.msra.mxu0 0
  %9110 = vmatprep.subr.bf16.mxu0 0
  %9111 = vmatpush1.bf16.msra.mxu0 0
  %9112 = vmatprep.subr.bf16.mxu0 0
  %9113 = vmatpush1.bf16.msra.mxu0 0
  %9114 = vmatprep.subr.bf16.mxu0 0
  %9115 = vmatpush1.bf16.msra.mxu0 0
  %9116 = vmatprep.subr.bf16.mxu0 0
  %9117 = vmatpush1.bf16.msra.mxu0 0
  %9118 = vmatprep.subr.bf16.mxu0 0
  %9119 = vmatpush1.bf16.msra.mxu0 0
  %9120 = vmatprep.subr.bf16.mxu0 0
  %9121 = vmatpush1.bf16.msra.mxu0 0
  %9122 = vmatprep.subr.bf16.mxu0 0
  %9123 = vmatpush1.bf16.msra.mxu0 0
  %9124 = vmatprep.subr.bf16.mxu0 0
  %9125 = vmatpush1.bf16.msra.mxu0 0
  %9126 = vmatprep.subr.bf16.mxu0 0
  %9127 = vmatpush1.bf16.msra.mxu0 0
  %9128 = vmatprep.subr.bf16.mxu0 0
  %9129 = vmatpush1.bf16.msra.mxu0 0
  %9130 = vmatprep.subr.bf16.mxu0 0
  %9131 = vmatpush1.bf16.msra.mxu0 0
  %9132 = vmatprep.subr.bf16.mxu0 0
  %9133 = vmatpush1.bf16.msra.mxu0 0
  %9134 = vmatprep.mubr.bf16.mxu0 0
  %9135 = vmatmul.mubr.bf16.gmra.mrb[0].mxu0 %v8765
  %v9136 = vpop.f32.mrb[0].mxu0
  %v9137 = vadd.f32 0.0, %v9136
  %v9138 = vpop.f32.mrb[0].mxu0
  %v9139 = vadd.f32 0.0, %v9138
  %v9140 = vpop.f32.mrb[0].mxu0
  %v9141 = vpop.f32.mrb[0].mxu0
  %9142 = vdwg.mxu0
  %v9143 = vadd.f32 %v8471, %v8850
  %v9144 = vadd.f32 %v8473, %v8852
  %v9145 = vadd.f32 %v8512, %v8891
  %v9146 = vadd.f32 %v8514, %v8893
  %v9147 = vadd.f32 %v8553, %v8932
  %v9148 = vadd.f32 %v8555, %v8934
  %v9149 = vadd.f32 %v8594, %v8973
  %v9150 = vadd.f32 %v8596, %v8975
  %v9151 = vadd.f32 %v8635, %v9014
  %v9152 = vadd.f32 %v8637, %v9016
  %v9153 = vadd.f32 %v8676, %v9055
  %v9154 = vadd.f32 %v8678, %v9057
  %v9155 = vadd.f32 %v8717, %v9096
  %v9156 = vadd.f32 %v8719, %v9098
  %v9157 = vadd.f32 %v8758, %v9137
  %v9158 = vadd.f32 %v8760, %v9139
  %v9160 = vsel %vm8005, %v8004, 0
  %v9163 = vsel %vm376, %v7984, 0
  %v9166 = vsel %vm376, %v7985, 0
  %v9169 = vsel %vm376, %v7986, 0
  %v9172 = vsel %vm376, %v7987, 0
  %v9175 = vsel %vm376, %v7988, 0
  %v9178 = vsel %vm376, %v7989, 0
  %v9181 = vsel %vm376, %v7990, 0
  %v9184 = vsel %vm376, %v7991, 0
  %v9187 = vsel %vm376, %v7992, 0
  %v9190 = vsel %vm376, %v7993, 0
  %v9193 = vsel %vm376, %v7994, 0
  %v9196 = vsel %vm376, %v7995, 0
  %v9199 = vsel %vm376, %v7996, 0
  %v9202 = vsel %vm376, %v7997, 0
  %v9205 = vsel %vm376, %v7998, 0
  %v9208 = vsel %vm376, %v7999, 0
  %9210 = vmatprep.subr.bf16.mxu0 %v9166
  %9211 = vmatpush1.bf16.msra.mxu0 %v9163
  %9212 = vmatprep.subr.bf16.mxu0 0
  %9213 = vmatpush1.bf16.msra.mxu0 0
  %9214 = vmatprep.subr.bf16.mxu0 0
  %9215 = vmatpush1.bf16.msra.mxu0 0
  %9216 = vmatprep.subr.bf16.mxu0 0
  %9217 = vmatpush1.bf16.msra.mxu0 0
  %9218 = vmatprep.subr.bf16.mxu0 0
  %9219 = vmatpush1.bf16.msra.mxu0 0
  %9220 = vmatprep.subr.bf16.mxu0 0
  %9221 = vmatpush1.bf16.msra.mxu0 0
  %9222 = vmatprep.subr.bf16.mxu0 0
  %9223 = vmatpush1.bf16.msra.mxu0 0
  %9224 = vmatprep.subr.bf16.mxu0 0
  %9225 = vmatpush1.bf16.msra.mxu0 0
  %9226 = vmatprep.subr.bf16.mxu0 0
  %9227 = vmatpush1.bf16.msra.mxu0 0
  %9228 = vmatprep.subr.bf16.mxu0 0
  %9229 = vmatpush1.bf16.msra.mxu0 0
  %9230 = vmatprep.subr.bf16.mxu0 0
  %9231 = vmatpush1.bf16.msra.mxu0 0
  %9232 = vmatprep.subr.bf16.mxu0 0
  %9233 = vmatpush1.bf16.msra.mxu0 0
  %9234 = vmatprep.subr.bf16.mxu0 0
  %9235 = vmatpush1.bf16.msra.mxu0 0
  %9236 = vmatprep.subr.bf16.mxu0 0
  %9237 = vmatpush1.bf16.msra.mxu0 0
  %9238 = vmatprep.subr.bf16.mxu0 0
  %9239 = vmatpush1.bf16.msra.mxu0 0
  %9240 = vmatprep.subr.bf16.mxu0 0
  %9241 = vmatpush1.bf16.msra.mxu0 0
  %9242 = vmatprep.mubr.bf16.mxu0 0
  %9243 = vmatmul.mubr.bf16.gmra.mrb[0].mxu0 %v9160
  %v9244 = vpop.f32.mrb[0].mxu0
  %v9245 = vadd.f32 0.0, %v9244
  %v9246 = vpop.f32.mrb[0].mxu0
  %v9247 = vadd.f32 0.0, %v9246
  %v9248 = vpop.f32.mrb[0].mxu0
  %v9249 = vpop.f32.mrb[0].mxu0
  %9250 = vdwg.mxu0
  %9251 = vmatprep.subr.bf16.mxu0 %v9172
  %9252 = vmatpush1.bf16.msra.mxu0 %v9169
  %9253 = vmatprep.subr.bf16.mxu0 0
  %9254 = vmatpush1.bf16.msra.mxu0 0
  %9255 = vmatprep.subr.bf16.mxu0 0
  %9256 = vmatpush1.bf16.msra.mxu0 0
  %9257 = vmatprep.subr.bf16.mxu0 0
  %9258 = vmatpush1.bf16.msra.mxu0 0
  %9259 = vmatprep.subr.bf16.mxu0 0
  %9260 = vmatpush1.bf16.msra.mxu0 0
  %9261 = vmatprep.subr.bf16.mxu0 0
  %9262 = vmatpush1.bf16.msra.mxu0 0
  %9263 = vmatprep.subr.bf16.mxu0 0
  %9264 = vmatpush1.bf16.msra.mxu0 0
  %9265 = vmatprep.subr.bf16.mxu0 0
  %9266 = vmatpush1.bf16.msra.mxu0 0
  %9267 = vmatprep.subr.bf16.mxu0 0
  %9268 = vmatpush1.bf16.msra.mxu0 0
  %9269 = vmatprep.subr.bf16.mxu0 0
  %9270 = vmatpush1.bf16.msra.mxu0 0
  %9271 = vmatprep.subr.bf16.mxu0 0
  %9272 = vmatpush1.bf16.msra.mxu0 0
  %9273 = vmatprep.subr.bf16.mxu0 0
  %9274 = vmatpush1.bf16.msra.mxu0 0
  %9275 = vmatprep.subr.bf16.mxu0 0
  %9276 = vmatpush1.bf16.msra.mxu0 0
  %9277 = vmatprep.subr.bf16.mxu0 0
  %9278 = vmatpush1.bf16.msra.mxu0 0
  %9279 = vmatprep.subr.bf16.mxu0 0
  %9280 = vmatpush1.bf16.msra.mxu0 0
  %9281 = vmatprep.subr.bf16.mxu0 0
  %9282 = vmatpush1.bf16.msra.mxu0 0
  %9283 = vmatprep.mubr.bf16.mxu0 0
  %9284 = vmatmul.mubr.bf16.gmra.mrb[0].mxu0 %v9160
  %v9285 = vpop.f32.mrb[0].mxu0
  %v9286 = vadd.f32 0.0, %v9285
  %v9287 = vpop.f32.mrb[0].mxu0
  %v9288 = vadd.f32 0.0, %v9287
  %v9289 = vpop.f32.mrb[0].mxu0
  %v9290 = vpop.f32.mrb[0].mxu0
  %9291 = vdwg.mxu0
  %9292 = vmatprep.subr.bf16.mxu0 %v9178
  %9293 = vmatpush1.bf16.msra.mxu0 %v9175
  %9294 = vmatprep.subr.bf16.mxu0 0
  %9295 = vmatpush1.bf16.msra.mxu0 0
  %9296 = vmatprep.subr.bf16.mxu0 0
  %9297 = vmatpush1.bf16.msra.mxu0 0
  %9298 = vmatprep.subr.bf16.mxu0 0
  %9299 = vmatpush1.bf16.msra.mxu0 0
  %9300 = vmatprep.subr.bf16.mxu0 0
  %9301 = vmatpush1.bf16.msra.mxu0 0
  %9302 = vmatprep.subr.bf16.mxu0 0
  %9303 = vmatpush1.bf16.msra.mxu0 0
  %9304 = vmatprep.subr.bf16.mxu0 0
  %9305 = vmatpush1.bf16.msra.mxu0 0
  %9306 = vmatprep.subr.bf16.mxu0 0
  %9307 = vmatpush1.bf16.msra.mxu0 0
  %9308 = vmatprep.subr.bf16.mxu0 0
  %9309 = vmatpush1.bf16.msra.mxu0 0
  %9310 = vmatprep.subr.bf16.mxu0 0
  %9311 = vmatpush1.bf16.msra.mxu0 0
  %9312 = vmatprep.subr.bf16.mxu0 0
  %9313 = vmatpush1.bf16.msra.mxu0 0
  %9314 = vmatprep.subr.bf16.mxu0 0
  %9315 = vmatpush1.bf16.msra.mxu0 0
  %9316 = vmatprep.subr.bf16.mxu0 0
  %9317 = vmatpush1.bf16.msra.mxu0 0
  %9318 = vmatprep.subr.bf16.mxu0 0
  %9319 = vmatpush1.bf16.msra.mxu0 0
  %9320 = vmatprep.subr.bf16.mxu0 0
  %9321 = vmatpush1.bf16.msra.mxu0 0
  %9322 = vmatprep.subr.bf16.mxu0 0
  %9323 = vmatpush1.bf16.msra.mxu0 0
  %9324 = vmatprep.mubr.bf16.mxu0 0
  %9325 = vmatmul.mubr.bf16.gmra.mrb[0].mxu0 %v9160
  %v9326 = vpop.f32.mrb[0].mxu0
  %v9327 = vadd.f32 0.0, %v9326
  %v9328 = vpop.f32.mrb[0].mxu0
  %v9329 = vadd.f32 0.0, %v9328
  %v9330 = vpop.f32.mrb[0].mxu0
  %v9331 = vpop.f32.mrb[0].mxu0
  %9332 = vdwg.mxu0
  %9333 = vmatprep.subr.bf16.mxu0 %v9184
  %9334 = vmatpush1.bf16.msra.mxu0 %v9181
  %9335 = vmatprep.subr.bf16.mxu0 0
  %9336 = vmatpush1.bf16.msra.mxu0 0
  %9337 = vmatprep.subr.bf16.mxu0 0
  %9338 = vmatpush1.bf16.msra.mxu0 0
  %9339 = vmatprep.subr.bf16.mxu0 0
  %9340 = vmatpush1.bf16.msra.mxu0 0
  %9341 = vmatprep.subr.bf16.mxu0 0
  %9342 = vmatpush1.bf16.msra.mxu0 0
  %9343 = vmatprep.subr.bf16.mxu0 0
  %9344 = vmatpush1.bf16.msra.mxu0 0
  %9345 = vmatprep.subr.bf16.mxu0 0
  %9346 = vmatpush1.bf16.msra.mxu0 0
  %9347 = vmatprep.subr.bf16.mxu0 0
  %9348 = vmatpush1.bf16.msra.mxu0 0
  %9349 = vmatprep.subr.bf16.mxu0 0
  %9350 = vmatpush1.bf16.msra.mxu0 0
  %9351 = vmatprep.subr.bf16.mxu0 0
  %9352 = vmatpush1.bf16.msra.mxu0 0
  %9353 = vmatprep.subr.bf16.mxu0 0
  %9354 = vmatpush1.bf16.msra.mxu0 0
  %9355 = vmatprep.subr.bf16.mxu0 0
  %9356 = vmatpush1.bf16.msra.mxu0 0
  %9357 = vmatprep.subr.bf16.mxu0 0
  %9358 = vmatpush1.bf16.msra.mxu0 0
  %9359 = vmatprep.subr.bf16.mxu0 0
  %9360 = vmatpush1.bf16.msra.mxu0 0
  %9361 = vmatprep.subr.bf16.mxu0 0
  %9362 = vmatpush1.bf16.msra.mxu0 0
  %9363 = vmatprep.subr.bf16.mxu0 0
  %9364 = vmatpush1.bf16.msra.mxu0 0
  %9365 = vmatprep.mubr.bf16.mxu0 0
  %9366 = vmatmul.mubr.bf16.gmra.mrb[0].mxu0 %v9160
  %v9367 = vpop.f32.mrb[0].mxu0
  %v9368 = vadd.f32 0.0, %v9367
  %v9369 = vpop.f32.mrb[0].mxu0
  %v9370 = vadd.f32 0.0, %v9369
  %v9371 = vpop.f32.mrb[0].mxu0
  %v9372 = vpop.f32.mrb[0].mxu0
  %9373 = vdwg.mxu0
  %9374 = vmatprep.subr.bf16.mxu0 %v9190
  %9375 = vmatpush1.bf16.msra.mxu0 %v9187
  %9376 = vmatprep.subr.bf16.mxu0 0
  %9377 = vmatpush1.bf16.msra.mxu0 0
  %9378 = vmatprep.subr.bf16.mxu0 0
  %9379 = vmatpush1.bf16.msra.mxu0 0
  %9380 = vmatprep.subr.bf16.mxu0 0
  %9381 = vmatpush1.bf16.msra.mxu0 0
  %9382 = vmatprep.subr.bf16.mxu0 0
  %9383 = vmatpush1.bf16.msra.mxu0 0
  %9384 = vmatprep.subr.bf16.mxu0 0
  %9385 = vmatpush1.bf16.msra.mxu0 0
  %9386 = vmatprep.subr.bf16.mxu0 0
  %9387 = vmatpush1.bf16.msra.mxu0 0
  %9388 = vmatprep.subr.bf16.mxu0 0
  %9389 = vmatpush1.bf16.msra.mxu0 0
  %9390 = vmatprep.subr.bf16.mxu0 0
  %9391 = vmatpush1.bf16.msra.mxu0 0
  %9392 = vmatprep.subr.bf16.mxu0 0
  %9393 = vmatpush1.bf16.msra.mxu0 0
  %9394 = vmatprep.subr.bf16.mxu0 0
  %9395 = vmatpush1.bf16.msra.mxu0 0
  %9396 = vmatprep.subr.bf16.mxu0 0
  %9397 = vmatpush1.bf16.msra.mxu0 0
  %9398 = vmatprep.subr.bf16.mxu0 0
  %9399 = vmatpush1.bf16.msra.mxu0 0
  %9400 = vmatprep.subr.bf16.mxu0 0
  %9401 = vmatpush1.bf16.msra.mxu0 0
  %9402 = vmatprep.subr.bf16.mxu0 0
  %9403 = vmatpush1.bf16.msra.mxu0 0
  %9404 = vmatprep.subr.bf16.mxu0 0
  %9405 = vmatpush1.bf16.msra.mxu0 0
  %9406 = vmatprep.mubr.bf16.mxu0 0
  %9407 = vmatmul.mubr.bf16.gmra.mrb[0].mxu0 %v9160
  %v9408 = vpop.f32.mrb[0].mxu0
  %v9409 = vadd.f32 0.0, %v9408
  %v9410 = vpop.f32.mrb[0].mxu0
  %v9411 = vadd.f32 0.0, %v9410
  %v9412 = vpop.f32.mrb[0].mxu0
  %v9413 = vpop.f32.mrb[0].mxu0
  %9414 = vdwg.mxu0
  %9415 = vmatprep.subr.bf16.mxu0 %v9196
  %9416 = vmatpush1.bf16.msra.mxu0 %v9193
  %9417 = vmatprep.subr.bf16.mxu0 0
  %9418 = vmatpush1.bf16.msra.mxu0 0
  %9419 = vmatprep.subr.bf16.mxu0 0
  %9420 = vmatpush1.bf16.msra.mxu0 0
  %9421 = vmatprep.subr.bf16.mxu0 0
  %9422 = vmatpush1.bf16.msra.mxu0 0
  %9423 = vmatprep.subr.bf16.mxu0 0
  %9424 = vmatpush1.bf16.msra.mxu0 0
  %9425 = vmatprep.subr.bf16.mxu0 0
  %9426 = vmatpush1.bf16.msra.mxu0 0
  %9427 = vmatprep.subr.bf16.mxu0 0
  %9428 = vmatpush1.bf16.msra.mxu0 0
  %9429 = vmatprep.subr.bf16.mxu0 0
  %9430 = vmatpush1.bf16.msra.mxu0 0
  %9431 = vmatprep.subr.bf16.mxu0 0
  %9432 = vmatpush1.bf16.msra.mxu0 0
  %9433 = vmatprep.subr.bf16.mxu0 0
  %9434 = vmatpush1.bf16.msra.mxu0 0
  %9435 = vmatprep.subr.bf16.mxu0 0
  %9436 = vmatpush1.bf16.msra.mxu0 0
  %9437 = vmatprep.subr.bf16.mxu0 0
  %9438 = vmatpush1.bf16.msra.mxu0 0
  %9439 = vmatprep.subr.bf16.mxu0 0
  %9440 = vmatpush1.bf16.msra.mxu0 0
  %9441 = vmatprep.subr.bf16.mxu0 0
  %9442 = vmatpush1.bf16.msra.mxu0 0
  %9443 = vmatprep.subr.bf16.mxu0 0
  %9444 = vmatpush1.bf16.msra.mxu0 0
  %9445 = vmatprep.subr.bf16.mxu0 0
  %9446 = vmatpush1.bf16.msra.mxu0 0
  %9447 = vmatprep.mubr.bf16.mxu0 0
  %9448 = vmatmul.mubr.bf16.gmra.mrb[0].mxu0 %v9160
  %v9449 = vpop.f32.mrb[0].mxu0
  %v9450 = vadd.f32 0.0, %v9449
  %v9451 = vpop.f32.mrb[0].mxu0
  %v9452 = vadd.f32 0.0, %v9451
  %v9453 = vpop.f32.mrb[0].mxu0
  %v9454 = vpop.f32.mrb[0].mxu0
  %9455 = vdwg.mxu0
  %9456 = vmatprep.subr.bf16.mxu0 %v9202
  %9457 = vmatpush1.bf16.msra.mxu0 %v9199
  %9458 = vmatprep.subr.bf16.mxu0 0
  %9459 = vmatpush1.bf16.msra.mxu0 0
  %9460 = vmatprep.subr.bf16.mxu0 0
  %9461 = vmatpush1.bf16.msra.mxu0 0
  %9462 = vmatprep.subr.bf16.mxu0 0
  %9463 = vmatpush1.bf16.msra.mxu0 0
  %9464 = vmatprep.subr.bf16.mxu0 0
  %9465 = vmatpush1.bf16.msra.mxu0 0
  %9466 = vmatprep.subr.bf16.mxu0 0
  %9467 = vmatpush1.bf16.msra.mxu0 0
  %9468 = vmatprep.subr.bf16.mxu0 0
  %9469 = vmatpush1.bf16.msra.mxu0 0
  %9470 = vmatprep.subr.bf16.mxu0 0
  %9471 = vmatpush1.bf16.msra.mxu0 0
  %9472 = vmatprep.subr.bf16.mxu0 0
  %9473 = vmatpush1.bf16.msra.mxu0 0
  %9474 = vmatprep.subr.bf16.mxu0 0
  %9475 = vmatpush1.bf16.msra.mxu0 0
  %9476 = vmatprep.subr.bf16.mxu0 0
  %9477 = vmatpush1.bf16.msra.mxu0 0
  %9478 = vmatprep.subr.bf16.mxu0 0
  %9479 = vmatpush1.bf16.msra.mxu0 0
  %9480 = vmatprep.subr.bf16.mxu0 0
  %9481 = vmatpush1.bf16.msra.mxu0 0
  %9482 = vmatprep.subr.bf16.mxu0 0
  %9483 = vmatpush1.bf16.msra.mxu0 0
  %9484 = vmatprep.subr.bf16.mxu0 0
  %9485 = vmatpush1.bf16.msra.mxu0 0
  %9486 = vmatprep.subr.bf16.mxu0 0
  %9487 = vmatpush1.bf16.msra.mxu0 0
  %9488 = vmatprep.mubr.bf16.mxu0 0
  %9489 = vmatmul.mubr.bf16.gmra.mrb[0].mxu0 %v9160
  %v9490 = vpop.f32.mrb[0].mxu0
  %v9491 = vadd.f32 0.0, %v9490
  %v9492 = vpop.f32.mrb[0].mxu0
  %v9493 = vadd.f32 0.0, %v9492
  %v9494 = vpop.f32.mrb[0].mxu0
  %v9495 = vpop.f32.mrb[0].mxu0
  %9496 = vdwg.mxu0
  %9497 = vmatprep.subr.bf16.mxu0 %v9208
  %9498 = vmatpush1.bf16.msra.mxu0 %v9205
  %9499 = vmatprep.subr.bf16.mxu0 0
  %9500 = vmatpush1.bf16.msra.mxu0 0
  %9501 = vmatprep.subr.bf16.mxu0 0
  %9502 = vmatpush1.bf16.msra.mxu0 0
  %9503 = vmatprep.subr.bf16.mxu0 0
  %9504 = vmatpush1.bf16.msra.mxu0 0
  %9505 = vmatprep.subr.bf16.mxu0 0
  %9506 = vmatpush1.bf16.msra.mxu0 0
  %9507 = vmatprep.subr.bf16.mxu0 0
  %9508 = vmatpush1.bf16.msra.mxu0 0
  %9509 = vmatprep.subr.bf16.mxu0 0
  %9510 = vmatpush1.bf16.msra.mxu0 0
  %9511 = vmatprep.subr.bf16.mxu0 0
  %9512 = vmatpush1.bf16.msra.mxu0 0
  %9513 = vmatprep.subr.bf16.mxu0 0
  %9514 = vmatpush1.bf16.msra.mxu0 0
  %9515 = vmatprep.subr.bf16.mxu0 0
  %9516 = vmatpush1.bf16.msra.mxu0 0
  %9517 = vmatprep.subr.bf16.mxu0 0
  %9518 = vmatpush1.bf16.msra.mxu0 0
  %9519 = vmatprep.subr.bf16.mxu0 0
  %9520 = vmatpush1.bf16.msra.mxu0 0
  %9521 = vmatprep.subr.bf16.mxu0 0
  %9522 = vmatpush1.bf16.msra.mxu0 0
  %9523 = vmatprep.subr.bf16.mxu0 0
  %9524 = vmatpush1.bf16.msra.mxu0 0
  %9525 = vmatprep.subr.bf16.mxu0 0
  %9526 = vmatpush1.bf16.msra.mxu0 0
  %9527 = vmatprep.subr.bf16.mxu0 0
  %9528 = vmatpush1.bf16.msra.mxu0 0
  %9529 = vmatprep.mubr.bf16.mxu0 0
  %9530 = vmatmul.mubr.bf16.gmra.mrb[0].mxu0 %v9160
  %v9531 = vpop.f32.mrb[0].mxu0
  %v9532 = vadd.f32 0.0, %v9531
  %v9533 = vpop.f32.mrb[0].mxu0
  %v9534 = vadd.f32 0.0, %v9533
  %v9535 = vpop.f32.mrb[0].mxu0
  %v9536 = vpop.f32.mrb[0].mxu0
  %9537 = vdwg.mxu0
  %v9538 = vadd.f32 %v9143, %v9245
  %v9539 = vadd.f32 %v9144, %v9247
  %v9540 = vadd.f32 %v9145, %v9286
  %v9541 = vadd.f32 %v9146, %v9288
  %v9542 = vadd.f32 %v9147, %v9327
  %v9543 = vadd.f32 %v9148, %v9329
  %v9544 = vadd.f32 %v9149, %v9368
  %v9545 = vadd.f32 %v9150, %v9370
  %v9546 = vadd.f32 %v9151, %v9409
  %v9547 = vadd.f32 %v9152, %v9411
  %v9548 = vadd.f32 %v9153, %v9450
  %v9549 = vadd.f32 %v9154, %v9452
  %v9550 = vadd.f32 %v9155, %v9491
  %v9551 = vadd.f32 %v9156, %v9493
  %v9552 = vadd.f32 %v9157, %v9532
  %v9553 = vadd.f32 %v9158, %v9534
  %v9554 = vadd.f32 %v9538, %v9539
  %v9555 = vadd.f32 %v9554, %v9540
  %v9556 = vadd.f32 %v9555, %v9541
  %v9557 = vadd.f32 %v9556, %v9542
  %v9558 = vadd.f32 %v9557, %v9543
  %v9559 = vadd.f32 %v9558, %v9544
  %v9560 = vadd.f32 %v9559, %v9545
  %v9561 = vadd.f32 %v9560, %v9546
  %v9562 = vadd.f32 %v9561, %v9547
  %v9563 = vadd.f32 %v9562, %v9548
  %v9564 = vadd.f32 %v9563, %v9549
  %v9565 = vadd.f32 %v9564, %v9550
  %v9566 = vadd.f32 %v9565, %v9551
  %v9567 = vadd.f32 %v9566, %v9552
  %v9568 = vadd.f32 %v9567, %v9553
  %9569 = vadd.xlane.f32.xlu0 %v9568
  %v9570 = vpop.xlane.xlu0 %9569
  %v9571 = vmul.f32 %v9538, %v9538
  %v9572 = vmul.f32 %v9539, %v9539
  %v9573 = vmul.f32 %v9540, %v9540
  %v9574 = vmul.f32 %v9541, %v9541
  %v9575 = vmul.f32 %v9542, %v9542
  %v9576 = vmul.f32 %v9543, %v9543
  %v9577 = vmul.f32 %v9544, %v9544
  %v9578 = vmul.f32 %v9545, %v9545
  %v9579 = vmul.f32 %v9546, %v9546
  %v9580 = vmul.f32 %v9547, %v9547
  %v9581 = vmul.f32 %v9548, %v9548
  %v9582 = vmul.f32 %v9549, %v9549
  %v9583 = vmul.f32 %v9550, %v9550
  %v9584 = vmul.f32 %v9551, %v9551
  %v9585 = vmul.f32 %v9552, %v9552
  %v9586 = vmul.f32 %v9553, %v9553
  %v9587 = vadd.f32 %v9571, %v9572
  %v9588 = vadd.f32 %v9587, %v9573
  %v9589 = vadd.f32 %v9588, %v9574
  %v9590 = vadd.f32 %v9589, %v9575
  %v9591 = vadd.f32 %v9590, %v9576
  %v9592 = vadd.f32 %v9591, %v9577
  %v9593 = vadd.f32 %v9592, %v9578
  %v9594 = vadd.f32 %v9593, %v9579
  %v9595 = vadd.f32 %v9594, %v9580
  %v9596 = vadd.f32 %v9595, %v9581
  %v9597 = vadd.f32 %v9596, %v9582
  %v9598 = vadd.f32 %v9597, %v9583
  %v9599 = vadd.f32 %v9598, %v9584
  %v9600 = vadd.f32 %v9599, %v9585
  %v9601 = vadd.f32 %v9600, %v9586
  %9602 = vadd.xlane.f32.xlu0 %v9601
  %v9603 = vpop.xlane.xlu0 %9602
  %v9604 = vmul.f32 %v9570, 0.00048828125
  %v9605 = vmul.f32 %v9603, 0.00048828125
  %v9606 = vmul.f32 %v9604, %v9604
  %v9607 = vsub.f32 %v9605, %v9606
  %v9608 = vmax.f32 %v9607, 0.0
  %s9609 = scalar_lea.vmem %s2, 32
  %v9610 = vld [vmem:[%s9609] sm:$0xff]
  %v9611 = vadd.f32 %v9608, 1e-05
  %v9612 = vrsqrt.pop %v9611
  %v9613 = vmul.f32 %v9610, %v9612
  %v9614 = vmul.f32 %v9604, %v9613
  %9616 = vrot.lane.b32.xlu0 %v9614, 1
  %v9617 = vpop.permute.xlu0 %9616
  %v9619 = vsub.f32 %v9610, %v9617
  %9621 = vset.pattern.permute.xlu0 0
  %9622 = vperm.xlu0 %9621, %v9613
  %v9623 = vpop.permute.xlu0 %9622
  %v9625 = vmul.f32 %v9538, %v9623
  %v9626 = vmul.f32 %v9539, %v9623
  %v9627 = vmul.f32 %v9540, %v9623
  %v9628 = vmul.f32 %v9541, %v9623
  %v9629 = vmul.f32 %v9542, %v9623
  %v9630 = vmul.f32 %v9543, %v9623
  %v9631 = vmul.f32 %v9544, %v9623
  %v9632 = vmul.f32 %v9545, %v9623
  %v9633 = vmul.f32 %v9546, %v9623
  %v9634 = vmul.f32 %v9547, %v9623
  %v9635 = vmul.f32 %v9548, %v9623
  %v9636 = vmul.f32 %v9549, %v9623
  %v9637 = vmul.f32 %v9550, %v9623
  %v9638 = vmul.f32 %v9551, %v9623
  %v9639 = vmul.f32 %v9552, %v9623
  %v9640 = vmul.f32 %v9553, %v9623
  %9642 = vset.pattern.permute.xlu0 1
  %9643 = vperm.xlu0 %9642, %v9619
  %v9644 = vpop.permute.xlu0 %9643
  %v9646 = vadd.f32 %v9625, %v9644
  %v9647 = vadd.f32 %v9626, %v9644
  %v9648 = vadd.f32 %v9627, %v9644
  %v9649 = vadd.f32 %v9628, %v9644
  %v9650 = vadd.f32 %v9629, %v9644
  %v9651 = vadd.f32 %v9630, %v9644
  %v9652 = vadd.f32 %v9631, %v9644
  %v9653 = vadd.f32 %v9632, %v9644
  %v9654 = vadd.f32 %v9633, %v9644
  %v9655 = vadd.f32 %v9634, %v9644
  %v9656 = vadd.f32 %v9635, %v9644
  %v9657 = vadd.f32 %v9636, %v9644
  %v9658 = vadd.f32 %v9637, %v9644
  %v9659 = vadd.f32 %v9638, %v9644
  %v9660 = vadd.f32 %v9639, %v9644
  %v9661 = vadd.f32 %v9640, %v9644
  %v9662 = vmax.f32 %v9646, 0.0
  %v9663 = vmax.f32 %v9647, 0.0
  %v9664 = vmax.f32 %v9648, 0.0
  %v9665 = vmax.f32 %v9649, 0.0
  %v9666 = vmax.f32 %v9650, 0.0
  %v9667 = vmax.f32 %v9651, 0.0
  %v9668 = vmax.f32 %v9652, 0.0
  %v9669 = vmax.f32 %v9653, 0.0
  %v9670 = vmax.f32 %v9654, 0.0
  %v9671 = vmax.f32 %v9655, 0.0
  %v9672 = vmax.f32 %v9656, 0.0
  %v9673 = vmax.f32 %v9657, 0.0
  %v9674 = vmax.f32 %v9658, 0.0
  %v9675 = vmax.f32 %v9659, 0.0
  %v9676 = vmax.f32 %v9660, 0.0
  %v9677 = vmax.f32 %v9661, 0.0
  %v9678 = vpack.c.bf16 %v9662, %v9662
  %v9679 = vpack.c.bf16 %v9663, %v9663
  %v9680 = vpack.c.bf16 %v9664, %v9664
  %v9681 = vpack.c.bf16 %v9665, %v9665
  %v9682 = vpack.c.bf16 %v9666, %v9666
  %v9683 = vpack.c.bf16 %v9667, %v9667
  %v9684 = vpack.c.bf16 %v9668, %v9668
  %v9685 = vpack.c.bf16 %v9669, %v9669
  %v9686 = vpack.c.bf16 %v9670, %v9670
  %v9687 = vpack.c.bf16 %v9671, %v9671
  %v9688 = vpack.c.bf16 %v9672, %v9672
  %v9689 = vpack.c.bf16 %v9673, %v9673
  %v9690 = vpack.c.bf16 %v9674, %v9674
  %v9691 = vpack.c.bf16 %v9675, %v9675
  %v9692 = vpack.c.bf16 %v9676, %v9676
  %v9693 = vpack.c.bf16 %v9677, %v9677
  %s9694 = scalar_lea.vmem %s1, 128
  %v9695 = vld [vmem:[%s9694] sm:$0xf]
  %v9696 = vld [vmem:[%s9694 + $0x4] sm:$0xf]
  %v9697 = vld [vmem:[%s9694 + $0x10] sm:$0xf]
  %v9698 = vld [vmem:[%s9694 + $0x14] sm:$0xf]
  %v9699 = vld [vmem:[%s9694 + $0x20] sm:$0xf]
  %v9700 = vld [vmem:[%s9694 + $0x24] sm:$0xf]
  %v9701 = vld [vmem:[%s9694 + $0x30] sm:$0xf]
  %v9702 = vld [vmem:[%s9694 + $0x34] sm:$0xf]
  %v9705 = vunpack.c.l.b16 %v9697
  %v9706 = vunpack.c.l.b16 %v9698
  %v9707 = vpack.c.b16 %v9706, %v9705
  %vm9708 = vcmask 64512
  %v9710 = vsel %vm9708, %v9707, 0
  %v9713 = vsel %vm7396, %v9682, 0
  %v9716 = vsel %vm7396, %v9683, 0
  %v9719 = vsel %vm7396, %v9684, 0
  %v9722 = vsel %vm7396, %v9685, 0
  %9724 = vmatprep.subr.bf16.mxu0 %v9716
  %9725 = vmatpush1.bf16.msra.mxu0 %v9713
  %9726 = vmatprep.subr.bf16.mxu0 0
  %9727 = vmatpush1.bf16.msra.mxu0 0
  %9728 = vmatprep.subr.bf16.mxu0 0
  %9729 = vmatpush1.bf16.msra.mxu0 0
  %9730 = vmatprep.subr.bf16.mxu0 0
  %9731 = vmatpush1.bf16.msra.mxu0 0
  %9732 = vmatprep.subr.bf16.mxu0 0
  %9733 = vmatpush1.bf16.msra.mxu0 0
  %9734 = vmatprep.subr.bf16.mxu0 0
  %9735 = vmatpush1.bf16.msra.mxu0 0
  %9736 = vmatprep.subr.bf16.mxu0 0
  %9737 = vmatpush1.bf16.msra.mxu0 0
  %9738 = vmatprep.subr.bf16.mxu0 0
  %9739 = vmatpush1.bf16.msra.mxu0 0
  %9740 = vmatprep.subr.bf16.mxu0 0
  %9741 = vmatpush1.bf16.msra.mxu0 0
  %9742 = vmatprep.subr.bf16.mxu0 0
  %9743 = vmatpush1.bf16.msra.mxu0 0
  %9744 = vmatprep.subr.bf16.mxu0 0
  %9745 = vmatpush1.bf16.msra.mxu0 0
  %9746 = vmatprep.subr.bf16.mxu0 0
  %9747 = vmatpush1.bf16.msra.mxu0 0
  %9748 = vmatprep.subr.bf16.mxu0 0
  %9749 = vmatpush1.bf16.msra.mxu0 0
  %9750 = vmatprep.subr.bf16.mxu0 0
  %9751 = vmatpush1.bf16.msra.mxu0 0
  %9752 = vmatprep.subr.bf16.mxu0 0
  %9753 = vmatpush1.bf16.msra.mxu0 0
  %9754 = vmatprep.subr.bf16.mxu0 0
  %9755 = vmatpush1.bf16.msra.mxu0 0
  %9756 = vmatprep.mubr.bf16.mxu0 0
  %9757 = vmatmul.mubr.bf16.gmra.mrb[0].mxu0 %v9710
  %v9758 = vpop.f32.mrb[0].mxu0
  %v9759 = vadd.f32 0.0, %v9758
  %v9760 = vpop.f32.mrb[0].mxu0
  %v9761 = vadd.f32 0.0, %v9760
  %v9762 = vpop.f32.mrb[0].mxu0
  %v9763 = vadd.f32 0.0, %v9762
  %v9764 = vpop.f32.mrb[0].mxu0
  %v9765 = vadd.f32 0.0, %v9764
  %9766 = vdwg.mxu0
  %9767 = vmatprep.subr.bf16.mxu0 %v9722
  %9768 = vmatpush1.bf16.msra.mxu0 %v9719
  %9769 = vmatprep.subr.bf16.mxu0 0
  %9770 = vmatpush1.bf16.msra.mxu0 0
  %9771 = vmatprep.subr.bf16.mxu0 0
  %9772 = vmatpush1.bf16.msra.mxu0 0
  %9773 = vmatprep.subr.bf16.mxu0 0
  %9774 = vmatpush1.bf16.msra.mxu0 0
  %9775 = vmatprep.subr.bf16.mxu0 0
  %9776 = vmatpush1.bf16.msra.mxu0 0
  %9777 = vmatprep.subr.bf16.mxu0 0
  %9778 = vmatpush1.bf16.msra.mxu0 0
  %9779 = vmatprep.subr.bf16.mxu0 0
  %9780 = vmatpush1.bf16.msra.mxu0 0
  %9781 = vmatprep.subr.bf16.mxu0 0
  %9782 = vmatpush1.bf16.msra.mxu0 0
  %9783 = vmatprep.subr.bf16.mxu0 0
  %9784 = vmatpush1.bf16.msra.mxu0 0
  %9785 = vmatprep.subr.bf16.mxu0 0
  %9786 = vmatpush1.bf16.msra.mxu0 0
  %9787 = vmatprep.subr.bf16.mxu0 0
  %9788 = vmatpush1.bf16.msra.mxu0 0
  %9789 = vmatprep.subr.bf16.mxu0 0
  %9790 = vmatpush1.bf16.msra.mxu0 0
  %9791 = vmatprep.subr.bf16.mxu0 0
  %9792 = vmatpush1.bf16.msra.mxu0 0
  %9793 = vmatprep.subr.bf16.mxu0 0
  %9794 = vmatpush1.bf16.msra.mxu0 0
  %9795 = vmatprep.subr.bf16.mxu0 0
  %9796 = vmatpush1.bf16.msra.mxu0 0
  %9797 = vmatprep.subr.bf16.mxu0 0
  %9798 = vmatpush1.bf16.msra.mxu0 0
  %9799 = vmatprep.mubr.bf16.mxu0 0
  %9800 = vmatmul.mubr.bf16.gmra.mrb[0].mxu0 %v9710
  %v9801 = vpop.f32.mrb[0].mxu0
  %v9802 = vadd.f32 0.0, %v9801
  %v9803 = vpop.f32.mrb[0].mxu0
  %v9804 = vadd.f32 0.0, %v9803
  %v9805 = vpop.f32.mrb[0].mxu0
  %v9806 = vadd.f32 0.0, %v9805
  %v9807 = vpop.f32.mrb[0].mxu0
  %v9808 = vadd.f32 0.0, %v9807
  %9809 = vdwg.mxu0
  %v9812 = vunpack.c.l.b16 %v9695
  %v9813 = vunpack.c.l.b16 %v9696
  %v9814 = vpack.c.b16 %v9813, %v9812
  %v9816 = vsel %vm9708, %v9814, 0
  %v9819 = vsel %vm7396, %v9678, 0
  %v9822 = vsel %vm7396, %v9679, 0
  %v9825 = vsel %vm7396, %v9680, 0
  %v9828 = vsel %vm7396, %v9681, 0
  %9830 = vmatprep.subr.bf16.mxu0 %v9822
  %9831 = vmatpush1.bf16.msra.mxu0 %v9819
  %9832 = vmatprep.subr.bf16.mxu0 0
  %9833 = vmatpush1.bf16.msra.mxu0 0
  %9834 = vmatprep.subr.bf16.mxu0 0
  %9835 = vmatpush1.bf16.msra.mxu0 0
  %9836 = vmatprep.subr.bf16.mxu0 0
  %9837 = vmatpush1.bf16.msra.mxu0 0
  %9838 = vmatprep.subr.bf16.mxu0 0
  %9839 = vmatpush1.bf16.msra.mxu0 0
  %9840 = vmatprep.subr.bf16.mxu0 0
  %9841 = vmatpush1.bf16.msra.mxu0 0
  %9842 = vmatprep.subr.bf16.mxu0 0
  %9843 = vmatpush1.bf16.msra.mxu0 0
  %9844 = vmatprep.subr.bf16.mxu0 0
  %9845 = vmatpush1.bf16.msra.mxu0 0
  %9846 = vmatprep.subr.bf16.mxu0 0
  %9847 = vmatpush1.bf16.msra.mxu0 0
  %9848 = vmatprep.subr.bf16.mxu0 0
  %9849 = vmatpush1.bf16.msra.mxu0 0
  %9850 = vmatprep.subr.bf16.mxu0 0
  %9851 = vmatpush1.bf16.msra.mxu0 0
  %9852 = vmatprep.subr.bf16.mxu0 0
  %9853 = vmatpush1.bf16.msra.mxu0 0
  %9854 = vmatprep.subr.bf16.mxu0 0
  %9855 = vmatpush1.bf16.msra.mxu0 0
  %9856 = vmatprep.subr.bf16.mxu0 0
  %9857 = vmatpush1.bf16.msra.mxu0 0
  %9858 = vmatprep.subr.bf16.mxu0 0
  %9859 = vmatpush1.bf16.msra.mxu0 0
  %9860 = vmatprep.subr.bf16.mxu0 0
  %9861 = vmatpush1.bf16.msra.mxu0 0
  %9862 = vmatprep.mubr.bf16.mxu0 0
  %9863 = vmatmul.mubr.bf16.gmra.mrb[0].mxu0 %v9816
  %v9864 = vpop.f32.mrb[0].mxu0
  %v9865 = vadd.f32 %v9759, %v9864
  %v9866 = vpop.f32.mrb[0].mxu0
  %v9867 = vadd.f32 %v9761, %v9866
  %v9868 = vpop.f32.mrb[0].mxu0
  %v9869 = vadd.f32 %v9763, %v9868
  %v9870 = vpop.f32.mrb[0].mxu0
  %v9871 = vadd.f32 %v9765, %v9870
  %9872 = vdwg.mxu0
  %9873 = vmatprep.subr.bf16.mxu0 %v9828
  %9874 = vmatpush1.bf16.msra.mxu0 %v9825
  %9875 = vmatprep.subr.bf16.mxu0 0
  %9876 = vmatpush1.bf16.msra.mxu0 0
  %9877 = vmatprep.subr.bf16.mxu0 0
  %9878 = vmatpush1.bf16.msra.mxu0 0
  %9879 = vmatprep.subr.bf16.mxu0 0
  %9880 = vmatpush1.bf16.msra.mxu0 0
  %9881 = vmatprep.subr.bf16.mxu0 0
  %9882 = vmatpush1.bf16.msra.mxu0 0
  %9883 = vmatprep.subr.bf16.mxu0 0
  %9884 = vmatpush1.bf16.msra.mxu0 0
  %9885 = vmatprep.subr.bf16.mxu0 0
  %9886 = vmatpush1.bf16.msra.mxu0 0
  %9887 = vmatprep.subr.bf16.mxu0 0
  %9888 = vmatpush1.bf16.msra.mxu0 0
  %9889 = vmatprep.subr.bf16.mxu0 0
  %9890 = vmatpush1.bf16.msra.mxu0 0
  %9891 = vmatprep.subr.bf16.mxu0 0
  %9892 = vmatpush1.bf16.msra.mxu0 0
  %9893 = vmatprep.subr.bf16.mxu0 0
  %9894 = vmatpush1.bf16.msra.mxu0 0
  %9895 = vmatprep.subr.bf16.mxu0 0
  %9896 = vmatpush1.bf16.msra.mxu0 0
  %9897 = vmatprep.subr.bf16.mxu0 0
  %9898 = vmatpush1.bf16.msra.mxu0 0
  %9899 = vmatprep.subr.bf16.mxu0 0
  %9900 = vmatpush1.bf16.msra.mxu0 0
  %9901 = vmatprep.subr.bf16.mxu0 0
  %9902 = vmatpush1.bf16.msra.mxu0 0
  %9903 = vmatprep.subr.bf16.mxu0 0
  %9904 = vmatpush1.bf16.msra.mxu0 0
  %9905 = vmatprep.mubr.bf16.mxu0 0
  %9906 = vmatmul.mubr.bf16.gmra.mrb[0].mxu0 %v9816
  %v9907 = vpop.f32.mrb[0].mxu0
  %v9908 = vadd.f32 %v9802, %v9907
  %v9909 = vpop.f32.mrb[0].mxu0
  %v9910 = vadd.f32 %v9804, %v9909
  %v9911 = vpop.f32.mrb[0].mxu0
  %v9912 = vadd.f32 %v9806, %v9911
  %v9913 = vpop.f32.mrb[0].mxu0
  %v9914 = vadd.f32 %v9808, %v9913
  %9915 = vdwg.mxu0
  %v9918 = vunpack.c.l.b16 %v9699
  %v9919 = vunpack.c.l.b16 %v9700
  %v9920 = vpack.c.b16 %v9919, %v9918
  %v9922 = vsel %vm9708, %v9920, 0
  %v9925 = vsel %vm7396, %v9686, 0
  %v9928 = vsel %vm7396, %v9687, 0
  %v9931 = vsel %vm7396, %v9688, 0
  %v9934 = vsel %vm7396, %v9689, 0
  %9936 = vmatprep.subr.bf16.mxu0 %v9928
  %9937 = vmatpush1.bf16.msra.mxu0 %v9925
  %9938 = vmatprep.subr.bf16.mxu0 0
  %9939 = vmatpush1.bf16.msra.mxu0 0
  %9940 = vmatprep.subr.bf16.mxu0 0
  %9941 = vmatpush1.bf16.msra.mxu0 0
  %9942 = vmatprep.subr.bf16.mxu0 0
  %9943 = vmatpush1.bf16.msra.mxu0 0
  %9944 = vmatprep.subr.bf16.mxu0 0
  %9945 = vmatpush1.bf16.msra.mxu0 0
  %9946 = vmatprep.subr.bf16.mxu0 0
  %9947 = vmatpush1.bf16.msra.mxu0 0
  %9948 = vmatprep.subr.bf16.mxu0 0
  %9949 = vmatpush1.bf16.msra.mxu0 0
  %9950 = vmatprep.subr.bf16.mxu0 0
  %9951 = vmatpush1.bf16.msra.mxu0 0
  %9952 = vmatprep.subr.bf16.mxu0 0
  %9953 = vmatpush1.bf16.msra.mxu0 0
  %9954 = vmatprep.subr.bf16.mxu0 0
  %9955 = vmatpush1.bf16.msra.mxu0 0
  %9956 = vmatprep.subr.bf16.mxu0 0
  %9957 = vmatpush1.bf16.msra.mxu0 0
  %9958 = vmatprep.subr.bf16.mxu0 0
  %9959 = vmatpush1.bf16.msra.mxu0 0
  %9960 = vmatprep.subr.bf16.mxu0 0
  %9961 = vmatpush1.bf16.msra.mxu0 0
  %9962 = vmatprep.subr.bf16.mxu0 0
  %9963 = vmatpush1.bf16.msra.mxu0 0
  %9964 = vmatprep.subr.bf16.mxu0 0
  %9965 = vmatpush1.bf16.msra.mxu0 0
  %9966 = vmatprep.subr.bf16.mxu0 0
  %9967 = vmatpush1.bf16.msra.mxu0 0
  %9968 = vmatprep.mubr.bf16.mxu0 0
  %9969 = vmatmul.mubr.bf16.gmra.mrb[0].mxu0 %v9922
  %v9970 = vpop.f32.mrb[0].mxu0
  %v9971 = vadd.f32 0.0, %v9970
  %v9972 = vpop.f32.mrb[0].mxu0
  %v9973 = vadd.f32 0.0, %v9972
  %v9974 = vpop.f32.mrb[0].mxu0
  %v9975 = vadd.f32 0.0, %v9974
  %v9976 = vpop.f32.mrb[0].mxu0
  %v9977 = vadd.f32 0.0, %v9976
  %9978 = vdwg.mxu0
  %9979 = vmatprep.subr.bf16.mxu0 %v9934
  %9980 = vmatpush1.bf16.msra.mxu0 %v9931
  %9981 = vmatprep.subr.bf16.mxu0 0
  %9982 = vmatpush1.bf16.msra.mxu0 0
  %9983 = vmatprep.subr.bf16.mxu0 0
  %9984 = vmatpush1.bf16.msra.mxu0 0
  %9985 = vmatprep.subr.bf16.mxu0 0
  %9986 = vmatpush1.bf16.msra.mxu0 0
  %9987 = vmatprep.subr.bf16.mxu0 0
  %9988 = vmatpush1.bf16.msra.mxu0 0
  %9989 = vmatprep.subr.bf16.mxu0 0
  %9990 = vmatpush1.bf16.msra.mxu0 0
  %9991 = vmatprep.subr.bf16.mxu0 0
  %9992 = vmatpush1.bf16.msra.mxu0 0
  %9993 = vmatprep.subr.bf16.mxu0 0
  %9994 = vmatpush1.bf16.msra.mxu0 0
  %9995 = vmatprep.subr.bf16.mxu0 0
  %9996 = vmatpush1.bf16.msra.mxu0 0
  %9997 = vmatprep.subr.bf16.mxu0 0
  %9998 = vmatpush1.bf16.msra.mxu0 0
  %9999 = vmatprep.subr.bf16.mxu0 0
  %10000 = vmatpush1.bf16.msra.mxu0 0
  %10001 = vmatprep.subr.bf16.mxu0 0
  %10002 = vmatpush1.bf16.msra.mxu0 0
  %10003 = vmatprep.subr.bf16.mxu0 0
  %10004 = vmatpush1.bf16.msra.mxu0 0
  %10005 = vmatprep.subr.bf16.mxu0 0
  %10006 = vmatpush1.bf16.msra.mxu0 0
  %10007 = vmatprep.subr.bf16.mxu0 0
  %10008 = vmatpush1.bf16.msra.mxu0 0
  %10009 = vmatprep.subr.bf16.mxu0 0
  %10010 = vmatpush1.bf16.msra.mxu0 0
  %10011 = vmatprep.mubr.bf16.mxu0 0
  %10012 = vmatmul.mubr.bf16.gmra.mrb[0].mxu0 %v9922
  %v10013 = vpop.f32.mrb[0].mxu0
  %v10014 = vadd.f32 0.0, %v10013
  %v10015 = vpop.f32.mrb[0].mxu0
  %v10016 = vadd.f32 0.0, %v10015
  %v10017 = vpop.f32.mrb[0].mxu0
  %v10018 = vadd.f32 0.0, %v10017
  %v10019 = vpop.f32.mrb[0].mxu0
  %v10020 = vadd.f32 0.0, %v10019
  %10021 = vdwg.mxu0
  %v10022 = vadd.f32 %v9865, %v9971
  %v10023 = vadd.f32 %v9867, %v9973
  %v10024 = vadd.f32 %v9908, %v10014
  %v10025 = vadd.f32 %v9910, %v10016
  %v10026 = vadd.f32 %v9869, %v9975
  %v10027 = vadd.f32 %v9871, %v9977
  %v10028 = vadd.f32 %v9912, %v10018
  %v10029 = vadd.f32 %v9914, %v10020
  %v10032 = vunpack.c.l.b16 %v9701
  %v10033 = vunpack.c.l.b16 %v9702
  %v10034 = vpack.c.b16 %v10033, %v10032
  %v10036 = vsel %vm9708, %v10034, 0
  %v10039 = vsel %vm7396, %v9690, 0
  %v10042 = vsel %vm7396, %v9691, 0
  %v10045 = vsel %vm7396, %v9692, 0
  %v10048 = vsel %vm7396, %v9693, 0
  %10050 = vmatprep.subr.bf16.mxu0 %v10042
  %10051 = vmatpush1.bf16.msra.mxu0 %v10039
  %10052 = vmatprep.subr.bf16.mxu0 0
  %10053 = vmatpush1.bf16.msra.mxu0 0
  %10054 = vmatprep.subr.bf16.mxu0 0
  %10055 = vmatpush1.bf16.msra.mxu0 0
  %10056 = vmatprep.subr.bf16.mxu0 0
  %10057 = vmatpush1.bf16.msra.mxu0 0
  %10058 = vmatprep.subr.bf16.mxu0 0
  %10059 = vmatpush1.bf16.msra.mxu0 0
  %10060 = vmatprep.subr.bf16.mxu0 0
  %10061 = vmatpush1.bf16.msra.mxu0 0
  %10062 = vmatprep.subr.bf16.mxu0 0
  %10063 = vmatpush1.bf16.msra.mxu0 0
  %10064 = vmatprep.subr.bf16.mxu0 0
  %10065 = vmatpush1.bf16.msra.mxu0 0
  %10066 = vmatprep.subr.bf16.mxu0 0
  %10067 = vmatpush1.bf16.msra.mxu0 0
  %10068 = vmatprep.subr.bf16.mxu0 0
  %10069 = vmatpush1.bf16.msra.mxu0 0
  %10070 = vmatprep.subr.bf16.mxu0 0
  %10071 = vmatpush1.bf16.msra.mxu0 0
  %10072 = vmatprep.subr.bf16.mxu0 0
  %10073 = vmatpush1.bf16.msra.mxu0 0
  %10074 = vmatprep.subr.bf16.mxu0 0
  %10075 = vmatpush1.bf16.msra.mxu0 0
  %10076 = vmatprep.subr.bf16.mxu0 0
  %10077 = vmatpush1.bf16.msra.mxu0 0
  %10078 = vmatprep.subr.bf16.mxu0 0
  %10079 = vmatpush1.bf16.msra.mxu0 0
  %10080 = vmatprep.subr.bf16.mxu0 0
  %10081 = vmatpush1.bf16.msra.mxu0 0
  %10082 = vmatprep.mubr.bf16.mxu0 0
  %10083 = vmatmul.mubr.bf16.gmra.mrb[0].mxu0 %v10036
  %v10084 = vpop.f32.mrb[0].mxu0
  %v10085 = vadd.f32 0.0, %v10084
  %v10086 = vpop.f32.mrb[0].mxu0
  %v10087 = vadd.f32 0.0, %v10086
  %v10088 = vpop.f32.mrb[0].mxu0
  %v10089 = vadd.f32 0.0, %v10088
  %v10090 = vpop.f32.mrb[0].mxu0
  %v10091 = vadd.f32 0.0, %v10090
  %10092 = vdwg.mxu0
  %10093 = vmatprep.subr.bf16.mxu0 %v10048
  %10094 = vmatpush1.bf16.msra.mxu0 %v10045
  %10095 = vmatprep.subr.bf16.mxu0 0
  %10096 = vmatpush1.bf16.msra.mxu0 0
  %10097 = vmatprep.subr.bf16.mxu0 0
  %10098 = vmatpush1.bf16.msra.mxu0 0
  %10099 = vmatprep.subr.bf16.mxu0 0
  %10100 = vmatpush1.bf16.msra.mxu0 0
  %10101 = vmatprep.subr.bf16.mxu0 0
  %10102 = vmatpush1.bf16.msra.mxu0 0
  %10103 = vmatprep.subr.bf16.mxu0 0
  %10104 = vmatpush1.bf16.msra.mxu0 0
  %10105 = vmatprep.subr.bf16.mxu0 0
  %10106 = vmatpush1.bf16.msra.mxu0 0
  %10107 = vmatprep.subr.bf16.mxu0 0
  %10108 = vmatpush1.bf16.msra.mxu0 0
  %10109 = vmatprep.subr.bf16.mxu0 0
  %10110 = vmatpush1.bf16.msra.mxu0 0
  %10111 = vmatprep.subr.bf16.mxu0 0
  %10112 = vmatpush1.bf16.msra.mxu0 0
  %10113 = vmatprep.subr.bf16.mxu0 0
  %10114 = vmatpush1.bf16.msra.mxu0 0
  %10115 = vmatprep.subr.bf16.mxu0 0
  %10116 = vmatpush1.bf16.msra.mxu0 0
  %10117 = vmatprep.subr.bf16.mxu0 0
  %10118 = vmatpush1.bf16.msra.mxu0 0
  %10119 = vmatprep.subr.bf16.mxu0 0
  %10120 = vmatpush1.bf16.msra.mxu0 0
  %10121 = vmatprep.subr.bf16.mxu0 0
  %10122 = vmatpush1.bf16.msra.mxu0 0
  %10123 = vmatprep.subr.bf16.mxu0 0
  %10124 = vmatpush1.bf16.msra.mxu0 0
  %10125 = vmatprep.mubr.bf16.mxu0 0
  %10126 = vmatmul.mubr.bf16.gmra.mrb[0].mxu0 %v10036
  %v10127 = vpop.f32.mrb[0].mxu0
  %v10128 = vadd.f32 0.0, %v10127
  %v10129 = vpop.f32.mrb[0].mxu0
  %v10130 = vadd.f32 0.0, %v10129
  %v10131 = vpop.f32.mrb[0].mxu0
  %v10132 = vadd.f32 0.0, %v10131
  %v10133 = vpop.f32.mrb[0].mxu0
  %v10134 = vadd.f32 0.0, %v10133
  %10135 = vdwg.mxu0
  %v10136 = vadd.f32 %v10022, %v10085
  %v10137 = vadd.f32 %v10023, %v10087
  %v10138 = vadd.f32 %v10024, %v10128
  %v10139 = vadd.f32 %v10025, %v10130
  %v10140 = vadd.f32 %v10026, %v10089
  %v10141 = vadd.f32 %v10027, %v10091
  %v10142 = vadd.f32 %v10028, %v10132
  %v10143 = vadd.f32 %v10029, %v10134
  %v10144 = vadd.f32 %v10136, %v10137
  %v10145 = vadd.f32 %v10144, %v10138
  %v10146 = vadd.f32 %v10145, %v10139
  %10147 = vadd.xlane.f32.xlu0 %v10146
  %v10148 = vpop.xlane.xlu0 %10147
  %v10149 = vadd.f32 %v10140, %v10141
  %v10150 = vadd.f32 %v10149, %v10142
  %v10151 = vadd.f32 %v10150, %v10143
  %10152 = vadd.xlane.f32.xlu0 %v10151
  %v10153 = vpop.xlane.xlu0 %10152
  %v10154 = vmul.f32 %v10136, %v10136
  %v10155 = vmul.f32 %v10137, %v10137
  %v10156 = vmul.f32 %v10138, %v10138
  %v10157 = vmul.f32 %v10139, %v10139
  %v10158 = vmul.f32 %v10140, %v10140
  %v10159 = vmul.f32 %v10141, %v10141
  %v10160 = vmul.f32 %v10142, %v10142
  %v10161 = vmul.f32 %v10143, %v10143
  %v10162 = vadd.f32 %v10154, %v10155
  %v10163 = vadd.f32 %v10162, %v10156
  %v10164 = vadd.f32 %v10163, %v10157
  %10165 = vadd.xlane.f32.xlu0 %v10164
  %v10166 = vpop.xlane.xlu0 %10165
  %v10167 = vadd.f32 %v10158, %v10159
  %v10168 = vadd.f32 %v10167, %v10160
  %v10169 = vadd.f32 %v10168, %v10161
  %10170 = vadd.xlane.f32.xlu0 %v10169
  %v10171 = vpop.xlane.xlu0 %10170
  %v10172 = vmul.f32 %v10148, 0.001953125
  %v10173 = vmul.f32 %v10153, 0.001953125
  %v10174 = vmul.f32 %v10166, 0.001953125
  %v10175 = vmul.f32 %v10171, 0.001953125
  %v10176 = vmul.f32 %v10172, %v10172
  %v10177 = vmul.f32 %v10173, %v10173
  %v10178 = vsub.f32 %v10174, %v10176
  %v10179 = vsub.f32 %v10175, %v10177
  %v10180 = vmax.f32 %v10178, 0.0
  %v10181 = vmax.f32 %v10179, 0.0
  %s10182 = scalar_lea.vmem %s2, 64
  %v10183 = vld [vmem:[%s10182] sm:$0xff]
  %v10184 = vld [vmem:[%s10182 + $0x8] sm:$0xff]
  %v10185 = vadd.f32 %v10180, 1e-05
  %v10186 = vadd.f32 %v10181, 1e-05
  %v10187 = vrsqrt.pop %v10185
  %v10188 = vrsqrt.pop %v10186
  %v10189 = vmul.f32 %v10183, %v10187
  %v10190 = vmul.f32 %v10184, %v10188
  %v10191 = vmul.f32 %v10172, %v10189
  %v10192 = vmul.f32 %v10173, %v10190
  %10195 = vrot.lane.b32.xlu0 %v10191, 1
  %v10196 = vpop.permute.xlu0 %10195
  %10197 = vrot.lane.b32.xlu0 %v10192, 1
  %v10198 = vpop.permute.xlu0 %10197
  %v10201 = vsub.f32 %v10183, %v10196
  %v10202 = vsub.f32 %v10184, %v10198
  %10204 = vset.pattern.permute.xlu0 0
  %10205 = vperm.xlu0 %10204, %v10189
  %v10206 = vpop.permute.xlu0 %10205
  %10209 = vset.pattern.permute.xlu0 0
  %10210 = vperm.xlu0 %10209, %v10190
  %v10211 = vpop.permute.xlu0 %10210
  %v10213 = vmul.f32 %v10136, %v10206
  %v10214 = vmul.f32 %v10137, %v10206
  %v10215 = vmul.f32 %v10138, %v10206
  %v10216 = vmul.f32 %v10139, %v10206
  %v10217 = vmul.f32 %v10140, %v10211
  %v10218 = vmul.f32 %v10141, %v10211
  %v10219 = vmul.f32 %v10142, %v10211
  %v10220 = vmul.f32 %v10143, %v10211
  %10222 = vset.pattern.permute.xlu0 1
  %10223 = vperm.xlu0 %10222, %v10201
  %v10224 = vpop.permute.xlu0 %10223
  %10227 = vset.pattern.permute.xlu0 1
  %10228 = vperm.xlu0 %10227, %v10202
  %v10229 = vpop.permute.xlu0 %10228
  %v10231 = vadd.f32 %v10213, %v10224
  %v10232 = vadd.f32 %v10214, %v10224
  %v10233 = vadd.f32 %v10215, %v10224
  %v10234 = vadd.f32 %v10216, %v10224
  %v10235 = vadd.f32 %v10217, %v10229
  %v10236 = vadd.f32 %v10218, %v10229
  %v10237 = vadd.f32 %v10219, %v10229
  %v10238 = vadd.f32 %v10220, %v10229
  %v10239 = vmax.f32 %v10231, 0.0
  %v10240 = vmax.f32 %v10232, 0.0
  %v10241 = vmax.f32 %v10233, 0.0
  %v10242 = vmax.f32 %v10234, 0.0
  %v10243 = vmax.f32 %v10235, 0.0
  %v10244 = vmax.f32 %v10236, 0.0
  %v10245 = vmax.f32 %v10237, 0.0
  %v10246 = vmax.f32 %v10238, 0.0
  %v10247 = vpack.c.bf16 %v10243, %v10239
  %v10248 = vpack.c.bf16 %v10244, %v10240
  %v10249 = vpack.c.bf16 %v10245, %v10241
  %v10250 = vpack.c.bf16 %v10246, %v10242
  %s10251 = scalar_lea.vmem %s1, 192
  %v10252 = vld [vmem:[%s10251] sm:$0xf]
  %v10253 = vld [vmem:[%s10251 + $0x4] sm:$0xf]
  %v10254 = vld [vmem:[%s10251 + $0x8] sm:$0xf]
  %v10255 = vld [vmem:[%s10251 + $0xc] sm:$0xf]
  %v10256 = vld [vmem:[%s10251 + $0x10] sm:$0xf]
  %v10257 = vld [vmem:[%s10251 + $0x14] sm:$0xf]
  %v10258 = vld [vmem:[%s10251 + $0x18] sm:$0xf]
  %v10259 = vld [vmem:[%s10251 + $0x1c] sm:$0xf]
  %v10260 = vld [vmem:[%s10251 + $0x20] sm:$0xf]
  %v10261 = vld [vmem:[%s10251 + $0x24] sm:$0xf]
  %v10262 = vld [vmem:[%s10251 + $0x28] sm:$0xf]
  %v10263 = vld [vmem:[%s10251 + $0x2c] sm:$0xf]
  %v10264 = vld [vmem:[%s10251 + $0x30] sm:$0xf]
  %v10265 = vld [vmem:[%s10251 + $0x34] sm:$0xf]
  %v10266 = vld [vmem:[%s10251 + $0x38] sm:$0xf]
  %v10267 = vld [vmem:[%s10251 + $0x3c] sm:$0xf]
  %v10272 = vunpack.c.l.b16 %v10256
  %v10273 = vunpack.c.l.b16 %v10257
  %v10274 = vunpack.c.l.b16 %v10258
  %v10275 = vunpack.c.l.b16 %v10259
  %v10276 = vpack.c.b16 %v10273, %v10272
  %v10277 = vpack.c.b16 %v10275, %v10274
  %vm10278 = vcmask 130048
  %v10280 = vsel %vm10278, %v10276, 0
  %v10283 = vsel %vm10278, %v10277, 0
  %10285 = vmatprep.subr.bf16.mxu0 0
  %10286 = vmatpush1.bf16.msra.mxu0 %v10248
  %10287 = vmatprep.subr.bf16.mxu0 0
  %10288 = vmatpush1.bf16.msra.mxu0 0
  %10289 = vmatprep.subr.bf16.mxu0 0
  %10290 = vmatpush1.bf16.msra.mxu0 0
  %10291 = vmatprep.subr.bf16.mxu0 0
  %10292 = vmatpush1.bf16.msra.mxu0 0
  %10293 = vmatprep.subr.bf16.mxu0 0
  %10294 = vmatpush1.bf16.msra.mxu0 0
  %10295 = vmatprep.subr.bf16.mxu0 0
  %10296 = vmatpush1.bf16.msra.mxu0 0
  %10297 = vmatprep.subr.bf16.mxu0 0
  %10298 = vmatpush1.bf16.msra.mxu0 0
  %10299 = vmatprep.subr.bf16.mxu0 0
  %10300 = vmatpush1.bf16.msra.mxu0 0
  %10301 = vmatprep.subr.bf16.mxu0 0
  %10302 = vmatpush1.bf16.msra.mxu0 0
  %10303 = vmatprep.subr.bf16.mxu0 0
  %10304 = vmatpush1.bf16.msra.mxu0 0
  %10305 = vmatprep.subr.bf16.mxu0 0
  %10306 = vmatpush1.bf16.msra.mxu0 0
  %10307 = vmatprep.subr.bf16.mxu0 0
  %10308 = vmatpush1.bf16.msra.mxu0 0
  %10309 = vmatprep.subr.bf16.mxu0 0
  %10310 = vmatpush1.bf16.msra.mxu0 0
  %10311 = vmatprep.subr.bf16.mxu0 0
  %10312 = vmatpush1.bf16.msra.mxu0 0
  %10313 = vmatprep.subr.bf16.mxu0 0
  %10314 = vmatpush1.bf16.msra.mxu0 0
  %10315 = vmatprep.subr.bf16.mxu0 0
  %10316 = vmatpush1.bf16.msra.mxu0 0
  %10317 = vmatprep.mubr.bf16.mxu0 0
  %10318 = vmatmul.mubr.bf16.gmra.mrb[0].mxu0 %v10280
  %v10319 = vpop.f32.mrb[0].mxu0
  %v10320 = vadd.f32 0.0, %v10319
  %v10321 = vpop.f32.mrb[0].mxu0
  %v10322 = vpop.f32.mrb[0].mxu0
  %v10323 = vadd.f32 0.0, %v10322
  %v10324 = vpop.f32.mrb[0].mxu0
  %10325 = vmatprep.mubr.bf16.mxu0 0
  %10326 = vmatmul.mubr.bf16.gmra.mrb[0].mxu0 %v10283
  %v10327 = vpop.f32.mrb[0].mxu0
  %v10328 = vadd.f32 0.0, %v10327
  %v10329 = vpop.f32.mrb[0].mxu0
  %v10330 = vpop.f32.mrb[0].mxu0
  %v10331 = vadd.f32 0.0, %v10330
  %v10332 = vpop.f32.mrb[0].mxu0
  %10333 = vdwg.mxu0
  %v10338 = vunpack.c.l.b16 %v10252
  %v10339 = vunpack.c.l.b16 %v10253
  %v10340 = vunpack.c.l.b16 %v10254
  %v10341 = vunpack.c.l.b16 %v10255
  %v10342 = vpack.c.b16 %v10339, %v10338
  %v10343 = vpack.c.b16 %v10341, %v10340
  %v10345 = vsel %vm10278, %v10342, 0
  %v10348 = vsel %vm10278, %v10343, 0
  %10350 = vmatprep.subr.bf16.mxu0 0
  %10351 = vmatpush1.bf16.msra.mxu0 %v10247
  %10352 = vmatprep.subr.bf16.mxu0 0
  %10353 = vmatpush1.bf16.msra.mxu0 0
  %10354 = vmatprep.subr.bf16.mxu0 0
  %10355 = vmatpush1.bf16.msra.mxu0 0
  %10356 = vmatprep.subr.bf16.mxu0 0
  %10357 = vmatpush1.bf16.msra.mxu0 0
  %10358 = vmatprep.subr.bf16.mxu0 0
  %10359 = vmatpush1.bf16.msra.mxu0 0
  %10360 = vmatprep.subr.bf16.mxu0 0
  %10361 = vmatpush1.bf16.msra.mxu0 0
  %10362 = vmatprep.subr.bf16.mxu0 0
  %10363 = vmatpush1.bf16.msra.mxu0 0
  %10364 = vmatprep.subr.bf16.mxu0 0
  %10365 = vmatpush1.bf16.msra.mxu0 0
  %10366 = vmatprep.subr.bf16.mxu0 0
  %10367 = vmatpush1.bf16.msra.mxu0 0
  %10368 = vmatprep.subr.bf16.mxu0 0
  %10369 = vmatpush1.bf16.msra.mxu0 0
  %10370 = vmatprep.subr.bf16.mxu0 0
  %10371 = vmatpush1.bf16.msra.mxu0 0
  %10372 = vmatprep.subr.bf16.mxu0 0
  %10373 = vmatpush1.bf16.msra.mxu0 0
  %10374 = vmatprep.subr.bf16.mxu0 0
  %10375 = vmatpush1.bf16.msra.mxu0 0
  %10376 = vmatprep.subr.bf16.mxu0 0
  %10377 = vmatpush1.bf16.msra.mxu0 0
  %10378 = vmatprep.subr.bf16.mxu0 0
  %10379 = vmatpush1.bf16.msra.mxu0 0
  %10380 = vmatprep.subr.bf16.mxu0 0
  %10381 = vmatpush1.bf16.msra.mxu0 0
  %10382 = vmatprep.mubr.bf16.mxu0 0
  %10383 = vmatmul.mubr.bf16.gmra.mrb[0].mxu0 %v10345
  %v10384 = vpop.f32.mrb[0].mxu0
  %v10385 = vadd.f32 %v10320, %v10384
  %v10386 = vpop.f32.mrb[0].mxu0
  %v10387 = vpop.f32.mrb[0].mxu0
  %v10388 = vadd.f32 %v10323, %v10387
  %v10389 = vpop.f32.mrb[0].mxu0
  %10390 = vmatprep.mubr.bf16.mxu0 0
  %10391 = vmatmul.mubr.bf16.gmra.mrb[0].mxu0 %v10348
  %v10392 = vpop.f32.mrb[0].mxu0
  %v10393 = vadd.f32 %v10328, %v10392
  %v10394 = vpop.f32.mrb[0].mxu0
  %v10395 = vpop.f32.mrb[0].mxu0
  %v10396 = vadd.f32 %v10331, %v10395
  %v10397 = vpop.f32.mrb[0].mxu0
  %10398 = vdwg.mxu0
  %v10403 = vunpack.c.l.b16 %v10260
  %v10404 = vunpack.c.l.b16 %v10261
  %v10405 = vunpack.c.l.b16 %v10262
  %v10406 = vunpack.c.l.b16 %v10263
  %v10407 = vpack.c.b16 %v10404, %v10403
  %v10408 = vpack.c.b16 %v10406, %v10405
  %v10410 = vsel %vm10278, %v10407, 0
  %v10413 = vsel %vm10278, %v10408, 0
  %10415 = vmatprep.subr.bf16.mxu0 0
  %10416 = vmatpush1.bf16.msra.mxu0 %v10249
  %10417 = vmatprep.subr.bf16.mxu0 0
  %10418 = vmatpush1.bf16.msra.mxu0 0
  %10419 = vmatprep.subr.bf16.mxu0 0
  %10420 = vmatpush1.bf16.msra.mxu0 0
  %10421 = vmatprep.subr.bf16.mxu0 0
  %10422 = vmatpush1.bf16.msra.mxu0 0
  %10423 = vmatprep.subr.bf16.mxu0 0
  %10424 = vmatpush1.bf16.msra.mxu0 0
  %10425 = vmatprep.subr.bf16.mxu0 0
  %10426 = vmatpush1.bf16.msra.mxu0 0
  %10427 = vmatprep.subr.bf16.mxu0 0
  %10428 = vmatpush1.bf16.msra.mxu0 0
  %10429 = vmatprep.subr.bf16.mxu0 0
  %10430 = vmatpush1.bf16.msra.mxu0 0
  %10431 = vmatprep.subr.bf16.mxu0 0
  %10432 = vmatpush1.bf16.msra.mxu0 0
  %10433 = vmatprep.subr.bf16.mxu0 0
  %10434 = vmatpush1.bf16.msra.mxu0 0
  %10435 = vmatprep.subr.bf16.mxu0 0
  %10436 = vmatpush1.bf16.msra.mxu0 0
  %10437 = vmatprep.subr.bf16.mxu0 0
  %10438 = vmatpush1.bf16.msra.mxu0 0
  %10439 = vmatprep.subr.bf16.mxu0 0
  %10440 = vmatpush1.bf16.msra.mxu0 0
  %10441 = vmatprep.subr.bf16.mxu0 0
  %10442 = vmatpush1.bf16.msra.mxu0 0
  %10443 = vmatprep.subr.bf16.mxu0 0
  %10444 = vmatpush1.bf16.msra.mxu0 0
  %10445 = vmatprep.subr.bf16.mxu0 0
  %10446 = vmatpush1.bf16.msra.mxu0 0
  %10447 = vmatprep.mubr.bf16.mxu0 0
  %10448 = vmatmul.mubr.bf16.gmra.mrb[0].mxu0 %v10410
  %v10449 = vpop.f32.mrb[0].mxu0
  %v10450 = vadd.f32 0.0, %v10449
  %v10451 = vpop.f32.mrb[0].mxu0
  %v10452 = vpop.f32.mrb[0].mxu0
  %v10453 = vadd.f32 0.0, %v10452
  %v10454 = vpop.f32.mrb[0].mxu0
  %10455 = vmatprep.mubr.bf16.mxu0 0
  %10456 = vmatmul.mubr.bf16.gmra.mrb[0].mxu0 %v10413
  %v10457 = vpop.f32.mrb[0].mxu0
  %v10458 = vadd.f32 0.0, %v10457
  %v10459 = vpop.f32.mrb[0].mxu0
  %v10460 = vpop.f32.mrb[0].mxu0
  %v10461 = vadd.f32 0.0, %v10460
  %v10462 = vpop.f32.mrb[0].mxu0
  %10463 = vdwg.mxu0
  %v10464 = vadd.f32 %v10385, %v10450
  %v10465 = vadd.f32 %v10388, %v10453
  %v10466 = vadd.f32 %v10393, %v10458
  %v10467 = vadd.f32 %v10396, %v10461
  %v10472 = vunpack.c.l.b16 %v10264
  %v10473 = vunpack.c.l.b16 %v10265
  %v10474 = vunpack.c.l.b16 %v10266
  %v10475 = vunpack.c.l.b16 %v10267
  %v10476 = vpack.c.b16 %v10473, %v10472
  %v10477 = vpack.c.b16 %v10475, %v10474
  %v10479 = vsel %vm10278, %v10476, 0
  %v10482 = vsel %vm10278, %v10477, 0
  %10484 = vmatprep.subr.bf16.mxu0 0
  %10485 = vmatpush1.bf16.msra.mxu0 %v10250
  %10486 = vmatprep.subr.bf16.mxu0 0
  %10487 = vmatpush1.bf16.msra.mxu0 0
  %10488 = vmatprep.subr.bf16.mxu0 0
  %10489 = vmatpush1.bf16.msra.mxu0 0
  %10490 = vmatprep.subr.bf16.mxu0 0
  %10491 = vmatpush1.bf16.msra.mxu0 0
  %10492 = vmatprep.subr.bf16.mxu0 0
  %10493 = vmatpush1.bf16.msra.mxu0 0
  %10494 = vmatprep.subr.bf16.mxu0 0
  %10495 = vmatpush1.bf16.msra.mxu0 0
  %10496 = vmatprep.subr.bf16.mxu0 0
  %10497 = vmatpush1.bf16.msra.mxu0 0
  %10498 = vmatprep.subr.bf16.mxu0 0
  %10499 = vmatpush1.bf16.msra.mxu0 0
  %10500 = vmatprep.subr.bf16.mxu0 0
  %10501 = vmatpush1.bf16.msra.mxu0 0
  %10502 = vmatprep.subr.bf16.mxu0 0
  %10503 = vmatpush1.bf16.msra.mxu0 0
  %10504 = vmatprep.subr.bf16.mxu0 0
  %10505 = vmatpush1.bf16.msra.mxu0 0
  %10506 = vmatprep.subr.bf16.mxu0 0
  %10507 = vmatpush1.bf16.msra.mxu0 0
  %10508 = vmatprep.subr.bf16.mxu0 0
  %10509 = vmatpush1.bf16.msra.mxu0 0
  %10510 = vmatprep.subr.bf16.mxu0 0
  %10511 = vmatpush1.bf16.msra.mxu0 0
  %10512 = vmatprep.subr.bf16.mxu0 0
  %10513 = vmatpush1.bf16.msra.mxu0 0
  %10514 = vmatprep.subr.bf16.mxu0 0
  %10515 = vmatpush1.bf16.msra.mxu0 0
  %10516 = vmatprep.mubr.bf16.mxu0 0
  %10517 = vmatmul.mubr.bf16.gmra.mrb[0].mxu0 %v10479
  %v10518 = vpop.f32.mrb[0].mxu0
  %v10519 = vadd.f32 0.0, %v10518
  %v10520 = vpop.f32.mrb[0].mxu0
  %v10521 = vpop.f32.mrb[0].mxu0
  %v10522 = vadd.f32 0.0, %v10521
  %v10523 = vpop.f32.mrb[0].mxu0
  %10524 = vmatprep.mubr.bf16.mxu0 0
  %10525 = vmatmul.mubr.bf16.gmra.mrb[0].mxu0 %v10482
  %v10526 = vpop.f32.mrb[0].mxu0
  %v10527 = vadd.f32 0.0, %v10526
  %v10528 = vpop.f32.mrb[0].mxu0
  %v10529 = vpop.f32.mrb[0].mxu0
  %v10530 = vadd.f32 0.0, %v10529
  %v10531 = vpop.f32.mrb[0].mxu0
  %10532 = vdwg.mxu0
  %v10533 = vadd.f32 %v10464, %v10519
  %v10534 = vadd.f32 %v10465, %v10522
  %v10535 = vadd.f32 %v10466, %v10527
  %v10536 = vadd.f32 %v10467, %v10530
  %10537 = vadd.xlane.f32.xlu0 %v10533
  %v10538 = vpop.xlane.xlu0 %10537
  %10539 = vadd.xlane.f32.xlu0 %v10534
  %v10540 = vpop.xlane.xlu0 %10539
  %10541 = vadd.xlane.f32.xlu0 %v10535
  %v10542 = vpop.xlane.xlu0 %10541
  %10543 = vadd.xlane.f32.xlu0 %v10536
  %v10544 = vpop.xlane.xlu0 %10543
  %v10545 = vmul.f32 %v10533, %v10533
  %v10546 = vmul.f32 %v10534, %v10534
  %v10547 = vmul.f32 %v10535, %v10535
  %v10548 = vmul.f32 %v10536, %v10536
  %10549 = vadd.xlane.f32.xlu0 %v10545
  %v10550 = vpop.xlane.xlu0 %10549
  %10551 = vadd.xlane.f32.xlu0 %v10546
  %v10552 = vpop.xlane.xlu0 %10551
  %10553 = vadd.xlane.f32.xlu0 %v10547
  %v10554 = vpop.xlane.xlu0 %10553
  %10555 = vadd.xlane.f32.xlu0 %v10548
  %v10556 = vpop.xlane.xlu0 %10555
  %v10557 = vmul.f32 %v10538, 0.0078125
  %v10558 = vmul.f32 %v10540, 0.0078125
  %v10559 = vmul.f32 %v10542, 0.0078125
  %v10560 = vmul.f32 %v10544, 0.0078125
  %v10561 = vmul.f32 %v10550, 0.0078125
  %v10562 = vmul.f32 %v10552, 0.0078125
  %v10563 = vmul.f32 %v10554, 0.0078125
  %v10564 = vmul.f32 %v10556, 0.0078125
  %v10565 = vmul.f32 %v10557, %v10557
  %v10566 = vmul.f32 %v10558, %v10558
  %v10567 = vmul.f32 %v10559, %v10559
  %v10568 = vmul.f32 %v10560, %v10560
  %v10569 = vsub.f32 %v10561, %v10565
  %v10570 = vsub.f32 %v10562, %v10566
  %v10571 = vsub.f32 %v10563, %v10567
  %v10572 = vsub.f32 %v10564, %v10568
  %v10573 = vmax.f32 %v10569, 0.0
  %v10574 = vmax.f32 %v10570, 0.0
  %v10575 = vmax.f32 %v10571, 0.0
  %v10576 = vmax.f32 %v10572, 0.0
  %s10577 = scalar_lea.vmem %s2, 96
  %v10578 = vld [vmem:[%s10577] sm:$0xff]
  %v10579 = vld [vmem:[%s10577 + $0x8] sm:$0xff]
  %v10580 = vld [vmem:[%s10577 + $0x10] sm:$0xff]
  %v10581 = vld [vmem:[%s10577 + $0x18] sm:$0xff]
  %v10582 = vadd.f32 %v10573, 1e-05
  %v10583 = vadd.f32 %v10574, 1e-05
  %v10584 = vadd.f32 %v10575, 1e-05
  %v10585 = vadd.f32 %v10576, 1e-05
  %v10586 = vrsqrt.pop %v10582
  %v10587 = vrsqrt.pop %v10583
  %v10588 = vrsqrt.pop %v10584
  %v10589 = vrsqrt.pop %v10585
  %v10590 = vmul.f32 %v10578, %v10586
  %v10591 = vmul.f32 %v10579, %v10587
  %v10592 = vmul.f32 %v10580, %v10588
  %v10593 = vmul.f32 %v10581, %v10589
  %v10594 = vmul.f32 %v10557, %v10590
  %v10595 = vmul.f32 %v10558, %v10591
  %v10596 = vmul.f32 %v10559, %v10592
  %v10597 = vmul.f32 %v10560, %v10593
  %10602 = vrot.lane.b32.xlu0 %v10594, 1
  %v10603 = vpop.permute.xlu0 %10602
  %10604 = vrot.lane.b32.xlu0 %v10595, 1
  %v10605 = vpop.permute.xlu0 %10604
  %10606 = vrot.lane.b32.xlu0 %v10596, 1
  %v10607 = vpop.permute.xlu0 %10606
  %10608 = vrot.lane.b32.xlu0 %v10597, 1
  %v10609 = vpop.permute.xlu0 %10608
  %v10614 = vsub.f32 %v10578, %v10603
  %v10615 = vsub.f32 %v10579, %v10605
  %v10616 = vsub.f32 %v10580, %v10607
  %v10617 = vsub.f32 %v10581, %v10609
  %10619 = vset.pattern.permute.xlu0 0
  %10620 = vperm.xlu0 %10619, %v10590
  %v10621 = vpop.permute.xlu0 %10620
  %10624 = vset.pattern.permute.xlu0 0
  %10625 = vperm.xlu0 %10624, %v10591
  %v10626 = vpop.permute.xlu0 %10625
  %10629 = vset.pattern.permute.xlu0 0
  %10630 = vperm.xlu0 %10629, %v10592
  %v10631 = vpop.permute.xlu0 %10630
  %10634 = vset.pattern.permute.xlu0 0
  %10635 = vperm.xlu0 %10634, %v10593
  %v10636 = vpop.permute.xlu0 %10635
  %v10638 = vmul.f32 %v10533, %v10621
  %v10639 = vmul.f32 %v10534, %v10626
  %v10640 = vmul.f32 %v10535, %v10631
  %v10641 = vmul.f32 %v10536, %v10636
  %10643 = vset.pattern.permute.xlu0 1
  %10644 = vperm.xlu0 %10643, %v10614
  %v10645 = vpop.permute.xlu0 %10644
  %10648 = vset.pattern.permute.xlu0 1
  %10649 = vperm.xlu0 %10648, %v10615
  %v10650 = vpop.permute.xlu0 %10649
  %10653 = vset.pattern.permute.xlu0 1
  %10654 = vperm.xlu0 %10653, %v10616
  %v10655 = vpop.permute.xlu0 %10654
  %10658 = vset.pattern.permute.xlu0 1
  %10659 = vperm.xlu0 %10658, %v10617
  %v10660 = vpop.permute.xlu0 %10659
  %v10662 = vadd.f32 %v10638, %v10645
  %v10663 = vadd.f32 %v10639, %v10650
  %v10664 = vadd.f32 %v10640, %v10655
  %v10665 = vadd.f32 %v10641, %v10660
  %v10666 = vmax.f32 %v10662, 0.0
  %v10667 = vmax.f32 %v10663, 0.0
  %v10668 = vmax.f32 %v10664, 0.0
  %v10669 = vmax.f32 %v10665, 0.0
  %10670 = vst [vmem:[%s3] sm:$0xff] %v10666
  %10671 = vst [vmem:[%s3 + $0x8] sm:$0xff] %v10667
  %10672 = vst [vmem:[%s3 + $0x10] sm:$0xff] %v10668
  %10673 = vst [vmem:[%s3 + $0x18] sm:$0xff] %v10669
  // Predicated region
  $region14: #{encoder_forward.1} parent=0 // pred_check
    _
  $region15: #{encoder_forward.1} parent=0 // pred_check_branch
    %10675 = sbr.rel (0) target = $region17
  $region16: #{encoder_forward.1} parent=0 // pred_region
    _
  $region17: #{encoder_forward.1} parent=0 // pred_fallthru
    _
  // Predicated region
  $region18: #{encoder_forward.1} parent=0 // pred_check
    _
  $region19: #{encoder_forward.1} parent=0 // pred_check_branch
    %10677 = sbr.rel (0) target = $region21
  $region20: #{encoder_forward.1} parent=0 // pred_region
    _
  $region21: #{encoder_forward.1} parent=0 // pred_fallthru
    _

</llo_original>
